<compile_context>
chip_gen: v7x
topology: tpu7x:2x2x1
jax: 0.10.0
libtpu: 0.0.40
codegen_flags: <defaults>
</compile_context>

<pallas_src>
import functools

import jax
import jax.numpy as jnp
from jax.experimental import pallas as pl
from jax.experimental.pallas import tpu as pltpu

GN_EPS = 1e-5   # nn.GroupNorm default eps
WS_EPS = 1e-5   # weight-standardization eps


def _make_fused_kernel(*, BPC, Cg, n_groups):
    """Fused GN + Mish + upsample + conv kernel. All shapes static at trace time."""

    def kernel(x_ref, gamma_ref, beta_ref, uw_ref, uh_ref, ws_ref, o_ref, t1s_ref):
        # x_ref:    (1, BPC, H*W)      packed-batch channels on sublanes, flat spatial on lanes
        # gamma_ref/beta_ref: (BPC, 1) GroupNorm affine, tiled per packed image
        # uw_ref:   (3, H*W, H*Wo)     W-upsample matrices, conv dx shift folded in
        # uh_ref:   (3, H*Wo, Ho*Wo)   H-upsample matrices, conv dy shift + zero-pad folded in
        # ws_ref:   (3, BP*Cout, 3*BPC) weight-standardized conv weights, batch block-packed
        # o_ref:    (1, BP*Cout, Ho*Wo) flat output (lane-dense stores)
        # t1s_ref:  (3*BPC, H*Wo)      scratch: W-upsampled rows, stacked by dx shift
        x = x_ref[0]                                             # (BPC, H*W) f32
        hw = x.shape[1]
        inv_cnt = 1.0 / float(Cg * hw)

        # ---- GroupNorm: one stats pass, then a single fused scale/bias pass ----
        s1 = jnp.sum(x, axis=1, keepdims=True)                   # (BPC, 1)
        s2 = jnp.sum(x * x, axis=1, keepdims=True)                # (BPC, 1)
        row = jax.lax.broadcasted_iota(jnp.int32, (BPC, 1), 0)
        scale = jnp.zeros((BPC, 1), jnp.float32)
        shift = jnp.zeros((BPC, 1), jnp.float32)
        for gi in range(n_groups):                                # tiny (BPC,1) work only
            lo = gi * Cg
            gs1 = s1[lo:lo + 1, :]
            gs2 = s2[lo:lo + 1, :]
            for c in range(1, Cg):
                gs1 = gs1 + s1[lo + c:lo + c + 1, :]
                gs2 = gs2 + s2[lo + c:lo + c + 1, :]
            mean = gs1 * inv_cnt
            var = jnp.maximum(gs2 * inv_cnt - mean * mean, 0.0)
            inv = jax.lax.rsqrt(var + GN_EPS)
            m = ((row >= lo) & (row < lo + Cg)).astype(jnp.float32)
            scale = scale + m * inv
            shift = shift + m * (mean * inv)
        a = scale * gamma_ref[...]                                # per-channel scale = inv*gamma
        b = beta_ref[...] - shift * gamma_ref[...]                # per-channel bias
        y = x * a + b                                             # (BPC, H*W)

        # ---- Mish: y * tanh(softplus(y)) with a single exp ----
        e = jnp.exp(jnp.minimum(y, 20.0))
        n2 = (1.0 + e) * (1.0 + e)
        t = (n2 - 1.0) / (n2 + 1.0)                               # tanh(softplus(y))
        t = jnp.where(y > 20.0, 1.0, t)                           # softplus threshold-20 bypass
        act = y * t                                               # (BPC, H*W)

        # ---- W-direction bilinear upsample (conv dx=-1/0/+1 folded): 3 lane-dense matmuls ----
        for k in range(3):
            t1s_ref[k * BPC:(k + 1) * BPC, :] = jnp.dot(
                act, uw_ref[k], preferred_element_type=jnp.float32)

        # ---- H-direction upsample (conv dy folded) + 3x3 conv: chained accumulation ----
        t1 = t1s_ref[...]                                         # (3*BPC, H*Wo)
        acc = jnp.dot(ws_ref[0],
                      jnp.dot(t1, uh_ref[0], preferred_element_type=jnp.float32),
                      preferred_element_type=jnp.float32)
        for dy in (1, 2):
            acc = acc + jnp.dot(ws_ref[dy],
                                jnp.dot(t1, uh_ref[dy], preferred_element_type=jnp.float32),
                                preferred_element_type=jnp.float32)
        o_ref[0] = acc                                            # (BP*Cout, Ho*Wo) lane-dense

    return kernel


def _bilinear_matrix(in_size, out_size):
    # M (in, out) such that out_vec = in_vec @ M, matching F.interpolate bilinear with
    # align_corners=False (source coord clamped at 0, indices clamped at in_size-1).
    i = jnp.arange(out_size, dtype=jnp.float32)
    src = jnp.maximum((i + 0.5) * (in_size / out_size) - 0.5, 0.0)
    i0 = jnp.minimum(jnp.floor(src), in_size - 1)
    i1 = jnp.minimum(i0 + 1, in_size - 1)
    lam = src - i0
    rows = jnp.arange(in_size, dtype=jnp.float32)[:, None]
    return (jnp.where(rows == i0[None, :], 1.0 - lam[None, :], 0.0)
            + jnp.where(rows == i1[None, :], lam[None, :], 0.0))           # (in, out)


def _shifted_variants(m):
    # Column-shifted copies of m (in, out): value at o-1 / o / o+1 with zero padding.
    in_size = m.shape[0]
    z = jnp.zeros((in_size, 1), jnp.float32)
    return [jnp.concatenate([z, m[:, :-1]], axis=1),   # value at o-1  (conv tap index 0)
            m,                                         # value at o    (conv tap index 1)
            jnp.concatenate([m[:, 1:], z], axis=1)]    # value at o+1  (conv tap index 2)


def _standardize_and_pack(conv_weight, bp):
    # conv_weight: (Cout, Cin, 3, 3) OIHW.  Weight standardization (per-output-channel mean,
    # unbiased std, eps added to std), then block-pack for bp packed images:
    #   wsb[dy, b*Cout+co, dx*(bp*Cin) + b*Cin + ci] = w_std[co, ci, dy, dx]
    cout, cin = conv_weight.shape[0], conv_weight.shape[1]
    wf = conv_weight.reshape(cout, -1)
    mean = jnp.mean(wf, axis=1, keepdims=True)
    std = jnp.std(wf, axis=1, ddof=1, keepdims=True)
    w = ((wf - mean) / (std + WS_EPS)).reshape(conv_weight.shape)
    eye = jnp.eye(bp, dtype=jnp.float32)
    wsb = jnp.einsum('oidk,bB->dbokBi', w, eye)        # (3, bp, Cout, 3, bp, Cin)
    return wsb.reshape(3, bp * cout, 3 * bp * cin)


@functools.partial(jax.jit, static_argnames=("num_groups", "scale_factor"))
def up_conv_layer(x_nchw, gamma, beta, conv_weight, *, num_groups, scale_factor):
    N, C, H, W = x_nchw.shape
    s = int(scale_factor)
    Ho, Wo = H * s, W * s
    Cout = conv_weight.shape[0]
    G = int(num_groups)

    # Pack 2 images per grid step when possible: fills all 8 sublanes at C=4 and halves the
    # number of grid steps.  (On v7x with tiny N this trades the 2nd TC for sublane packing;
    # see TODO about a second spatial grid axis.)
    BP = 2 if N % 2 == 0 else 1
    NB = N // BP
    BPC = BP * C
    BPCout = BP * Cout
    HoWo = Ho * Wo

    # Free, contiguous reshapes only (no transposes): batch-major packing of channels.
    x3 = x_nchw.astype(jnp.float32).reshape(NB, BPC, H * W)
    gamma2 = jnp.tile(gamma.astype(jnp.float32).reshape(-1), (BP,)).reshape(BPC, 1)
    beta2 = jnp.tile(beta.astype(jnp.float32).reshape(-1), (BP,)).reshape(BPC, 1)

    # W-direction: block-diagonal over rows, conv dx shift folded in.  (3, H*W, H*Wo)
    uw3 = jnp.stack([jnp.kron(jnp.eye(H, dtype=jnp.float32), m)
                     for m in _shifted_variants(_bilinear_matrix(W, Wo))], axis=0)
    # H-direction: per-width-identity expansion, conv dy shift + zero-row pad folded in.
    # (3, H*Wo, Ho*Wo)
    uh3 = jnp.stack([jnp.kron(m, jnp.eye(Wo, dtype=jnp.float32))
                     for m in _shifted_variants(_bilinear_matrix(H, Ho))], axis=0)

    wsb = _standardize_and_pack(conv_weight.astype(jnp.float32), BP)   # (3, BP*Cout, 3*BPC)

    kernel = _make_fused_kernel(BPC=BPC, Cg=C // G, n_groups=BP * G)

    out_flat = pl.pallas_call(
        kernel,
        out_shape=jax.ShapeDtypeStruct((NB, BPCout, HoWo), jnp.float32),
        grid_spec=pltpu.PrefetchScalarGridSpec(
            num_scalar_prefetch=0,
            grid=(NB,),
            in_specs=[
                pl.BlockSpec((1, BPC, H * W), lambda n: (n, 0, 0)),
                pl.BlockSpec((BPC, 1), lambda n: (0, 0)),
                pl.BlockSpec((BPC, 1), lambda n: (0, 0)),
                pl.BlockSpec((3, H * W, H * Wo), lambda n: (0, 0, 0)),
                pl.BlockSpec((3, H * Wo, HoWo), lambda n: (0, 0, 0)),
                pl.BlockSpec((3, BPCout, 3 * BPC), lambda n: (0, 0, 0)),
            ],
            out_specs=pl.BlockSpec((1, BPCout, HoWo), lambda n: (n, 0, 0)),
            scratch_shapes=[
                pltpu.VMEM((3 * BPC, H * Wo), jnp.float32),   # W-upsampled, dx-stacked
            ],
        ),
        compiler_params=pltpu.CompilerParams(
            dimension_semantics=("parallel",),
            vmem_limit_bytes=32 * 1024 * 1024,    # explicit raise matters on v5e (16 MiB default)
        ),
    )(x3, gamma2, beta2, uw3, uh3, wsb)

    # Free contiguous reshape back to NCHW like the PyTorch module.
    return out_flat.reshape(N, Cout, Ho, Wo)


if __name__ == "__main__":
    key = jax.random.PRNGKey(0)
    k1, k2, k3, k4 = jax.random.split(key, 4)

    N, Cin, H, W = 2, 4, 16, 16
    Cout, G, scale = 8, 2, 2

    x = jax.random.normal(k1, (N, Cin, H, W), jnp.float32)
    gamma = 1.0 + 0.1 * jax.random.normal(k2, (Cin,), jnp.float32)
    beta = 0.1 * jax.random.normal(k3, (Cin,), jnp.float32)
    conv_weight = 0.1 * jax.random.normal(k4, (Cout, Cin, 3, 3), jnp.float32)

    out = up_conv_layer(x, gamma, beta, conv_weight, num_groups=G, scale_factor=scale)
    jax.block_until_ready(out)
    assert out.shape == (N, Cout, H * scale, W * scale), out.shape
    print("KERNEL_OK")
</pallas_src>

<mosaic_0001>
module attributes {stable_mosaic.version = 11 : i64} {
  func.func @kernel(%arg0: i32, %arg1: memref<1x8x256xf32, #tpu.memory_space<vmem>>, %arg2: memref<8x1xf32, #tpu.memory_space<vmem>>, %arg3: memref<8x1xf32, #tpu.memory_space<vmem>>, %arg4: memref<3x256x512xf32, #tpu.memory_space<vmem>>, %arg5: memref<3x512x1024xf32, #tpu.memory_space<vmem>>, %arg6: memref<3x16x24xf32, #tpu.memory_space<vmem>>, %arg7: memref<1x16x1024xf32, #tpu.memory_space<vmem>>, %arg8: memref<24x512xf32, #tpu.memory_space<vmem>>) attributes {dimension_semantics = [#tpu.dimension_semantics<parallel>], iteration_bounds = array<i64: 1>, scalar_prefetch = 0 : i64, scratch_operands = 1 : i64, tpu.core_type = #tpu.core_type<tc>, window_params = [{transform_indices = @transform_0, window_bounds = array<i64: 1, 8, 256>}, {pipeline_mode = #tpu.pipeline_mode<synchronous>, transform_indices = @transform_1, window_bounds = array<i64: 8, 1>}, {pipeline_mode = #tpu.pipeline_mode<synchronous>, transform_indices = @transform_2, window_bounds = array<i64: 8, 1>}, {pipeline_mode = #tpu.pipeline_mode<synchronous>, transform_indices = @transform_3, window_bounds = array<i64: 3, 256, 512>}, {pipeline_mode = #tpu.pipeline_mode<synchronous>, transform_indices = @transform_4, window_bounds = array<i64: 3, 512, 1024>}, {pipeline_mode = #tpu.pipeline_mode<synchronous>, transform_indices = @transform_5, window_bounds = array<i64: 3, 16, 24>}, {transform_indices = @transform_6, window_bounds = array<i64: 1, 16, 1024>}]} {
    %c0 = arith.constant 0 : index
    %c0_0 = arith.constant 0 : index
    %c0_1 = arith.constant 0 : index
    %0 = vector.load %arg1[%c0, %c0_0, %c0_1] : memref<1x8x256xf32, #tpu.memory_space<vmem>>, vector<1x8x256xf32>
    %1 = vector.shape_cast %0 : vector<1x8x256xf32> to vector<8x256xf32>
    %cst = arith.constant dense<0.000000e+00> : vector<8xf32>
    %2 = vector.multi_reduction <add>, %1, %cst [1] : vector<8x256xf32> to vector<8xf32>
    %3 = vector.shape_cast %2 : vector<8xf32> to vector<8x1xf32>
    %4 = arith.mulf %1, %1 : vector<8x256xf32>
    %cst_2 = arith.constant dense<0.000000e+00> : vector<8xf32>
    %5 = vector.multi_reduction <add>, %4, %cst_2 [1] : vector<8x256xf32> to vector<8xf32>
    %6 = vector.shape_cast %5 : vector<8xf32> to vector<8x1xf32>
    %7 = tpu.iota {dimensions = array<i32: 0>} : vector<8x1xi32>
    %cst_3 = arith.constant 0.000000e+00 : f32
    %8 = vector.broadcast %cst_3 : f32 to vector<8x1xf32>
    %cst_4 = arith.constant 0.000000e+00 : f32
    %9 = vector.broadcast %cst_4 : f32 to vector<8x1xf32>
    %10 = vector.extract_strided_slice %3 {offsets = [0, 0], sizes = [1, 1], strides = [1, 1]} : vector<8x1xf32> to vector<1x1xf32>
    %11 = vector.extract_strided_slice %6 {offsets = [0, 0], sizes = [1, 1], strides = [1, 1]} : vector<8x1xf32> to vector<1x1xf32>
    %12 = vector.extract_strided_slice %3 {offsets = [1, 0], sizes = [1, 1], strides = [1, 1]} : vector<8x1xf32> to vector<1x1xf32>
    %13 = arith.addf %10, %12 : vector<1x1xf32>
    %14 = vector.extract_strided_slice %6 {offsets = [1, 0], sizes = [1, 1], strides = [1, 1]} : vector<8x1xf32> to vector<1x1xf32>
    %15 = arith.addf %11, %14 : vector<1x1xf32>
    %cst_5 = arith.constant 0.001953125 : f32
    %16 = vector.broadcast %cst_5 : f32 to vector<1x1xf32>
    %17 = arith.mulf %13, %16 : vector<1x1xf32>
    %cst_6 = arith.constant 0.001953125 : f32
    %18 = vector.broadcast %cst_6 : f32 to vector<1x1xf32>
    %19 = arith.mulf %15, %18 : vector<1x1xf32>
    %20 = arith.mulf %17, %17 : vector<1x1xf32>
    %21 = arith.subf %19, %20 : vector<1x1xf32>
    %cst_7 = arith.constant 0.000000e+00 : f32
    %22 = vector.broadcast %cst_7 : f32 to vector<1x1xf32>
    %23 = arith.maximumf %21, %22 : vector<1x1xf32>
    %cst_8 = arith.constant 9.99999974E-6 : f32
    %24 = vector.broadcast %cst_8 : f32 to vector<1x1xf32>
    %25 = arith.addf %23, %24 : vector<1x1xf32>
    %26 = math.rsqrt %25 : vector<1x1xf32>
    %c0_i32 = arith.constant 0 : i32
    %27 = vector.broadcast %c0_i32 : i32 to vector<8x1xi32>
    %28 = arith.cmpi sge, %7, %27 : vector<8x1xi32>
    %c2_i32 = arith.constant 2 : i32
    %29 = vector.broadcast %c2_i32 : i32 to vector<8x1xi32>
    %30 = arith.cmpi slt, %7, %29 : vector<8x1xi32>
    %31 = arith.andi %28, %30 : vector<8x1xi1>
    %32 = arith.extui %31 : vector<8x1xi1> to vector<8x1xi32>
    %33 = arith.sitofp %32 : vector<8x1xi32> to vector<8x1xf32>
    %34 = vector.broadcast %26 : vector<1x1xf32> to vector<8x1xf32>
    %35 = arith.mulf %33, %34 : vector<8x1xf32>
    %36 = arith.addf %8, %35 : vector<8x1xf32>
    %37 = arith.mulf %17, %26 : vector<1x1xf32>
    %38 = vector.broadcast %37 : vector<1x1xf32> to vector<8x1xf32>
    %39 = arith.mulf %33, %38 : vector<8x1xf32>
    %40 = arith.addf %9, %39 : vector<8x1xf32>
    %41 = vector.extract_strided_slice %3 {offsets = [2, 0], sizes = [1, 1], strides = [1, 1]} : vector<8x1xf32> to vector<1x1xf32>
    %42 = vector.extract_strided_slice %6 {offsets = [2, 0], sizes = [1, 1], strides = [1, 1]} : vector<8x1xf32> to vector<1x1xf32>
    %43 = vector.extract_strided_slice %3 {offsets = [3, 0], sizes = [1, 1], strides = [1, 1]} : vector<8x1xf32> to vector<1x1xf32>
    %44 = arith.addf %41, %43 : vector<1x1xf32>
    %45 = vector.extract_strided_slice %6 {offsets = [3, 0], sizes = [1, 1], strides = [1, 1]} : vector<8x1xf32> to vector<1x1xf32>
    %46 = arith.addf %42, %45 : vector<1x1xf32>
    %cst_9 = arith.constant 0.001953125 : f32
    %47 = vector.broadcast %cst_9 : f32 to vector<1x1xf32>
    %48 = arith.mulf %44, %47 : vector<1x1xf32>
    %cst_10 = arith.constant 0.001953125 : f32
    %49 = vector.broadcast %cst_10 : f32 to vector<1x1xf32>
    %50 = arith.mulf %46, %49 : vector<1x1xf32>
    %51 = arith.mulf %48, %48 : vector<1x1xf32>
    %52 = arith.subf %50, %51 : vector<1x1xf32>
    %cst_11 = arith.constant 0.000000e+00 : f32
    %53 = vector.broadcast %cst_11 : f32 to vector<1x1xf32>
    %54 = arith.maximumf %52, %53 : vector<1x1xf32>
    %cst_12 = arith.constant 9.99999974E-6 : f32
    %55 = vector.broadcast %cst_12 : f32 to vector<1x1xf32>
    %56 = arith.addf %54, %55 : vector<1x1xf32>
    %57 = math.rsqrt %56 : vector<1x1xf32>
    %c2_i32_13 = arith.constant 2 : i32
    %58 = vector.broadcast %c2_i32_13 : i32 to vector<8x1xi32>
    %59 = arith.cmpi sge, %7, %58 : vector<8x1xi32>
    %c4_i32 = arith.constant 4 : i32
    %60 = vector.broadcast %c4_i32 : i32 to vector<8x1xi32>
    %61 = arith.cmpi slt, %7, %60 : vector<8x1xi32>
    %62 = arith.andi %59, %61 : vector<8x1xi1>
    %63 = arith.extui %62 : vector<8x1xi1> to vector<8x1xi32>
    %64 = arith.sitofp %63 : vector<8x1xi32> to vector<8x1xf32>
    %65 = vector.broadcast %57 : vector<1x1xf32> to vector<8x1xf32>
    %66 = arith.mulf %64, %65 : vector<8x1xf32>
    %67 = arith.addf %36, %66 : vector<8x1xf32>
    %68 = arith.mulf %48, %57 : vector<1x1xf32>
    %69 = vector.broadcast %68 : vector<1x1xf32> to vector<8x1xf32>
    %70 = arith.mulf %64, %69 : vector<8x1xf32>
    %71 = arith.addf %40, %70 : vector<8x1xf32>
    %72 = vector.extract_strided_slice %3 {offsets = [4, 0], sizes = [1, 1], strides = [1, 1]} : vector<8x1xf32> to vector<1x1xf32>
    %73 = vector.extract_strided_slice %6 {offsets = [4, 0], sizes = [1, 1], strides = [1, 1]} : vector<8x1xf32> to vector<1x1xf32>
    %74 = vector.extract_strided_slice %3 {offsets = [5, 0], sizes = [1, 1], strides = [1, 1]} : vector<8x1xf32> to vector<1x1xf32>
    %75 = arith.addf %72, %74 : vector<1x1xf32>
    %76 = vector.extract_strided_slice %6 {offsets = [5, 0], sizes = [1, 1], strides = [1, 1]} : vector<8x1xf32> to vector<1x1xf32>
    %77 = arith.addf %73, %76 : vector<1x1xf32>
    %cst_14 = arith.constant 0.001953125 : f32
    %78 = vector.broadcast %cst_14 : f32 to vector<1x1xf32>
    %79 = arith.mulf %75, %78 : vector<1x1xf32>
    %cst_15 = arith.constant 0.001953125 : f32
    %80 = vector.broadcast %cst_15 : f32 to vector<1x1xf32>
    %81 = arith.mulf %77, %80 : vector<1x1xf32>
    %82 = arith.mulf %79, %79 : vector<1x1xf32>
    %83 = arith.subf %81, %82 : vector<1x1xf32>
    %cst_16 = arith.constant 0.000000e+00 : f32
    %84 = vector.broadcast %cst_16 : f32 to vector<1x1xf32>
    %85 = arith.maximumf %83, %84 : vector<1x1xf32>
    %cst_17 = arith.constant 9.99999974E-6 : f32
    %86 = vector.broadcast %cst_17 : f32 to vector<1x1xf32>
    %87 = arith.addf %85, %86 : vector<1x1xf32>
    %88 = math.rsqrt %87 : vector<1x1xf32>
    %c4_i32_18 = arith.constant 4 : i32
    %89 = vector.broadcast %c4_i32_18 : i32 to vector<8x1xi32>
    %90 = arith.cmpi sge, %7, %89 : vector<8x1xi32>
    %c6_i32 = arith.constant 6 : i32
    %91 = vector.broadcast %c6_i32 : i32 to vector<8x1xi32>
    %92 = arith.cmpi slt, %7, %91 : vector<8x1xi32>
    %93 = arith.andi %90, %92 : vector<8x1xi1>
    %94 = arith.extui %93 : vector<8x1xi1> to vector<8x1xi32>
    %95 = arith.sitofp %94 : vector<8x1xi32> to vector<8x1xf32>
    %96 = vector.broadcast %88 : vector<1x1xf32> to vector<8x1xf32>
    %97 = arith.mulf %95, %96 : vector<8x1xf32>
    %98 = arith.addf %67, %97 : vector<8x1xf32>
    %99 = arith.mulf %79, %88 : vector<1x1xf32>
    %100 = vector.broadcast %99 : vector<1x1xf32> to vector<8x1xf32>
    %101 = arith.mulf %95, %100 : vector<8x1xf32>
    %102 = arith.addf %71, %101 : vector<8x1xf32>
    %103 = vector.extract_strided_slice %3 {offsets = [6, 0], sizes = [1, 1], strides = [1, 1]} : vector<8x1xf32> to vector<1x1xf32>
    %104 = vector.extract_strided_slice %6 {offsets = [6, 0], sizes = [1, 1], strides = [1, 1]} : vector<8x1xf32> to vector<1x1xf32>
    %105 = vector.extract_strided_slice %3 {offsets = [7, 0], sizes = [1, 1], strides = [1, 1]} : vector<8x1xf32> to vector<1x1xf32>
    %106 = arith.addf %103, %105 : vector<1x1xf32>
    %107 = vector.extract_strided_slice %6 {offsets = [7, 0], sizes = [1, 1], strides = [1, 1]} : vector<8x1xf32> to vector<1x1xf32>
    %108 = arith.addf %104, %107 : vector<1x1xf32>
    %cst_19 = arith.constant 0.001953125 : f32
    %109 = vector.broadcast %cst_19 : f32 to vector<1x1xf32>
    %110 = arith.mulf %106, %109 : vector<1x1xf32>
    %cst_20 = arith.constant 0.001953125 : f32
    %111 = vector.broadcast %cst_20 : f32 to vector<1x1xf32>
    %112 = arith.mulf %108, %111 : vector<1x1xf32>
    %113 = arith.mulf %110, %110 : vector<1x1xf32>
    %114 = arith.subf %112, %113 : vector<1x1xf32>
    %cst_21 = arith.constant 0.000000e+00 : f32
    %115 = vector.broadcast %cst_21 : f32 to vector<1x1xf32>
    %116 = arith.maximumf %114, %115 : vector<1x1xf32>
    %cst_22 = arith.constant 9.99999974E-6 : f32
    %117 = vector.broadcast %cst_22 : f32 to vector<1x1xf32>
    %118 = arith.addf %116, %117 : vector<1x1xf32>
    %119 = math.rsqrt %118 : vector<1x1xf32>
    %c6_i32_23 = arith.constant 6 : i32
    %120 = vector.broadcast %c6_i32_23 : i32 to vector<8x1xi32>
    %121 = arith.cmpi sge, %7, %120 : vector<8x1xi32>
    %c8_i32 = arith.constant 8 : i32
    %122 = vector.broadcast %c8_i32 : i32 to vector<8x1xi32>
    %123 = arith.cmpi slt, %7, %122 : vector<8x1xi32>
    %124 = arith.andi %121, %123 : vector<8x1xi1>
    %125 = arith.extui %124 : vector<8x1xi1> to vector<8x1xi32>
    %126 = arith.sitofp %125 : vector<8x1xi32> to vector<8x1xf32>
    %127 = vector.broadcast %119 : vector<1x1xf32> to vector<8x1xf32>
    %128 = arith.mulf %126, %127 : vector<8x1xf32>
    %129 = arith.addf %98, %128 : vector<8x1xf32>
    %130 = arith.mulf %110, %119 : vector<1x1xf32>
    %131 = vector.broadcast %130 : vector<1x1xf32> to vector<8x1xf32>
    %132 = arith.mulf %126, %131 : vector<8x1xf32>
    %133 = arith.addf %102, %132 : vector<8x1xf32>
    %c0_24 = arith.constant 0 : index
    %c0_25 = arith.constant 0 : index
    %134 = vector.load %arg2[%c0_24, %c0_25] : memref<8x1xf32, #tpu.memory_space<vmem>>, vector<8x1xf32>
    %135 = arith.mulf %129, %134 : vector<8x1xf32>
    %c0_26 = arith.constant 0 : index
    %c0_27 = arith.constant 0 : index
    %136 = vector.load %arg3[%c0_26, %c0_27] : memref<8x1xf32, #tpu.memory_space<vmem>>, vector<8x1xf32>
    %c0_28 = arith.constant 0 : index
    %c0_29 = arith.constant 0 : index
    %137 = vector.load %arg2[%c0_28, %c0_29] : memref<8x1xf32, #tpu.memory_space<vmem>>, vector<8x1xf32>
    %138 = arith.mulf %133, %137 : vector<8x1xf32>
    %139 = arith.subf %136, %138 : vector<8x1xf32>
    %140 = vector.broadcast %135 : vector<8x1xf32> to vector<8x256xf32>
    %141 = arith.mulf %1, %140 : vector<8x256xf32>
    %142 = vector.broadcast %139 : vector<8x1xf32> to vector<8x256xf32>
    %143 = arith.addf %141, %142 : vector<8x256xf32>
    %cst_30 = arith.constant 2.000000e+01 : f32
    %144 = vector.broadcast %cst_30 : f32 to vector<8x256xf32>
    %145 = arith.minimumf %143, %144 : vector<8x256xf32>
    %146 = math.exp %145 : vector<8x256xf32>
    %cst_31 = arith.constant 1.000000e+00 : f32
    %147 = vector.broadcast %cst_31 : f32 to vector<8x256xf32>
    %148 = arith.addf %147, %146 : vector<8x256xf32>
    %cst_32 = arith.constant 1.000000e+00 : f32
    %149 = vector.broadcast %cst_32 : f32 to vector<8x256xf32>
    %150 = arith.addf %149, %146 : vector<8x256xf32>
    %151 = arith.mulf %148, %150 : vector<8x256xf32>
    %cst_33 = arith.constant 1.000000e+00 : f32
    %152 = vector.broadcast %cst_33 : f32 to vector<8x256xf32>
    %153 = arith.subf %151, %152 : vector<8x256xf32>
    %cst_34 = arith.constant 1.000000e+00 : f32
    %154 = vector.broadcast %cst_34 : f32 to vector<8x256xf32>
    %155 = arith.addf %151, %154 : vector<8x256xf32>
    %156 = arith.divf %153, %155 : vector<8x256xf32>
    %cst_35 = arith.constant 2.000000e+01 : f32
    %157 = vector.broadcast %cst_35 : f32 to vector<8x256xf32>
    %158 = arith.cmpf ogt, %143, %157 : vector<8x256xf32>
    %cst_36 = arith.constant 1.000000e+00 : f32
    %159 = vector.broadcast %cst_36 : f32 to vector<8x256xf32>
    %160 = arith.select %158, %159, %156 : vector<8x256xi1>, vector<8x256xf32>
    %161 = arith.mulf %143, %160 : vector<8x256xf32>
    %c0_37 = arith.constant 0 : index
    %c0_38 = arith.constant 0 : index
    %c0_39 = arith.constant 0 : index
    %162 = vector.load %arg4[%c0_37, %c0_38, %c0_39] : memref<3x256x512xf32, #tpu.memory_space<vmem>>, vector<1x256x512xf32>
    %163 = vector.shape_cast %162 : vector<1x256x512xf32> to vector<256x512xf32>
    %cst_40 = arith.constant dense<0.000000e+00> : vector<8x512xf32>
    %164 = tpu.matmul %161, %163, %cst_40 {dimension_numbers = #tpu.dot_dimension_numbers<[1], [0], [0], [1], [0, 0, 1, 1], [], []>} : vector<8x256xf32>, vector<256x512xf32>, vector<8x512xf32> -> vector<8x512xf32>
    %c0_41 = arith.constant 0 : index
    %c0_42 = arith.constant 0 : index
    %165 = vector.load %arg8[%c0_41, %c0_42] : memref<24x512xf32, #tpu.memory_space<vmem>>, vector<8x512xf32>
    tpu.vector_store %arg8[%c0_41, %c0_42], %164 {strides = array<i32>} : memref<24x512xf32, #tpu.memory_space<vmem>>, vector<8x512xf32>,
    %c1 = arith.constant 1 : index
    %c0_43 = arith.constant 0 : index
    %c0_44 = arith.constant 0 : index
    %166 = vector.load %arg4[%c1, %c0_43, %c0_44] : memref<3x256x512xf32, #tpu.memory_space<vmem>>, vector<1x256x512xf32>
    %167 = vector.shape_cast %166 : vector<1x256x512xf32> to vector<256x512xf32>
    %cst_45 = arith.constant dense<0.000000e+00> : vector<8x512xf32>
    %168 = tpu.matmul %161, %167, %cst_45 {dimension_numbers = #tpu.dot_dimension_numbers<[1], [0], [0], [1], [0, 0, 1, 1], [], []>} : vector<8x256xf32>, vector<256x512xf32>, vector<8x512xf32> -> vector<8x512xf32>
    %c8 = arith.constant 8 : index
    %c0_46 = arith.constant 0 : index
    %169 = vector.load %arg8[%c8, %c0_46] : memref<24x512xf32, #tpu.memory_space<vmem>>, vector<8x512xf32>
    tpu.vector_store %arg8[%c8, %c0_46], %168 {strides = array<i32>} : memref<24x512xf32, #tpu.memory_space<vmem>>, vector<8x512xf32>,
    %c2 = arith.constant 2 : index
    %c0_47 = arith.constant 0 : index
    %c0_48 = arith.constant 0 : index
    %170 = vector.load %arg4[%c2, %c0_47, %c0_48] : memref<3x256x512xf32, #tpu.memory_space<vmem>>, vector<1x256x512xf32>
    %171 = vector.shape_cast %170 : vector<1x256x512xf32> to vector<256x512xf32>
    %cst_49 = arith.constant dense<0.000000e+00> : vector<8x512xf32>
    %172 = tpu.matmul %161, %171, %cst_49 {dimension_numbers = #tpu.dot_dimension_numbers<[1], [0], [0], [1], [0, 0, 1, 1], [], []>} : vector<8x256xf32>, vector<256x512xf32>, vector<8x512xf32> -> vector<8x512xf32>
    %c16 = arith.constant 16 : index
    %c0_50 = arith.constant 0 : index
    %173 = vector.load %arg8[%c16, %c0_50] : memref<24x512xf32, #tpu.memory_space<vmem>>, vector<8x512xf32>
    tpu.vector_store %arg8[%c16, %c0_50], %172 {strides = array<i32>} : memref<24x512xf32, #tpu.memory_space<vmem>>, vector<8x512xf32>,
    %c0_51 = arith.constant 0 : index
    %c0_52 = arith.constant 0 : index
    %174 = vector.load %arg8[%c0_51, %c0_52] : memref<24x512xf32, #tpu.memory_space<vmem>>, vector<24x512xf32>
    %c0_53 = arith.constant 0 : index
    %c0_54 = arith.constant 0 : index
    %c0_55 = arith.constant 0 : index
    %175 = vector.load %arg6[%c0_53, %c0_54, %c0_55] : memref<3x16x24xf32, #tpu.memory_space<vmem>>, vector<1x16x24xf32>
    %176 = vector.shape_cast %175 : vector<1x16x24xf32> to vector<16x24xf32>
    %c0_56 = arith.constant 0 : index
    %c0_57 = arith.constant 0 : index
    %c0_58 = arith.constant 0 : index
    %177 = vector.load %arg5[%c0_56, %c0_57, %c0_58] : memref<3x512x1024xf32, #tpu.memory_space<vmem>>, vector<1x512x1024xf32>
    %178 = vector.shape_cast %177 : vector<1x512x1024xf32> to vector<512x1024xf32>
    %cst_59 = arith.constant dense<0.000000e+00> : vector<24x1024xf32>
    %179 = tpu.matmul %174, %178, %cst_59 {dimension_numbers = #tpu.dot_dimension_numbers<[1], [0], [0], [1], [0, 0, 1, 1], [], []>} : vector<24x512xf32>, vector<512x1024xf32>, vector<24x1024xf32> -> vector<24x1024xf32>
    %cst_60 = arith.constant dense<0.000000e+00> : vector<16x1024xf32>
    %180 = tpu.matmul %176, %179, %cst_60 {dimension_numbers = #tpu.dot_dimension_numbers<[1], [0], [0], [1], [0, 0, 1, 1], [], []>} : vector<16x24xf32>, vector<24x1024xf32>, vector<16x1024xf32> -> vector<16x1024xf32>
    %c1_61 = arith.constant 1 : index
    %c0_62 = arith.constant 0 : index
    %c0_63 = arith.constant 0 : index
    %181 = vector.load %arg6[%c1_61, %c0_62, %c0_63] : memref<3x16x24xf32, #tpu.memory_space<vmem>>, vector<1x16x24xf32>
    %182 = vector.shape_cast %181 : vector<1x16x24xf32> to vector<16x24xf32>
    %c1_64 = arith.constant 1 : index
    %c0_65 = arith.constant 0 : index
    %c0_66 = arith.constant 0 : index
    %183 = vector.load %arg5[%c1_64, %c0_65, %c0_66] : memref<3x512x1024xf32, #tpu.memory_space<vmem>>, vector<1x512x1024xf32>
    %184 = vector.shape_cast %183 : vector<1x512x1024xf32> to vector<512x1024xf32>
    %cst_67 = arith.constant dense<0.000000e+00> : vector<24x1024xf32>
    %185 = tpu.matmul %174, %184, %cst_67 {dimension_numbers = #tpu.dot_dimension_numbers<[1], [0], [0], [1], [0, 0, 1, 1], [], []>} : vector<24x512xf32>, vector<512x1024xf32>, vector<24x1024xf32> -> vector<24x1024xf32>
    %cst_68 = arith.constant dense<0.000000e+00> : vector<16x1024xf32>
    %186 = tpu.matmul %182, %185, %cst_68 {dimension_numbers = #tpu.dot_dimension_numbers<[1], [0], [0], [1], [0, 0, 1, 1], [], []>} : vector<16x24xf32>, vector<24x1024xf32>, vector<16x1024xf32> -> vector<16x1024xf32>
    %187 = arith.addf %180, %186 : vector<16x1024xf32>
    %c2_69 = arith.constant 2 : index
    %c0_70 = arith.constant 0 : index
    %c0_71 = arith.constant 0 : index
    %188 = vector.load %arg6[%c2_69, %c0_70, %c0_71] : memref<3x16x24xf32, #tpu.memory_space<vmem>>, vector<1x16x24xf32>
    %189 = vector.shape_cast %188 : vector<1x16x24xf32> to vector<16x24xf32>
    %c2_72 = arith.constant 2 : index
    %c0_73 = arith.constant 0 : index
    %c0_74 = arith.constant 0 : index
    %190 = vector.load %arg5[%c2_72, %c0_73, %c0_74] : memref<3x512x1024xf32, #tpu.memory_space<vmem>>, vector<1x512x1024xf32>
    %191 = vector.shape_cast %190 : vector<1x512x1024xf32> to vector<512x1024xf32>
    %cst_75 = arith.constant dense<0.000000e+00> : vector<24x1024xf32>
    %192 = tpu.matmul %174, %191, %cst_75 {dimension_numbers = #tpu.dot_dimension_numbers<[1], [0], [0], [1], [0, 0, 1, 1], [], []>} : vector<24x512xf32>, vector<512x1024xf32>, vector<24x1024xf32> -> vector<24x1024xf32>
    %cst_76 = arith.constant dense<0.000000e+00> : vector<16x1024xf32>
    %193 = tpu.matmul %189, %192, %cst_76 {dimension_numbers = #tpu.dot_dimension_numbers<[1], [0], [0], [1], [0, 0, 1, 1], [], []>} : vector<16x24xf32>, vector<24x1024xf32>, vector<16x1024xf32> -> vector<16x1024xf32>
    %194 = arith.addf %187, %193 : vector<16x1024xf32>
    %c0_77 = arith.constant 0 : index
    %c0_78 = arith.constant 0 : index
    %c0_79 = arith.constant 0 : index
    %195 = vector.load %arg7[%c0_77, %c0_78, %c0_79] : memref<1x16x1024xf32, #tpu.memory_space<vmem>>, vector<1x16x1024xf32>
    %196 = vector.shape_cast %195 : vector<1x16x1024xf32> to vector<16x1024xf32>
    %197 = vector.shape_cast %194 : vector<16x1024xf32> to vector<1x16x1024xf32>
    tpu.vector_store %arg7[%c0_77, %c0_78, %c0_79], %197 {strides = array<i32>} : memref<1x16x1024xf32, #tpu.memory_space<vmem>>, vector<1x16x1024xf32>,
    return
  }
  func.func @transform_0(%arg0: i32) -> (i32, i32, i32) {
    %c0_i32 = arith.constant 0 : i32
    %c0_i32_0 = arith.constant 0 : i32
    %c0_i32_1 = arith.constant 0 : i32
    return %arg0, %c0_i32, %c0_i32_0 : i32, i32, i32
  }
  func.func @transform_1(%arg0: i32) -> (i32, i32) {
    %c0_i32 = arith.constant 0 : i32
    %c0_i32_0 = arith.constant 0 : i32
    %c0_i32_1 = arith.constant 0 : i32
    return %c0_i32, %c0_i32_0 : i32, i32
  }
  func.func @transform_2(%arg0: i32) -> (i32, i32) {
    %c0_i32 = arith.constant 0 : i32
    %c0_i32_0 = arith.constant 0 : i32
    %c0_i32_1 = arith.constant 0 : i32
    return %c0_i32, %c0_i32_0 : i32, i32
  }
  func.func @transform_3(%arg0: i32) -> (i32, i32, i32) {
    %c0_i32 = arith.constant 0 : i32
    %c0_i32_0 = arith.constant 0 : i32
    %c0_i32_1 = arith.constant 0 : i32
    %c0_i32_2 = arith.constant 0 : i32
    return %c0_i32, %c0_i32_0, %c0_i32_1 : i32, i32, i32
  }
  func.func @transform_4(%arg0: i32) -> (i32, i32, i32) {
    %c0_i32 = arith.constant 0 : i32
    %c0_i32_0 = arith.constant 0 : i32
    %c0_i32_1 = arith.constant 0 : i32
    %c0_i32_2 = arith.constant 0 : i32
    return %c0_i32, %c0_i32_0, %c0_i32_1 : i32, i32, i32
  }
  func.func @transform_5(%arg0: i32) -> (i32, i32, i32) {
    %c0_i32 = arith.constant 0 : i32
    %c0_i32_0 = arith.constant 0 : i32
    %c0_i32_1 = arith.constant 0 : i32
    %c0_i32_2 = arith.constant 0 : i32
    return %c0_i32, %c0_i32_0, %c0_i32_1 : i32, i32, i32
  }
  func.func @transform_6(%arg0: i32) -> (i32, i32, i32) {
    %c0_i32 = arith.constant 0 : i32
    %c0_i32_0 = arith.constant 0 : i32
    %c0_i32_1 = arith.constant 0 : i32
    return %arg0, %c0_i32, %c0_i32_0 : i32, i32, i32
  }
}

</mosaic_0001>

<llo_original>
// kernel: tile.13
$region0: #{tile.13}
  #allocation0 [shape = 's32[1]{0}', space=sflag, size = 0x4, scoped, tag = 'scoped memory for tile.13']
  %s0 = inlined_call_operand.vmem [shape: f32[4], index: 0, kind: input, shape index: {}]
  %s1 = inlined_call_operand.vmem [shape: f32[2,4], index: 1, kind: output, shape index: {}]
  // Predicated region
  $region2: #{tile.13} parent=0 // pred_check
    _
  $region3: #{tile.13} parent=0 // pred_check_branch
    %3 = sbr.rel (0) target = $region5
  $region4: #{tile.13} parent=0 // pred_region
    _
  $region5: #{tile.13} parent=0 // pred_fallthru
    _
  %v4 = vld [vmem:[%s0] ss:$0 sm:$0xff]
  %5 = vst [vmem:[%s1] sm:$0x3] %v4

// kernel: tile.0
$region0: #{tile.0}
  %s0 = inlined_call_operand.vmem [shape: f32[2,4], index: 0, kind: input, shape index: {}]
  %s1 = inlined_call_operand.vmem [shape: f32[8,1], index: 1, kind: output, shape index: {}]
  $region1: #{tile.0} parent=0
    #allocation0 [shape = 'u8[4096]{0}', space=vmem, size = 0x1000, scoped, tag = 'scoped mem for input reshape']
    %s3 = sshllo.u32 0, 2
    %v4 = vld [vmem:[%s0] sm:%s3]
    %5 = vst [vmem:[#allocation0] sm:%s3] %v4
    %v6 = vld [vmem:[#allocation0] sm:$0x3]
    %vm7 = vcmask 7168
    %8 = vst.msk [vmem:[%s1] ss:$4 sm:$0x3] %vm7, %v6
    %v9 = vld [vmem:[#allocation0] sm:$0x3]
    %10 = vrot.lane.b32.xlu0 %v9, 127
    %v11 = vpop.permute.xlu0 %10
    %vm12 = vcmask 7168
    %s13 = scalar_lea.vmem %s1, 1
    %14 = vst.msk [vmem:[%s13] ss:$4 sm:$0x3] %vm12, %v11
    %v15 = vld [vmem:[#allocation0] sm:$0x3]
    %16 = vrot.lane.b32.xlu0 %v15, 126
    %v17 = vpop.permute.xlu0 %16
    %vm18 = vcmask 7168
    %s19 = scalar_lea.vmem %s1, 2
    %20 = vst.msk [vmem:[%s19] ss:$4 sm:$0x3] %vm18, %v17
    %v21 = vld [vmem:[#allocation0] sm:$0x3]
    %22 = vrot.lane.b32.xlu0 %v21, 125
    %v23 = vpop.permute.xlu0 %22
    %vm24 = vcmask 7168
    %s25 = scalar_lea.vmem %s1, 3
    %26 = vst.msk [vmem:[%s25] ss:$4 sm:$0x3] %vm24, %v23

// kernel: up_conv_layer.1
$region0: #{up_conv_layer.1}
  #allocation0 [shape = 'u32[]', space=smem, size = 0x4, offset = 0x4, fixed_abs, tag = 'smem constant byte address 0x4 - core index']
  #allocation1 [shape = 'u32[144,128]{1,0:T(1,128)}', space=vmem, size = 0x12000, scoped, tag = 'internal scratch']
  #allocation2 [shape = 'f32[24,512]{1,0:T(8,128)}', space=vmem, size = 0xc000, scoped, tag = 'scratch operand']
  %s0 = inlined_call_operand.vmem [shape: f32[1,8,256], index: 0, kind: input, shape index: {}]
  %s1 = inlined_call_operand.vmem [shape: f32[8,1], index: 1, kind: input, shape index: {}]
  %s2 = inlined_call_operand.vmem [shape: f32[8,1], index: 2, kind: input, shape index: {}]
  %s3 = inlined_call_operand.vmem [shape: f32[3,256,512], index: 3, kind: input, shape index: {}]
  %s4 = inlined_call_operand.vmem [shape: f32[3,512,1024], index: 4, kind: input, shape index: {}]
  %s5 = inlined_call_operand.vmem [shape: f32[3,16,24], index: 5, kind: input, shape index: {}]
  %s6 = inlined_call_operand.vmem [shape: f32[1,16,1024], index: 6, kind: output, shape index: {}]
  %s7 = sld [smem:[#allocation0]]
  $region34: #{up_conv_layer.1} parent=0
    _
  %s9 = ssub.s32 1, %s7
  %s10 = scalar_select 0, %s9, %s7
  // Predicated region
  $region2: #{up_conv_layer.1} parent=0 // pred_check
    _
  $region3: #{up_conv_layer.1} parent=0 // pred_check_branch
    %12 = sbr.rel (0) target = $region5
  $region4: #{up_conv_layer.1} parent=0 // pred_region
    _
  $region5: #{up_conv_layer.1} parent=0 // pred_fallthru
    _
  // Predicated region
  $region6: #{up_conv_layer.1} parent=0 // pred_check
    _
  $region7: #{up_conv_layer.1} parent=0 // pred_check_branch
    %14 = sbr.rel (0) target = $region9
  $region8: #{up_conv_layer.1} parent=0 // pred_region
    _
  $region9: #{up_conv_layer.1} parent=0 // pred_fallthru
    _
  // Predicated region
  $region10: #{up_conv_layer.1} parent=0 // pred_check
    _
  $region11: #{up_conv_layer.1} parent=0 // pred_check_branch
    %16 = sbr.rel (0) target = $region13
  $region12: #{up_conv_layer.1} parent=0 // pred_region
    _
  $region13: #{up_conv_layer.1} parent=0 // pred_fallthru
    _
  // Predicated region
  $region14: #{up_conv_layer.1} parent=0 // pred_check
    _
  $region15: #{up_conv_layer.1} parent=0 // pred_check_branch
    %18 = sbr.rel (0) target = $region17
  $region16: #{up_conv_layer.1} parent=0 // pred_region
    _
  $region17: #{up_conv_layer.1} parent=0 // pred_fallthru
    _
  // Predicated region
  $region18: #{up_conv_layer.1} parent=0 // pred_check
    _
  $region19: #{up_conv_layer.1} parent=0 // pred_check_branch
    %20 = sbr.rel (0) target = $region21
  $region20: #{up_conv_layer.1} parent=0 // pred_region
    _
  $region21: #{up_conv_layer.1} parent=0 // pred_fallthru
    _
  // Predicated region
  $region22: #{up_conv_layer.1} parent=0 // pred_check
    _
  $region23: #{up_conv_layer.1} parent=0 // pred_check_branch
    %22 = sbr.rel (0) target = $region25
  $region24: #{up_conv_layer.1} parent=0 // pred_region
    _
  $region25: #{up_conv_layer.1} parent=0 // pred_fallthru
    _
  %v23 = vld [vmem:[%s0] sm:$0xff]
  %v24 = vld [vmem:[%s0 + $0x8] sm:$0xff]
  %v25 = vadd.f32 %v23, %v24
  %26 = vadd.xlane.f32.xlu0 %v25
  %v27 = vpop.xlane.xlu0 %26
  %v28 = vmul.f32 %v23, %v23
  %v29 = vmul.f32 %v24, %v24
  %v30 = vadd.f32 %v28, %v29
  %31 = vadd.xlane.f32.xlu0 %v30
  %v32 = vpop.xlane.xlu0 %31
  %v33 = vlaneseq
  %v34 = vshrl.u32 %v33, 7
  %v36 = vrot.slane %v27, 1
  %v38 = vadd.f32 %v27, %v36
  %v40 = vrot.slane %v32, 1
  %v42 = vadd.f32 %v32, %v40
  %v43 = vmul.f32 %v38, 0.001953125
  %v44 = vmul.f32 %v42, 0.001953125
  %v45 = vmul.f32 %v43, %v43
  %v46 = vsub.f32 %v44, %v45
  %v47 = vmax.f32 %v46, 0.0
  %v48 = vadd.f32 %v47, 1e-05
  %v49 = vrsqrt.pop %v48
  %vm50 = vcmp.ge.s32.totalorder %v34, 0
  %vm51 = vcmp.lt.s32.totalorder %v34, 2
  %vm52 = vmand %vm50, %vm51
  %v53 = vsel %vm52, 1, 0
  %v54 = vcvt.s32.f32 %v53
  %v55 = vlaneseq
  %v56 = vshrl.u32 %v55, 7
  %v57 = vsub.s32 0, %v56
  %v58 = vrot.slane %v49, %v57
  %v59 = vmul.f32 %v54, %v58
  %v60 = vadd.f32 %v59, 0.0
  %v61 = vmul.f32 %v43, %v49
  %v62 = vlaneseq
  %v63 = vshrl.u32 %v62, 7
  %v64 = vsub.s32 0, %v63
  %v65 = vrot.slane %v61, %v64
  %v66 = vmul.f32 %v54, %v65
  %v67 = vadd.f32 %v66, 0.0
  %vm68 = vcmp.ge.s32.totalorder %v34, 2
  %vm69 = vcmp.lt.s32.totalorder %v34, 4
  %vm70 = vmand %vm68, %vm69
  %v71 = vsel %vm70, 1, 0
  %v72 = vcvt.s32.f32 %v71
  %v73 = vlaneseq
  %v74 = vshrl.u32 %v73, 7
  %v75 = vsub.s32 2, %v74
  %v76 = vrot.slane %v49, %v75
  %v77 = vmul.f32 %v72, %v76
  %v78 = vadd.f32 %v60, %v77
  %v79 = vlaneseq
  %v80 = vshrl.u32 %v79, 7
  %v81 = vsub.s32 2, %v80
  %v82 = vrot.slane %v61, %v81
  %v83 = vmul.f32 %v72, %v82
  %v84 = vadd.f32 %v67, %v83
  %vm85 = vcmp.ge.s32.totalorder %v34, 4
  %vm86 = vcmp.lt.s32.totalorder %v34, 6
  %vm87 = vmand %vm85, %vm86
  %v88 = vsel %vm87, 1, 0
  %v89 = vcvt.s32.f32 %v88
  %v90 = vlaneseq
  %v91 = vshrl.u32 %v90, 7
  %v92 = vsub.s32 4, %v91
  %v93 = vrot.slane %v49, %v92
  %v94 = vmul.f32 %v89, %v93
  %v95 = vadd.f32 %v78, %v94
  %v96 = vlaneseq
  %v97 = vshrl.u32 %v96, 7
  %v98 = vsub.s32 4, %v97
  %v99 = vrot.slane %v61, %v98
  %v100 = vmul.f32 %v89, %v99
  %v101 = vadd.f32 %v84, %v100
  %vm102 = vcmp.ge.s32.totalorder %v34, 6
  %vm103 = vcmp.lt.s32.totalorder %v34, 8
  %vm104 = vmand %vm102, %vm103
  %v105 = vsel %vm104, 1, 0
  %v106 = vcvt.s32.f32 %v105
  %v107 = vlaneseq
  %v108 = vshrl.u32 %v107, 7
  %v109 = vsub.s32 6, %v108
  %v110 = vrot.slane %v49, %v109
  %v111 = vmul.f32 %v106, %v110
  %v112 = vadd.f32 %v95, %v111
  %v113 = vlaneseq
  %v114 = vshrl.u32 %v113, 7
  %v115 = vsub.s32 6, %v114
  %v116 = vrot.slane %v61, %v115
  %v117 = vmul.f32 %v106, %v116
  %v118 = vadd.f32 %v101, %v117
  %v119 = vld [vmem:[%s1] sm:$0xff]
  %v120 = vmul.f32 %v112, %v119
  %v121 = vld [vmem:[%s2] sm:$0xff]
  %v122 = vmul.f32 %v118, %v119
  %v123 = vsub.f32 %v121, %v122
  %125 = vset.pattern.permute.xlu0 0
  %126 = vperm.xlu0 %125, %v120
  %v127 = vpop.permute.xlu0 %126
  %v129 = vmul.f32 %v23, %v127
  %v130 = vmul.f32 %v24, %v127
  %132 = vset.pattern.permute.xlu0 0
  %133 = vperm.xlu0 %132, %v123
  %v134 = vpop.permute.xlu0 %133
  %v136 = vadd.f32 %v129, %v134
  %v137 = vadd.f32 %v130, %v134
  %v138 = vmin.f32 %v136, 20.0
  %v139 = vmin.f32 %v137, 20.0
  %v140 = vmul.f32 %v138, 1.442695
  %v141 = vpow.pop %v140
  %v142 = vmul.f32 %v139, 1.442695
  %v143 = vpow.pop %v142
  %v144 = vadd.f32 %v141, 1.0
  %v145 = vadd.f32 %v143, 1.0
  %v146 = vmul.f32 %v144, %v144
  %v147 = vmul.f32 %v145, %v145
  %v148 = vsub.f32 %v146, 1.0
  %v149 = vsub.f32 %v147, 1.0
  %v150 = vadd.f32 %v146, 1.0
  %v151 = vadd.f32 %v147, 1.0
  %v152 = vrcp.pop %v150
  %v153 = vmul.f32 %v148, %v152
  %v154 = vrcp.pop %v151
  %v155 = vmul.f32 %v149, %v154
  %vm156 = vcmp.gt.f32.partialorder %v136, 20.0
  %vm157 = vcmp.gt.f32.partialorder %v137, 20.0
  %v158 = vsel %vm156, 1.0, %v153
  %v159 = vsel %vm157, 1.0, %v155
  %v160 = vmul.f32 %v136, %v158
  %v161 = vmul.f32 %v137, %v159
  %v162 = vld [vmem:[%s3] sm:$0xff]
  %v163 = vld [vmem:[%s3 + $0x8] sm:$0xff]
  %v164 = vld [vmem:[%s3 + $0x10] sm:$0xff]
  %v165 = vld [vmem:[%s3 + $0x18] sm:$0xff]
  %v166 = vld [vmem:[%s3 + $0x20] sm:$0xff]
  %v167 = vld [vmem:[%s3 + $0x28] sm:$0xff]
  %v168 = vld [vmem:[%s3 + $0x30] sm:$0xff]
  %v169 = vld [vmem:[%s3 + $0x38] sm:$0xff]
  %v170 = vld [vmem:[%s3 + $0x40] sm:$0xff]
  %v171 = vld [vmem:[%s3 + $0x48] sm:$0xff]
  %v172 = vld [vmem:[%s3 + $0x50] sm:$0xff]
  %v173 = vld [vmem:[%s3 + $0x58] sm:$0xff]
  %v174 = vld [vmem:[%s3 + $0x60] sm:$0xff]
  %v175 = vld [vmem:[%s3 + $0x68] sm:$0xff]
  %v176 = vld [vmem:[%s3 + $0x70] sm:$0xff]
  %v177 = vld [vmem:[%s3 + $0x78] sm:$0xff]
  %v178 = vld [vmem:[%s3 + $0x80] sm:$0xff]
  %v179 = vld [vmem:[%s3 + $0x88] sm:$0xff]
  %v180 = vld [vmem:[%s3 + $0x90] sm:$0xff]
  %v181 = vld [vmem:[%s3 + $0x98] sm:$0xff]
  %v182 = vld [vmem:[%s3 + $0xa0] sm:$0xff]
  %v183 = vld [vmem:[%s3 + $0xa8] sm:$0xff]
  %v184 = vld [vmem:[%s3 + $0xb0] sm:$0xff]
  %v185 = vld [vmem:[%s3 + $0xb8] sm:$0xff]
  %v186 = vld [vmem:[%s3 + $0xc0] sm:$0xff]
  %v187 = vld [vmem:[%s3 + $0xc8] sm:$0xff]
  %v188 = vld [vmem:[%s3 + $0xd0] sm:$0xff]
  %v189 = vld [vmem:[%s3 + $0xd8] sm:$0xff]
  %v190 = vld [vmem:[%s3 + $0xe0] sm:$0xff]
  %v191 = vld [vmem:[%s3 + $0xe8] sm:$0xff]
  %v192 = vld [vmem:[%s3 + $0xf0] sm:$0xff]
  %v193 = vld [vmem:[%s3 + $0xf8] sm:$0xff]
  %v194 = vld [vmem:[%s3 + $0x100] sm:$0xff]
  %v195 = vld [vmem:[%s3 + $0x108] sm:$0xff]
  %v196 = vld [vmem:[%s3 + $0x110] sm:$0xff]
  %v197 = vld [vmem:[%s3 + $0x118] sm:$0xff]
  %v198 = vld [vmem:[%s3 + $0x120] sm:$0xff]
  %v199 = vld [vmem:[%s3 + $0x128] sm:$0xff]
  %v200 = vld [vmem:[%s3 + $0x130] sm:$0xff]
  %v201 = vld [vmem:[%s3 + $0x138] sm:$0xff]
  %v202 = vld [vmem:[%s3 + $0x140] sm:$0xff]
  %v203 = vld [vmem:[%s3 + $0x148] sm:$0xff]
  %v204 = vld [vmem:[%s3 + $0x150] sm:$0xff]
  %v205 = vld [vmem:[%s3 + $0x158] sm:$0xff]
  %v206 = vld [vmem:[%s3 + $0x160] sm:$0xff]
  %v207 = vld [vmem:[%s3 + $0x168] sm:$0xff]
  %v208 = vld [vmem:[%s3 + $0x170] sm:$0xff]
  %v209 = vld [vmem:[%s3 + $0x178] sm:$0xff]
  %v210 = vld [vmem:[%s3 + $0x180] sm:$0xff]
  %v211 = vld [vmem:[%s3 + $0x188] sm:$0xff]
  %v212 = vld [vmem:[%s3 + $0x190] sm:$0xff]
  %v213 = vld [vmem:[%s3 + $0x198] sm:$0xff]
  %v214 = vld [vmem:[%s3 + $0x1a0] sm:$0xff]
  %v215 = vld [vmem:[%s3 + $0x1a8] sm:$0xff]
  %v216 = vld [vmem:[%s3 + $0x1b0] sm:$0xff]
  %v217 = vld [vmem:[%s3 + $0x1b8] sm:$0xff]
  %v218 = vld [vmem:[%s3 + $0x1c0] sm:$0xff]
  %v219 = vld [vmem:[%s3 + $0x1c8] sm:$0xff]
  %v220 = vld [vmem:[%s3 + $0x1d0] sm:$0xff]
  %v221 = vld [vmem:[%s3 + $0x1d8] sm:$0xff]
  %v222 = vld [vmem:[%s3 + $0x1e0] sm:$0xff]
  %v223 = vld [vmem:[%s3 + $0x1e8] sm:$0xff]
  %v224 = vld [vmem:[%s3 + $0x1f0] sm:$0xff]
  %v225 = vld [vmem:[%s3 + $0x1f8] sm:$0xff]
  %v226 = vld [vmem:[%s3 + $0x200] sm:$0xff]
  %v227 = vld [vmem:[%s3 + $0x208] sm:$0xff]
  %v228 = vld [vmem:[%s3 + $0x210] sm:$0xff]
  %v229 = vld [vmem:[%s3 + $0x218] sm:$0xff]
  %v230 = vld [vmem:[%s3 + $0x220] sm:$0xff]
  %v231 = vld [vmem:[%s3 + $0x228] sm:$0xff]
  %v232 = vld [vmem:[%s3 + $0x230] sm:$0xff]
  %v233 = vld [vmem:[%s3 + $0x238] sm:$0xff]
  %v234 = vld [vmem:[%s3 + $0x240] sm:$0xff]
  %v235 = vld [vmem:[%s3 + $0x248] sm:$0xff]
  %v236 = vld [vmem:[%s3 + $0x250] sm:$0xff]
  %v237 = vld [vmem:[%s3 + $0x258] sm:$0xff]
  %v238 = vld [vmem:[%s3 + $0x260] sm:$0xff]
  %v239 = vld [vmem:[%s3 + $0x268] sm:$0xff]
  %v240 = vld [vmem:[%s3 + $0x270] sm:$0xff]
  %v241 = vld [vmem:[%s3 + $0x278] sm:$0xff]
  %v242 = vld [vmem:[%s3 + $0x280] sm:$0xff]
  %v243 = vld [vmem:[%s3 + $0x288] sm:$0xff]
  %v244 = vld [vmem:[%s3 + $0x290] sm:$0xff]
  %v245 = vld [vmem:[%s3 + $0x298] sm:$0xff]
  %v246 = vld [vmem:[%s3 + $0x2a0] sm:$0xff]
  %v247 = vld [vmem:[%s3 + $0x2a8] sm:$0xff]
  %v248 = vld [vmem:[%s3 + $0x2b0] sm:$0xff]
  %v249 = vld [vmem:[%s3 + $0x2b8] sm:$0xff]
  %v250 = vld [vmem:[%s3 + $0x2c0] sm:$0xff]
  %v251 = vld [vmem:[%s3 + $0x2c8] sm:$0xff]
  %v252 = vld [vmem:[%s3 + $0x2d0] sm:$0xff]
  %v253 = vld [vmem:[%s3 + $0x2d8] sm:$0xff]
  %v254 = vld [vmem:[%s3 + $0x2e0] sm:$0xff]
  %v255 = vld [vmem:[%s3 + $0x2e8] sm:$0xff]
  %v256 = vld [vmem:[%s3 + $0x2f0] sm:$0xff]
  %v257 = vld [vmem:[%s3 + $0x2f8] sm:$0xff]
  %v258 = vld [vmem:[%s3 + $0x300] sm:$0xff]
  %v259 = vld [vmem:[%s3 + $0x308] sm:$0xff]
  %v260 = vld [vmem:[%s3 + $0x310] sm:$0xff]
  %v261 = vld [vmem:[%s3 + $0x318] sm:$0xff]
  %v262 = vld [vmem:[%s3 + $0x320] sm:$0xff]
  %v263 = vld [vmem:[%s3 + $0x328] sm:$0xff]
  %v264 = vld [vmem:[%s3 + $0x330] sm:$0xff]
  %v265 = vld [vmem:[%s3 + $0x338] sm:$0xff]
  %v266 = vld [vmem:[%s3 + $0x340] sm:$0xff]
  %v267 = vld [vmem:[%s3 + $0x348] sm:$0xff]
  %v268 = vld [vmem:[%s3 + $0x350] sm:$0xff]
  %v269 = vld [vmem:[%s3 + $0x358] sm:$0xff]
  %v270 = vld [vmem:[%s3 + $0x360] sm:$0xff]
  %v271 = vld [vmem:[%s3 + $0x368] sm:$0xff]
  %v272 = vld [vmem:[%s3 + $0x370] sm:$0xff]
  %v273 = vld [vmem:[%s3 + $0x378] sm:$0xff]
  %v274 = vld [vmem:[%s3 + $0x380] sm:$0xff]
  %v275 = vld [vmem:[%s3 + $0x388] sm:$0xff]
  %v276 = vld [vmem:[%s3 + $0x390] sm:$0xff]
  %v277 = vld [vmem:[%s3 + $0x398] sm:$0xff]
  %v278 = vld [vmem:[%s3 + $0x3a0] sm:$0xff]
  %v279 = vld [vmem:[%s3 + $0x3a8] sm:$0xff]
  %v280 = vld [vmem:[%s3 + $0x3b0] sm:$0xff]
  %v281 = vld [vmem:[%s3 + $0x3b8] sm:$0xff]
  %v282 = vld [vmem:[%s3 + $0x3c0] sm:$0xff]
  %v283 = vld [vmem:[%s3 + $0x3c8] sm:$0xff]
  %v284 = vld [vmem:[%s3 + $0x3d0] sm:$0xff]
  %v285 = vld [vmem:[%s3 + $0x3d8] sm:$0xff]
  %v286 = vld [vmem:[%s3 + $0x3e0] sm:$0xff]
  %v287 = vld [vmem:[%s3 + $0x3e8] sm:$0xff]
  %v288 = vld [vmem:[%s3 + $0x3f0] sm:$0xff]
  %v289 = vld [vmem:[%s3 + $0x3f8] sm:$0xff]
  %290 = vmatprep.subr.mxu0 %v163
  %291 = vmatpush1.msra.mxu0 %v162
  %292 = vmatprep.subr.mxu0 %v167
  %293 = vmatpush1.msra.mxu0 %v166
  %294 = vmatprep.subr.mxu0 %v171
  %295 = vmatpush1.msra.mxu0 %v170
  %296 = vmatprep.subr.mxu0 %v175
  %297 = vmatpush1.msra.mxu0 %v174
  %298 = vmatprep.subr.mxu0 %v179
  %299 = vmatpush1.msra.mxu0 %v178
  %300 = vmatprep.subr.mxu0 %v183
  %301 = vmatpush1.msra.mxu0 %v182
  %302 = vmatprep.subr.mxu0 %v187
  %303 = vmatpush1.msra.mxu0 %v186
  %304 = vmatprep.subr.mxu0 %v191
  %305 = vmatpush1.msra.mxu0 %v190
  %306 = vmatprep.subr.mxu0 %v195
  %307 = vmatpush1.msra.mxu0 %v194
  %308 = vmatprep.subr.mxu0 %v199
  %309 = vmatpush1.msra.mxu0 %v198
  %310 = vmatprep.subr.mxu0 %v203
  %311 = vmatpush1.msra.mxu0 %v202
  %312 = vmatprep.subr.mxu0 %v207
  %313 = vmatpush1.msra.mxu0 %v206
  %314 = vmatprep.subr.mxu0 %v211
  %315 = vmatpush1.msra.mxu0 %v210
  %316 = vmatprep.subr.mxu0 %v215
  %317 = vmatpush1.msra.mxu0 %v214
  %318 = vmatprep.subr.mxu0 %v219
  %319 = vmatpush1.msra.mxu0 %v218
  %320 = vmatprep.subr.mxu0 %v223
  %321 = vmatpush1.msra.mxu0 %v222
  %322 = vmatprep.subr.mxu0 %v227
  %323 = vmatpush1.msra.mxu0 %v226
  %324 = vmatprep.subr.mxu0 %v231
  %325 = vmatpush1.msra.mxu0 %v230
  %326 = vmatprep.subr.mxu0 %v235
  %327 = vmatpush1.msra.mxu0 %v234
  %328 = vmatprep.subr.mxu0 %v239
  %329 = vmatpush1.msra.mxu0 %v238
  %330 = vmatprep.subr.mxu0 %v243
  %331 = vmatpush1.msra.mxu0 %v242
  %332 = vmatprep.subr.mxu0 %v247
  %333 = vmatpush1.msra.mxu0 %v246
  %334 = vmatprep.subr.mxu0 %v251
  %335 = vmatpush1.msra.mxu0 %v250
  %336 = vmatprep.subr.mxu0 %v255
  %337 = vmatpush1.msra.mxu0 %v254
  %338 = vmatprep.subr.mxu0 %v259
  %339 = vmatpush1.msra.mxu0 %v258
  %340 = vmatprep.subr.mxu0 %v263
  %341 = vmatpush1.msra.mxu0 %v262
  %342 = vmatprep.subr.mxu0 %v267
  %343 = vmatpush1.msra.mxu0 %v266
  %344 = vmatprep.subr.mxu0 %v271
  %345 = vmatpush1.msra.mxu0 %v270
  %346 = vmatprep.subr.mxu0 %v275
  %347 = vmatpush1.msra.mxu0 %v274
  %348 = vmatprep.subr.mxu0 %v279
  %349 = vmatpush1.msra.mxu0 %v278
  %350 = vmatprep.subr.mxu0 %v283
  %351 = vmatpush1.msra.mxu0 %v282
  %352 = vmatprep.subr.mxu0 %v287
  %353 = vmatpush1.msra.mxu0 %v286
  %354 = vmatprep.mubr.f32.mxu0 %v161
  %355 = vmatmul.mubr.f32.gmra.mrb[0].mxu0 %v160
  %v356 = vpop.f32.mrb[0].mxu0
  %v357 = vadd.f32 0.0, %v356
  %v358 = vpop.f32.mrb[0].mxu0
  %v359 = vadd.f32 0.0, %v358
  %360 = vdwg.mxu0
  %361 = vmatprep.subr.mxu0 %v165
  %362 = vmatpush1.msra.mxu0 %v164
  %363 = vmatprep.subr.mxu0 %v169
  %364 = vmatpush1.msra.mxu0 %v168
  %365 = vmatprep.subr.mxu0 %v173
  %366 = vmatpush1.msra.mxu0 %v172
  %367 = vmatprep.subr.mxu0 %v177
  %368 = vmatpush1.msra.mxu0 %v176
  %369 = vmatprep.subr.mxu0 %v181
  %370 = vmatpush1.msra.mxu0 %v180
  %371 = vmatprep.subr.mxu0 %v185
  %372 = vmatpush1.msra.mxu0 %v184
  %373 = vmatprep.subr.mxu0 %v189
  %374 = vmatpush1.msra.mxu0 %v188
  %375 = vmatprep.subr.mxu0 %v193
  %376 = vmatpush1.msra.mxu0 %v192
  %377 = vmatprep.subr.mxu0 %v197
  %378 = vmatpush1.msra.mxu0 %v196
  %379 = vmatprep.subr.mxu0 %v201
  %380 = vmatpush1.msra.mxu0 %v200
  %381 = vmatprep.subr.mxu0 %v205
  %382 = vmatpush1.msra.mxu0 %v204
  %383 = vmatprep.subr.mxu0 %v209
  %384 = vmatpush1.msra.mxu0 %v208
  %385 = vmatprep.subr.mxu0 %v213
  %386 = vmatpush1.msra.mxu0 %v212
  %387 = vmatprep.subr.mxu0 %v217
  %388 = vmatpush1.msra.mxu0 %v216
  %389 = vmatprep.subr.mxu0 %v221
  %390 = vmatpush1.msra.mxu0 %v220
  %391 = vmatprep.subr.mxu0 %v225
  %392 = vmatpush1.msra.mxu0 %v224
  %393 = vmatprep.subr.mxu0 %v229
  %394 = vmatpush1.msra.mxu0 %v228
  %395 = vmatprep.subr.mxu0 %v233
  %396 = vmatpush1.msra.mxu0 %v232
  %397 = vmatprep.subr.mxu0 %v237
  %398 = vmatpush1.msra.mxu0 %v236
  %399 = vmatprep.subr.mxu0 %v241
  %400 = vmatpush1.msra.mxu0 %v240
  %401 = vmatprep.subr.mxu0 %v245
  %402 = vmatpush1.msra.mxu0 %v244
  %403 = vmatprep.subr.mxu0 %v249
  %404 = vmatpush1.msra.mxu0 %v248
  %405 = vmatprep.subr.mxu0 %v253
  %406 = vmatpush1.msra.mxu0 %v252
  %407 = vmatprep.subr.mxu0 %v257
  %408 = vmatpush1.msra.mxu0 %v256
  %409 = vmatprep.subr.mxu0 %v261
  %410 = vmatpush1.msra.mxu0 %v260
  %411 = vmatprep.subr.mxu0 %v265
  %412 = vmatpush1.msra.mxu0 %v264
  %413 = vmatprep.subr.mxu0 %v269
  %414 = vmatpush1.msra.mxu0 %v268
  %415 = vmatprep.subr.mxu0 %v273
  %416 = vmatpush1.msra.mxu0 %v272
  %417 = vmatprep.subr.mxu0 %v277
  %418 = vmatpush1.msra.mxu0 %v276
  %419 = vmatprep.subr.mxu0 %v281
  %420 = vmatpush1.msra.mxu0 %v280
  %421 = vmatprep.subr.mxu0 %v285
  %422 = vmatpush1.msra.mxu0 %v284
  %423 = vmatprep.subr.mxu0 %v289
  %424 = vmatpush1.msra.mxu0 %v288
  %425 = vmatprep.mubr.f32.mxu0 %v161
  %426 = vmatmul.mubr.f32.gmra.mrb[0].mxu0 %v160
  %v427 = vpop.f32.mrb[0].mxu0
  %v428 = vadd.f32 0.0, %v427
  %v429 = vpop.f32.mrb[0].mxu0
  %v430 = vadd.f32 0.0, %v429
  %431 = vdwg.mxu0
  %432 = vst [vmem:[#allocation2] sm:$0xff] %v357
  %433 = vst [vmem:[#allocation2 + $0x8] sm:$0xff] %v359
  %434 = vst [vmem:[#allocation2 + $0x10] sm:$0xff] %v428
  %435 = vst [vmem:[#allocation2 + $0x18] sm:$0xff] %v430
  %s436 = scalar_lea.vmem %s3, 1024
  %v437 = vld [vmem:[%s436] sm:$0xff]
  %v438 = vld [vmem:[%s436 + $0x8] sm:$0xff]
  %v439 = vld [vmem:[%s436 + $0x10] sm:$0xff]
  %v440 = vld [vmem:[%s436 + $0x18] sm:$0xff]
  %v441 = vld [vmem:[%s436 + $0x20] sm:$0xff]
  %v442 = vld [vmem:[%s436 + $0x28] sm:$0xff]
  %v443 = vld [vmem:[%s436 + $0x30] sm:$0xff]
  %v444 = vld [vmem:[%s436 + $0x38] sm:$0xff]
  %v445 = vld [vmem:[%s436 + $0x40] sm:$0xff]
  %v446 = vld [vmem:[%s436 + $0x48] sm:$0xff]
  %v447 = vld [vmem:[%s436 + $0x50] sm:$0xff]
  %v448 = vld [vmem:[%s436 + $0x58] sm:$0xff]
  %v449 = vld [vmem:[%s436 + $0x60] sm:$0xff]
  %v450 = vld [vmem:[%s436 + $0x68] sm:$0xff]
  %v451 = vld [vmem:[%s436 + $0x70] sm:$0xff]
  %v452 = vld [vmem:[%s436 + $0x78] sm:$0xff]
  %v453 = vld [vmem:[%s436 + $0x80] sm:$0xff]
  %v454 = vld [vmem:[%s436 + $0x88] sm:$0xff]
  %v455 = vld [vmem:[%s436 + $0x90] sm:$0xff]
  %v456 = vld [vmem:[%s436 + $0x98] sm:$0xff]
  %v457 = vld [vmem:[%s436 + $0xa0] sm:$0xff]
  %v458 = vld [vmem:[%s436 + $0xa8] sm:$0xff]
  %v459 = vld [vmem:[%s436 + $0xb0] sm:$0xff]
  %v460 = vld [vmem:[%s436 + $0xb8] sm:$0xff]
  %v461 = vld [vmem:[%s436 + $0xc0] sm:$0xff]
  %v462 = vld [vmem:[%s436 + $0xc8] sm:$0xff]
  %v463 = vld [vmem:[%s436 + $0xd0] sm:$0xff]
  %v464 = vld [vmem:[%s436 + $0xd8] sm:$0xff]
  %v465 = vld [vmem:[%s436 + $0xe0] sm:$0xff]
  %v466 = vld [vmem:[%s436 + $0xe8] sm:$0xff]
  %v467 = vld [vmem:[%s436 + $0xf0] sm:$0xff]
  %v468 = vld [vmem:[%s436 + $0xf8] sm:$0xff]
  %v469 = vld [vmem:[%s436 + $0x100] sm:$0xff]
  %v470 = vld [vmem:[%s436 + $0x108] sm:$0xff]
  %v471 = vld [vmem:[%s436 + $0x110] sm:$0xff]
  %v472 = vld [vmem:[%s436 + $0x118] sm:$0xff]
  %v473 = vld [vmem:[%s436 + $0x120] sm:$0xff]
  %v474 = vld [vmem:[%s436 + $0x128] sm:$0xff]
  %v475 = vld [vmem:[%s436 + $0x130] sm:$0xff]
  %v476 = vld [vmem:[%s436 + $0x138] sm:$0xff]
  %v477 = vld [vmem:[%s436 + $0x140] sm:$0xff]
  %v478 = vld [vmem:[%s436 + $0x148] sm:$0xff]
  %v479 = vld [vmem:[%s436 + $0x150] sm:$0xff]
  %v480 = vld [vmem:[%s436 + $0x158] sm:$0xff]
  %v481 = vld [vmem:[%s436 + $0x160] sm:$0xff]
  %v482 = vld [vmem:[%s436 + $0x168] sm:$0xff]
  %v483 = vld [vmem:[%s436 + $0x170] sm:$0xff]
  %v484 = vld [vmem:[%s436 + $0x178] sm:$0xff]
  %v485 = vld [vmem:[%s436 + $0x180] sm:$0xff]
  %v486 = vld [vmem:[%s436 + $0x188] sm:$0xff]
  %v487 = vld [vmem:[%s436 + $0x190] sm:$0xff]
  %v488 = vld [vmem:[%s436 + $0x198] sm:$0xff]
  %v489 = vld [vmem:[%s436 + $0x1a0] sm:$0xff]
  %v490 = vld [vmem:[%s436 + $0x1a8] sm:$0xff]
  %v491 = vld [vmem:[%s436 + $0x1b0] sm:$0xff]
  %v492 = vld [vmem:[%s436 + $0x1b8] sm:$0xff]
  %v493 = vld [vmem:[%s436 + $0x1c0] sm:$0xff]
  %v494 = vld [vmem:[%s436 + $0x1c8] sm:$0xff]
  %v495 = vld [vmem:[%s436 + $0x1d0] sm:$0xff]
  %v496 = vld [vmem:[%s436 + $0x1d8] sm:$0xff]
  %v497 = vld [vmem:[%s436 + $0x1e0] sm:$0xff]
  %v498 = vld [vmem:[%s436 + $0x1e8] sm:$0xff]
  %v499 = vld [vmem:[%s436 + $0x1f0] sm:$0xff]
  %v500 = vld [vmem:[%s436 + $0x1f8] sm:$0xff]
  %v501 = vld [vmem:[%s436 + $0x200] sm:$0xff]
  %v502 = vld [vmem:[%s436 + $0x208] sm:$0xff]
  %v503 = vld [vmem:[%s436 + $0x210] sm:$0xff]
  %v504 = vld [vmem:[%s436 + $0x218] sm:$0xff]
  %v505 = vld [vmem:[%s436 + $0x220] sm:$0xff]
  %v506 = vld [vmem:[%s436 + $0x228] sm:$0xff]
  %v507 = vld [vmem:[%s436 + $0x230] sm:$0xff]
  %v508 = vld [vmem:[%s436 + $0x238] sm:$0xff]
  %v509 = vld [vmem:[%s436 + $0x240] sm:$0xff]
  %v510 = vld [vmem:[%s436 + $0x248] sm:$0xff]
  %v511 = vld [vmem:[%s436 + $0x250] sm:$0xff]
  %v512 = vld [vmem:[%s436 + $0x258] sm:$0xff]
  %v513 = vld [vmem:[%s436 + $0x260] sm:$0xff]
  %v514 = vld [vmem:[%s436 + $0x268] sm:$0xff]
  %v515 = vld [vmem:[%s436 + $0x270] sm:$0xff]
  %v516 = vld [vmem:[%s436 + $0x278] sm:$0xff]
  %v517 = vld [vmem:[%s436 + $0x280] sm:$0xff]
  %v518 = vld [vmem:[%s436 + $0x288] sm:$0xff]
  %v519 = vld [vmem:[%s436 + $0x290] sm:$0xff]
  %v520 = vld [vmem:[%s436 + $0x298] sm:$0xff]
  %v521 = vld [vmem:[%s436 + $0x2a0] sm:$0xff]
  %v522 = vld [vmem:[%s436 + $0x2a8] sm:$0xff]
  %v523 = vld [vmem:[%s436 + $0x2b0] sm:$0xff]
  %v524 = vld [vmem:[%s436 + $0x2b8] sm:$0xff]
  %v525 = vld [vmem:[%s436 + $0x2c0] sm:$0xff]
  %v526 = vld [vmem:[%s436 + $0x2c8] sm:$0xff]
  %v527 = vld [vmem:[%s436 + $0x2d0] sm:$0xff]
  %v528 = vld [vmem:[%s436 + $0x2d8] sm:$0xff]
  %v529 = vld [vmem:[%s436 + $0x2e0] sm:$0xff]
  %v530 = vld [vmem:[%s436 + $0x2e8] sm:$0xff]
  %v531 = vld [vmem:[%s436 + $0x2f0] sm:$0xff]
  %v532 = vld [vmem:[%s436 + $0x2f8] sm:$0xff]
  %v533 = vld [vmem:[%s436 + $0x300] sm:$0xff]
  %v534 = vld [vmem:[%s436 + $0x308] sm:$0xff]
  %v535 = vld [vmem:[%s436 + $0x310] sm:$0xff]
  %v536 = vld [vmem:[%s436 + $0x318] sm:$0xff]
  %v537 = vld [vmem:[%s436 + $0x320] sm:$0xff]
  %v538 = vld [vmem:[%s436 + $0x328] sm:$0xff]
  %v539 = vld [vmem:[%s436 + $0x330] sm:$0xff]
  %v540 = vld [vmem:[%s436 + $0x338] sm:$0xff]
  %v541 = vld [vmem:[%s436 + $0x340] sm:$0xff]
  %v542 = vld [vmem:[%s436 + $0x348] sm:$0xff]
  %v543 = vld [vmem:[%s436 + $0x350] sm:$0xff]
  %v544 = vld [vmem:[%s436 + $0x358] sm:$0xff]
  %v545 = vld [vmem:[%s436 + $0x360] sm:$0xff]
  %v546 = vld [vmem:[%s436 + $0x368] sm:$0xff]
  %v547 = vld [vmem:[%s436 + $0x370] sm:$0xff]
  %v548 = vld [vmem:[%s436 + $0x378] sm:$0xff]
  %v549 = vld [vmem:[%s436 + $0x380] sm:$0xff]
  %v550 = vld [vmem:[%s436 + $0x388] sm:$0xff]
  %v551 = vld [vmem:[%s436 + $0x390] sm:$0xff]
  %v552 = vld [vmem:[%s436 + $0x398] sm:$0xff]
  %v553 = vld [vmem:[%s436 + $0x3a0] sm:$0xff]
  %v554 = vld [vmem:[%s436 + $0x3a8] sm:$0xff]
  %v555 = vld [vmem:[%s436 + $0x3b0] sm:$0xff]
  %v556 = vld [vmem:[%s436 + $0x3b8] sm:$0xff]
  %v557 = vld [vmem:[%s436 + $0x3c0] sm:$0xff]
  %v558 = vld [vmem:[%s436 + $0x3c8] sm:$0xff]
  %v559 = vld [vmem:[%s436 + $0x3d0] sm:$0xff]
  %v560 = vld [vmem:[%s436 + $0x3d8] sm:$0xff]
  %v561 = vld [vmem:[%s436 + $0x3e0] sm:$0xff]
  %v562 = vld [vmem:[%s436 + $0x3e8] sm:$0xff]
  %v563 = vld [vmem:[%s436 + $0x3f0] sm:$0xff]
  %v564 = vld [vmem:[%s436 + $0x3f8] sm:$0xff]
  %565 = vmatprep.subr.mxu0 %v438
  %566 = vmatpush1.msra.mxu0 %v437
  %567 = vmatprep.subr.mxu0 %v442
  %568 = vmatpush1.msra.mxu0 %v441
  %569 = vmatprep.subr.mxu0 %v446
  %570 = vmatpush1.msra.mxu0 %v445
  %571 = vmatprep.subr.mxu0 %v450
  %572 = vmatpush1.msra.mxu0 %v449
  %573 = vmatprep.subr.mxu0 %v454
  %574 = vmatpush1.msra.mxu0 %v453
  %575 = vmatprep.subr.mxu0 %v458
  %576 = vmatpush1.msra.mxu0 %v457
  %577 = vmatprep.subr.mxu0 %v462
  %578 = vmatpush1.msra.mxu0 %v461
  %579 = vmatprep.subr.mxu0 %v466
  %580 = vmatpush1.msra.mxu0 %v465
  %581 = vmatprep.subr.mxu0 %v470
  %582 = vmatpush1.msra.mxu0 %v469
  %583 = vmatprep.subr.mxu0 %v474
  %584 = vmatpush1.msra.mxu0 %v473
  %585 = vmatprep.subr.mxu0 %v478
  %586 = vmatpush1.msra.mxu0 %v477
  %587 = vmatprep.subr.mxu0 %v482
  %588 = vmatpush1.msra.mxu0 %v481
  %589 = vmatprep.subr.mxu0 %v486
  %590 = vmatpush1.msra.mxu0 %v485
  %591 = vmatprep.subr.mxu0 %v490
  %592 = vmatpush1.msra.mxu0 %v489
  %593 = vmatprep.subr.mxu0 %v494
  %594 = vmatpush1.msra.mxu0 %v493
  %595 = vmatprep.subr.mxu0 %v498
  %596 = vmatpush1.msra.mxu0 %v497
  %597 = vmatprep.subr.mxu0 %v502
  %598 = vmatpush1.msra.mxu0 %v501
  %599 = vmatprep.subr.mxu0 %v506
  %600 = vmatpush1.msra.mxu0 %v505
  %601 = vmatprep.subr.mxu0 %v510
  %602 = vmatpush1.msra.mxu0 %v509
  %603 = vmatprep.subr.mxu0 %v514
  %604 = vmatpush1.msra.mxu0 %v513
  %605 = vmatprep.subr.mxu0 %v518
  %606 = vmatpush1.msra.mxu0 %v517
  %607 = vmatprep.subr.mxu0 %v522
  %608 = vmatpush1.msra.mxu0 %v521
  %609 = vmatprep.subr.mxu0 %v526
  %610 = vmatpush1.msra.mxu0 %v525
  %611 = vmatprep.subr.mxu0 %v530
  %612 = vmatpush1.msra.mxu0 %v529
  %613 = vmatprep.subr.mxu0 %v534
  %614 = vmatpush1.msra.mxu0 %v533
  %615 = vmatprep.subr.mxu0 %v538
  %616 = vmatpush1.msra.mxu0 %v537
  %617 = vmatprep.subr.mxu0 %v542
  %618 = vmatpush1.msra.mxu0 %v541
  %619 = vmatprep.subr.mxu0 %v546
  %620 = vmatpush1.msra.mxu0 %v545
  %621 = vmatprep.subr.mxu0 %v550
  %622 = vmatpush1.msra.mxu0 %v549
  %623 = vmatprep.subr.mxu0 %v554
  %624 = vmatpush1.msra.mxu0 %v553
  %625 = vmatprep.subr.mxu0 %v558
  %626 = vmatpush1.msra.mxu0 %v557
  %627 = vmatprep.subr.mxu0 %v562
  %628 = vmatpush1.msra.mxu0 %v561
  %629 = vmatprep.mubr.f32.mxu0 %v161
  %630 = vmatmul.mubr.f32.gmra.mrb[0].mxu0 %v160
  %v631 = vpop.f32.mrb[0].mxu0
  %v632 = vadd.f32 0.0, %v631
  %v633 = vpop.f32.mrb[0].mxu0
  %v634 = vadd.f32 0.0, %v633
  %635 = vdwg.mxu0
  %636 = vmatprep.subr.mxu0 %v440
  %637 = vmatpush1.msra.mxu0 %v439
  %638 = vmatprep.subr.mxu0 %v444
  %639 = vmatpush1.msra.mxu0 %v443
  %640 = vmatprep.subr.mxu0 %v448
  %641 = vmatpush1.msra.mxu0 %v447
  %642 = vmatprep.subr.mxu0 %v452
  %643 = vmatpush1.msra.mxu0 %v451
  %644 = vmatprep.subr.mxu0 %v456
  %645 = vmatpush1.msra.mxu0 %v455
  %646 = vmatprep.subr.mxu0 %v460
  %647 = vmatpush1.msra.mxu0 %v459
  %648 = vmatprep.subr.mxu0 %v464
  %649 = vmatpush1.msra.mxu0 %v463
  %650 = vmatprep.subr.mxu0 %v468
  %651 = vmatpush1.msra.mxu0 %v467
  %652 = vmatprep.subr.mxu0 %v472
  %653 = vmatpush1.msra.mxu0 %v471
  %654 = vmatprep.subr.mxu0 %v476
  %655 = vmatpush1.msra.mxu0 %v475
  %656 = vmatprep.subr.mxu0 %v480
  %657 = vmatpush1.msra.mxu0 %v479
  %658 = vmatprep.subr.mxu0 %v484
  %659 = vmatpush1.msra.mxu0 %v483
  %660 = vmatprep.subr.mxu0 %v488
  %661 = vmatpush1.msra.mxu0 %v487
  %662 = vmatprep.subr.mxu0 %v492
  %663 = vmatpush1.msra.mxu0 %v491
  %664 = vmatprep.subr.mxu0 %v496
  %665 = vmatpush1.msra.mxu0 %v495
  %666 = vmatprep.subr.mxu0 %v500
  %667 = vmatpush1.msra.mxu0 %v499
  %668 = vmatprep.subr.mxu0 %v504
  %669 = vmatpush1.msra.mxu0 %v503
  %670 = vmatprep.subr.mxu0 %v508
  %671 = vmatpush1.msra.mxu0 %v507
  %672 = vmatprep.subr.mxu0 %v512
  %673 = vmatpush1.msra.mxu0 %v511
  %674 = vmatprep.subr.mxu0 %v516
  %675 = vmatpush1.msra.mxu0 %v515
  %676 = vmatprep.subr.mxu0 %v520
  %677 = vmatpush1.msra.mxu0 %v519
  %678 = vmatprep.subr.mxu0 %v524
  %679 = vmatpush1.msra.mxu0 %v523
  %680 = vmatprep.subr.mxu0 %v528
  %681 = vmatpush1.msra.mxu0 %v527
  %682 = vmatprep.subr.mxu0 %v532
  %683 = vmatpush1.msra.mxu0 %v531
  %684 = vmatprep.subr.mxu0 %v536
  %685 = vmatpush1.msra.mxu0 %v535
  %686 = vmatprep.subr.mxu0 %v540
  %687 = vmatpush1.msra.mxu0 %v539
  %688 = vmatprep.subr.mxu0 %v544
  %689 = vmatpush1.msra.mxu0 %v543
  %690 = vmatprep.subr.mxu0 %v548
  %691 = vmatpush1.msra.mxu0 %v547
  %692 = vmatprep.subr.mxu0 %v552
  %693 = vmatpush1.msra.mxu0 %v551
  %694 = vmatprep.subr.mxu0 %v556
  %695 = vmatpush1.msra.mxu0 %v555
  %696 = vmatprep.subr.mxu0 %v560
  %697 = vmatpush1.msra.mxu0 %v559
  %698 = vmatprep.subr.mxu0 %v564
  %699 = vmatpush1.msra.mxu0 %v563
  %700 = vmatprep.mubr.f32.mxu0 %v161
  %701 = vmatmul.mubr.f32.gmra.mrb[0].mxu0 %v160
  %v702 = vpop.f32.mrb[0].mxu0
  %v703 = vadd.f32 0.0, %v702
  %v704 = vpop.f32.mrb[0].mxu0
  %v705 = vadd.f32 0.0, %v704
  %706 = vdwg.mxu0
  %707 = vst [vmem:[#allocation2 + $0x20] sm:$0xff] %v632
  %708 = vst [vmem:[#allocation2 + $0x28] sm:$0xff] %v634
  %709 = vst [vmem:[#allocation2 + $0x30] sm:$0xff] %v703
  %710 = vst [vmem:[#allocation2 + $0x38] sm:$0xff] %v705
  %s711 = scalar_lea.vmem %s3, 2048
  %v712 = vld [vmem:[%s711] sm:$0xff]
  %v713 = vld [vmem:[%s711 + $0x8] sm:$0xff]
  %v714 = vld [vmem:[%s711 + $0x10] sm:$0xff]
  %v715 = vld [vmem:[%s711 + $0x18] sm:$0xff]
  %v716 = vld [vmem:[%s711 + $0x20] sm:$0xff]
  %v717 = vld [vmem:[%s711 + $0x28] sm:$0xff]
  %v718 = vld [vmem:[%s711 + $0x30] sm:$0xff]
  %v719 = vld [vmem:[%s711 + $0x38] sm:$0xff]
  %v720 = vld [vmem:[%s711 + $0x40] sm:$0xff]
  %v721 = vld [vmem:[%s711 + $0x48] sm:$0xff]
  %v722 = vld [vmem:[%s711 + $0x50] sm:$0xff]
  %v723 = vld [vmem:[%s711 + $0x58] sm:$0xff]
  %v724 = vld [vmem:[%s711 + $0x60] sm:$0xff]
  %v725 = vld [vmem:[%s711 + $0x68] sm:$0xff]
  %v726 = vld [vmem:[%s711 + $0x70] sm:$0xff]
  %v727 = vld [vmem:[%s711 + $0x78] sm:$0xff]
  %v728 = vld [vmem:[%s711 + $0x80] sm:$0xff]
  %v729 = vld [vmem:[%s711 + $0x88] sm:$0xff]
  %v730 = vld [vmem:[%s711 + $0x90] sm:$0xff]
  %v731 = vld [vmem:[%s711 + $0x98] sm:$0xff]
  %v732 = vld [vmem:[%s711 + $0xa0] sm:$0xff]
  %v733 = vld [vmem:[%s711 + $0xa8] sm:$0xff]
  %v734 = vld [vmem:[%s711 + $0xb0] sm:$0xff]
  %v735 = vld [vmem:[%s711 + $0xb8] sm:$0xff]
  %v736 = vld [vmem:[%s711 + $0xc0] sm:$0xff]
  %v737 = vld [vmem:[%s711 + $0xc8] sm:$0xff]
  %v738 = vld [vmem:[%s711 + $0xd0] sm:$0xff]
  %v739 = vld [vmem:[%s711 + $0xd8] sm:$0xff]
  %v740 = vld [vmem:[%s711 + $0xe0] sm:$0xff]
  %v741 = vld [vmem:[%s711 + $0xe8] sm:$0xff]
  %v742 = vld [vmem:[%s711 + $0xf0] sm:$0xff]
  %v743 = vld [vmem:[%s711 + $0xf8] sm:$0xff]
  %v744 = vld [vmem:[%s711 + $0x100] sm:$0xff]
  %v745 = vld [vmem:[%s711 + $0x108] sm:$0xff]
  %v746 = vld [vmem:[%s711 + $0x110] sm:$0xff]
  %v747 = vld [vmem:[%s711 + $0x118] sm:$0xff]
  %v748 = vld [vmem:[%s711 + $0x120] sm:$0xff]
  %v749 = vld [vmem:[%s711 + $0x128] sm:$0xff]
  %v750 = vld [vmem:[%s711 + $0x130] sm:$0xff]
  %v751 = vld [vmem:[%s711 + $0x138] sm:$0xff]
  %v752 = vld [vmem:[%s711 + $0x140] sm:$0xff]
  %v753 = vld [vmem:[%s711 + $0x148] sm:$0xff]
  %v754 = vld [vmem:[%s711 + $0x150] sm:$0xff]
  %v755 = vld [vmem:[%s711 + $0x158] sm:$0xff]
  %v756 = vld [vmem:[%s711 + $0x160] sm:$0xff]
  %v757 = vld [vmem:[%s711 + $0x168] sm:$0xff]
  %v758 = vld [vmem:[%s711 + $0x170] sm:$0xff]
  %v759 = vld [vmem:[%s711 + $0x178] sm:$0xff]
  %v760 = vld [vmem:[%s711 + $0x180] sm:$0xff]
  %v761 = vld [vmem:[%s711 + $0x188] sm:$0xff]
  %v762 = vld [vmem:[%s711 + $0x190] sm:$0xff]
  %v763 = vld [vmem:[%s711 + $0x198] sm:$0xff]
  %v764 = vld [vmem:[%s711 + $0x1a0] sm:$0xff]
  %v765 = vld [vmem:[%s711 + $0x1a8] sm:$0xff]
  %v766 = vld [vmem:[%s711 + $0x1b0] sm:$0xff]
  %v767 = vld [vmem:[%s711 + $0x1b8] sm:$0xff]
  %v768 = vld [vmem:[%s711 + $0x1c0] sm:$0xff]
  %v769 = vld [vmem:[%s711 + $0x1c8] sm:$0xff]
  %v770 = vld [vmem:[%s711 + $0x1d0] sm:$0xff]
  %v771 = vld [vmem:[%s711 + $0x1d8] sm:$0xff]
  %v772 = vld [vmem:[%s711 + $0x1e0] sm:$0xff]
  %v773 = vld [vmem:[%s711 + $0x1e8] sm:$0xff]
  %v774 = vld [vmem:[%s711 + $0x1f0] sm:$0xff]
  %v775 = vld [vmem:[%s711 + $0x1f8] sm:$0xff]
  %v776 = vld [vmem:[%s711 + $0x200] sm:$0xff]
  %v777 = vld [vmem:[%s711 + $0x208] sm:$0xff]
  %v778 = vld [vmem:[%s711 + $0x210] sm:$0xff]
  %v779 = vld [vmem:[%s711 + $0x218] sm:$0xff]
  %v780 = vld [vmem:[%s711 + $0x220] sm:$0xff]
  %v781 = vld [vmem:[%s711 + $0x228] sm:$0xff]
  %v782 = vld [vmem:[%s711 + $0x230] sm:$0xff]
  %v783 = vld [vmem:[%s711 + $0x238] sm:$0xff]
  %v784 = vld [vmem:[%s711 + $0x240] sm:$0xff]
  %v785 = vld [vmem:[%s711 + $0x248] sm:$0xff]
  %v786 = vld [vmem:[%s711 + $0x250] sm:$0xff]
  %v787 = vld [vmem:[%s711 + $0x258] sm:$0xff]
  %v788 = vld [vmem:[%s711 + $0x260] sm:$0xff]
  %v789 = vld [vmem:[%s711 + $0x268] sm:$0xff]
  %v790 = vld [vmem:[%s711 + $0x270] sm:$0xff]
  %v791 = vld [vmem:[%s711 + $0x278] sm:$0xff]
  %v792 = vld [vmem:[%s711 + $0x280] sm:$0xff]
  %v793 = vld [vmem:[%s711 + $0x288] sm:$0xff]
  %v794 = vld [vmem:[%s711 + $0x290] sm:$0xff]
  %v795 = vld [vmem:[%s711 + $0x298] sm:$0xff]
  %v796 = vld [vmem:[%s711 + $0x2a0] sm:$0xff]
  %v797 = vld [vmem:[%s711 + $0x2a8] sm:$0xff]
  %v798 = vld [vmem:[%s711 + $0x2b0] sm:$0xff]
  %v799 = vld [vmem:[%s711 + $0x2b8] sm:$0xff]
  %v800 = vld [vmem:[%s711 + $0x2c0] sm:$0xff]
  %v801 = vld [vmem:[%s711 + $0x2c8] sm:$0xff]
  %v802 = vld [vmem:[%s711 + $0x2d0] sm:$0xff]
  %v803 = vld [vmem:[%s711 + $0x2d8] sm:$0xff]
  %v804 = vld [vmem:[%s711 + $0x2e0] sm:$0xff]
  %v805 = vld [vmem:[%s711 + $0x2e8] sm:$0xff]
  %v806 = vld [vmem:[%s711 + $0x2f0] sm:$0xff]
  %v807 = vld [vmem:[%s711 + $0x2f8] sm:$0xff]
  %v808 = vld [vmem:[%s711 + $0x300] sm:$0xff]
  %v809 = vld [vmem:[%s711 + $0x308] sm:$0xff]
  %v810 = vld [vmem:[%s711 + $0x310] sm:$0xff]
  %v811 = vld [vmem:[%s711 + $0x318] sm:$0xff]
  %v812 = vld [vmem:[%s711 + $0x320] sm:$0xff]
  %v813 = vld [vmem:[%s711 + $0x328] sm:$0xff]
  %v814 = vld [vmem:[%s711 + $0x330] sm:$0xff]
  %v815 = vld [vmem:[%s711 + $0x338] sm:$0xff]
  %v816 = vld [vmem:[%s711 + $0x340] sm:$0xff]
  %v817 = vld [vmem:[%s711 + $0x348] sm:$0xff]
  %v818 = vld [vmem:[%s711 + $0x350] sm:$0xff]
  %v819 = vld [vmem:[%s711 + $0x358] sm:$0xff]
  %v820 = vld [vmem:[%s711 + $0x360] sm:$0xff]
  %v821 = vld [vmem:[%s711 + $0x368] sm:$0xff]
  %v822 = vld [vmem:[%s711 + $0x370] sm:$0xff]
  %v823 = vld [vmem:[%s711 + $0x378] sm:$0xff]
  %v824 = vld [vmem:[%s711 + $0x380] sm:$0xff]
  %v825 = vld [vmem:[%s711 + $0x388] sm:$0xff]
  %v826 = vld [vmem:[%s711 + $0x390] sm:$0xff]
  %v827 = vld [vmem:[%s711 + $0x398] sm:$0xff]
  %v828 = vld [vmem:[%s711 + $0x3a0] sm:$0xff]
  %v829 = vld [vmem:[%s711 + $0x3a8] sm:$0xff]
  %v830 = vld [vmem:[%s711 + $0x3b0] sm:$0xff]
  %v831 = vld [vmem:[%s711 + $0x3b8] sm:$0xff]
  %v832 = vld [vmem:[%s711 + $0x3c0] sm:$0xff]
  %v833 = vld [vmem:[%s711 + $0x3c8] sm:$0xff]
  %v834 = vld [vmem:[%s711 + $0x3d0] sm:$0xff]
  %v835 = vld [vmem:[%s711 + $0x3d8] sm:$0xff]
  %v836 = vld [vmem:[%s711 + $0x3e0] sm:$0xff]
  %v837 = vld [vmem:[%s711 + $0x3e8] sm:$0xff]
  %v838 = vld [vmem:[%s711 + $0x3f0] sm:$0xff]
  %v839 = vld [vmem:[%s711 + $0x3f8] sm:$0xff]
  %840 = vmatprep.subr.mxu0 %v713
  %841 = vmatpush1.msra.mxu0 %v712
  %842 = vmatprep.subr.mxu0 %v717
  %843 = vmatpush1.msra.mxu0 %v716
  %844 = vmatprep.subr.mxu0 %v721
  %845 = vmatpush1.msra.mxu0 %v720
  %846 = vmatprep.subr.mxu0 %v725
  %847 = vmatpush1.msra.mxu0 %v724
  %848 = vmatprep.subr.mxu0 %v729
  %849 = vmatpush1.msra.mxu0 %v728
  %850 = vmatprep.subr.mxu0 %v733
  %851 = vmatpush1.msra.mxu0 %v732
  %852 = vmatprep.subr.mxu0 %v737
  %853 = vmatpush1.msra.mxu0 %v736
  %854 = vmatprep.subr.mxu0 %v741
  %855 = vmatpush1.msra.mxu0 %v740
  %856 = vmatprep.subr.mxu0 %v745
  %857 = vmatpush1.msra.mxu0 %v744
  %858 = vmatprep.subr.mxu0 %v749
  %859 = vmatpush1.msra.mxu0 %v748
  %860 = vmatprep.subr.mxu0 %v753
  %861 = vmatpush1.msra.mxu0 %v752
  %862 = vmatprep.subr.mxu0 %v757
  %863 = vmatpush1.msra.mxu0 %v756
  %864 = vmatprep.subr.mxu0 %v761
  %865 = vmatpush1.msra.mxu0 %v760
  %866 = vmatprep.subr.mxu0 %v765
  %867 = vmatpush1.msra.mxu0 %v764
  %868 = vmatprep.subr.mxu0 %v769
  %869 = vmatpush1.msra.mxu0 %v768
  %870 = vmatprep.subr.mxu0 %v773
  %871 = vmatpush1.msra.mxu0 %v772
  %872 = vmatprep.subr.mxu0 %v777
  %873 = vmatpush1.msra.mxu0 %v776
  %874 = vmatprep.subr.mxu0 %v781
  %875 = vmatpush1.msra.mxu0 %v780
  %876 = vmatprep.subr.mxu0 %v785
  %877 = vmatpush1.msra.mxu0 %v784
  %878 = vmatprep.subr.mxu0 %v789
  %879 = vmatpush1.msra.mxu0 %v788
  %880 = vmatprep.subr.mxu0 %v793
  %881 = vmatpush1.msra.mxu0 %v792
  %882 = vmatprep.subr.mxu0 %v797
  %883 = vmatpush1.msra.mxu0 %v796
  %884 = vmatprep.subr.mxu0 %v801
  %885 = vmatpush1.msra.mxu0 %v800
  %886 = vmatprep.subr.mxu0 %v805
  %887 = vmatpush1.msra.mxu0 %v804
  %888 = vmatprep.subr.mxu0 %v809
  %889 = vmatpush1.msra.mxu0 %v808
  %890 = vmatprep.subr.mxu0 %v813
  %891 = vmatpush1.msra.mxu0 %v812
  %892 = vmatprep.subr.mxu0 %v817
  %893 = vmatpush1.msra.mxu0 %v816
  %894 = vmatprep.subr.mxu0 %v821
  %895 = vmatpush1.msra.mxu0 %v820
  %896 = vmatprep.subr.mxu0 %v825
  %897 = vmatpush1.msra.mxu0 %v824
  %898 = vmatprep.subr.mxu0 %v829
  %899 = vmatpush1.msra.mxu0 %v828
  %900 = vmatprep.subr.mxu0 %v833
  %901 = vmatpush1.msra.mxu0 %v832
  %902 = vmatprep.subr.mxu0 %v837
  %903 = vmatpush1.msra.mxu0 %v836
  %904 = vmatprep.mubr.f32.mxu0 %v161
  %905 = vmatmul.mubr.f32.gmra.mrb[0].mxu0 %v160
  %v906 = vpop.f32.mrb[0].mxu0
  %v907 = vadd.f32 0.0, %v906
  %v908 = vpop.f32.mrb[0].mxu0
  %v909 = vadd.f32 0.0, %v908
  %910 = vdwg.mxu0
  %911 = vmatprep.subr.mxu0 %v715
  %912 = vmatpush1.msra.mxu0 %v714
  %913 = vmatprep.subr.mxu0 %v719
  %914 = vmatpush1.msra.mxu0 %v718
  %915 = vmatprep.subr.mxu0 %v723
  %916 = vmatpush1.msra.mxu0 %v722
  %917 = vmatprep.subr.mxu0 %v727
  %918 = vmatpush1.msra.mxu0 %v726
  %919 = vmatprep.subr.mxu0 %v731
  %920 = vmatpush1.msra.mxu0 %v730
  %921 = vmatprep.subr.mxu0 %v735
  %922 = vmatpush1.msra.mxu0 %v734
  %923 = vmatprep.subr.mxu0 %v739
  %924 = vmatpush1.msra.mxu0 %v738
  %925 = vmatprep.subr.mxu0 %v743
  %926 = vmatpush1.msra.mxu0 %v742
  %927 = vmatprep.subr.mxu0 %v747
  %928 = vmatpush1.msra.mxu0 %v746
  %929 = vmatprep.subr.mxu0 %v751
  %930 = vmatpush1.msra.mxu0 %v750
  %931 = vmatprep.subr.mxu0 %v755
  %932 = vmatpush1.msra.mxu0 %v754
  %933 = vmatprep.subr.mxu0 %v759
  %934 = vmatpush1.msra.mxu0 %v758
  %935 = vmatprep.subr.mxu0 %v763
  %936 = vmatpush1.msra.mxu0 %v762
  %937 = vmatprep.subr.mxu0 %v767
  %938 = vmatpush1.msra.mxu0 %v766
  %939 = vmatprep.subr.mxu0 %v771
  %940 = vmatpush1.msra.mxu0 %v770
  %941 = vmatprep.subr.mxu0 %v775
  %942 = vmatpush1.msra.mxu0 %v774
  %943 = vmatprep.subr.mxu0 %v779
  %944 = vmatpush1.msra.mxu0 %v778
  %945 = vmatprep.subr.mxu0 %v783
  %946 = vmatpush1.msra.mxu0 %v782
  %947 = vmatprep.subr.mxu0 %v787
  %948 = vmatpush1.msra.mxu0 %v786
  %949 = vmatprep.subr.mxu0 %v791
  %950 = vmatpush1.msra.mxu0 %v790
  %951 = vmatprep.subr.mxu0 %v795
  %952 = vmatpush1.msra.mxu0 %v794
  %953 = vmatprep.subr.mxu0 %v799
  %954 = vmatpush1.msra.mxu0 %v798
  %955 = vmatprep.subr.mxu0 %v803
  %956 = vmatpush1.msra.mxu0 %v802
  %957 = vmatprep.subr.mxu0 %v807
  %958 = vmatpush1.msra.mxu0 %v806
  %959 = vmatprep.subr.mxu0 %v811
  %960 = vmatpush1.msra.mxu0 %v810
  %961 = vmatprep.subr.mxu0 %v815
  %962 = vmatpush1.msra.mxu0 %v814
  %963 = vmatprep.subr.mxu0 %v819
  %964 = vmatpush1.msra.mxu0 %v818
  %965 = vmatprep.subr.mxu0 %v823
  %966 = vmatpush1.msra.mxu0 %v822
  %967 = vmatprep.subr.mxu0 %v827
  %968 = vmatpush1.msra.mxu0 %v826
  %969 = vmatprep.subr.mxu0 %v831
  %970 = vmatpush1.msra.mxu0 %v830
  %971 = vmatprep.subr.mxu0 %v835
  %972 = vmatpush1.msra.mxu0 %v834
  %973 = vmatprep.subr.mxu0 %v839
  %974 = vmatpush1.msra.mxu0 %v838
  %975 = vmatprep.mubr.f32.mxu0 %v161
  %976 = vmatmul.mubr.f32.gmra.mrb[0].mxu0 %v160
  %v977 = vpop.f32.mrb[0].mxu0
  %v978 = vadd.f32 0.0, %v977
  %v979 = vpop.f32.mrb[0].mxu0
  %v980 = vadd.f32 0.0, %v979
  %981 = vdwg.mxu0
  %982 = vst [vmem:[#allocation2 + $0x40] sm:$0xff] %v907
  %983 = vst [vmem:[#allocation2 + $0x48] sm:$0xff] %v909
  %984 = vst [vmem:[#allocation2 + $0x50] sm:$0xff] %v978
  %985 = vst [vmem:[#allocation2 + $0x58] sm:$0xff] %v980
  %v986 = vld [vmem:[#allocation2] sm:$0xff]
  %v987 = vld [vmem:[#allocation2 + $0x8] sm:$0xff]
  %v988 = vld [vmem:[#allocation2 + $0x10] sm:$0xff]
  %v989 = vld [vmem:[#allocation2 + $0x18] sm:$0xff]
  %v990 = vld [vmem:[#allocation2 + $0x20] sm:$0xff]
  %v991 = vld [vmem:[#allocation2 + $0x28] sm:$0xff]
  %v992 = vld [vmem:[#allocation2 + $0x30] sm:$0xff]
  %v993 = vld [vmem:[#allocation2 + $0x38] sm:$0xff]
  %v994 = vld [vmem:[#allocation2 + $0x40] sm:$0xff]
  %v995 = vld [vmem:[#allocation2 + $0x48] sm:$0xff]
  %v996 = vld [vmem:[#allocation2 + $0x50] sm:$0xff]
  %v997 = vld [vmem:[#allocation2 + $0x58] sm:$0xff]
  %v998 = vld [vmem:[%s5] sm:$0xff]
  %v999 = vld [vmem:[%s5 + $0x8] sm:$0xff]
  %v1000 = vld [vmem:[%s4] sm:$0xff]
  %v1001 = vld [vmem:[%s4 + $0x8] sm:$0xff]
  %v1002 = vld [vmem:[%s4 + $0x10] sm:$0xff]
  %v1003 = vld [vmem:[%s4 + $0x18] sm:$0xff]
  %v1004 = vld [vmem:[%s4 + $0x20] sm:$0xff]
  %v1005 = vld [vmem:[%s4 + $0x28] sm:$0xff]
  %v1006 = vld [vmem:[%s4 + $0x30] sm:$0xff]
  %v1007 = vld [vmem:[%s4 + $0x38] sm:$0xff]
  %v1008 = vld [vmem:[%s4 + $0x40] sm:$0xff]
  %v1009 = vld [vmem:[%s4 + $0x48] sm:$0xff]
  %v1010 = vld [vmem:[%s4 + $0x50] sm:$0xff]
  %v1011 = vld [vmem:[%s4 + $0x58] sm:$0xff]
  %v1012 = vld [vmem:[%s4 + $0x60] sm:$0xff]
  %v1013 = vld [vmem:[%s4 + $0x68] sm:$0xff]
  %v1014 = vld [vmem:[%s4 + $0x70] sm:$0xff]
  %v1015 = vld [vmem:[%s4 + $0x78] sm:$0xff]
  %v1016 = vld [vmem:[%s4 + $0x80] sm:$0xff]
  %v1017 = vld [vmem:[%s4 + $0x88] sm:$0xff]
  %v1018 = vld [vmem:[%s4 + $0x90] sm:$0xff]
  %v1019 = vld [vmem:[%s4 + $0x98] sm:$0xff]
  %v1020 = vld [vmem:[%s4 + $0xa0] sm:$0xff]
  %v1021 = vld [vmem:[%s4 + $0xa8] sm:$0xff]
  %v1022 = vld [vmem:[%s4 + $0xb0] sm:$0xff]
  %v1023 = vld [vmem:[%s4 + $0xb8] sm:$0xff]
  %v1024 = vld [vmem:[%s4 + $0xc0] sm:$0xff]
  %v1025 = vld [vmem:[%s4 + $0xc8] sm:$0xff]
  %v1026 = vld [vmem:[%s4 + $0xd0] sm:$0xff]
  %v1027 = vld [vmem:[%s4 + $0xd8] sm:$0xff]
  %v1028 = vld [vmem:[%s4 + $0xe0] sm:$0xff]
  %v1029 = vld [vmem:[%s4 + $0xe8] sm:$0xff]
  %v1030 = vld [vmem:[%s4 + $0xf0] sm:$0xff]
  %v1031 = vld [vmem:[%s4 + $0xf8] sm:$0xff]
  %v1032 = vld [vmem:[%s4 + $0x100] sm:$0xff]
  %v1033 = vld [vmem:[%s4 + $0x108] sm:$0xff]
  %v1034 = vld [vmem:[%s4 + $0x110] sm:$0xff]
  %v1035 = vld [vmem:[%s4 + $0x118] sm:$0xff]
  %v1036 = vld [vmem:[%s4 + $0x120] sm:$0xff]
  %v1037 = vld [vmem:[%s4 + $0x128] sm:$0xff]
  %v1038 = vld [vmem:[%s4 + $0x130] sm:$0xff]
  %v1039 = vld [vmem:[%s4 + $0x138] sm:$0xff]
  %v1040 = vld [vmem:[%s4 + $0x140] sm:$0xff]
  %v1041 = vld [vmem:[%s4 + $0x148] sm:$0xff]
  %v1042 = vld [vmem:[%s4 + $0x150] sm:$0xff]
  %v1043 = vld [vmem:[%s4 + $0x158] sm:$0xff]
  %v1044 = vld [vmem:[%s4 + $0x160] sm:$0xff]
  %v1045 = vld [vmem:[%s4 + $0x168] sm:$0xff]
  %v1046 = vld [vmem:[%s4 + $0x170] sm:$0xff]
  %v1047 = vld [vmem:[%s4 + $0x178] sm:$0xff]
  %v1048 = vld [vmem:[%s4 + $0x180] sm:$0xff]
  %v1049 = vld [vmem:[%s4 + $0x188] sm:$0xff]
  %v1050 = vld [vmem:[%s4 + $0x190] sm:$0xff]
  %v1051 = vld [vmem:[%s4 + $0x198] sm:$0xff]
  %v1052 = vld [vmem:[%s4 + $0x1a0] sm:$0xff]
  %v1053 = vld [vmem:[%s4 + $0x1a8] sm:$0xff]
  %v1054 = vld [vmem:[%s4 + $0x1b0] sm:$0xff]
  %v1055 = vld [vmem:[%s4 + $0x1b8] sm:$0xff]
  %v1056 = vld [vmem:[%s4 + $0x1c0] sm:$0xff]
  %v1057 = vld [vmem:[%s4 + $0x1c8] sm:$0xff]
  %v1058 = vld [vmem:[%s4 + $0x1d0] sm:$0xff]
  %v1059 = vld [vmem:[%s4 + $0x1d8] sm:$0xff]
  %v1060 = vld [vmem:[%s4 + $0x1e0] sm:$0xff]
  %v1061 = vld [vmem:[%s4 + $0x1e8] sm:$0xff]
  %v1062 = vld [vmem:[%s4 + $0x1f0] sm:$0xff]
  %v1063 = vld [vmem:[%s4 + $0x1f8] sm:$0xff]
  %v1064 = vld [vmem:[%s4 + $0x200] sm:$0xff]
  %v1065 = vld [vmem:[%s4 + $0x208] sm:$0xff]
  %v1066 = vld [vmem:[%s4 + $0x210] sm:$0xff]
  %v1067 = vld [vmem:[%s4 + $0x218] sm:$0xff]
  %v1068 = vld [vmem:[%s4 + $0x220] sm:$0xff]
  %v1069 = vld [vmem:[%s4 + $0x228] sm:$0xff]
  %v1070 = vld [vmem:[%s4 + $0x230] sm:$0xff]
  %v1071 = vld [vmem:[%s4 + $0x238] sm:$0xff]
  %v1072 = vld [vmem:[%s4 + $0x240] sm:$0xff]
  %v1073 = vld [vmem:[%s4 + $0x248] sm:$0xff]
  %v1074 = vld [vmem:[%s4 + $0x250] sm:$0xff]
  %v1075 = vld [vmem:[%s4 + $0x258] sm:$0xff]
  %v1076 = vld [vmem:[%s4 + $0x260] sm:$0xff]
  %v1077 = vld [vmem:[%s4 + $0x268] sm:$0xff]
  %v1078 = vld [vmem:[%s4 + $0x270] sm:$0xff]
  %v1079 = vld [vmem:[%s4 + $0x278] sm:$0xff]
  %v1080 = vld [vmem:[%s4 + $0x280] sm:$0xff]
  %v1081 = vld [vmem:[%s4 + $0x288] sm:$0xff]
  %v1082 = vld [vmem:[%s4 + $0x290] sm:$0xff]
  %v1083 = vld [vmem:[%s4 + $0x298] sm:$0xff]
  %v1084 = vld [vmem:[%s4 + $0x2a0] sm:$0xff]
  %v1085 = vld [vmem:[%s4 + $0x2a8] sm:$0xff]
  %v1086 = vld [vmem:[%s4 + $0x2b0] sm:$0xff]
  %v1087 = vld [vmem:[%s4 + $0x2b8] sm:$0xff]
  %v1088 = vld [vmem:[%s4 + $0x2c0] sm:$0xff]
  %v1089 = vld [vmem:[%s4 + $0x2c8] sm:$0xff]
  %v1090 = vld [vmem:[%s4 + $0x2d0] sm:$0xff]
  %v1091 = vld [vmem:[%s4 + $0x2d8] sm:$0xff]
  %v1092 = vld [vmem:[%s4 + $0x2e0] sm:$0xff]
  %v1093 = vld [vmem:[%s4 + $0x2e8] sm:$0xff]
  %v1094 = vld [vmem:[%s4 + $0x2f0] sm:$0xff]
  %v1095 = vld [vmem:[%s4 + $0x2f8] sm:$0xff]
  %v1096 = vld [vmem:[%s4 + $0x300] sm:$0xff]
  %v1097 = vld [vmem:[%s4 + $0x308] sm:$0xff]
  %v1098 = vld [vmem:[%s4 + $0x310] sm:$0xff]
  %v1099 = vld [vmem:[%s4 + $0x318] sm:$0xff]
  %v1100 = vld [vmem:[%s4 + $0x320] sm:$0xff]
  %v1101 = vld [vmem:[%s4 + $0x328] sm:$0xff]
  %v1102 = vld [vmem:[%s4 + $0x330] sm:$0xff]
  %v1103 = vld [vmem:[%s4 + $0x338] sm:$0xff]
  %v1104 = vld [vmem:[%s4 + $0x340] sm:$0xff]
  %v1105 = vld [vmem:[%s4 + $0x348] sm:$0xff]
  %v1106 = vld [vmem:[%s4 + $0x350] sm:$0xff]
  %v1107 = vld [vmem:[%s4 + $0x358] sm:$0xff]
  %v1108 = vld [vmem:[%s4 + $0x360] sm:$0xff]
  %v1109 = vld [vmem:[%s4 + $0x368] sm:$0xff]
  %v1110 = vld [vmem:[%s4 + $0x370] sm:$0xff]
  %v1111 = vld [vmem:[%s4 + $0x378] sm:$0xff]
  %v1112 = vld [vmem:[%s4 + $0x380] sm:$0xff]
  %v1113 = vld [vmem:[%s4 + $0x388] sm:$0xff]
  %v1114 = vld [vmem:[%s4 + $0x390] sm:$0xff]
  %v1115 = vld [vmem:[%s4 + $0x398] sm:$0xff]
  %v1116 = vld [vmem:[%s4 + $0x3a0] sm:$0xff]
  %v1117 = vld [vmem:[%s4 + $0x3a8] sm:$0xff]
  %v1118 = vld [vmem:[%s4 + $0x3b0] sm:$0xff]
  %v1119 = vld [vmem:[%s4 + $0x3b8] sm:$0xff]
  %v1120 = vld [vmem:[%s4 + $0x3c0] sm:$0xff]
  %v1121 = vld [vmem:[%s4 + $0x3c8] sm:$0xff]
  %v1122 = vld [vmem:[%s4 + $0x3d0] sm:$0xff]
  %v1123 = vld [vmem:[%s4 + $0x3d8] sm:$0xff]
  %v1124 = vld [vmem:[%s4 + $0x3e0] sm:$0xff]
  %v1125 = vld [vmem:[%s4 + $0x3e8] sm:$0xff]
  %v1126 = vld [vmem:[%s4 + $0x3f0] sm:$0xff]
  %v1127 = vld [vmem:[%s4 + $0x3f8] sm:$0xff]
  %v1128 = vld [vmem:[%s4 + $0x400] sm:$0xff]
  %v1129 = vld [vmem:[%s4 + $0x408] sm:$0xff]
  %v1130 = vld [vmem:[%s4 + $0x410] sm:$0xff]
  %v1131 = vld [vmem:[%s4 + $0x418] sm:$0xff]
  %v1132 = vld [vmem:[%s4 + $0x420] sm:$0xff]
  %v1133 = vld [vmem:[%s4 + $0x428] sm:$0xff]
  %v1134 = vld [vmem:[%s4 + $0x430] sm:$0xff]
  %v1135 = vld [vmem:[%s4 + $0x438] sm:$0xff]
  %v1136 = vld [vmem:[%s4 + $0x440] sm:$0xff]
  %v1137 = vld [vmem:[%s4 + $0x448] sm:$0xff]
  %v1138 = vld [vmem:[%s4 + $0x450] sm:$0xff]
  %v1139 = vld [vmem:[%s4 + $0x458] sm:$0xff]
  %v1140 = vld [vmem:[%s4 + $0x460] sm:$0xff]
  %v1141 = vld [vmem:[%s4 + $0x468] sm:$0xff]
  %v1142 = vld [vmem:[%s4 + $0x470] sm:$0xff]
  %v1143 = vld [vmem:[%s4 + $0x478] sm:$0xff]
  %v1144 = vld [vmem:[%s4 + $0x480] sm:$0xff]
  %v1145 = vld [vmem:[%s4 + $0x488] sm:$0xff]
  %v1146 = vld [vmem:[%s4 + $0x490] sm:$0xff]
  %v1147 = vld [vmem:[%s4 + $0x498] sm:$0xff]
  %v1148 = vld [vmem:[%s4 + $0x4a0] sm:$0xff]
  %v1149 = vld [vmem:[%s4 + $0x4a8] sm:$0xff]
  %v1150 = vld [vmem:[%s4 + $0x4b0] sm:$0xff]
  %v1151 = vld [vmem:[%s4 + $0x4b8] sm:$0xff]
  %v1152 = vld [vmem:[%s4 + $0x4c0] sm:$0xff]
  %v1153 = vld [vmem:[%s4 + $0x4c8] sm:$0xff]
  %v1154 = vld [vmem:[%s4 + $0x4d0] sm:$0xff]
  %v1155 = vld [vmem:[%s4 + $0x4d8] sm:$0xff]
  %v1156 = vld [vmem:[%s4 + $0x4e0] sm:$0xff]
  %v1157 = vld [vmem:[%s4 + $0x4e8] sm:$0xff]
  %v1158 = vld [vmem:[%s4 + $0x4f0] sm:$0xff]
  %v1159 = vld [vmem:[%s4 + $0x4f8] sm:$0xff]
  %v1160 = vld [vmem:[%s4 + $0x500] sm:$0xff]
  %v1161 = vld [vmem:[%s4 + $0x508] sm:$0xff]
  %v1162 = vld [vmem:[%s4 + $0x510] sm:$0xff]
  %v1163 = vld [vmem:[%s4 + $0x518] sm:$0xff]
  %v1164 = vld [vmem:[%s4 + $0x520] sm:$0xff]
  %v1165 = vld [vmem:[%s4 + $0x528] sm:$0xff]
  %v1166 = vld [vmem:[%s4 + $0x530] sm:$0xff]
  %v1167 = vld [vmem:[%s4 + $0x538] sm:$0xff]
  %v1168 = vld [vmem:[%s4 + $0x540] sm:$0xff]
  %v1169 = vld [vmem:[%s4 + $0x548] sm:$0xff]
  %v1170 = vld [vmem:[%s4 + $0x550] sm:$0xff]
  %v1171 = vld [vmem:[%s4 + $0x558] sm:$0xff]
  %v1172 = vld [vmem:[%s4 + $0x560] sm:$0xff]
  %v1173 = vld [vmem:[%s4 + $0x568] sm:$0xff]
  %v1174 = vld [vmem:[%s4 + $0x570] sm:$0xff]
  %v1175 = vld [vmem:[%s4 + $0x578] sm:$0xff]
  %v1176 = vld [vmem:[%s4 + $0x580] sm:$0xff]
  %v1177 = vld [vmem:[%s4 + $0x588] sm:$0xff]
  %v1178 = vld [vmem:[%s4 + $0x590] sm:$0xff]
  %v1179 = vld [vmem:[%s4 + $0x598] sm:$0xff]
  %v1180 = vld [vmem:[%s4 + $0x5a0] sm:$0xff]
  %v1181 = vld [vmem:[%s4 + $0x5a8] sm:$0xff]
  %v1182 = vld [vmem:[%s4 + $0x5b0] sm:$0xff]
  %v1183 = vld [vmem:[%s4 + $0x5b8] sm:$0xff]
  %v1184 = vld [vmem:[%s4 + $0x5c0] sm:$0xff]
  %v1185 = vld [vmem:[%s4 + $0x5c8] sm:$0xff]
  %v1186 = vld [vmem:[%s4 + $0x5d0] sm:$0xff]
  %v1187 = vld [vmem:[%s4 + $0x5d8] sm:$0xff]
  %v1188 = vld [vmem:[%s4 + $0x5e0] sm:$0xff]
  %v1189 = vld [vmem:[%s4 + $0x5e8] sm:$0xff]
  %v1190 = vld [vmem:[%s4 + $0x5f0] sm:$0xff]
  %v1191 = vld [vmem:[%s4 + $0x5f8] sm:$0xff]
  %v1192 = vld [vmem:[%s4 + $0x600] sm:$0xff]
  %v1193 = vld [vmem:[%s4 + $0x608] sm:$0xff]
  %v1194 = vld [vmem:[%s4 + $0x610] sm:$0xff]
  %v1195 = vld [vmem:[%s4 + $0x618] sm:$0xff]
  %v1196 = vld [vmem:[%s4 + $0x620] sm:$0xff]
  %v1197 = vld [vmem:[%s4 + $0x628] sm:$0xff]
  %v1198 = vld [vmem:[%s4 + $0x630] sm:$0xff]
  %v1199 = vld [vmem:[%s4 + $0x638] sm:$0xff]
  %v1200 = vld [vmem:[%s4 + $0x640] sm:$0xff]
  %v1201 = vld [vmem:[%s4 + $0x648] sm:$0xff]
  %v1202 = vld [vmem:[%s4 + $0x650] sm:$0xff]
  %v1203 = vld [vmem:[%s4 + $0x658] sm:$0xff]
  %v1204 = vld [vmem:[%s4 + $0x660] sm:$0xff]
  %v1205 = vld [vmem:[%s4 + $0x668] sm:$0xff]
  %v1206 = vld [vmem:[%s4 + $0x670] sm:$0xff]
  %v1207 = vld [vmem:[%s4 + $0x678] sm:$0xff]
  %v1208 = vld [vmem:[%s4 + $0x680] sm:$0xff]
  %v1209 = vld [vmem:[%s4 + $0x688] sm:$0xff]
  %v1210 = vld [vmem:[%s4 + $0x690] sm:$0xff]
  %v1211 = vld [vmem:[%s4 + $0x698] sm:$0xff]
  %v1212 = vld [vmem:[%s4 + $0x6a0] sm:$0xff]
  %v1213 = vld [vmem:[%s4 + $0x6a8] sm:$0xff]
  %v1214 = vld [vmem:[%s4 + $0x6b0] sm:$0xff]
  %v1215 = vld [vmem:[%s4 + $0x6b8] sm:$0xff]
  %v1216 = vld [vmem:[%s4 + $0x6c0] sm:$0xff]
  %v1217 = vld [vmem:[%s4 + $0x6c8] sm:$0xff]
  %v1218 = vld [vmem:[%s4 + $0x6d0] sm:$0xff]
  %v1219 = vld [vmem:[%s4 + $0x6d8] sm:$0xff]
  %v1220 = vld [vmem:[%s4 + $0x6e0] sm:$0xff]
  %v1221 = vld [vmem:[%s4 + $0x6e8] sm:$0xff]
  %v1222 = vld [vmem:[%s4 + $0x6f0] sm:$0xff]
  %v1223 = vld [vmem:[%s4 + $0x6f8] sm:$0xff]
  %v1224 = vld [vmem:[%s4 + $0x700] sm:$0xff]
  %v1225 = vld [vmem:[%s4 + $0x708] sm:$0xff]
  %v1226 = vld [vmem:[%s4 + $0x710] sm:$0xff]
  %v1227 = vld [vmem:[%s4 + $0x718] sm:$0xff]
  %v1228 = vld [vmem:[%s4 + $0x720] sm:$0xff]
  %v1229 = vld [vmem:[%s4 + $0x728] sm:$0xff]
  %v1230 = vld [vmem:[%s4 + $0x730] sm:$0xff]
  %v1231 = vld [vmem:[%s4 + $0x738] sm:$0xff]
  %v1232 = vld [vmem:[%s4 + $0x740] sm:$0xff]
  %v1233 = vld [vmem:[%s4 + $0x748] sm:$0xff]
  %v1234 = vld [vmem:[%s4 + $0x750] sm:$0xff]
  %v1235 = vld [vmem:[%s4 + $0x758] sm:$0xff]
  %v1236 = vld [vmem:[%s4 + $0x760] sm:$0xff]
  %v1237 = vld [vmem:[%s4 + $0x768] sm:$0xff]
  %v1238 = vld [vmem:[%s4 + $0x770] sm:$0xff]
  %v1239 = vld [vmem:[%s4 + $0x778] sm:$0xff]
  %v1240 = vld [vmem:[%s4 + $0x780] sm:$0xff]
  %v1241 = vld [vmem:[%s4 + $0x788] sm:$0xff]
  %v1242 = vld [vmem:[%s4 + $0x790] sm:$0xff]
  %v1243 = vld [vmem:[%s4 + $0x798] sm:$0xff]
  %v1244 = vld [vmem:[%s4 + $0x7a0] sm:$0xff]
  %v1245 = vld [vmem:[%s4 + $0x7a8] sm:$0xff]
  %v1246 = vld [vmem:[%s4 + $0x7b0] sm:$0xff]
  %v1247 = vld [vmem:[%s4 + $0x7b8] sm:$0xff]
  %v1248 = vld [vmem:[%s4 + $0x7c0] sm:$0xff]
  %v1249 = vld [vmem:[%s4 + $0x7c8] sm:$0xff]
  %v1250 = vld [vmem:[%s4 + $0x7d0] sm:$0xff]
  %v1251 = vld [vmem:[%s4 + $0x7d8] sm:$0xff]
  %v1252 = vld [vmem:[%s4 + $0x7e0] sm:$0xff]
  %v1253 = vld [vmem:[%s4 + $0x7e8] sm:$0xff]
  %v1254 = vld [vmem:[%s4 + $0x7f0] sm:$0xff]
  %v1255 = vld [vmem:[%s4 + $0x7f8] sm:$0xff]
  %v1256 = vld [vmem:[%s4 + $0x800] sm:$0xff]
  %v1257 = vld [vmem:[%s4 + $0x808] sm:$0xff]
  %v1258 = vld [vmem:[%s4 + $0x810] sm:$0xff]
  %v1259 = vld [vmem:[%s4 + $0x818] sm:$0xff]
  %v1260 = vld [vmem:[%s4 + $0x820] sm:$0xff]
  %v1261 = vld [vmem:[%s4 + $0x828] sm:$0xff]
  %v1262 = vld [vmem:[%s4 + $0x830] sm:$0xff]
  %v1263 = vld [vmem:[%s4 + $0x838] sm:$0xff]
  %v1264 = vld [vmem:[%s4 + $0x840] sm:$0xff]
  %v1265 = vld [vmem:[%s4 + $0x848] sm:$0xff]
  %v1266 = vld [vmem:[%s4 + $0x850] sm:$0xff]
  %v1267 = vld [vmem:[%s4 + $0x858] sm:$0xff]
  %v1268 = vld [vmem:[%s4 + $0x860] sm:$0xff]
  %v1269 = vld [vmem:[%s4 + $0x868] sm:$0xff]
  %v1270 = vld [vmem:[%s4 + $0x870] sm:$0xff]
  %v1271 = vld [vmem:[%s4 + $0x878] sm:$0xff]
  %v1272 = vld [vmem:[%s4 + $0x880] sm:$0xff]
  %v1273 = vld [vmem:[%s4 + $0x888] sm:$0xff]
  %v1274 = vld [vmem:[%s4 + $0x890] sm:$0xff]
  %v1275 = vld [vmem:[%s4 + $0x898] sm:$0xff]
  %v1276 = vld [vmem:[%s4 + $0x8a0] sm:$0xff]
  %v1277 = vld [vmem:[%s4 + $0x8a8] sm:$0xff]
  %v1278 = vld [vmem:[%s4 + $0x8b0] sm:$0xff]
  %v1279 = vld [vmem:[%s4 + $0x8b8] sm:$0xff]
  %v1280 = vld [vmem:[%s4 + $0x8c0] sm:$0xff]
  %v1281 = vld [vmem:[%s4 + $0x8c8] sm:$0xff]
  %v1282 = vld [vmem:[%s4 + $0x8d0] sm:$0xff]
  %v1283 = vld [vmem:[%s4 + $0x8d8] sm:$0xff]
  %v1284 = vld [vmem:[%s4 + $0x8e0] sm:$0xff]
  %v1285 = vld [vmem:[%s4 + $0x8e8] sm:$0xff]
  %v1286 = vld [vmem:[%s4 + $0x8f0] sm:$0xff]
  %v1287 = vld [vmem:[%s4 + $0x8f8] sm:$0xff]
  %v1288 = vld [vmem:[%s4 + $0x900] sm:$0xff]
  %v1289 = vld [vmem:[%s4 + $0x908] sm:$0xff]
  %v1290 = vld [vmem:[%s4 + $0x910] sm:$0xff]
  %v1291 = vld [vmem:[%s4 + $0x918] sm:$0xff]
  %v1292 = vld [vmem:[%s4 + $0x920] sm:$0xff]
  %v1293 = vld [vmem:[%s4 + $0x928] sm:$0xff]
  %v1294 = vld [vmem:[%s4 + $0x930] sm:$0xff]
  %v1295 = vld [vmem:[%s4 + $0x938] sm:$0xff]
  %v1296 = vld [vmem:[%s4 + $0x940] sm:$0xff]
  %v1297 = vld [vmem:[%s4 + $0x948] sm:$0xff]
  %v1298 = vld [vmem:[%s4 + $0x950] sm:$0xff]
  %v1299 = vld [vmem:[%s4 + $0x958] sm:$0xff]
  %v1300 = vld [vmem:[%s4 + $0x960] sm:$0xff]
  %v1301 = vld [vmem:[%s4 + $0x968] sm:$0xff]
  %v1302 = vld [vmem:[%s4 + $0x970] sm:$0xff]
  %v1303 = vld [vmem:[%s4 + $0x978] sm:$0xff]
  %v1304 = vld [vmem:[%s4 + $0x980] sm:$0xff]
  %v1305 = vld [vmem:[%s4 + $0x988] sm:$0xff]
  %v1306 = vld [vmem:[%s4 + $0x990] sm:$0xff]
  %v1307 = vld [vmem:[%s4 + $0x998] sm:$0xff]
  %v1308 = vld [vmem:[%s4 + $0x9a0] sm:$0xff]
  %v1309 = vld [vmem:[%s4 + $0x9a8] sm:$0xff]
  %v1310 = vld [vmem:[%s4 + $0x9b0] sm:$0xff]
  %v1311 = vld [vmem:[%s4 + $0x9b8] sm:$0xff]
  %v1312 = vld [vmem:[%s4 + $0x9c0] sm:$0xff]
  %v1313 = vld [vmem:[%s4 + $0x9c8] sm:$0xff]
  %v1314 = vld [vmem:[%s4 + $0x9d0] sm:$0xff]
  %v1315 = vld [vmem:[%s4 + $0x9d8] sm:$0xff]
  %v1316 = vld [vmem:[%s4 + $0x9e0] sm:$0xff]
  %v1317 = vld [vmem:[%s4 + $0x9e8] sm:$0xff]
  %v1318 = vld [vmem:[%s4 + $0x9f0] sm:$0xff]
  %v1319 = vld [vmem:[%s4 + $0x9f8] sm:$0xff]
  %v1320 = vld [vmem:[%s4 + $0xa00] sm:$0xff]
  %v1321 = vld [vmem:[%s4 + $0xa08] sm:$0xff]
  %v1322 = vld [vmem:[%s4 + $0xa10] sm:$0xff]
  %v1323 = vld [vmem:[%s4 + $0xa18] sm:$0xff]
  %v1324 = vld [vmem:[%s4 + $0xa20] sm:$0xff]
  %v1325 = vld [vmem:[%s4 + $0xa28] sm:$0xff]
  %v1326 = vld [vmem:[%s4 + $0xa30] sm:$0xff]
  %v1327 = vld [vmem:[%s4 + $0xa38] sm:$0xff]
  %v1328 = vld [vmem:[%s4 + $0xa40] sm:$0xff]
  %v1329 = vld [vmem:[%s4 + $0xa48] sm:$0xff]
  %v1330 = vld [vmem:[%s4 + $0xa50] sm:$0xff]
  %v1331 = vld [vmem:[%s4 + $0xa58] sm:$0xff]
  %v1332 = vld [vmem:[%s4 + $0xa60] sm:$0xff]
  %v1333 = vld [vmem:[%s4 + $0xa68] sm:$0xff]
  %v1334 = vld [vmem:[%s4 + $0xa70] sm:$0xff]
  %v1335 = vld [vmem:[%s4 + $0xa78] sm:$0xff]
  %v1336 = vld [vmem:[%s4 + $0xa80] sm:$0xff]
  %v1337 = vld [vmem:[%s4 + $0xa88] sm:$0xff]
  %v1338 = vld [vmem:[%s4 + $0xa90] sm:$0xff]
  %v1339 = vld [vmem:[%s4 + $0xa98] sm:$0xff]
  %v1340 = vld [vmem:[%s4 + $0xaa0] sm:$0xff]
  %v1341 = vld [vmem:[%s4 + $0xaa8] sm:$0xff]
  %v1342 = vld [vmem:[%s4 + $0xab0] sm:$0xff]
  %v1343 = vld [vmem:[%s4 + $0xab8] sm:$0xff]
  %v1344 = vld [vmem:[%s4 + $0xac0] sm:$0xff]
  %v1345 = vld [vmem:[%s4 + $0xac8] sm:$0xff]
  %v1346 = vld [vmem:[%s4 + $0xad0] sm:$0xff]
  %v1347 = vld [vmem:[%s4 + $0xad8] sm:$0xff]
  %v1348 = vld [vmem:[%s4 + $0xae0] sm:$0xff]
  %v1349 = vld [vmem:[%s4 + $0xae8] sm:$0xff]
  %v1350 = vld [vmem:[%s4 + $0xaf0] sm:$0xff]
  %v1351 = vld [vmem:[%s4 + $0xaf8] sm:$0xff]
  %v1352 = vld [vmem:[%s4 + $0xb00] sm:$0xff]
  %v1353 = vld [vmem:[%s4 + $0xb08] sm:$0xff]
  %v1354 = vld [vmem:[%s4 + $0xb10] sm:$0xff]
  %v1355 = vld [vmem:[%s4 + $0xb18] sm:$0xff]
  %v1356 = vld [vmem:[%s4 + $0xb20] sm:$0xff]
  %v1357 = vld [vmem:[%s4 + $0xb28] sm:$0xff]
  %v1358 = vld [vmem:[%s4 + $0xb30] sm:$0xff]
  %v1359 = vld [vmem:[%s4 + $0xb38] sm:$0xff]
  %v1360 = vld [vmem:[%s4 + $0xb40] sm:$0xff]
  %v1361 = vld [vmem:[%s4 + $0xb48] sm:$0xff]
  %v1362 = vld [vmem:[%s4 + $0xb50] sm:$0xff]
  %v1363 = vld [vmem:[%s4 + $0xb58] sm:$0xff]
  %v1364 = vld [vmem:[%s4 + $0xb60] sm:$0xff]
  %v1365 = vld [vmem:[%s4 + $0xb68] sm:$0xff]
  %v1366 = vld [vmem:[%s4 + $0xb70] sm:$0xff]
  %v1367 = vld [vmem:[%s4 + $0xb78] sm:$0xff]
  %v1368 = vld [vmem:[%s4 + $0xb80] sm:$0xff]
  %v1369 = vld [vmem:[%s4 + $0xb88] sm:$0xff]
  %v1370 = vld [vmem:[%s4 + $0xb90] sm:$0xff]
  %v1371 = vld [vmem:[%s4 + $0xb98] sm:$0xff]
  %v1372 = vld [vmem:[%s4 + $0xba0] sm:$0xff]
  %v1373 = vld [vmem:[%s4 + $0xba8] sm:$0xff]
  %v1374 = vld [vmem:[%s4 + $0xbb0] sm:$0xff]
  %v1375 = vld [vmem:[%s4 + $0xbb8] sm:$0xff]
  %v1376 = vld [vmem:[%s4 + $0xbc0] sm:$0xff]
  %v1377 = vld [vmem:[%s4 + $0xbc8] sm:$0xff]
  %v1378 = vld [vmem:[%s4 + $0xbd0] sm:$0xff]
  %v1379 = vld [vmem:[%s4 + $0xbd8] sm:$0xff]
  %v1380 = vld [vmem:[%s4 + $0xbe0] sm:$0xff]
  %v1381 = vld [vmem:[%s4 + $0xbe8] sm:$0xff]
  %v1382 = vld [vmem:[%s4 + $0xbf0] sm:$0xff]
  %v1383 = vld [vmem:[%s4 + $0xbf8] sm:$0xff]
  %v1384 = vld [vmem:[%s4 + $0xc00] sm:$0xff]
  %v1385 = vld [vmem:[%s4 + $0xc08] sm:$0xff]
  %v1386 = vld [vmem:[%s4 + $0xc10] sm:$0xff]
  %v1387 = vld [vmem:[%s4 + $0xc18] sm:$0xff]
  %v1388 = vld [vmem:[%s4 + $0xc20] sm:$0xff]
  %v1389 = vld [vmem:[%s4 + $0xc28] sm:$0xff]
  %v1390 = vld [vmem:[%s4 + $0xc30] sm:$0xff]
  %v1391 = vld [vmem:[%s4 + $0xc38] sm:$0xff]
  %v1392 = vld [vmem:[%s4 + $0xc40] sm:$0xff]
  %v1393 = vld [vmem:[%s4 + $0xc48] sm:$0xff]
  %v1394 = vld [vmem:[%s4 + $0xc50] sm:$0xff]
  %v1395 = vld [vmem:[%s4 + $0xc58] sm:$0xff]
  %v1396 = vld [vmem:[%s4 + $0xc60] sm:$0xff]
  %v1397 = vld [vmem:[%s4 + $0xc68] sm:$0xff]
  %v1398 = vld [vmem:[%s4 + $0xc70] sm:$0xff]
  %v1399 = vld [vmem:[%s4 + $0xc78] sm:$0xff]
  %v1400 = vld [vmem:[%s4 + $0xc80] sm:$0xff]
  %v1401 = vld [vmem:[%s4 + $0xc88] sm:$0xff]
  %v1402 = vld [vmem:[%s4 + $0xc90] sm:$0xff]
  %v1403 = vld [vmem:[%s4 + $0xc98] sm:$0xff]
  %v1404 = vld [vmem:[%s4 + $0xca0] sm:$0xff]
  %v1405 = vld [vmem:[%s4 + $0xca8] sm:$0xff]
  %v1406 = vld [vmem:[%s4 + $0xcb0] sm:$0xff]
  %v1407 = vld [vmem:[%s4 + $0xcb8] sm:$0xff]
  %v1408 = vld [vmem:[%s4 + $0xcc0] sm:$0xff]
  %v1409 = vld [vmem:[%s4 + $0xcc8] sm:$0xff]
  %v1410 = vld [vmem:[%s4 + $0xcd0] sm:$0xff]
  %v1411 = vld [vmem:[%s4 + $0xcd8] sm:$0xff]
  %v1412 = vld [vmem:[%s4 + $0xce0] sm:$0xff]
  %v1413 = vld [vmem:[%s4 + $0xce8] sm:$0xff]
  %v1414 = vld [vmem:[%s4 + $0xcf0] sm:$0xff]
  %v1415 = vld [vmem:[%s4 + $0xcf8] sm:$0xff]
  %v1416 = vld [vmem:[%s4 + $0xd00] sm:$0xff]
  %v1417 = vld [vmem:[%s4 + $0xd08] sm:$0xff]
  %v1418 = vld [vmem:[%s4 + $0xd10] sm:$0xff]
  %v1419 = vld [vmem:[%s4 + $0xd18] sm:$0xff]
  %v1420 = vld [vmem:[%s4 + $0xd20] sm:$0xff]
  %v1421 = vld [vmem:[%s4 + $0xd28] sm:$0xff]
  %v1422 = vld [vmem:[%s4 + $0xd30] sm:$0xff]
  %v1423 = vld [vmem:[%s4 + $0xd38] sm:$0xff]
  %v1424 = vld [vmem:[%s4 + $0xd40] sm:$0xff]
  %v1425 = vld [vmem:[%s4 + $0xd48] sm:$0xff]
  %v1426 = vld [vmem:[%s4 + $0xd50] sm:$0xff]
  %v1427 = vld [vmem:[%s4 + $0xd58] sm:$0xff]
  %v1428 = vld [vmem:[%s4 + $0xd60] sm:$0xff]
  %v1429 = vld [vmem:[%s4 + $0xd68] sm:$0xff]
  %v1430 = vld [vmem:[%s4 + $0xd70] sm:$0xff]
  %v1431 = vld [vmem:[%s4 + $0xd78] sm:$0xff]
  %v1432 = vld [vmem:[%s4 + $0xd80] sm:$0xff]
  %v1433 = vld [vmem:[%s4 + $0xd88] sm:$0xff]
  %v1434 = vld [vmem:[%s4 + $0xd90] sm:$0xff]
  %v1435 = vld [vmem:[%s4 + $0xd98] sm:$0xff]
  %v1436 = vld [vmem:[%s4 + $0xda0] sm:$0xff]
  %v1437 = vld [vmem:[%s4 + $0xda8] sm:$0xff]
  %v1438 = vld [vmem:[%s4 + $0xdb0] sm:$0xff]
  %v1439 = vld [vmem:[%s4 + $0xdb8] sm:$0xff]
  %v1440 = vld [vmem:[%s4 + $0xdc0] sm:$0xff]
  %v1441 = vld [vmem:[%s4 + $0xdc8] sm:$0xff]
  %v1442 = vld [vmem:[%s4 + $0xdd0] sm:$0xff]
  %v1443 = vld [vmem:[%s4 + $0xdd8] sm:$0xff]
  %v1444 = vld [vmem:[%s4 + $0xde0] sm:$0xff]
  %v1445 = vld [vmem:[%s4 + $0xde8] sm:$0xff]
  %v1446 = vld [vmem:[%s4 + $0xdf0] sm:$0xff]
  %v1447 = vld [vmem:[%s4 + $0xdf8] sm:$0xff]
  %v1448 = vld [vmem:[%s4 + $0xe00] sm:$0xff]
  %v1449 = vld [vmem:[%s4 + $0xe08] sm:$0xff]
  %v1450 = vld [vmem:[%s4 + $0xe10] sm:$0xff]
  %v1451 = vld [vmem:[%s4 + $0xe18] sm:$0xff]
  %v1452 = vld [vmem:[%s4 + $0xe20] sm:$0xff]
  %v1453 = vld [vmem:[%s4 + $0xe28] sm:$0xff]
  %v1454 = vld [vmem:[%s4 + $0xe30] sm:$0xff]
  %v1455 = vld [vmem:[%s4 + $0xe38] sm:$0xff]
  %v1456 = vld [vmem:[%s4 + $0xe40] sm:$0xff]
  %v1457 = vld [vmem:[%s4 + $0xe48] sm:$0xff]
  %v1458 = vld [vmem:[%s4 + $0xe50] sm:$0xff]
  %v1459 = vld [vmem:[%s4 + $0xe58] sm:$0xff]
  %v1460 = vld [vmem:[%s4 + $0xe60] sm:$0xff]
  %v1461 = vld [vmem:[%s4 + $0xe68] sm:$0xff]
  %v1462 = vld [vmem:[%s4 + $0xe70] sm:$0xff]
  %v1463 = vld [vmem:[%s4 + $0xe78] sm:$0xff]
  %v1464 = vld [vmem:[%s4 + $0xe80] sm:$0xff]
  %v1465 = vld [vmem:[%s4 + $0xe88] sm:$0xff]
  %v1466 = vld [vmem:[%s4 + $0xe90] sm:$0xff]
  %v1467 = vld [vmem:[%s4 + $0xe98] sm:$0xff]
  %v1468 = vld [vmem:[%s4 + $0xea0] sm:$0xff]
  %v1469 = vld [vmem:[%s4 + $0xea8] sm:$0xff]
  %v1470 = vld [vmem:[%s4 + $0xeb0] sm:$0xff]
  %v1471 = vld [vmem:[%s4 + $0xeb8] sm:$0xff]
  %v1472 = vld [vmem:[%s4 + $0xec0] sm:$0xff]
  %v1473 = vld [vmem:[%s4 + $0xec8] sm:$0xff]
  %v1474 = vld [vmem:[%s4 + $0xed0] sm:$0xff]
  %v1475 = vld [vmem:[%s4 + $0xed8] sm:$0xff]
  %v1476 = vld [vmem:[%s4 + $0xee0] sm:$0xff]
  %v1477 = vld [vmem:[%s4 + $0xee8] sm:$0xff]
  %v1478 = vld [vmem:[%s4 + $0xef0] sm:$0xff]
  %v1479 = vld [vmem:[%s4 + $0xef8] sm:$0xff]
  %v1480 = vld [vmem:[%s4 + $0xf00] sm:$0xff]
  %v1481 = vld [vmem:[%s4 + $0xf08] sm:$0xff]
  %v1482 = vld [vmem:[%s4 + $0xf10] sm:$0xff]
  %v1483 = vld [vmem:[%s4 + $0xf18] sm:$0xff]
  %v1484 = vld [vmem:[%s4 + $0xf20] sm:$0xff]
  %v1485 = vld [vmem:[%s4 + $0xf28] sm:$0xff]
  %v1486 = vld [vmem:[%s4 + $0xf30] sm:$0xff]
  %v1487 = vld [vmem:[%s4 + $0xf38] sm:$0xff]
  %v1488 = vld [vmem:[%s4 + $0xf40] sm:$0xff]
  %v1489 = vld [vmem:[%s4 + $0xf48] sm:$0xff]
  %v1490 = vld [vmem:[%s4 + $0xf50] sm:$0xff]
  %v1491 = vld [vmem:[%s4 + $0xf58] sm:$0xff]
  %v1492 = vld [vmem:[%s4 + $0xf60] sm:$0xff]
  %v1493 = vld [vmem:[%s4 + $0xf68] sm:$0xff]
  %v1494 = vld [vmem:[%s4 + $0xf70] sm:$0xff]
  %v1495 = vld [vmem:[%s4 + $0xf78] sm:$0xff]
  %v1496 = vld [vmem:[%s4 + $0xf80] sm:$0xff]
  %v1497 = vld [vmem:[%s4 + $0xf88] sm:$0xff]
  %v1498 = vld [vmem:[%s4 + $0xf90] sm:$0xff]
  %v1499 = vld [vmem:[%s4 + $0xf98] sm:$0xff]
  %v1500 = vld [vmem:[%s4 + $0xfa0] sm:$0xff]
  %v1501 = vld [vmem:[%s4 + $0xfa8] sm:$0xff]
  %v1502 = vld [vmem:[%s4 + $0xfb0] sm:$0xff]
  %v1503 = vld [vmem:[%s4 + $0xfb8] sm:$0xff]
  %v1504 = vld [vmem:[%s4 + $0xfc0] sm:$0xff]
  %v1505 = vld [vmem:[%s4 + $0xfc8] sm:$0xff]
  %v1506 = vld [vmem:[%s4 + $0xfd0] sm:$0xff]
  %v1507 = vld [vmem:[%s4 + $0xfd8] sm:$0xff]
  %v1508 = vld [vmem:[%s4 + $0xfe0] sm:$0xff]
  %v1509 = vld [vmem:[%s4 + $0xfe8] sm:$0xff]
  %v1510 = vld [vmem:[%s4 + $0xff0] sm:$0xff]
  %v1511 = vld [vmem:[%s4 + $0xff8] sm:$0xff]
  %1512 = vmatprep.subr.mxu0 %v1001
  %1513 = vmatpush1.msra.mxu0 %v1000
  %1514 = vmatprep.subr.mxu0 %v1009
  %1515 = vmatpush1.msra.mxu0 %v1008
  %1516 = vmatprep.subr.mxu0 %v1017
  %1517 = vmatpush1.msra.mxu0 %v1016
  %1518 = vmatprep.subr.mxu0 %v1025
  %1519 = vmatpush1.msra.mxu0 %v1024
  %1520 = vmatprep.subr.mxu0 %v1033
  %1521 = vmatpush1.msra.mxu0 %v1032
  %1522 = vmatprep.subr.mxu0 %v1041
  %1523 = vmatpush1.msra.mxu0 %v1040
  %1524 = vmatprep.subr.mxu0 %v1049
  %1525 = vmatpush1.msra.mxu0 %v1048
  %1526 = vmatprep.subr.mxu0 %v1057
  %1527 = vmatpush1.msra.mxu0 %v1056
  %1528 = vmatprep.subr.mxu0 %v1065
  %1529 = vmatpush1.msra.mxu0 %v1064
  %1530 = vmatprep.subr.mxu0 %v1073
  %1531 = vmatpush1.msra.mxu0 %v1072
  %1532 = vmatprep.subr.mxu0 %v1081
  %1533 = vmatpush1.msra.mxu0 %v1080
  %1534 = vmatprep.subr.mxu0 %v1089
  %1535 = vmatpush1.msra.mxu0 %v1088
  %1536 = vmatprep.subr.mxu0 %v1097
  %1537 = vmatpush1.msra.mxu0 %v1096
  %1538 = vmatprep.subr.mxu0 %v1105
  %1539 = vmatpush1.msra.mxu0 %v1104
  %1540 = vmatprep.subr.mxu0 %v1113
  %1541 = vmatpush1.msra.mxu0 %v1112
  %1542 = vmatprep.subr.mxu0 %v1121
  %1543 = vmatpush1.msra.mxu0 %v1120
  %1544 = vmatprep.subr.mxu0 %v1129
  %1545 = vmatpush1.msra.mxu0 %v1128
  %1546 = vmatprep.subr.mxu0 %v1137
  %1547 = vmatpush1.msra.mxu0 %v1136
  %1548 = vmatprep.subr.mxu0 %v1145
  %1549 = vmatpush1.msra.mxu0 %v1144
  %1550 = vmatprep.subr.mxu0 %v1153
  %1551 = vmatpush1.msra.mxu0 %v1152
  %1552 = vmatprep.subr.mxu0 %v1161
  %1553 = vmatpush1.msra.mxu0 %v1160
  %1554 = vmatprep.subr.mxu0 %v1169
  %1555 = vmatpush1.msra.mxu0 %v1168
  %1556 = vmatprep.subr.mxu0 %v1177
  %1557 = vmatpush1.msra.mxu0 %v1176
  %1558 = vmatprep.subr.mxu0 %v1185
  %1559 = vmatpush1.msra.mxu0 %v1184
  %1560 = vmatprep.subr.mxu0 %v1193
  %1561 = vmatpush1.msra.mxu0 %v1192
  %1562 = vmatprep.subr.mxu0 %v1201
  %1563 = vmatpush1.msra.mxu0 %v1200
  %1564 = vmatprep.subr.mxu0 %v1209
  %1565 = vmatpush1.msra.mxu0 %v1208
  %1566 = vmatprep.subr.mxu0 %v1217
  %1567 = vmatpush1.msra.mxu0 %v1216
  %1568 = vmatprep.subr.mxu0 %v1225
  %1569 = vmatpush1.msra.mxu0 %v1224
  %1570 = vmatprep.subr.mxu0 %v1233
  %1571 = vmatpush1.msra.mxu0 %v1232
  %1572 = vmatprep.subr.mxu0 %v1241
  %1573 = vmatpush1.msra.mxu0 %v1240
  %1574 = vmatprep.subr.mxu0 %v1249
  %1575 = vmatpush1.msra.mxu0 %v1248
  %1576 = vmatprep.mubr.f32.mxu0 %v987
  %1577 = vmatmul.mubr.f32.gmra.mrb[0].mxu0 %v986
  %v1578 = vpop.f32.mrb[0].mxu0
  %v1579 = vadd.f32 0.0, %v1578
  %v1580 = vpop.f32.mrb[0].mxu0
  %v1581 = vadd.f32 0.0, %v1580
  %1582 = vmatprep.mubr.f32.mxu0 %v991
  %1583 = vmatmul.mubr.f32.gmra.mrb[0].mxu0 %v990
  %v1584 = vpop.f32.mrb[0].mxu0
  %v1585 = vadd.f32 0.0, %v1584
  %v1586 = vpop.f32.mrb[0].mxu0
  %v1587 = vadd.f32 0.0, %v1586
  %1588 = vmatprep.mubr.f32.mxu0 %v995
  %1589 = vmatmul.mubr.f32.gmra.mrb[0].mxu0 %v994
  %v1590 = vpop.f32.mrb[0].mxu0
  %v1591 = vadd.f32 0.0, %v1590
  %v1592 = vpop.f32.mrb[0].mxu0
  %v1593 = vadd.f32 0.0, %v1592
  %1594 = vdwg.mxu0
  %1595 = vmatprep.subr.mxu0 %v1257
  %1596 = vmatpush1.msra.mxu0 %v1256
  %1597 = vmatprep.subr.mxu0 %v1265
  %1598 = vmatpush1.msra.mxu0 %v1264
  %1599 = vmatprep.subr.mxu0 %v1273
  %1600 = vmatpush1.msra.mxu0 %v1272
  %1601 = vmatprep.subr.mxu0 %v1281
  %1602 = vmatpush1.msra.mxu0 %v1280
  %1603 = vmatprep.subr.mxu0 %v1289
  %1604 = vmatpush1.msra.mxu0 %v1288
  %1605 = vmatprep.subr.mxu0 %v1297
  %1606 = vmatpush1.msra.mxu0 %v1296
  %1607 = vmatprep.subr.mxu0 %v1305
  %1608 = vmatpush1.msra.mxu0 %v1304
  %1609 = vmatprep.subr.mxu0 %v1313
  %1610 = vmatpush1.msra.mxu0 %v1312
  %1611 = vmatprep.subr.mxu0 %v1321
  %1612 = vmatpush1.msra.mxu0 %v1320
  %1613 = vmatprep.subr.mxu0 %v1329
  %1614 = vmatpush1.msra.mxu0 %v1328
  %1615 = vmatprep.subr.mxu0 %v1337
  %1616 = vmatpush1.msra.mxu0 %v1336
  %1617 = vmatprep.subr.mxu0 %v1345
  %1618 = vmatpush1.msra.mxu0 %v1344
  %1619 = vmatprep.subr.mxu0 %v1353
  %1620 = vmatpush1.msra.mxu0 %v1352
  %1621 = vmatprep.subr.mxu0 %v1361
  %1622 = vmatpush1.msra.mxu0 %v1360
  %1623 = vmatprep.subr.mxu0 %v1369
  %1624 = vmatpush1.msra.mxu0 %v1368
  %1625 = vmatprep.subr.mxu0 %v1377
  %1626 = vmatpush1.msra.mxu0 %v1376
  %1627 = vmatprep.subr.mxu0 %v1385
  %1628 = vmatpush1.msra.mxu0 %v1384
  %1629 = vmatprep.subr.mxu0 %v1393
  %1630 = vmatpush1.msra.mxu0 %v1392
  %1631 = vmatprep.subr.mxu0 %v1401
  %1632 = vmatpush1.msra.mxu0 %v1400
  %1633 = vmatprep.subr.mxu0 %v1409
  %1634 = vmatpush1.msra.mxu0 %v1408
  %1635 = vmatprep.subr.mxu0 %v1417
  %1636 = vmatpush1.msra.mxu0 %v1416
  %1637 = vmatprep.subr.mxu0 %v1425
  %1638 = vmatpush1.msra.mxu0 %v1424
  %1639 = vmatprep.subr.mxu0 %v1433
  %1640 = vmatpush1.msra.mxu0 %v1432
  %1641 = vmatprep.subr.mxu0 %v1441
  %1642 = vmatpush1.msra.mxu0 %v1440
  %1643 = vmatprep.subr.mxu0 %v1449
  %1644 = vmatpush1.msra.mxu0 %v1448
  %1645 = vmatprep.subr.mxu0 %v1457
  %1646 = vmatpush1.msra.mxu0 %v1456
  %1647 = vmatprep.subr.mxu0 %v1465
  %1648 = vmatpush1.msra.mxu0 %v1464
  %1649 = vmatprep.subr.mxu0 %v1473
  %1650 = vmatpush1.msra.mxu0 %v1472
  %1651 = vmatprep.subr.mxu0 %v1481
  %1652 = vmatpush1.msra.mxu0 %v1480
  %1653 = vmatprep.subr.mxu0 %v1489
  %1654 = vmatpush1.msra.mxu0 %v1488
  %1655 = vmatprep.subr.mxu0 %v1497
  %1656 = vmatpush1.msra.mxu0 %v1496
  %1657 = vmatprep.subr.mxu0 %v1505
  %1658 = vmatpush1.msra.mxu0 %v1504
  %1659 = vmatprep.mubr.f32.mxu0 %v989
  %1660 = vmatmul.mubr.f32.gmra.mrb[0].mxu0 %v988
  %v1661 = vpop.f32.mrb[0].mxu0
  %v1662 = vadd.f32 %v1579, %v1661
  %v1663 = vpop.f32.mrb[0].mxu0
  %v1664 = vadd.f32 %v1581, %v1663
  %1665 = vmatprep.mubr.f32.mxu0 %v993
  %1666 = vmatmul.mubr.f32.gmra.mrb[0].mxu0 %v992
  %v1667 = vpop.f32.mrb[0].mxu0
  %v1668 = vadd.f32 %v1585, %v1667
  %v1669 = vpop.f32.mrb[0].mxu0
  %v1670 = vadd.f32 %v1587, %v1669
  %1671 = vmatprep.mubr.f32.mxu0 %v997
  %1672 = vmatmul.mubr.f32.gmra.mrb[0].mxu0 %v996
  %v1673 = vpop.f32.mrb[0].mxu0
  %v1674 = vadd.f32 %v1591, %v1673
  %v1675 = vpop.f32.mrb[0].mxu0
  %v1676 = vadd.f32 %v1593, %v1675
  %1677 = vdwg.mxu0
  %1678 = vmatprep.subr.mxu0 %v1003
  %1679 = vmatpush1.msra.mxu0 %v1002
  %1680 = vmatprep.subr.mxu0 %v1011
  %1681 = vmatpush1.msra.mxu0 %v1010
  %1682 = vmatprep.subr.mxu0 %v1019
  %1683 = vmatpush1.msra.mxu0 %v1018
  %1684 = vmatprep.subr.mxu0 %v1027
  %1685 = vmatpush1.msra.mxu0 %v1026
  %1686 = vmatprep.subr.mxu0 %v1035
  %1687 = vmatpush1.msra.mxu0 %v1034
  %1688 = vmatprep.subr.mxu0 %v1043
  %1689 = vmatpush1.msra.mxu0 %v1042
  %1690 = vmatprep.subr.mxu0 %v1051
  %1691 = vmatpush1.msra.mxu0 %v1050
  %1692 = vmatprep.subr.mxu0 %v1059
  %1693 = vmatpush1.msra.mxu0 %v1058
  %1694 = vmatprep.subr.mxu0 %v1067
  %1695 = vmatpush1.msra.mxu0 %v1066
  %1696 = vmatprep.subr.mxu0 %v1075
  %1697 = vmatpush1.msra.mxu0 %v1074
  %1698 = vmatprep.subr.mxu0 %v1083
  %1699 = vmatpush1.msra.mxu0 %v1082
  %1700 = vmatprep.subr.mxu0 %v1091
  %1701 = vmatpush1.msra.mxu0 %v1090
  %1702 = vmatprep.subr.mxu0 %v1099
  %1703 = vmatpush1.msra.mxu0 %v1098
  %1704 = vmatprep.subr.mxu0 %v1107
  %1705 = vmatpush1.msra.mxu0 %v1106
  %1706 = vmatprep.subr.mxu0 %v1115
  %1707 = vmatpush1.msra.mxu0 %v1114
  %1708 = vmatprep.subr.mxu0 %v1123
  %1709 = vmatpush1.msra.mxu0 %v1122
  %1710 = vmatprep.subr.mxu0 %v1131
  %1711 = vmatpush1.msra.mxu0 %v1130
  %1712 = vmatprep.subr.mxu0 %v1139
  %1713 = vmatpush1.msra.mxu0 %v1138
  %1714 = vmatprep.subr.mxu0 %v1147
  %1715 = vmatpush1.msra.mxu0 %v1146
  %1716 = vmatprep.subr.mxu0 %v1155
  %1717 = vmatpush1.msra.mxu0 %v1154
  %1718 = vmatprep.subr.mxu0 %v1163
  %1719 = vmatpush1.msra.mxu0 %v1162
  %1720 = vmatprep.subr.mxu0 %v1171
  %1721 = vmatpush1.msra.mxu0 %v1170
  %1722 = vmatprep.subr.mxu0 %v1179
  %1723 = vmatpush1.msra.mxu0 %v1178
  %1724 = vmatprep.subr.mxu0 %v1187
  %1725 = vmatpush1.msra.mxu0 %v1186
  %1726 = vmatprep.subr.mxu0 %v1195
  %1727 = vmatpush1.msra.mxu0 %v1194
  %1728 = vmatprep.subr.mxu0 %v1203
  %1729 = vmatpush1.msra.mxu0 %v1202
  %1730 = vmatprep.subr.mxu0 %v1211
  %1731 = vmatpush1.msra.mxu0 %v1210
  %1732 = vmatprep.subr.mxu0 %v1219
  %1733 = vmatpush1.msra.mxu0 %v1218
  %1734 = vmatprep.subr.mxu0 %v1227
  %1735 = vmatpush1.msra.mxu0 %v1226
  %1736 = vmatprep.subr.mxu0 %v1235
  %1737 = vmatpush1.msra.mxu0 %v1234
  %1738 = vmatprep.subr.mxu0 %v1243
  %1739 = vmatpush1.msra.mxu0 %v1242
  %1740 = vmatprep.subr.mxu0 %v1251
  %1741 = vmatpush1.msra.mxu0 %v1250
  %1742 = vmatprep.mubr.f32.mxu0 %v987
  %1743 = vmatmul.mubr.f32.gmra.mrb[0].mxu0 %v986
  %v1744 = vpop.f32.mrb[0].mxu0
  %v1745 = vadd.f32 0.0, %v1744
  %v1746 = vpop.f32.mrb[0].mxu0
  %v1747 = vadd.f32 0.0, %v1746
  %1748 = vmatprep.mubr.f32.mxu0 %v991
  %1749 = vmatmul.mubr.f32.gmra.mrb[0].mxu0 %v990
  %v1750 = vpop.f32.mrb[0].mxu0
  %v1751 = vadd.f32 0.0, %v1750
  %v1752 = vpop.f32.mrb[0].mxu0
  %v1753 = vadd.f32 0.0, %v1752
  %1754 = vmatprep.mubr.f32.mxu0 %v995
  %1755 = vmatmul.mubr.f32.gmra.mrb[0].mxu0 %v994
  %v1756 = vpop.f32.mrb[0].mxu0
  %v1757 = vadd.f32 0.0, %v1756
  %v1758 = vpop.f32.mrb[0].mxu0
  %v1759 = vadd.f32 0.0, %v1758
  %1760 = vdwg.mxu0
  %1761 = vmatprep.subr.mxu0 %v1259
  %1762 = vmatpush1.msra.mxu0 %v1258
  %1763 = vmatprep.subr.mxu0 %v1267
  %1764 = vmatpush1.msra.mxu0 %v1266
  %1765 = vmatprep.subr.mxu0 %v1275
  %1766 = vmatpush1.msra.mxu0 %v1274
  %1767 = vmatprep.subr.mxu0 %v1283
  %1768 = vmatpush1.msra.mxu0 %v1282
  %1769 = vmatprep.subr.mxu0 %v1291
  %1770 = vmatpush1.msra.mxu0 %v1290
  %1771 = vmatprep.subr.mxu0 %v1299
  %1772 = vmatpush1.msra.mxu0 %v1298
  %1773 = vmatprep.subr.mxu0 %v1307
  %1774 = vmatpush1.msra.mxu0 %v1306
  %1775 = vmatprep.subr.mxu0 %v1315
  %1776 = vmatpush1.msra.mxu0 %v1314
  %1777 = vmatprep.subr.mxu0 %v1323
  %1778 = vmatpush1.msra.mxu0 %v1322
  %1779 = vmatprep.subr.mxu0 %v1331
  %1780 = vmatpush1.msra.mxu0 %v1330
  %1781 = vmatprep.subr.mxu0 %v1339
  %1782 = vmatpush1.msra.mxu0 %v1338
  %1783 = vmatprep.subr.mxu0 %v1347
  %1784 = vmatpush1.msra.mxu0 %v1346
  %1785 = vmatprep.subr.mxu0 %v1355
  %1786 = vmatpush1.msra.mxu0 %v1354
  %1787 = vmatprep.subr.mxu0 %v1363
  %1788 = vmatpush1.msra.mxu0 %v1362
  %1789 = vmatprep.subr.mxu0 %v1371
  %1790 = vmatpush1.msra.mxu0 %v1370
  %1791 = vmatprep.subr.mxu0 %v1379
  %1792 = vmatpush1.msra.mxu0 %v1378
  %1793 = vmatprep.subr.mxu0 %v1387
  %1794 = vmatpush1.msra.mxu0 %v1386
  %1795 = vmatprep.subr.mxu0 %v1395
  %1796 = vmatpush1.msra.mxu0 %v1394
  %1797 = vmatprep.subr.mxu0 %v1403
  %1798 = vmatpush1.msra.mxu0 %v1402
  %1799 = vmatprep.subr.mxu0 %v1411
  %1800 = vmatpush1.msra.mxu0 %v1410
  %1801 = vmatprep.subr.mxu0 %v1419
  %1802 = vmatpush1.msra.mxu0 %v1418
  %1803 = vmatprep.subr.mxu0 %v1427
  %1804 = vmatpush1.msra.mxu0 %v1426
  %1805 = vmatprep.subr.mxu0 %v1435
  %1806 = vmatpush1.msra.mxu0 %v1434
  %1807 = vmatprep.subr.mxu0 %v1443
  %1808 = vmatpush1.msra.mxu0 %v1442
  %1809 = vmatprep.subr.mxu0 %v1451
  %1810 = vmatpush1.msra.mxu0 %v1450
  %1811 = vmatprep.subr.mxu0 %v1459
  %1812 = vmatpush1.msra.mxu0 %v1458
  %1813 = vmatprep.subr.mxu0 %v1467
  %1814 = vmatpush1.msra.mxu0 %v1466
  %1815 = vmatprep.subr.mxu0 %v1475
  %1816 = vmatpush1.msra.mxu0 %v1474
  %1817 = vmatprep.subr.mxu0 %v1483
  %1818 = vmatpush1.msra.mxu0 %v1482
  %1819 = vmatprep.subr.mxu0 %v1491
  %1820 = vmatpush1.msra.mxu0 %v1490
  %1821 = vmatprep.subr.mxu0 %v1499
  %1822 = vmatpush1.msra.mxu0 %v1498
  %1823 = vmatprep.subr.mxu0 %v1507
  %1824 = vmatpush1.msra.mxu0 %v1506
  %1825 = vmatprep.mubr.f32.mxu0 %v989
  %1826 = vmatmul.mubr.f32.gmra.mrb[0].mxu0 %v988
  %v1827 = vpop.f32.mrb[0].mxu0
  %v1828 = vadd.f32 %v1745, %v1827
  %v1829 = vpop.f32.mrb[0].mxu0
  %v1830 = vadd.f32 %v1747, %v1829
  %1831 = vmatprep.mubr.f32.mxu0 %v993
  %1832 = vmatmul.mubr.f32.gmra.mrb[0].mxu0 %v992
  %v1833 = vpop.f32.mrb[0].mxu0
  %v1834 = vadd.f32 %v1751, %v1833
  %v1835 = vpop.f32.mrb[0].mxu0
  %v1836 = vadd.f32 %v1753, %v1835
  %1837 = vmatprep.mubr.f32.mxu0 %v997
  %1838 = vmatmul.mubr.f32.gmra.mrb[0].mxu0 %v996
  %v1839 = vpop.f32.mrb[0].mxu0
  %v1840 = vadd.f32 %v1757, %v1839
  %v1841 = vpop.f32.mrb[0].mxu0
  %v1842 = vadd.f32 %v1759, %v1841
  %1843 = vdwg.mxu0
  %1844 = vmatprep.subr.mxu0 %v1005
  %1845 = vmatpush1.msra.mxu0 %v1004
  %1846 = vmatprep.subr.mxu0 %v1013
  %1847 = vmatpush1.msra.mxu0 %v1012
  %1848 = vmatprep.subr.mxu0 %v1021
  %1849 = vmatpush1.msra.mxu0 %v1020
  %1850 = vmatprep.subr.mxu0 %v1029
  %1851 = vmatpush1.msra.mxu0 %v1028
  %1852 = vmatprep.subr.mxu0 %v1037
  %1853 = vmatpush1.msra.mxu0 %v1036
  %1854 = vmatprep.subr.mxu0 %v1045
  %1855 = vmatpush1.msra.mxu0 %v1044
  %1856 = vmatprep.subr.mxu0 %v1053
  %1857 = vmatpush1.msra.mxu0 %v1052
  %1858 = vmatprep.subr.mxu0 %v1061
  %1859 = vmatpush1.msra.mxu0 %v1060
  %1860 = vmatprep.subr.mxu0 %v1069
  %1861 = vmatpush1.msra.mxu0 %v1068
  %1862 = vmatprep.subr.mxu0 %v1077
  %1863 = vmatpush1.msra.mxu0 %v1076
  %1864 = vmatprep.subr.mxu0 %v1085
  %1865 = vmatpush1.msra.mxu0 %v1084
  %1866 = vmatprep.subr.mxu0 %v1093
  %1867 = vmatpush1.msra.mxu0 %v1092
  %1868 = vmatprep.subr.mxu0 %v1101
  %1869 = vmatpush1.msra.mxu0 %v1100
  %1870 = vmatprep.subr.mxu0 %v1109
  %1871 = vmatpush1.msra.mxu0 %v1108
  %1872 = vmatprep.subr.mxu0 %v1117
  %1873 = vmatpush1.msra.mxu0 %v1116
  %1874 = vmatprep.subr.mxu0 %v1125
  %1875 = vmatpush1.msra.mxu0 %v1124
  %1876 = vmatprep.subr.mxu0 %v1133
  %1877 = vmatpush1.msra.mxu0 %v1132
  %1878 = vmatprep.subr.mxu0 %v1141
  %1879 = vmatpush1.msra.mxu0 %v1140
  %1880 = vmatprep.subr.mxu0 %v1149
  %1881 = vmatpush1.msra.mxu0 %v1148
  %1882 = vmatprep.subr.mxu0 %v1157
  %1883 = vmatpush1.msra.mxu0 %v1156
  %1884 = vmatprep.subr.mxu0 %v1165
  %1885 = vmatpush1.msra.mxu0 %v1164
  %1886 = vmatprep.subr.mxu0 %v1173
  %1887 = vmatpush1.msra.mxu0 %v1172
  %1888 = vmatprep.subr.mxu0 %v1181
  %1889 = vmatpush1.msra.mxu0 %v1180
  %1890 = vmatprep.subr.mxu0 %v1189
  %1891 = vmatpush1.msra.mxu0 %v1188
  %1892 = vmatprep.subr.mxu0 %v1197
  %1893 = vmatpush1.msra.mxu0 %v1196
  %1894 = vmatprep.subr.mxu0 %v1205
  %1895 = vmatpush1.msra.mxu0 %v1204
  %1896 = vmatprep.subr.mxu0 %v1213
  %1897 = vmatpush1.msra.mxu0 %v1212
  %1898 = vmatprep.subr.mxu0 %v1221
  %1899 = vmatpush1.msra.mxu0 %v1220
  %1900 = vmatprep.subr.mxu0 %v1229
  %1901 = vmatpush1.msra.mxu0 %v1228
  %1902 = vmatprep.subr.mxu0 %v1237
  %1903 = vmatpush1.msra.mxu0 %v1236
  %1904 = vmatprep.subr.mxu0 %v1245
  %1905 = vmatpush1.msra.mxu0 %v1244
  %1906 = vmatprep.subr.mxu0 %v1253
  %1907 = vmatpush1.msra.mxu0 %v1252
  %1908 = vmatprep.mubr.f32.mxu0 %v987
  %1909 = vmatmul.mubr.f32.gmra.mrb[0].mxu0 %v986
  %v1910 = vpop.f32.mrb[0].mxu0
  %v1911 = vadd.f32 0.0, %v1910
  %v1912 = vpop.f32.mrb[0].mxu0
  %v1913 = vadd.f32 0.0, %v1912
  %1914 = vmatprep.mubr.f32.mxu0 %v991
  %1915 = vmatmul.mubr.f32.gmra.mrb[0].mxu0 %v990
  %v1916 = vpop.f32.mrb[0].mxu0
  %v1917 = vadd.f32 0.0, %v1916
  %v1918 = vpop.f32.mrb[0].mxu0
  %v1919 = vadd.f32 0.0, %v1918
  %1920 = vmatprep.mubr.f32.mxu0 %v995
  %1921 = vmatmul.mubr.f32.gmra.mrb[0].mxu0 %v994
  %v1922 = vpop.f32.mrb[0].mxu0
  %v1923 = vadd.f32 0.0, %v1922
  %v1924 = vpop.f32.mrb[0].mxu0
  %v1925 = vadd.f32 0.0, %v1924
  %1926 = vdwg.mxu0
  %1927 = vmatprep.subr.mxu0 %v1261
  %1928 = vmatpush1.msra.mxu0 %v1260
  %1929 = vmatprep.subr.mxu0 %v1269
  %1930 = vmatpush1.msra.mxu0 %v1268
  %1931 = vmatprep.subr.mxu0 %v1277
  %1932 = vmatpush1.msra.mxu0 %v1276
  %1933 = vmatprep.subr.mxu0 %v1285
  %1934 = vmatpush1.msra.mxu0 %v1284
  %1935 = vmatprep.subr.mxu0 %v1293
  %1936 = vmatpush1.msra.mxu0 %v1292
  %1937 = vmatprep.subr.mxu0 %v1301
  %1938 = vmatpush1.msra.mxu0 %v1300
  %1939 = vmatprep.subr.mxu0 %v1309
  %1940 = vmatpush1.msra.mxu0 %v1308
  %1941 = vmatprep.subr.mxu0 %v1317
  %1942 = vmatpush1.msra.mxu0 %v1316
  %1943 = vmatprep.subr.mxu0 %v1325
  %1944 = vmatpush1.msra.mxu0 %v1324
  %1945 = vmatprep.subr.mxu0 %v1333
  %1946 = vmatpush1.msra.mxu0 %v1332
  %1947 = vmatprep.subr.mxu0 %v1341
  %1948 = vmatpush1.msra.mxu0 %v1340
  %1949 = vmatprep.subr.mxu0 %v1349
  %1950 = vmatpush1.msra.mxu0 %v1348
  %1951 = vmatprep.subr.mxu0 %v1357
  %1952 = vmatpush1.msra.mxu0 %v1356
  %1953 = vmatprep.subr.mxu0 %v1365
  %1954 = vmatpush1.msra.mxu0 %v1364
  %1955 = vmatprep.subr.mxu0 %v1373
  %1956 = vmatpush1.msra.mxu0 %v1372
  %1957 = vmatprep.subr.mxu0 %v1381
  %1958 = vmatpush1.msra.mxu0 %v1380
  %1959 = vmatprep.subr.mxu0 %v1389
  %1960 = vmatpush1.msra.mxu0 %v1388
  %1961 = vmatprep.subr.mxu0 %v1397
  %1962 = vmatpush1.msra.mxu0 %v1396
  %1963 = vmatprep.subr.mxu0 %v1405
  %1964 = vmatpush1.msra.mxu0 %v1404
  %1965 = vmatprep.subr.mxu0 %v1413
  %1966 = vmatpush1.msra.mxu0 %v1412
  %1967 = vmatprep.subr.mxu0 %v1421
  %1968 = vmatpush1.msra.mxu0 %v1420
  %1969 = vmatprep.subr.mxu0 %v1429
  %1970 = vmatpush1.msra.mxu0 %v1428
  %1971 = vmatprep.subr.mxu0 %v1437
  %1972 = vmatpush1.msra.mxu0 %v1436
  %1973 = vmatprep.subr.mxu0 %v1445
  %1974 = vmatpush1.msra.mxu0 %v1444
  %1975 = vmatprep.subr.mxu0 %v1453
  %1976 = vmatpush1.msra.mxu0 %v1452
  %1977 = vmatprep.subr.mxu0 %v1461
  %1978 = vmatpush1.msra.mxu0 %v1460
  %1979 = vmatprep.subr.mxu0 %v1469
  %1980 = vmatpush1.msra.mxu0 %v1468
  %1981 = vmatprep.subr.mxu0 %v1477
  %1982 = vmatpush1.msra.mxu0 %v1476
  %1983 = vmatprep.subr.mxu0 %v1485
  %1984 = vmatpush1.msra.mxu0 %v1484
  %1985 = vmatprep.subr.mxu0 %v1493
  %1986 = vmatpush1.msra.mxu0 %v1492
  %1987 = vmatprep.subr.mxu0 %v1501
  %1988 = vmatpush1.msra.mxu0 %v1500
  %1989 = vmatprep.subr.mxu0 %v1509
  %1990 = vmatpush1.msra.mxu0 %v1508
  %1991 = vmatprep.mubr.f32.mxu0 %v989
  %1992 = vmatmul.mubr.f32.gmra.mrb[0].mxu0 %v988
  %v1993 = vpop.f32.mrb[0].mxu0
  %v1994 = vadd.f32 %v1911, %v1993
  %v1995 = vpop.f32.mrb[0].mxu0
  %v1996 = vadd.f32 %v1913, %v1995
  %1997 = vmatprep.mubr.f32.mxu0 %v993
  %1998 = vmatmul.mubr.f32.gmra.mrb[0].mxu0 %v992
  %v1999 = vpop.f32.mrb[0].mxu0
  %v2000 = vadd.f32 %v1917, %v1999
  %v2001 = vpop.f32.mrb[0].mxu0
  %v2002 = vadd.f32 %v1919, %v2001
  %2003 = vmatprep.mubr.f32.mxu0 %v997
  %2004 = vmatmul.mubr.f32.gmra.mrb[0].mxu0 %v996
  %v2005 = vpop.f32.mrb[0].mxu0
  %v2006 = vadd.f32 %v1923, %v2005
  %v2007 = vpop.f32.mrb[0].mxu0
  %v2008 = vadd.f32 %v1925, %v2007
  %2009 = vdwg.mxu0
  %2010 = vmatprep.subr.mxu0 %v1007
  %2011 = vmatpush1.msra.mxu0 %v1006
  %2012 = vmatprep.subr.mxu0 %v1015
  %2013 = vmatpush1.msra.mxu0 %v1014
  %2014 = vmatprep.subr.mxu0 %v1023
  %2015 = vmatpush1.msra.mxu0 %v1022
  %2016 = vmatprep.subr.mxu0 %v1031
  %2017 = vmatpush1.msra.mxu0 %v1030
  %2018 = vmatprep.subr.mxu0 %v1039
  %2019 = vmatpush1.msra.mxu0 %v1038
  %2020 = vmatprep.subr.mxu0 %v1047
  %2021 = vmatpush1.msra.mxu0 %v1046
  %2022 = vmatprep.subr.mxu0 %v1055
  %2023 = vmatpush1.msra.mxu0 %v1054
  %2024 = vmatprep.subr.mxu0 %v1063
  %2025 = vmatpush1.msra.mxu0 %v1062
  %2026 = vmatprep.subr.mxu0 %v1071
  %2027 = vmatpush1.msra.mxu0 %v1070
  %2028 = vmatprep.subr.mxu0 %v1079
  %2029 = vmatpush1.msra.mxu0 %v1078
  %2030 = vmatprep.subr.mxu0 %v1087
  %2031 = vmatpush1.msra.mxu0 %v1086
  %2032 = vmatprep.subr.mxu0 %v1095
  %2033 = vmatpush1.msra.mxu0 %v1094
  %2034 = vmatprep.subr.mxu0 %v1103
  %2035 = vmatpush1.msra.mxu0 %v1102
  %2036 = vmatprep.subr.mxu0 %v1111
  %2037 = vmatpush1.msra.mxu0 %v1110
  %2038 = vmatprep.subr.mxu0 %v1119
  %2039 = vmatpush1.msra.mxu0 %v1118
  %2040 = vmatprep.subr.mxu0 %v1127
  %2041 = vmatpush1.msra.mxu0 %v1126
  %2042 = vmatprep.subr.mxu0 %v1135
  %2043 = vmatpush1.msra.mxu0 %v1134
  %2044 = vmatprep.subr.mxu0 %v1143
  %2045 = vmatpush1.msra.mxu0 %v1142
  %2046 = vmatprep.subr.mxu0 %v1151
  %2047 = vmatpush1.msra.mxu0 %v1150
  %2048 = vmatprep.subr.mxu0 %v1159
  %2049 = vmatpush1.msra.mxu0 %v1158
  %2050 = vmatprep.subr.mxu0 %v1167
  %2051 = vmatpush1.msra.mxu0 %v1166
  %2052 = vmatprep.subr.mxu0 %v1175
  %2053 = vmatpush1.msra.mxu0 %v1174
  %2054 = vmatprep.subr.mxu0 %v1183
  %2055 = vmatpush1.msra.mxu0 %v1182
  %2056 = vmatprep.subr.mxu0 %v1191
  %2057 = vmatpush1.msra.mxu0 %v1190
  %2058 = vmatprep.subr.mxu0 %v1199
  %2059 = vmatpush1.msra.mxu0 %v1198
  %2060 = vmatprep.subr.mxu0 %v1207
  %2061 = vmatpush1.msra.mxu0 %v1206
  %2062 = vmatprep.subr.mxu0 %v1215
  %2063 = vmatpush1.msra.mxu0 %v1214
  %2064 = vmatprep.subr.mxu0 %v1223
  %2065 = vmatpush1.msra.mxu0 %v1222
  %2066 = vmatprep.subr.mxu0 %v1231
  %2067 = vmatpush1.msra.mxu0 %v1230
  %2068 = vmatprep.subr.mxu0 %v1239
  %2069 = vmatpush1.msra.mxu0 %v1238
  %2070 = vmatprep.subr.mxu0 %v1247
  %2071 = vmatpush1.msra.mxu0 %v1246
  %2072 = vmatprep.subr.mxu0 %v1255
  %2073 = vmatpush1.msra.mxu0 %v1254
  %2074 = vmatprep.mubr.f32.mxu0 %v987
  %2075 = vmatmul.mubr.f32.gmra.mrb[0].mxu0 %v986
  %v2076 = vpop.f32.mrb[0].mxu0
  %v2077 = vadd.f32 0.0, %v2076
  %v2078 = vpop.f32.mrb[0].mxu0
  %v2079 = vadd.f32 0.0, %v2078
  %2080 = vmatprep.mubr.f32.mxu0 %v991
  %2081 = vmatmul.mubr.f32.gmra.mrb[0].mxu0 %v990
  %v2082 = vpop.f32.mrb[0].mxu0
  %v2083 = vadd.f32 0.0, %v2082
  %v2084 = vpop.f32.mrb[0].mxu0
  %v2085 = vadd.f32 0.0, %v2084
  %2086 = vmatprep.mubr.f32.mxu0 %v995
  %2087 = vmatmul.mubr.f32.gmra.mrb[0].mxu0 %v994
  %v2088 = vpop.f32.mrb[0].mxu0
  %v2089 = vadd.f32 0.0, %v2088
  %v2090 = vpop.f32.mrb[0].mxu0
  %v2091 = vadd.f32 0.0, %v2090
  %2092 = vdwg.mxu0
  %2093 = vmatprep.subr.mxu0 %v1263
  %2094 = vmatpush1.msra.mxu0 %v1262
  %2095 = vmatprep.subr.mxu0 %v1271
  %2096 = vmatpush1.msra.mxu0 %v1270
  %2097 = vmatprep.subr.mxu0 %v1279
  %2098 = vmatpush1.msra.mxu0 %v1278
  %2099 = vmatprep.subr.mxu0 %v1287
  %2100 = vmatpush1.msra.mxu0 %v1286
  %2101 = vmatprep.subr.mxu0 %v1295
  %2102 = vmatpush1.msra.mxu0 %v1294
  %2103 = vmatprep.subr.mxu0 %v1303
  %2104 = vmatpush1.msra.mxu0 %v1302
  %2105 = vmatprep.subr.mxu0 %v1311
  %2106 = vmatpush1.msra.mxu0 %v1310
  %2107 = vmatprep.subr.mxu0 %v1319
  %2108 = vmatpush1.msra.mxu0 %v1318
  %2109 = vmatprep.subr.mxu0 %v1327
  %2110 = vmatpush1.msra.mxu0 %v1326
  %2111 = vmatprep.subr.mxu0 %v1335
  %2112 = vmatpush1.msra.mxu0 %v1334
  %2113 = vmatprep.subr.mxu0 %v1343
  %2114 = vmatpush1.msra.mxu0 %v1342
  %2115 = vmatprep.subr.mxu0 %v1351
  %2116 = vmatpush1.msra.mxu0 %v1350
  %2117 = vmatprep.subr.mxu0 %v1359
  %2118 = vmatpush1.msra.mxu0 %v1358
  %2119 = vmatprep.subr.mxu0 %v1367
  %2120 = vmatpush1.msra.mxu0 %v1366
  %2121 = vmatprep.subr.mxu0 %v1375
  %2122 = vmatpush1.msra.mxu0 %v1374
  %2123 = vmatprep.subr.mxu0 %v1383
  %2124 = vmatpush1.msra.mxu0 %v1382
  %2125 = vmatprep.subr.mxu0 %v1391
  %2126 = vmatpush1.msra.mxu0 %v1390
  %2127 = vmatprep.subr.mxu0 %v1399
  %2128 = vmatpush1.msra.mxu0 %v1398
  %2129 = vmatprep.subr.mxu0 %v1407
  %2130 = vmatpush1.msra.mxu0 %v1406
  %2131 = vmatprep.subr.mxu0 %v1415
  %2132 = vmatpush1.msra.mxu0 %v1414
  %2133 = vmatprep.subr.mxu0 %v1423
  %2134 = vmatpush1.msra.mxu0 %v1422
  %2135 = vmatprep.subr.mxu0 %v1431
  %2136 = vmatpush1.msra.mxu0 %v1430
  %2137 = vmatprep.subr.mxu0 %v1439
  %2138 = vmatpush1.msra.mxu0 %v1438
  %2139 = vmatprep.subr.mxu0 %v1447
  %2140 = vmatpush1.msra.mxu0 %v1446
  %2141 = vmatprep.subr.mxu0 %v1455
  %2142 = vmatpush1.msra.mxu0 %v1454
  %2143 = vmatprep.subr.mxu0 %v1463
  %2144 = vmatpush1.msra.mxu0 %v1462
  %2145 = vmatprep.subr.mxu0 %v1471
  %2146 = vmatpush1.msra.mxu0 %v1470
  %2147 = vmatprep.subr.mxu0 %v1479
  %2148 = vmatpush1.msra.mxu0 %v1478
  %2149 = vmatprep.subr.mxu0 %v1487
  %2150 = vmatpush1.msra.mxu0 %v1486
  %2151 = vmatprep.subr.mxu0 %v1495
  %2152 = vmatpush1.msra.mxu0 %v1494
  %2153 = vmatprep.subr.mxu0 %v1503
  %2154 = vmatpush1.msra.mxu0 %v1502
  %2155 = vmatprep.subr.mxu0 %v1511
  %2156 = vmatpush1.msra.mxu0 %v1510
  %2157 = vmatprep.mubr.f32.mxu0 %v989
  %2158 = vmatmul.mubr.f32.gmra.mrb[0].mxu0 %v988
  %v2159 = vpop.f32.mrb[0].mxu0
  %v2160 = vadd.f32 %v2077, %v2159
  %v2161 = vpop.f32.mrb[0].mxu0
  %v2162 = vadd.f32 %v2079, %v2161
  %2163 = vmatprep.mubr.f32.mxu0 %v993
  %2164 = vmatmul.mubr.f32.gmra.mrb[0].mxu0 %v992
  %v2165 = vpop.f32.mrb[0].mxu0
  %v2166 = vadd.f32 %v2083, %v2165
  %v2167 = vpop.f32.mrb[0].mxu0
  %v2168 = vadd.f32 %v2085, %v2167
  %2169 = vmatprep.mubr.f32.mxu0 %v997
  %2170 = vmatmul.mubr.f32.gmra.mrb[0].mxu0 %v996
  %v2171 = vpop.f32.mrb[0].mxu0
  %v2172 = vadd.f32 %v2089, %v2171
  %v2173 = vpop.f32.mrb[0].mxu0
  %v2174 = vadd.f32 %v2091, %v2173
  %2175 = vdwg.mxu0
  %s2176 = scalar_lea.vmem %s5, 16
  %v2177 = vld [vmem:[%s2176] sm:$0xff]
  %v2178 = vld [vmem:[%s2176 + $0x8] sm:$0xff]
  %s2179 = scalar_lea.vmem %s4, 4096
  %v2180 = vld [vmem:[%s2179] sm:$0xff]
  %v2181 = vld [vmem:[%s2179 + $0x8] sm:$0xff]
  %v2182 = vld [vmem:[%s2179 + $0x10] sm:$0xff]
  %v2183 = vld [vmem:[%s2179 + $0x18] sm:$0xff]
  %v2184 = vld [vmem:[%s2179 + $0x20] sm:$0xff]
  %v2185 = vld [vmem:[%s2179 + $0x28] sm:$0xff]
  %v2186 = vld [vmem:[%s2179 + $0x30] sm:$0xff]
  %v2187 = vld [vmem:[%s2179 + $0x38] sm:$0xff]
  %v2188 = vld [vmem:[%s2179 + $0x40] sm:$0xff]
  %v2189 = vld [vmem:[%s2179 + $0x48] sm:$0xff]
  %v2190 = vld [vmem:[%s2179 + $0x50] sm:$0xff]
  %v2191 = vld [vmem:[%s2179 + $0x58] sm:$0xff]
  %v2192 = vld [vmem:[%s2179 + $0x60] sm:$0xff]
  %v2193 = vld [vmem:[%s2179 + $0x68] sm:$0xff]
  %v2194 = vld [vmem:[%s2179 + $0x70] sm:$0xff]
  %v2195 = vld [vmem:[%s2179 + $0x78] sm:$0xff]
  %v2196 = vld [vmem:[%s2179 + $0x80] sm:$0xff]
  %v2197 = vld [vmem:[%s2179 + $0x88] sm:$0xff]
  %v2198 = vld [vmem:[%s2179 + $0x90] sm:$0xff]
  %v2199 = vld [vmem:[%s2179 + $0x98] sm:$0xff]
  %v2200 = vld [vmem:[%s2179 + $0xa0] sm:$0xff]
  %v2201 = vld [vmem:[%s2179 + $0xa8] sm:$0xff]
  %v2202 = vld [vmem:[%s2179 + $0xb0] sm:$0xff]
  %v2203 = vld [vmem:[%s2179 + $0xb8] sm:$0xff]
  %v2204 = vld [vmem:[%s2179 + $0xc0] sm:$0xff]
  %v2205 = vld [vmem:[%s2179 + $0xc8] sm:$0xff]
  %v2206 = vld [vmem:[%s2179 + $0xd0] sm:$0xff]
  %v2207 = vld [vmem:[%s2179 + $0xd8] sm:$0xff]
  %v2208 = vld [vmem:[%s2179 + $0xe0] sm:$0xff]
  %v2209 = vld [vmem:[%s2179 + $0xe8] sm:$0xff]
  %v2210 = vld [vmem:[%s2179 + $0xf0] sm:$0xff]
  %v2211 = vld [vmem:[%s2179 + $0xf8] sm:$0xff]
  %v2212 = vld [vmem:[%s2179 + $0x100] sm:$0xff]
  %v2213 = vld [vmem:[%s2179 + $0x108] sm:$0xff]
  %v2214 = vld [vmem:[%s2179 + $0x110] sm:$0xff]
  %v2215 = vld [vmem:[%s2179 + $0x118] sm:$0xff]
  %v2216 = vld [vmem:[%s2179 + $0x120] sm:$0xff]
  %v2217 = vld [vmem:[%s2179 + $0x128] sm:$0xff]
  %v2218 = vld [vmem:[%s2179 + $0x130] sm:$0xff]
  %v2219 = vld [vmem:[%s2179 + $0x138] sm:$0xff]
  %v2220 = vld [vmem:[%s2179 + $0x140] sm:$0xff]
  %v2221 = vld [vmem:[%s2179 + $0x148] sm:$0xff]
  %v2222 = vld [vmem:[%s2179 + $0x150] sm:$0xff]
  %v2223 = vld [vmem:[%s2179 + $0x158] sm:$0xff]
  %v2224 = vld [vmem:[%s2179 + $0x160] sm:$0xff]
  %v2225 = vld [vmem:[%s2179 + $0x168] sm:$0xff]
  %v2226 = vld [vmem:[%s2179 + $0x170] sm:$0xff]
  %v2227 = vld [vmem:[%s2179 + $0x178] sm:$0xff]
  %v2228 = vld [vmem:[%s2179 + $0x180] sm:$0xff]
  %v2229 = vld [vmem:[%s2179 + $0x188] sm:$0xff]
  %v2230 = vld [vmem:[%s2179 + $0x190] sm:$0xff]
  %v2231 = vld [vmem:[%s2179 + $0x198] sm:$0xff]
  %v2232 = vld [vmem:[%s2179 + $0x1a0] sm:$0xff]
  %v2233 = vld [vmem:[%s2179 + $0x1a8] sm:$0xff]
  %v2234 = vld [vmem:[%s2179 + $0x1b0] sm:$0xff]
  %v2235 = vld [vmem:[%s2179 + $0x1b8] sm:$0xff]
  %v2236 = vld [vmem:[%s2179 + $0x1c0] sm:$0xff]
  %v2237 = vld [vmem:[%s2179 + $0x1c8] sm:$0xff]
  %v2238 = vld [vmem:[%s2179 + $0x1d0] sm:$0xff]
  %v2239 = vld [vmem:[%s2179 + $0x1d8] sm:$0xff]
  %v2240 = vld [vmem:[%s2179 + $0x1e0] sm:$0xff]
  %v2241 = vld [vmem:[%s2179 + $0x1e8] sm:$0xff]
  %v2242 = vld [vmem:[%s2179 + $0x1f0] sm:$0xff]
  %v2243 = vld [vmem:[%s2179 + $0x1f8] sm:$0xff]
  %v2244 = vld [vmem:[%s2179 + $0x200] sm:$0xff]
  %v2245 = vld [vmem:[%s2179 + $0x208] sm:$0xff]
  %v2246 = vld [vmem:[%s2179 + $0x210] sm:$0xff]
  %v2247 = vld [vmem:[%s2179 + $0x218] sm:$0xff]
  %v2248 = vld [vmem:[%s2179 + $0x220] sm:$0xff]
  %v2249 = vld [vmem:[%s2179 + $0x228] sm:$0xff]
  %v2250 = vld [vmem:[%s2179 + $0x230] sm:$0xff]
  %v2251 = vld [vmem:[%s2179 + $0x238] sm:$0xff]
  %v2252 = vld [vmem:[%s2179 + $0x240] sm:$0xff]
  %v2253 = vld [vmem:[%s2179 + $0x248] sm:$0xff]
  %v2254 = vld [vmem:[%s2179 + $0x250] sm:$0xff]
  %v2255 = vld [vmem:[%s2179 + $0x258] sm:$0xff]
  %v2256 = vld [vmem:[%s2179 + $0x260] sm:$0xff]
  %v2257 = vld [vmem:[%s2179 + $0x268] sm:$0xff]
  %v2258 = vld [vmem:[%s2179 + $0x270] sm:$0xff]
  %v2259 = vld [vmem:[%s2179 + $0x278] sm:$0xff]
  %v2260 = vld [vmem:[%s2179 + $0x280] sm:$0xff]
  %v2261 = vld [vmem:[%s2179 + $0x288] sm:$0xff]
  %v2262 = vld [vmem:[%s2179 + $0x290] sm:$0xff]
  %v2263 = vld [vmem:[%s2179 + $0x298] sm:$0xff]
  %v2264 = vld [vmem:[%s2179 + $0x2a0] sm:$0xff]
  %v2265 = vld [vmem:[%s2179 + $0x2a8] sm:$0xff]
  %v2266 = vld [vmem:[%s2179 + $0x2b0] sm:$0xff]
  %v2267 = vld [vmem:[%s2179 + $0x2b8] sm:$0xff]
  %v2268 = vld [vmem:[%s2179 + $0x2c0] sm:$0xff]
  %v2269 = vld [vmem:[%s2179 + $0x2c8] sm:$0xff]
  %v2270 = vld [vmem:[%s2179 + $0x2d0] sm:$0xff]
  %v2271 = vld [vmem:[%s2179 + $0x2d8] sm:$0xff]
  %v2272 = vld [vmem:[%s2179 + $0x2e0] sm:$0xff]
  %v2273 = vld [vmem:[%s2179 + $0x2e8] sm:$0xff]
  %v2274 = vld [vmem:[%s2179 + $0x2f0] sm:$0xff]
  %v2275 = vld [vmem:[%s2179 + $0x2f8] sm:$0xff]
  %v2276 = vld [vmem:[%s2179 + $0x300] sm:$0xff]
  %v2277 = vld [vmem:[%s2179 + $0x308] sm:$0xff]
  %v2278 = vld [vmem:[%s2179 + $0x310] sm:$0xff]
  %v2279 = vld [vmem:[%s2179 + $0x318] sm:$0xff]
  %v2280 = vld [vmem:[%s2179 + $0x320] sm:$0xff]
  %v2281 = vld [vmem:[%s2179 + $0x328] sm:$0xff]
  %v2282 = vld [vmem:[%s2179 + $0x330] sm:$0xff]
  %v2283 = vld [vmem:[%s2179 + $0x338] sm:$0xff]
  %v2284 = vld [vmem:[%s2179 + $0x340] sm:$0xff]
  %v2285 = vld [vmem:[%s2179 + $0x348] sm:$0xff]
  %v2286 = vld [vmem:[%s2179 + $0x350] sm:$0xff]
  %v2287 = vld [vmem:[%s2179 + $0x358] sm:$0xff]
  %v2288 = vld [vmem:[%s2179 + $0x360] sm:$0xff]
  %v2289 = vld [vmem:[%s2179 + $0x368] sm:$0xff]
  %v2290 = vld [vmem:[%s2179 + $0x370] sm:$0xff]
  %v2291 = vld [vmem:[%s2179 + $0x378] sm:$0xff]
  %v2292 = vld [vmem:[%s2179 + $0x380] sm:$0xff]
  %v2293 = vld [vmem:[%s2179 + $0x388] sm:$0xff]
  %v2294 = vld [vmem:[%s2179 + $0x390] sm:$0xff]
  %v2295 = vld [vmem:[%s2179 + $0x398] sm:$0xff]
  %v2296 = vld [vmem:[%s2179 + $0x3a0] sm:$0xff]
  %v2297 = vld [vmem:[%s2179 + $0x3a8] sm:$0xff]
  %v2298 = vld [vmem:[%s2179 + $0x3b0] sm:$0xff]
  %v2299 = vld [vmem:[%s2179 + $0x3b8] sm:$0xff]
  %v2300 = vld [vmem:[%s2179 + $0x3c0] sm:$0xff]
  %v2301 = vld [vmem:[%s2179 + $0x3c8] sm:$0xff]
  %v2302 = vld [vmem:[%s2179 + $0x3d0] sm:$0xff]
  %v2303 = vld [vmem:[%s2179 + $0x3d8] sm:$0xff]
  %v2304 = vld [vmem:[%s2179 + $0x3e0] sm:$0xff]
  %v2305 = vld [vmem:[%s2179 + $0x3e8] sm:$0xff]
  %v2306 = vld [vmem:[%s2179 + $0x3f0] sm:$0xff]
  %v2307 = vld [vmem:[%s2179 + $0x3f8] sm:$0xff]
  %v2308 = vld [vmem:[%s2179 + $0x400] sm:$0xff]
  %v2309 = vld [vmem:[%s2179 + $0x408] sm:$0xff]
  %v2310 = vld [vmem:[%s2179 + $0x410] sm:$0xff]
  %v2311 = vld [vmem:[%s2179 + $0x418] sm:$0xff]
  %v2312 = vld [vmem:[%s2179 + $0x420] sm:$0xff]
  %v2313 = vld [vmem:[%s2179 + $0x428] sm:$0xff]
  %v2314 = vld [vmem:[%s2179 + $0x430] sm:$0xff]
  %v2315 = vld [vmem:[%s2179 + $0x438] sm:$0xff]
  %v2316 = vld [vmem:[%s2179 + $0x440] sm:$0xff]
  %v2317 = vld [vmem:[%s2179 + $0x448] sm:$0xff]
  %v2318 = vld [vmem:[%s2179 + $0x450] sm:$0xff]
  %v2319 = vld [vmem:[%s2179 + $0x458] sm:$0xff]
  %v2320 = vld [vmem:[%s2179 + $0x460] sm:$0xff]
  %v2321 = vld [vmem:[%s2179 + $0x468] sm:$0xff]
  %v2322 = vld [vmem:[%s2179 + $0x470] sm:$0xff]
  %v2323 = vld [vmem:[%s2179 + $0x478] sm:$0xff]
  %v2324 = vld [vmem:[%s2179 + $0x480] sm:$0xff]
  %v2325 = vld [vmem:[%s2179 + $0x488] sm:$0xff]
  %v2326 = vld [vmem:[%s2179 + $0x490] sm:$0xff]
  %v2327 = vld [vmem:[%s2179 + $0x498] sm:$0xff]
  %v2328 = vld [vmem:[%s2179 + $0x4a0] sm:$0xff]
  %v2329 = vld [vmem:[%s2179 + $0x4a8] sm:$0xff]
  %v2330 = vld [vmem:[%s2179 + $0x4b0] sm:$0xff]
  %v2331 = vld [vmem:[%s2179 + $0x4b8] sm:$0xff]
  %v2332 = vld [vmem:[%s2179 + $0x4c0] sm:$0xff]
  %v2333 = vld [vmem:[%s2179 + $0x4c8] sm:$0xff]
  %v2334 = vld [vmem:[%s2179 + $0x4d0] sm:$0xff]
  %v2335 = vld [vmem:[%s2179 + $0x4d8] sm:$0xff]
  %v2336 = vld [vmem:[%s2179 + $0x4e0] sm:$0xff]
  %v2337 = vld [vmem:[%s2179 + $0x4e8] sm:$0xff]
  %v2338 = vld [vmem:[%s2179 + $0x4f0] sm:$0xff]
  %v2339 = vld [vmem:[%s2179 + $0x4f8] sm:$0xff]
  %v2340 = vld [vmem:[%s2179 + $0x500] sm:$0xff]
  %v2341 = vld [vmem:[%s2179 + $0x508] sm:$0xff]
  %v2342 = vld [vmem:[%s2179 + $0x510] sm:$0xff]
  %v2343 = vld [vmem:[%s2179 + $0x518] sm:$0xff]
  %v2344 = vld [vmem:[%s2179 + $0x520] sm:$0xff]
  %v2345 = vld [vmem:[%s2179 + $0x528] sm:$0xff]
  %v2346 = vld [vmem:[%s2179 + $0x530] sm:$0xff]
  %v2347 = vld [vmem:[%s2179 + $0x538] sm:$0xff]
  %v2348 = vld [vmem:[%s2179 + $0x540] sm:$0xff]
  %v2349 = vld [vmem:[%s2179 + $0x548] sm:$0xff]
  %v2350 = vld [vmem:[%s2179 + $0x550] sm:$0xff]
  %v2351 = vld [vmem:[%s2179 + $0x558] sm:$0xff]
  %v2352 = vld [vmem:[%s2179 + $0x560] sm:$0xff]
  %v2353 = vld [vmem:[%s2179 + $0x568] sm:$0xff]
  %v2354 = vld [vmem:[%s2179 + $0x570] sm:$0xff]
  %v2355 = vld [vmem:[%s2179 + $0x578] sm:$0xff]
  %v2356 = vld [vmem:[%s2179 + $0x580] sm:$0xff]
  %v2357 = vld [vmem:[%s2179 + $0x588] sm:$0xff]
  %v2358 = vld [vmem:[%s2179 + $0x590] sm:$0xff]
  %v2359 = vld [vmem:[%s2179 + $0x598] sm:$0xff]
  %v2360 = vld [vmem:[%s2179 + $0x5a0] sm:$0xff]
  %v2361 = vld [vmem:[%s2179 + $0x5a8] sm:$0xff]
  %v2362 = vld [vmem:[%s2179 + $0x5b0] sm:$0xff]
  %v2363 = vld [vmem:[%s2179 + $0x5b8] sm:$0xff]
  %v2364 = vld [vmem:[%s2179 + $0x5c0] sm:$0xff]
  %v2365 = vld [vmem:[%s2179 + $0x5c8] sm:$0xff]
  %v2366 = vld [vmem:[%s2179 + $0x5d0] sm:$0xff]
  %v2367 = vld [vmem:[%s2179 + $0x5d8] sm:$0xff]
  %v2368 = vld [vmem:[%s2179 + $0x5e0] sm:$0xff]
  %v2369 = vld [vmem:[%s2179 + $0x5e8] sm:$0xff]
  %v2370 = vld [vmem:[%s2179 + $0x5f0] sm:$0xff]
  %v2371 = vld [vmem:[%s2179 + $0x5f8] sm:$0xff]
  %v2372 = vld [vmem:[%s2179 + $0x600] sm:$0xff]
  %v2373 = vld [vmem:[%s2179 + $0x608] sm:$0xff]
  %v2374 = vld [vmem:[%s2179 + $0x610] sm:$0xff]
  %v2375 = vld [vmem:[%s2179 + $0x618] sm:$0xff]
  %v2376 = vld [vmem:[%s2179 + $0x620] sm:$0xff]
  %v2377 = vld [vmem:[%s2179 + $0x628] sm:$0xff]
  %v2378 = vld [vmem:[%s2179 + $0x630] sm:$0xff]
  %v2379 = vld [vmem:[%s2179 + $0x638] sm:$0xff]
  %v2380 = vld [vmem:[%s2179 + $0x640] sm:$0xff]
  %v2381 = vld [vmem:[%s2179 + $0x648] sm:$0xff]
  %v2382 = vld [vmem:[%s2179 + $0x650] sm:$0xff]
  %v2383 = vld [vmem:[%s2179 + $0x658] sm:$0xff]
  %v2384 = vld [vmem:[%s2179 + $0x660] sm:$0xff]
  %v2385 = vld [vmem:[%s2179 + $0x668] sm:$0xff]
  %v2386 = vld [vmem:[%s2179 + $0x670] sm:$0xff]
  %v2387 = vld [vmem:[%s2179 + $0x678] sm:$0xff]
  %v2388 = vld [vmem:[%s2179 + $0x680] sm:$0xff]
  %v2389 = vld [vmem:[%s2179 + $0x688] sm:$0xff]
  %v2390 = vld [vmem:[%s2179 + $0x690] sm:$0xff]
  %v2391 = vld [vmem:[%s2179 + $0x698] sm:$0xff]
  %v2392 = vld [vmem:[%s2179 + $0x6a0] sm:$0xff]
  %v2393 = vld [vmem:[%s2179 + $0x6a8] sm:$0xff]
  %v2394 = vld [vmem:[%s2179 + $0x6b0] sm:$0xff]
  %v2395 = vld [vmem:[%s2179 + $0x6b8] sm:$0xff]
  %v2396 = vld [vmem:[%s2179 + $0x6c0] sm:$0xff]
  %v2397 = vld [vmem:[%s2179 + $0x6c8] sm:$0xff]
  %v2398 = vld [vmem:[%s2179 + $0x6d0] sm:$0xff]
  %v2399 = vld [vmem:[%s2179 + $0x6d8] sm:$0xff]
  %v2400 = vld [vmem:[%s2179 + $0x6e0] sm:$0xff]
  %v2401 = vld [vmem:[%s2179 + $0x6e8] sm:$0xff]
  %v2402 = vld [vmem:[%s2179 + $0x6f0] sm:$0xff]
  %v2403 = vld [vmem:[%s2179 + $0x6f8] sm:$0xff]
  %v2404 = vld [vmem:[%s2179 + $0x700] sm:$0xff]
  %v2405 = vld [vmem:[%s2179 + $0x708] sm:$0xff]
  %v2406 = vld [vmem:[%s2179 + $0x710] sm:$0xff]
  %v2407 = vld [vmem:[%s2179 + $0x718] sm:$0xff]
  %v2408 = vld [vmem:[%s2179 + $0x720] sm:$0xff]
  %v2409 = vld [vmem:[%s2179 + $0x728] sm:$0xff]
  %v2410 = vld [vmem:[%s2179 + $0x730] sm:$0xff]
  %v2411 = vld [vmem:[%s2179 + $0x738] sm:$0xff]
  %v2412 = vld [vmem:[%s2179 + $0x740] sm:$0xff]
  %v2413 = vld [vmem:[%s2179 + $0x748] sm:$0xff]
  %v2414 = vld [vmem:[%s2179 + $0x750] sm:$0xff]
  %v2415 = vld [vmem:[%s2179 + $0x758] sm:$0xff]
  %v2416 = vld [vmem:[%s2179 + $0x760] sm:$0xff]
  %v2417 = vld [vmem:[%s2179 + $0x768] sm:$0xff]
  %v2418 = vld [vmem:[%s2179 + $0x770] sm:$0xff]
  %v2419 = vld [vmem:[%s2179 + $0x778] sm:$0xff]
  %v2420 = vld [vmem:[%s2179 + $0x780] sm:$0xff]
  %v2421 = vld [vmem:[%s2179 + $0x788] sm:$0xff]
  %v2422 = vld [vmem:[%s2179 + $0x790] sm:$0xff]
  %v2423 = vld [vmem:[%s2179 + $0x798] sm:$0xff]
  %v2424 = vld [vmem:[%s2179 + $0x7a0] sm:$0xff]
  %v2425 = vld [vmem:[%s2179 + $0x7a8] sm:$0xff]
  %v2426 = vld [vmem:[%s2179 + $0x7b0] sm:$0xff]
  %v2427 = vld [vmem:[%s2179 + $0x7b8] sm:$0xff]
  %v2428 = vld [vmem:[%s2179 + $0x7c0] sm:$0xff]
  %v2429 = vld [vmem:[%s2179 + $0x7c8] sm:$0xff]
  %v2430 = vld [vmem:[%s2179 + $0x7d0] sm:$0xff]
  %v2431 = vld [vmem:[%s2179 + $0x7d8] sm:$0xff]
  %v2432 = vld [vmem:[%s2179 + $0x7e0] sm:$0xff]
  %v2433 = vld [vmem:[%s2179 + $0x7e8] sm:$0xff]
  %v2434 = vld [vmem:[%s2179 + $0x7f0] sm:$0xff]
  %v2435 = vld [vmem:[%s2179 + $0x7f8] sm:$0xff]
  %v2436 = vld [vmem:[%s2179 + $0x800] sm:$0xff]
  %v2437 = vld [vmem:[%s2179 + $0x808] sm:$0xff]
  %v2438 = vld [vmem:[%s2179 + $0x810] sm:$0xff]
  %v2439 = vld [vmem:[%s2179 + $0x818] sm:$0xff]
  %v2440 = vld [vmem:[%s2179 + $0x820] sm:$0xff]
  %v2441 = vld [vmem:[%s2179 + $0x828] sm:$0xff]
  %v2442 = vld [vmem:[%s2179 + $0x830] sm:$0xff]
  %v2443 = vld [vmem:[%s2179 + $0x838] sm:$0xff]
  %v2444 = vld [vmem:[%s2179 + $0x840] sm:$0xff]
  %v2445 = vld [vmem:[%s2179 + $0x848] sm:$0xff]
  %v2446 = vld [vmem:[%s2179 + $0x850] sm:$0xff]
  %v2447 = vld [vmem:[%s2179 + $0x858] sm:$0xff]
  %v2448 = vld [vmem:[%s2179 + $0x860] sm:$0xff]
  %v2449 = vld [vmem:[%s2179 + $0x868] sm:$0xff]
  %v2450 = vld [vmem:[%s2179 + $0x870] sm:$0xff]
  %v2451 = vld [vmem:[%s2179 + $0x878] sm:$0xff]
  %v2452 = vld [vmem:[%s2179 + $0x880] sm:$0xff]
  %v2453 = vld [vmem:[%s2179 + $0x888] sm:$0xff]
  %v2454 = vld [vmem:[%s2179 + $0x890] sm:$0xff]
  %v2455 = vld [vmem:[%s2179 + $0x898] sm:$0xff]
  %v2456 = vld [vmem:[%s2179 + $0x8a0] sm:$0xff]
  %v2457 = vld [vmem:[%s2179 + $0x8a8] sm:$0xff]
  %v2458 = vld [vmem:[%s2179 + $0x8b0] sm:$0xff]
  %v2459 = vld [vmem:[%s2179 + $0x8b8] sm:$0xff]
  %v2460 = vld [vmem:[%s2179 + $0x8c0] sm:$0xff]
  %v2461 = vld [vmem:[%s2179 + $0x8c8] sm:$0xff]
  %v2462 = vld [vmem:[%s2179 + $0x8d0] sm:$0xff]
  %v2463 = vld [vmem:[%s2179 + $0x8d8] sm:$0xff]
  %v2464 = vld [vmem:[%s2179 + $0x8e0] sm:$0xff]
  %v2465 = vld [vmem:[%s2179 + $0x8e8] sm:$0xff]
  %v2466 = vld [vmem:[%s2179 + $0x8f0] sm:$0xff]
  %v2467 = vld [vmem:[%s2179 + $0x8f8] sm:$0xff]
  %v2468 = vld [vmem:[%s2179 + $0x900] sm:$0xff]
  %v2469 = vld [vmem:[%s2179 + $0x908] sm:$0xff]
  %v2470 = vld [vmem:[%s2179 + $0x910] sm:$0xff]
  %v2471 = vld [vmem:[%s2179 + $0x918] sm:$0xff]
  %v2472 = vld [vmem:[%s2179 + $0x920] sm:$0xff]
  %v2473 = vld [vmem:[%s2179 + $0x928] sm:$0xff]
  %v2474 = vld [vmem:[%s2179 + $0x930] sm:$0xff]
  %v2475 = vld [vmem:[%s2179 + $0x938] sm:$0xff]
  %v2476 = vld [vmem:[%s2179 + $0x940] sm:$0xff]
  %v2477 = vld [vmem:[%s2179 + $0x948] sm:$0xff]
  %v2478 = vld [vmem:[%s2179 + $0x950] sm:$0xff]
  %v2479 = vld [vmem:[%s2179 + $0x958] sm:$0xff]
  %v2480 = vld [vmem:[%s2179 + $0x960] sm:$0xff]
  %v2481 = vld [vmem:[%s2179 + $0x968] sm:$0xff]
  %v2482 = vld [vmem:[%s2179 + $0x970] sm:$0xff]
  %v2483 = vld [vmem:[%s2179 + $0x978] sm:$0xff]
  %v2484 = vld [vmem:[%s2179 + $0x980] sm:$0xff]
  %v2485 = vld [vmem:[%s2179 + $0x988] sm:$0xff]
  %v2486 = vld [vmem:[%s2179 + $0x990] sm:$0xff]
  %v2487 = vld [vmem:[%s2179 + $0x998] sm:$0xff]
  %v2488 = vld [vmem:[%s2179 + $0x9a0] sm:$0xff]
  %v2489 = vld [vmem:[%s2179 + $0x9a8] sm:$0xff]
  %v2490 = vld [vmem:[%s2179 + $0x9b0] sm:$0xff]
  %v2491 = vld [vmem:[%s2179 + $0x9b8] sm:$0xff]
  %v2492 = vld [vmem:[%s2179 + $0x9c0] sm:$0xff]
  %v2493 = vld [vmem:[%s2179 + $0x9c8] sm:$0xff]
  %v2494 = vld [vmem:[%s2179 + $0x9d0] sm:$0xff]
  %v2495 = vld [vmem:[%s2179 + $0x9d8] sm:$0xff]
  %v2496 = vld [vmem:[%s2179 + $0x9e0] sm:$0xff]
  %v2497 = vld [vmem:[%s2179 + $0x9e8] sm:$0xff]
  %v2498 = vld [vmem:[%s2179 + $0x9f0] sm:$0xff]
  %v2499 = vld [vmem:[%s2179 + $0x9f8] sm:$0xff]
  %v2500 = vld [vmem:[%s2179 + $0xa00] sm:$0xff]
  %v2501 = vld [vmem:[%s2179 + $0xa08] sm:$0xff]
  %v2502 = vld [vmem:[%s2179 + $0xa10] sm:$0xff]
  %v2503 = vld [vmem:[%s2179 + $0xa18] sm:$0xff]
  %v2504 = vld [vmem:[%s2179 + $0xa20] sm:$0xff]
  %v2505 = vld [vmem:[%s2179 + $0xa28] sm:$0xff]
  %v2506 = vld [vmem:[%s2179 + $0xa30] sm:$0xff]
  %v2507 = vld [vmem:[%s2179 + $0xa38] sm:$0xff]
  %v2508 = vld [vmem:[%s2179 + $0xa40] sm:$0xff]
  %v2509 = vld [vmem:[%s2179 + $0xa48] sm:$0xff]
  %v2510 = vld [vmem:[%s2179 + $0xa50] sm:$0xff]
  %v2511 = vld [vmem:[%s2179 + $0xa58] sm:$0xff]
  %v2512 = vld [vmem:[%s2179 + $0xa60] sm:$0xff]
  %v2513 = vld [vmem:[%s2179 + $0xa68] sm:$0xff]
  %v2514 = vld [vmem:[%s2179 + $0xa70] sm:$0xff]
  %v2515 = vld [vmem:[%s2179 + $0xa78] sm:$0xff]
  %v2516 = vld [vmem:[%s2179 + $0xa80] sm:$0xff]
  %v2517 = vld [vmem:[%s2179 + $0xa88] sm:$0xff]
  %v2518 = vld [vmem:[%s2179 + $0xa90] sm:$0xff]
  %v2519 = vld [vmem:[%s2179 + $0xa98] sm:$0xff]
  %v2520 = vld [vmem:[%s2179 + $0xaa0] sm:$0xff]
  %v2521 = vld [vmem:[%s2179 + $0xaa8] sm:$0xff]
  %v2522 = vld [vmem:[%s2179 + $0xab0] sm:$0xff]
  %v2523 = vld [vmem:[%s2179 + $0xab8] sm:$0xff]
  %v2524 = vld [vmem:[%s2179 + $0xac0] sm:$0xff]
  %v2525 = vld [vmem:[%s2179 + $0xac8] sm:$0xff]
  %v2526 = vld [vmem:[%s2179 + $0xad0] sm:$0xff]
  %v2527 = vld [vmem:[%s2179 + $0xad8] sm:$0xff]
  %v2528 = vld [vmem:[%s2179 + $0xae0] sm:$0xff]
  %v2529 = vld [vmem:[%s2179 + $0xae8] sm:$0xff]
  %v2530 = vld [vmem:[%s2179 + $0xaf0] sm:$0xff]
  %v2531 = vld [vmem:[%s2179 + $0xaf8] sm:$0xff]
  %v2532 = vld [vmem:[%s2179 + $0xb00] sm:$0xff]
  %v2533 = vld [vmem:[%s2179 + $0xb08] sm:$0xff]
  %v2534 = vld [vmem:[%s2179 + $0xb10] sm:$0xff]
  %v2535 = vld [vmem:[%s2179 + $0xb18] sm:$0xff]
  %v2536 = vld [vmem:[%s2179 + $0xb20] sm:$0xff]
  %v2537 = vld [vmem:[%s2179 + $0xb28] sm:$0xff]
  %v2538 = vld [vmem:[%s2179 + $0xb30] sm:$0xff]
  %v2539 = vld [vmem:[%s2179 + $0xb38] sm:$0xff]
  %v2540 = vld [vmem:[%s2179 + $0xb40] sm:$0xff]
  %v2541 = vld [vmem:[%s2179 + $0xb48] sm:$0xff]
  %v2542 = vld [vmem:[%s2179 + $0xb50] sm:$0xff]
  %v2543 = vld [vmem:[%s2179 + $0xb58] sm:$0xff]
  %v2544 = vld [vmem:[%s2179 + $0xb60] sm:$0xff]
  %v2545 = vld [vmem:[%s2179 + $0xb68] sm:$0xff]
  %v2546 = vld [vmem:[%s2179 + $0xb70] sm:$0xff]
  %v2547 = vld [vmem:[%s2179 + $0xb78] sm:$0xff]
  %v2548 = vld [vmem:[%s2179 + $0xb80] sm:$0xff]
  %v2549 = vld [vmem:[%s2179 + $0xb88] sm:$0xff]
  %v2550 = vld [vmem:[%s2179 + $0xb90] sm:$0xff]
  %v2551 = vld [vmem:[%s2179 + $0xb98] sm:$0xff]
  %v2552 = vld [vmem:[%s2179 + $0xba0] sm:$0xff]
  %v2553 = vld [vmem:[%s2179 + $0xba8] sm:$0xff]
  %v2554 = vld [vmem:[%s2179 + $0xbb0] sm:$0xff]
  %v2555 = vld [vmem:[%s2179 + $0xbb8] sm:$0xff]
  %v2556 = vld [vmem:[%s2179 + $0xbc0] sm:$0xff]
  %v2557 = vld [vmem:[%s2179 + $0xbc8] sm:$0xff]
  %v2558 = vld [vmem:[%s2179 + $0xbd0] sm:$0xff]
  %v2559 = vld [vmem:[%s2179 + $0xbd8] sm:$0xff]
  %v2560 = vld [vmem:[%s2179 + $0xbe0] sm:$0xff]
  %v2561 = vld [vmem:[%s2179 + $0xbe8] sm:$0xff]
  %v2562 = vld [vmem:[%s2179 + $0xbf0] sm:$0xff]
  %v2563 = vld [vmem:[%s2179 + $0xbf8] sm:$0xff]
  %v2564 = vld [vmem:[%s2179 + $0xc00] sm:$0xff]
  %v2565 = vld [vmem:[%s2179 + $0xc08] sm:$0xff]
  %v2566 = vld [vmem:[%s2179 + $0xc10] sm:$0xff]
  %v2567 = vld [vmem:[%s2179 + $0xc18] sm:$0xff]
  %v2568 = vld [vmem:[%s2179 + $0xc20] sm:$0xff]
  %v2569 = vld [vmem:[%s2179 + $0xc28] sm:$0xff]
  %v2570 = vld [vmem:[%s2179 + $0xc30] sm:$0xff]
  %v2571 = vld [vmem:[%s2179 + $0xc38] sm:$0xff]
  %v2572 = vld [vmem:[%s2179 + $0xc40] sm:$0xff]
  %v2573 = vld [vmem:[%s2179 + $0xc48] sm:$0xff]
  %v2574 = vld [vmem:[%s2179 + $0xc50] sm:$0xff]
  %v2575 = vld [vmem:[%s2179 + $0xc58] sm:$0xff]
  %v2576 = vld [vmem:[%s2179 + $0xc60] sm:$0xff]
  %v2577 = vld [vmem:[%s2179 + $0xc68] sm:$0xff]
  %v2578 = vld [vmem:[%s2179 + $0xc70] sm:$0xff]
  %v2579 = vld [vmem:[%s2179 + $0xc78] sm:$0xff]
  %v2580 = vld [vmem:[%s2179 + $0xc80] sm:$0xff]
  %v2581 = vld [vmem:[%s2179 + $0xc88] sm:$0xff]
  %v2582 = vld [vmem:[%s2179 + $0xc90] sm:$0xff]
  %v2583 = vld [vmem:[%s2179 + $0xc98] sm:$0xff]
  %v2584 = vld [vmem:[%s2179 + $0xca0] sm:$0xff]
  %v2585 = vld [vmem:[%s2179 + $0xca8] sm:$0xff]
  %v2586 = vld [vmem:[%s2179 + $0xcb0] sm:$0xff]
  %v2587 = vld [vmem:[%s2179 + $0xcb8] sm:$0xff]
  %v2588 = vld [vmem:[%s2179 + $0xcc0] sm:$0xff]
  %v2589 = vld [vmem:[%s2179 + $0xcc8] sm:$0xff]
  %v2590 = vld [vmem:[%s2179 + $0xcd0] sm:$0xff]
  %v2591 = vld [vmem:[%s2179 + $0xcd8] sm:$0xff]
  %v2592 = vld [vmem:[%s2179 + $0xce0] sm:$0xff]
  %v2593 = vld [vmem:[%s2179 + $0xce8] sm:$0xff]
  %v2594 = vld [vmem:[%s2179 + $0xcf0] sm:$0xff]
  %v2595 = vld [vmem:[%s2179 + $0xcf8] sm:$0xff]
  %v2596 = vld [vmem:[%s2179 + $0xd00] sm:$0xff]
  %v2597 = vld [vmem:[%s2179 + $0xd08] sm:$0xff]
  %v2598 = vld [vmem:[%s2179 + $0xd10] sm:$0xff]
  %v2599 = vld [vmem:[%s2179 + $0xd18] sm:$0xff]
  %v2600 = vld [vmem:[%s2179 + $0xd20] sm:$0xff]
  %v2601 = vld [vmem:[%s2179 + $0xd28] sm:$0xff]
  %v2602 = vld [vmem:[%s2179 + $0xd30] sm:$0xff]
  %v2603 = vld [vmem:[%s2179 + $0xd38] sm:$0xff]
  %v2604 = vld [vmem:[%s2179 + $0xd40] sm:$0xff]
  %v2605 = vld [vmem:[%s2179 + $0xd48] sm:$0xff]
  %v2606 = vld [vmem:[%s2179 + $0xd50] sm:$0xff]
  %v2607 = vld [vmem:[%s2179 + $0xd58] sm:$0xff]
  %v2608 = vld [vmem:[%s2179 + $0xd60] sm:$0xff]
  %v2609 = vld [vmem:[%s2179 + $0xd68] sm:$0xff]
  %v2610 = vld [vmem:[%s2179 + $0xd70] sm:$0xff]
  %v2611 = vld [vmem:[%s2179 + $0xd78] sm:$0xff]
  %v2612 = vld [vmem:[%s2179 + $0xd80] sm:$0xff]
  %v2613 = vld [vmem:[%s2179 + $0xd88] sm:$0xff]
  %v2614 = vld [vmem:[%s2179 + $0xd90] sm:$0xff]
  %v2615 = vld [vmem:[%s2179 + $0xd98] sm:$0xff]
  %v2616 = vld [vmem:[%s2179 + $0xda0] sm:$0xff]
  %v2617 = vld [vmem:[%s2179 + $0xda8] sm:$0xff]
  %v2618 = vld [vmem:[%s2179 + $0xdb0] sm:$0xff]
  %v2619 = vld [vmem:[%s2179 + $0xdb8] sm:$0xff]
  %v2620 = vld [vmem:[%s2179 + $0xdc0] sm:$0xff]
  %v2621 = vld [vmem:[%s2179 + $0xdc8] sm:$0xff]
  %v2622 = vld [vmem:[%s2179 + $0xdd0] sm:$0xff]
  %v2623 = vld [vmem:[%s2179 + $0xdd8] sm:$0xff]
  %v2624 = vld [vmem:[%s2179 + $0xde0] sm:$0xff]
  %v2625 = vld [vmem:[%s2179 + $0xde8] sm:$0xff]
  %v2626 = vld [vmem:[%s2179 + $0xdf0] sm:$0xff]
  %v2627 = vld [vmem:[%s2179 + $0xdf8] sm:$0xff]
  %v2628 = vld [vmem:[%s2179 + $0xe00] sm:$0xff]
  %v2629 = vld [vmem:[%s2179 + $0xe08] sm:$0xff]
  %v2630 = vld [vmem:[%s2179 + $0xe10] sm:$0xff]
  %v2631 = vld [vmem:[%s2179 + $0xe18] sm:$0xff]
  %v2632 = vld [vmem:[%s2179 + $0xe20] sm:$0xff]
  %v2633 = vld [vmem:[%s2179 + $0xe28] sm:$0xff]
  %v2634 = vld [vmem:[%s2179 + $0xe30] sm:$0xff]
  %v2635 = vld [vmem:[%s2179 + $0xe38] sm:$0xff]
  %v2636 = vld [vmem:[%s2179 + $0xe40] sm:$0xff]
  %v2637 = vld [vmem:[%s2179 + $0xe48] sm:$0xff]
  %v2638 = vld [vmem:[%s2179 + $0xe50] sm:$0xff]
  %v2639 = vld [vmem:[%s2179 + $0xe58] sm:$0xff]
  %v2640 = vld [vmem:[%s2179 + $0xe60] sm:$0xff]
  %v2641 = vld [vmem:[%s2179 + $0xe68] sm:$0xff]
  %v2642 = vld [vmem:[%s2179 + $0xe70] sm:$0xff]
  %v2643 = vld [vmem:[%s2179 + $0xe78] sm:$0xff]
  %v2644 = vld [vmem:[%s2179 + $0xe80] sm:$0xff]
  %v2645 = vld [vmem:[%s2179 + $0xe88] sm:$0xff]
  %v2646 = vld [vmem:[%s2179 + $0xe90] sm:$0xff]
  %v2647 = vld [vmem:[%s2179 + $0xe98] sm:$0xff]
  %v2648 = vld [vmem:[%s2179 + $0xea0] sm:$0xff]
  %v2649 = vld [vmem:[%s2179 + $0xea8] sm:$0xff]
  %v2650 = vld [vmem:[%s2179 + $0xeb0] sm:$0xff]
  %v2651 = vld [vmem:[%s2179 + $0xeb8] sm:$0xff]
  %v2652 = vld [vmem:[%s2179 + $0xec0] sm:$0xff]
  %v2653 = vld [vmem:[%s2179 + $0xec8] sm:$0xff]
  %v2654 = vld [vmem:[%s2179 + $0xed0] sm:$0xff]
  %v2655 = vld [vmem:[%s2179 + $0xed8] sm:$0xff]
  %v2656 = vld [vmem:[%s2179 + $0xee0] sm:$0xff]
  %v2657 = vld [vmem:[%s2179 + $0xee8] sm:$0xff]
  %v2658 = vld [vmem:[%s2179 + $0xef0] sm:$0xff]
  %v2659 = vld [vmem:[%s2179 + $0xef8] sm:$0xff]
  %v2660 = vld [vmem:[%s2179 + $0xf00] sm:$0xff]
  %v2661 = vld [vmem:[%s2179 + $0xf08] sm:$0xff]
  %v2662 = vld [vmem:[%s2179 + $0xf10] sm:$0xff]
  %v2663 = vld [vmem:[%s2179 + $0xf18] sm:$0xff]
  %v2664 = vld [vmem:[%s2179 + $0xf20] sm:$0xff]
  %v2665 = vld [vmem:[%s2179 + $0xf28] sm:$0xff]
  %v2666 = vld [vmem:[%s2179 + $0xf30] sm:$0xff]
  %v2667 = vld [vmem:[%s2179 + $0xf38] sm:$0xff]
  %v2668 = vld [vmem:[%s2179 + $0xf40] sm:$0xff]
  %v2669 = vld [vmem:[%s2179 + $0xf48] sm:$0xff]
  %v2670 = vld [vmem:[%s2179 + $0xf50] sm:$0xff]
  %v2671 = vld [vmem:[%s2179 + $0xf58] sm:$0xff]
  %v2672 = vld [vmem:[%s2179 + $0xf60] sm:$0xff]
  %v2673 = vld [vmem:[%s2179 + $0xf68] sm:$0xff]
  %v2674 = vld [vmem:[%s2179 + $0xf70] sm:$0xff]
  %v2675 = vld [vmem:[%s2179 + $0xf78] sm:$0xff]
  %v2676 = vld [vmem:[%s2179 + $0xf80] sm:$0xff]
  %v2677 = vld [vmem:[%s2179 + $0xf88] sm:$0xff]
  %v2678 = vld [vmem:[%s2179 + $0xf90] sm:$0xff]
  %v2679 = vld [vmem:[%s2179 + $0xf98] sm:$0xff]
  %v2680 = vld [vmem:[%s2179 + $0xfa0] sm:$0xff]
  %v2681 = vld [vmem:[%s2179 + $0xfa8] sm:$0xff]
  %v2682 = vld [vmem:[%s2179 + $0xfb0] sm:$0xff]
  %v2683 = vld [vmem:[%s2179 + $0xfb8] sm:$0xff]
  %v2684 = vld [vmem:[%s2179 + $0xfc0] sm:$0xff]
  %v2685 = vld [vmem:[%s2179 + $0xfc8] sm:$0xff]
  %v2686 = vld [vmem:[%s2179 + $0xfd0] sm:$0xff]
  %v2687 = vld [vmem:[%s2179 + $0xfd8] sm:$0xff]
  %v2688 = vld [vmem:[%s2179 + $0xfe0] sm:$0xff]
  %v2689 = vld [vmem:[%s2179 + $0xfe8] sm:$0xff]
  %v2690 = vld [vmem:[%s2179 + $0xff0] sm:$0xff]
  %v2691 = vld [vmem:[%s2179 + $0xff8] sm:$0xff]
  %2692 = vmatprep.subr.mxu0 %v2181
  %2693 = vmatpush1.msra.mxu0 %v2180
  %2694 = vmatprep.subr.mxu0 %v2189
  %2695 = vmatpush1.msra.mxu0 %v2188
  %2696 = vmatprep.subr.mxu0 %v2197
  %2697 = vmatpush1.msra.mxu0 %v2196
  %2698 = vmatprep.subr.mxu0 %v2205
  %2699 = vmatpush1.msra.mxu0 %v2204
  %2700 = vmatprep.subr.mxu0 %v2213
  %2701 = vmatpush1.msra.mxu0 %v2212
  %2702 = vmatprep.subr.mxu0 %v2221
  %2703 = vmatpush1.msra.mxu0 %v2220
  %2704 = vmatprep.subr.mxu0 %v2229
  %2705 = vmatpush1.msra.mxu0 %v2228
  %2706 = vmatprep.subr.mxu0 %v2237
  %2707 = vmatpush1.msra.mxu0 %v2236
  %2708 = vmatprep.subr.mxu0 %v2245
  %2709 = vmatpush1.msra.mxu0 %v2244
  %2710 = vmatprep.subr.mxu0 %v2253
  %2711 = vmatpush1.msra.mxu0 %v2252
  %2712 = vmatprep.subr.mxu0 %v2261
  %2713 = vmatpush1.msra.mxu0 %v2260
  %2714 = vmatprep.subr.mxu0 %v2269
  %2715 = vmatpush1.msra.mxu0 %v2268
  %2716 = vmatprep.subr.mxu0 %v2277
  %2717 = vmatpush1.msra.mxu0 %v2276
  %2718 = vmatprep.subr.mxu0 %v2285
  %2719 = vmatpush1.msra.mxu0 %v2284
  %2720 = vmatprep.subr.mxu0 %v2293
  %2721 = vmatpush1.msra.mxu0 %v2292
  %2722 = vmatprep.subr.mxu0 %v2301
  %2723 = vmatpush1.msra.mxu0 %v2300
  %2724 = vmatprep.subr.mxu0 %v2309
  %2725 = vmatpush1.msra.mxu0 %v2308
  %2726 = vmatprep.subr.mxu0 %v2317
  %2727 = vmatpush1.msra.mxu0 %v2316
  %2728 = vmatprep.subr.mxu0 %v2325
  %2729 = vmatpush1.msra.mxu0 %v2324
  %2730 = vmatprep.subr.mxu0 %v2333
  %2731 = vmatpush1.msra.mxu0 %v2332
  %2732 = vmatprep.subr.mxu0 %v2341
  %2733 = vmatpush1.msra.mxu0 %v2340
  %2734 = vmatprep.subr.mxu0 %v2349
  %2735 = vmatpush1.msra.mxu0 %v2348
  %2736 = vmatprep.subr.mxu0 %v2357
  %2737 = vmatpush1.msra.mxu0 %v2356
  %2738 = vmatprep.subr.mxu0 %v2365
  %2739 = vmatpush1.msra.mxu0 %v2364
  %2740 = vmatprep.subr.mxu0 %v2373
  %2741 = vmatpush1.msra.mxu0 %v2372
  %2742 = vmatprep.subr.mxu0 %v2381
  %2743 = vmatpush1.msra.mxu0 %v2380
  %2744 = vmatprep.subr.mxu0 %v2389
  %2745 = vmatpush1.msra.mxu0 %v2388
  %2746 = vmatprep.subr.mxu0 %v2397
  %2747 = vmatpush1.msra.mxu0 %v2396
  %2748 = vmatprep.subr.mxu0 %v2405
  %2749 = vmatpush1.msra.mxu0 %v2404
  %2750 = vmatprep.subr.mxu0 %v2413
  %2751 = vmatpush1.msra.mxu0 %v2412
  %2752 = vmatprep.subr.mxu0 %v2421
  %2753 = vmatpush1.msra.mxu0 %v2420
  %2754 = vmatprep.subr.mxu0 %v2429
  %2755 = vmatpush1.msra.mxu0 %v2428
  %2756 = vmatprep.mubr.f32.mxu0 %v987
  %2757 = vmatmul.mubr.f32.gmra.mrb[0].mxu0 %v986
  %v2758 = vpop.f32.mrb[0].mxu0
  %v2759 = vadd.f32 0.0, %v2758
  %v2760 = vpop.f32.mrb[0].mxu0
  %v2761 = vadd.f32 0.0, %v2760
  %2762 = vmatprep.mubr.f32.mxu0 %v991
  %2763 = vmatmul.mubr.f32.gmra.mrb[0].mxu0 %v990
  %v2764 = vpop.f32.mrb[0].mxu0
  %v2765 = vadd.f32 0.0, %v2764
  %v2766 = vpop.f32.mrb[0].mxu0
  %v2767 = vadd.f32 0.0, %v2766
  %2768 = vmatprep.mubr.f32.mxu0 %v995
  %2769 = vmatmul.mubr.f32.gmra.mrb[0].mxu0 %v994
  %v2770 = vpop.f32.mrb[0].mxu0
  %v2771 = vadd.f32 0.0, %v2770
  %v2772 = vpop.f32.mrb[0].mxu0
  %v2773 = vadd.f32 0.0, %v2772
  %2774 = vdwg.mxu0
  %2775 = vmatprep.subr.mxu0 %v2437
  %2776 = vmatpush1.msra.mxu0 %v2436
  %2777 = vmatprep.subr.mxu0 %v2445
  %2778 = vmatpush1.msra.mxu0 %v2444
  %2779 = vmatprep.subr.mxu0 %v2453
  %2780 = vmatpush1.msra.mxu0 %v2452
  %2781 = vmatprep.subr.mxu0 %v2461
  %2782 = vmatpush1.msra.mxu0 %v2460
  %2783 = vmatprep.subr.mxu0 %v2469
  %2784 = vmatpush1.msra.mxu0 %v2468
  %2785 = vmatprep.subr.mxu0 %v2477
  %2786 = vmatpush1.msra.mxu0 %v2476
  %2787 = vmatprep.subr.mxu0 %v2485
  %2788 = vmatpush1.msra.mxu0 %v2484
  %2789 = vmatprep.subr.mxu0 %v2493
  %2790 = vmatpush1.msra.mxu0 %v2492
  %2791 = vmatprep.subr.mxu0 %v2501
  %2792 = vmatpush1.msra.mxu0 %v2500
  %2793 = vmatprep.subr.mxu0 %v2509
  %2794 = vmatpush1.msra.mxu0 %v2508
  %2795 = vmatprep.subr.mxu0 %v2517
  %2796 = vmatpush1.msra.mxu0 %v2516
  %2797 = vmatprep.subr.mxu0 %v2525
  %2798 = vmatpush1.msra.mxu0 %v2524
  %2799 = vmatprep.subr.mxu0 %v2533
  %2800 = vmatpush1.msra.mxu0 %v2532
  %2801 = vmatprep.subr.mxu0 %v2541
  %2802 = vmatpush1.msra.mxu0 %v2540
  %2803 = vmatprep.subr.mxu0 %v2549
  %2804 = vmatpush1.msra.mxu0 %v2548
  %2805 = vmatprep.subr.mxu0 %v2557
  %2806 = vmatpush1.msra.mxu0 %v2556
  %2807 = vmatprep.subr.mxu0 %v2565
  %2808 = vmatpush1.msra.mxu0 %v2564
  %2809 = vmatprep.subr.mxu0 %v2573
  %2810 = vmatpush1.msra.mxu0 %v2572
  %2811 = vmatprep.subr.mxu0 %v2581
  %2812 = vmatpush1.msra.mxu0 %v2580
  %2813 = vmatprep.subr.mxu0 %v2589
  %2814 = vmatpush1.msra.mxu0 %v2588
  %2815 = vmatprep.subr.mxu0 %v2597
  %2816 = vmatpush1.msra.mxu0 %v2596
  %2817 = vmatprep.subr.mxu0 %v2605
  %2818 = vmatpush1.msra.mxu0 %v2604
  %2819 = vmatprep.subr.mxu0 %v2613
  %2820 = vmatpush1.msra.mxu0 %v2612
  %2821 = vmatprep.subr.mxu0 %v2621
  %2822 = vmatpush1.msra.mxu0 %v2620
  %2823 = vmatprep.subr.mxu0 %v2629
  %2824 = vmatpush1.msra.mxu0 %v2628
  %2825 = vmatprep.subr.mxu0 %v2637
  %2826 = vmatpush1.msra.mxu0 %v2636
  %2827 = vmatprep.subr.mxu0 %v2645
  %2828 = vmatpush1.msra.mxu0 %v2644
  %2829 = vmatprep.subr.mxu0 %v2653
  %2830 = vmatpush1.msra.mxu0 %v2652
  %2831 = vmatprep.subr.mxu0 %v2661
  %2832 = vmatpush1.msra.mxu0 %v2660
  %2833 = vmatprep.subr.mxu0 %v2669
  %2834 = vmatpush1.msra.mxu0 %v2668
  %2835 = vmatprep.subr.mxu0 %v2677
  %2836 = vmatpush1.msra.mxu0 %v2676
  %2837 = vmatprep.subr.mxu0 %v2685
  %2838 = vmatpush1.msra.mxu0 %v2684
  %2839 = vmatprep.mubr.f32.mxu0 %v989
  %2840 = vmatmul.mubr.f32.gmra.mrb[0].mxu0 %v988
  %v2841 = vpop.f32.mrb[0].mxu0
  %v2842 = vadd.f32 %v2759, %v2841
  %v2843 = vpop.f32.mrb[0].mxu0
  %v2844 = vadd.f32 %v2761, %v2843
  %2845 = vmatprep.mubr.f32.mxu0 %v993
  %2846 = vmatmul.mubr.f32.gmra.mrb[0].mxu0 %v992
  %v2847 = vpop.f32.mrb[0].mxu0
  %v2848 = vadd.f32 %v2765, %v2847
  %v2849 = vpop.f32.mrb[0].mxu0
  %v2850 = vadd.f32 %v2767, %v2849
  %2851 = vmatprep.mubr.f32.mxu0 %v997
  %2852 = vmatmul.mubr.f32.gmra.mrb[0].mxu0 %v996
  %v2853 = vpop.f32.mrb[0].mxu0
  %v2854 = vadd.f32 %v2771, %v2853
  %v2855 = vpop.f32.mrb[0].mxu0
  %v2856 = vadd.f32 %v2773, %v2855
  %2857 = vdwg.mxu0
  %2858 = vmatprep.subr.mxu0 %v2183
  %2859 = vmatpush1.msra.mxu0 %v2182
  %2860 = vmatprep.subr.mxu0 %v2191
  %2861 = vmatpush1.msra.mxu0 %v2190
  %2862 = vmatprep.subr.mxu0 %v2199
  %2863 = vmatpush1.msra.mxu0 %v2198
  %2864 = vmatprep.subr.mxu0 %v2207
  %2865 = vmatpush1.msra.mxu0 %v2206
  %2866 = vmatprep.subr.mxu0 %v2215
  %2867 = vmatpush1.msra.mxu0 %v2214
  %2868 = vmatprep.subr.mxu0 %v2223
  %2869 = vmatpush1.msra.mxu0 %v2222
  %2870 = vmatprep.subr.mxu0 %v2231
  %2871 = vmatpush1.msra.mxu0 %v2230
  %2872 = vmatprep.subr.mxu0 %v2239
  %2873 = vmatpush1.msra.mxu0 %v2238
  %2874 = vmatprep.subr.mxu0 %v2247
  %2875 = vmatpush1.msra.mxu0 %v2246
  %2876 = vmatprep.subr.mxu0 %v2255
  %2877 = vmatpush1.msra.mxu0 %v2254
  %2878 = vmatprep.subr.mxu0 %v2263
  %2879 = vmatpush1.msra.mxu0 %v2262
  %2880 = vmatprep.subr.mxu0 %v2271
  %2881 = vmatpush1.msra.mxu0 %v2270
  %2882 = vmatprep.subr.mxu0 %v2279
  %2883 = vmatpush1.msra.mxu0 %v2278
  %2884 = vmatprep.subr.mxu0 %v2287
  %2885 = vmatpush1.msra.mxu0 %v2286
  %2886 = vmatprep.subr.mxu0 %v2295
  %2887 = vmatpush1.msra.mxu0 %v2294
  %2888 = vmatprep.subr.mxu0 %v2303
  %2889 = vmatpush1.msra.mxu0 %v2302
  %2890 = vmatprep.subr.mxu0 %v2311
  %2891 = vmatpush1.msra.mxu0 %v2310
  %2892 = vmatprep.subr.mxu0 %v2319
  %2893 = vmatpush1.msra.mxu0 %v2318
  %2894 = vmatprep.subr.mxu0 %v2327
  %2895 = vmatpush1.msra.mxu0 %v2326
  %2896 = vmatprep.subr.mxu0 %v2335
  %2897 = vmatpush1.msra.mxu0 %v2334
  %2898 = vmatprep.subr.mxu0 %v2343
  %2899 = vmatpush1.msra.mxu0 %v2342
  %2900 = vmatprep.subr.mxu0 %v2351
  %2901 = vmatpush1.msra.mxu0 %v2350
  %2902 = vmatprep.subr.mxu0 %v2359
  %2903 = vmatpush1.msra.mxu0 %v2358
  %2904 = vmatprep.subr.mxu0 %v2367
  %2905 = vmatpush1.msra.mxu0 %v2366
  %2906 = vmatprep.subr.mxu0 %v2375
  %2907 = vmatpush1.msra.mxu0 %v2374
  %2908 = vmatprep.subr.mxu0 %v2383
  %2909 = vmatpush1.msra.mxu0 %v2382
  %2910 = vmatprep.subr.mxu0 %v2391
  %2911 = vmatpush1.msra.mxu0 %v2390
  %2912 = vmatprep.subr.mxu0 %v2399
  %2913 = vmatpush1.msra.mxu0 %v2398
  %2914 = vmatprep.subr.mxu0 %v2407
  %2915 = vmatpush1.msra.mxu0 %v2406
  %2916 = vmatprep.subr.mxu0 %v2415
  %2917 = vmatpush1.msra.mxu0 %v2414
  %2918 = vmatprep.subr.mxu0 %v2423
  %2919 = vmatpush1.msra.mxu0 %v2422
  %2920 = vmatprep.subr.mxu0 %v2431
  %2921 = vmatpush1.msra.mxu0 %v2430
  %2922 = vmatprep.mubr.f32.mxu0 %v987
  %2923 = vmatmul.mubr.f32.gmra.mrb[0].mxu0 %v986
  %v2924 = vpop.f32.mrb[0].mxu0
  %v2925 = vadd.f32 0.0, %v2924
  %v2926 = vpop.f32.mrb[0].mxu0
  %v2927 = vadd.f32 0.0, %v2926
  %2928 = vmatprep.mubr.f32.mxu0 %v991
  %2929 = vmatmul.mubr.f32.gmra.mrb[0].mxu0 %v990
  %v2930 = vpop.f32.mrb[0].mxu0
  %v2931 = vadd.f32 0.0, %v2930
  %v2932 = vpop.f32.mrb[0].mxu0
  %v2933 = vadd.f32 0.0, %v2932
  %2934 = vmatprep.mubr.f32.mxu0 %v995
  %2935 = vmatmul.mubr.f32.gmra.mrb[0].mxu0 %v994
  %v2936 = vpop.f32.mrb[0].mxu0
  %v2937 = vadd.f32 0.0, %v2936
  %v2938 = vpop.f32.mrb[0].mxu0
  %v2939 = vadd.f32 0.0, %v2938
  %2940 = vdwg.mxu0
  %2941 = vmatprep.subr.mxu0 %v2439
  %2942 = vmatpush1.msra.mxu0 %v2438
  %2943 = vmatprep.subr.mxu0 %v2447
  %2944 = vmatpush1.msra.mxu0 %v2446
  %2945 = vmatprep.subr.mxu0 %v2455
  %2946 = vmatpush1.msra.mxu0 %v2454
  %2947 = vmatprep.subr.mxu0 %v2463
  %2948 = vmatpush1.msra.mxu0 %v2462
  %2949 = vmatprep.subr.mxu0 %v2471
  %2950 = vmatpush1.msra.mxu0 %v2470
  %2951 = vmatprep.subr.mxu0 %v2479
  %2952 = vmatpush1.msra.mxu0 %v2478
  %2953 = vmatprep.subr.mxu0 %v2487
  %2954 = vmatpush1.msra.mxu0 %v2486
  %2955 = vmatprep.subr.mxu0 %v2495
  %2956 = vmatpush1.msra.mxu0 %v2494
  %2957 = vmatprep.subr.mxu0 %v2503
  %2958 = vmatpush1.msra.mxu0 %v2502
  %2959 = vmatprep.subr.mxu0 %v2511
  %2960 = vmatpush1.msra.mxu0 %v2510
  %2961 = vmatprep.subr.mxu0 %v2519
  %2962 = vmatpush1.msra.mxu0 %v2518
  %2963 = vmatprep.subr.mxu0 %v2527
  %2964 = vmatpush1.msra.mxu0 %v2526
  %2965 = vmatprep.subr.mxu0 %v2535
  %2966 = vmatpush1.msra.mxu0 %v2534
  %2967 = vmatprep.subr.mxu0 %v2543
  %2968 = vmatpush1.msra.mxu0 %v2542
  %2969 = vmatprep.subr.mxu0 %v2551
  %2970 = vmatpush1.msra.mxu0 %v2550
  %2971 = vmatprep.subr.mxu0 %v2559
  %2972 = vmatpush1.msra.mxu0 %v2558
  %2973 = vmatprep.subr.mxu0 %v2567
  %2974 = vmatpush1.msra.mxu0 %v2566
  %2975 = vmatprep.subr.mxu0 %v2575
  %2976 = vmatpush1.msra.mxu0 %v2574
  %2977 = vmatprep.subr.mxu0 %v2583
  %2978 = vmatpush1.msra.mxu0 %v2582
  %2979 = vmatprep.subr.mxu0 %v2591
  %2980 = vmatpush1.msra.mxu0 %v2590
  %2981 = vmatprep.subr.mxu0 %v2599
  %2982 = vmatpush1.msra.mxu0 %v2598
  %2983 = vmatprep.subr.mxu0 %v2607
  %2984 = vmatpush1.msra.mxu0 %v2606
  %2985 = vmatprep.subr.mxu0 %v2615
  %2986 = vmatpush1.msra.mxu0 %v2614
  %2987 = vmatprep.subr.mxu0 %v2623
  %2988 = vmatpush1.msra.mxu0 %v2622
  %2989 = vmatprep.subr.mxu0 %v2631
  %2990 = vmatpush1.msra.mxu0 %v2630
  %2991 = vmatprep.subr.mxu0 %v2639
  %2992 = vmatpush1.msra.mxu0 %v2638
  %2993 = vmatprep.subr.mxu0 %v2647
  %2994 = vmatpush1.msra.mxu0 %v2646
  %2995 = vmatprep.subr.mxu0 %v2655
  %2996 = vmatpush1.msra.mxu0 %v2654
  %2997 = vmatprep.subr.mxu0 %v2663
  %2998 = vmatpush1.msra.mxu0 %v2662
  %2999 = vmatprep.subr.mxu0 %v2671
  %3000 = vmatpush1.msra.mxu0 %v2670
  %3001 = vmatprep.subr.mxu0 %v2679
  %3002 = vmatpush1.msra.mxu0 %v2678
  %3003 = vmatprep.subr.mxu0 %v2687
  %3004 = vmatpush1.msra.mxu0 %v2686
  %3005 = vmatprep.mubr.f32.mxu0 %v989
  %3006 = vmatmul.mubr.f32.gmra.mrb[0].mxu0 %v988
  %v3007 = vpop.f32.mrb[0].mxu0
  %v3008 = vadd.f32 %v2925, %v3007
  %v3009 = vpop.f32.mrb[0].mxu0
  %v3010 = vadd.f32 %v2927, %v3009
  %3011 = vmatprep.mubr.f32.mxu0 %v993
  %3012 = vmatmul.mubr.f32.gmra.mrb[0].mxu0 %v992
  %v3013 = vpop.f32.mrb[0].mxu0
  %v3014 = vadd.f32 %v2931, %v3013
  %v3015 = vpop.f32.mrb[0].mxu0
  %v3016 = vadd.f32 %v2933, %v3015
  %3017 = vmatprep.mubr.f32.mxu0 %v997
  %3018 = vmatmul.mubr.f32.gmra.mrb[0].mxu0 %v996
  %v3019 = vpop.f32.mrb[0].mxu0
  %v3020 = vadd.f32 %v2937, %v3019
  %v3021 = vpop.f32.mrb[0].mxu0
  %v3022 = vadd.f32 %v2939, %v3021
  %3023 = vdwg.mxu0
  %3024 = vmatprep.subr.mxu0 %v2185
  %3025 = vmatpush1.msra.mxu0 %v2184
  %3026 = vmatprep.subr.mxu0 %v2193
  %3027 = vmatpush1.msra.mxu0 %v2192
  %3028 = vmatprep.subr.mxu0 %v2201
  %3029 = vmatpush1.msra.mxu0 %v2200
  %3030 = vmatprep.subr.mxu0 %v2209
  %3031 = vmatpush1.msra.mxu0 %v2208
  %3032 = vmatprep.subr.mxu0 %v2217
  %3033 = vmatpush1.msra.mxu0 %v2216
  %3034 = vmatprep.subr.mxu0 %v2225
  %3035 = vmatpush1.msra.mxu0 %v2224
  %3036 = vmatprep.subr.mxu0 %v2233
  %3037 = vmatpush1.msra.mxu0 %v2232
  %3038 = vmatprep.subr.mxu0 %v2241
  %3039 = vmatpush1.msra.mxu0 %v2240
  %3040 = vmatprep.subr.mxu0 %v2249
  %3041 = vmatpush1.msra.mxu0 %v2248
  %3042 = vmatprep.subr.mxu0 %v2257
  %3043 = vmatpush1.msra.mxu0 %v2256
  %3044 = vmatprep.subr.mxu0 %v2265
  %3045 = vmatpush1.msra.mxu0 %v2264
  %3046 = vmatprep.subr.mxu0 %v2273
  %3047 = vmatpush1.msra.mxu0 %v2272
  %3048 = vmatprep.subr.mxu0 %v2281
  %3049 = vmatpush1.msra.mxu0 %v2280
  %3050 = vmatprep.subr.mxu0 %v2289
  %3051 = vmatpush1.msra.mxu0 %v2288
  %3052 = vmatprep.subr.mxu0 %v2297
  %3053 = vmatpush1.msra.mxu0 %v2296
  %3054 = vmatprep.subr.mxu0 %v2305
  %3055 = vmatpush1.msra.mxu0 %v2304
  %3056 = vmatprep.subr.mxu0 %v2313
  %3057 = vmatpush1.msra.mxu0 %v2312
  %3058 = vmatprep.subr.mxu0 %v2321
  %3059 = vmatpush1.msra.mxu0 %v2320
  %3060 = vmatprep.subr.mxu0 %v2329
  %3061 = vmatpush1.msra.mxu0 %v2328
  %3062 = vmatprep.subr.mxu0 %v2337
  %3063 = vmatpush1.msra.mxu0 %v2336
  %3064 = vmatprep.subr.mxu0 %v2345
  %3065 = vmatpush1.msra.mxu0 %v2344
  %3066 = vmatprep.subr.mxu0 %v2353
  %3067 = vmatpush1.msra.mxu0 %v2352
  %3068 = vmatprep.subr.mxu0 %v2361
  %3069 = vmatpush1.msra.mxu0 %v2360
  %3070 = vmatprep.subr.mxu0 %v2369
  %3071 = vmatpush1.msra.mxu0 %v2368
  %3072 = vmatprep.subr.mxu0 %v2377
  %3073 = vmatpush1.msra.mxu0 %v2376
  %3074 = vmatprep.subr.mxu0 %v2385
  %3075 = vmatpush1.msra.mxu0 %v2384
  %3076 = vmatprep.subr.mxu0 %v2393
  %3077 = vmatpush1.msra.mxu0 %v2392
  %3078 = vmatprep.subr.mxu0 %v2401
  %3079 = vmatpush1.msra.mxu0 %v2400
  %3080 = vmatprep.subr.mxu0 %v2409
  %3081 = vmatpush1.msra.mxu0 %v2408
  %3082 = vmatprep.subr.mxu0 %v2417
  %3083 = vmatpush1.msra.mxu0 %v2416
  %3084 = vmatprep.subr.mxu0 %v2425
  %3085 = vmatpush1.msra.mxu0 %v2424
  %3086 = vmatprep.subr.mxu0 %v2433
  %3087 = vmatpush1.msra.mxu0 %v2432
  %3088 = vmatprep.mubr.f32.mxu0 %v987
  %3089 = vmatmul.mubr.f32.gmra.mrb[0].mxu0 %v986
  %v3090 = vpop.f32.mrb[0].mxu0
  %v3091 = vadd.f32 0.0, %v3090
  %v3092 = vpop.f32.mrb[0].mxu0
  %v3093 = vadd.f32 0.0, %v3092
  %3094 = vmatprep.mubr.f32.mxu0 %v991
  %3095 = vmatmul.mubr.f32.gmra.mrb[0].mxu0 %v990
  %v3096 = vpop.f32.mrb[0].mxu0
  %v3097 = vadd.f32 0.0, %v3096
  %v3098 = vpop.f32.mrb[0].mxu0
  %v3099 = vadd.f32 0.0, %v3098
  %3100 = vmatprep.mubr.f32.mxu0 %v995
  %3101 = vmatmul.mubr.f32.gmra.mrb[0].mxu0 %v994
  %v3102 = vpop.f32.mrb[0].mxu0
  %v3103 = vadd.f32 0.0, %v3102
  %v3104 = vpop.f32.mrb[0].mxu0
  %v3105 = vadd.f32 0.0, %v3104
  %3106 = vdwg.mxu0
  %3107 = vmatprep.subr.mxu0 %v2441
  %3108 = vmatpush1.msra.mxu0 %v2440
  %3109 = vmatprep.subr.mxu0 %v2449
  %3110 = vmatpush1.msra.mxu0 %v2448
  %3111 = vmatprep.subr.mxu0 %v2457
  %3112 = vmatpush1.msra.mxu0 %v2456
  %3113 = vmatprep.subr.mxu0 %v2465
  %3114 = vmatpush1.msra.mxu0 %v2464
  %3115 = vmatprep.subr.mxu0 %v2473
  %3116 = vmatpush1.msra.mxu0 %v2472
  %3117 = vmatprep.subr.mxu0 %v2481
  %3118 = vmatpush1.msra.mxu0 %v2480
  %3119 = vmatprep.subr.mxu0 %v2489
  %3120 = vmatpush1.msra.mxu0 %v2488
  %3121 = vmatprep.subr.mxu0 %v2497
  %3122 = vmatpush1.msra.mxu0 %v2496
  %3123 = vmatprep.subr.mxu0 %v2505
  %3124 = vmatpush1.msra.mxu0 %v2504
  %3125 = vmatprep.subr.mxu0 %v2513
  %3126 = vmatpush1.msra.mxu0 %v2512
  %3127 = vmatprep.subr.mxu0 %v2521
  %3128 = vmatpush1.msra.mxu0 %v2520
  %3129 = vmatprep.subr.mxu0 %v2529
  %3130 = vmatpush1.msra.mxu0 %v2528
  %3131 = vmatprep.subr.mxu0 %v2537
  %3132 = vmatpush1.msra.mxu0 %v2536
  %3133 = vmatprep.subr.mxu0 %v2545
  %3134 = vmatpush1.msra.mxu0 %v2544
  %3135 = vmatprep.subr.mxu0 %v2553
  %3136 = vmatpush1.msra.mxu0 %v2552
  %3137 = vmatprep.subr.mxu0 %v2561
  %3138 = vmatpush1.msra.mxu0 %v2560
  %3139 = vmatprep.subr.mxu0 %v2569
  %3140 = vmatpush1.msra.mxu0 %v2568
  %3141 = vmatprep.subr.mxu0 %v2577
  %3142 = vmatpush1.msra.mxu0 %v2576
  %3143 = vmatprep.subr.mxu0 %v2585
  %3144 = vmatpush1.msra.mxu0 %v2584
  %3145 = vmatprep.subr.mxu0 %v2593
  %3146 = vmatpush1.msra.mxu0 %v2592
  %3147 = vmatprep.subr.mxu0 %v2601
  %3148 = vmatpush1.msra.mxu0 %v2600
  %3149 = vmatprep.subr.mxu0 %v2609
  %3150 = vmatpush1.msra.mxu0 %v2608
  %3151 = vmatprep.subr.mxu0 %v2617
  %3152 = vmatpush1.msra.mxu0 %v2616
  %3153 = vmatprep.subr.mxu0 %v2625
  %3154 = vmatpush1.msra.mxu0 %v2624
  %3155 = vmatprep.subr.mxu0 %v2633
  %3156 = vmatpush1.msra.mxu0 %v2632
  %3157 = vmatprep.subr.mxu0 %v2641
  %3158 = vmatpush1.msra.mxu0 %v2640
  %3159 = vmatprep.subr.mxu0 %v2649
  %3160 = vmatpush1.msra.mxu0 %v2648
  %3161 = vmatprep.subr.mxu0 %v2657
  %3162 = vmatpush1.msra.mxu0 %v2656
  %3163 = vmatprep.subr.mxu0 %v2665
  %3164 = vmatpush1.msra.mxu0 %v2664
  %3165 = vmatprep.subr.mxu0 %v2673
  %3166 = vmatpush1.msra.mxu0 %v2672
  %3167 = vmatprep.subr.mxu0 %v2681
  %3168 = vmatpush1.msra.mxu0 %v2680
  %3169 = vmatprep.subr.mxu0 %v2689
  %3170 = vmatpush1.msra.mxu0 %v2688
  %3171 = vmatprep.mubr.f32.mxu0 %v989
  %3172 = vmatmul.mubr.f32.gmra.mrb[0].mxu0 %v988
  %v3173 = vpop.f32.mrb[0].mxu0
  %v3174 = vadd.f32 %v3091, %v3173
  %v3175 = vpop.f32.mrb[0].mxu0
  %v3176 = vadd.f32 %v3093, %v3175
  %3177 = vmatprep.mubr.f32.mxu0 %v993
  %3178 = vmatmul.mubr.f32.gmra.mrb[0].mxu0 %v992
  %v3179 = vpop.f32.mrb[0].mxu0
  %v3180 = vadd.f32 %v3097, %v3179
  %v3181 = vpop.f32.mrb[0].mxu0
  %v3182 = vadd.f32 %v3099, %v3181
  %3183 = vmatprep.mubr.f32.mxu0 %v997
  %3184 = vmatmul.mubr.f32.gmra.mrb[0].mxu0 %v996
  %v3185 = vpop.f32.mrb[0].mxu0
  %v3186 = vadd.f32 %v3103, %v3185
  %v3187 = vpop.f32.mrb[0].mxu0
  %v3188 = vadd.f32 %v3105, %v3187
  %3189 = vdwg.mxu0
  %3190 = vmatprep.subr.mxu0 %v2187
  %3191 = vmatpush1.msra.mxu0 %v2186
  %3192 = vmatprep.subr.mxu0 %v2195
  %3193 = vmatpush1.msra.mxu0 %v2194
  %3194 = vmatprep.subr.mxu0 %v2203
  %3195 = vmatpush1.msra.mxu0 %v2202
  %3196 = vmatprep.subr.mxu0 %v2211
  %3197 = vmatpush1.msra.mxu0 %v2210
  %3198 = vmatprep.subr.mxu0 %v2219
  %3199 = vmatpush1.msra.mxu0 %v2218
  %3200 = vmatprep.subr.mxu0 %v2227
  %3201 = vmatpush1.msra.mxu0 %v2226
  %3202 = vmatprep.subr.mxu0 %v2235
  %3203 = vmatpush1.msra.mxu0 %v2234
  %3204 = vmatprep.subr.mxu0 %v2243
  %3205 = vmatpush1.msra.mxu0 %v2242
  %3206 = vmatprep.subr.mxu0 %v2251
  %3207 = vmatpush1.msra.mxu0 %v2250
  %3208 = vmatprep.subr.mxu0 %v2259
  %3209 = vmatpush1.msra.mxu0 %v2258
  %3210 = vmatprep.subr.mxu0 %v2267
  %3211 = vmatpush1.msra.mxu0 %v2266
  %3212 = vmatprep.subr.mxu0 %v2275
  %3213 = vmatpush1.msra.mxu0 %v2274
  %3214 = vmatprep.subr.mxu0 %v2283
  %3215 = vmatpush1.msra.mxu0 %v2282
  %3216 = vmatprep.subr.mxu0 %v2291
  %3217 = vmatpush1.msra.mxu0 %v2290
  %3218 = vmatprep.subr.mxu0 %v2299
  %3219 = vmatpush1.msra.mxu0 %v2298
  %3220 = vmatprep.subr.mxu0 %v2307
  %3221 = vmatpush1.msra.mxu0 %v2306
  %3222 = vmatprep.subr.mxu0 %v2315
  %3223 = vmatpush1.msra.mxu0 %v2314
  %3224 = vmatprep.subr.mxu0 %v2323
  %3225 = vmatpush1.msra.mxu0 %v2322
  %3226 = vmatprep.subr.mxu0 %v2331
  %3227 = vmatpush1.msra.mxu0 %v2330
  %3228 = vmatprep.subr.mxu0 %v2339
  %3229 = vmatpush1.msra.mxu0 %v2338
  %3230 = vmatprep.subr.mxu0 %v2347
  %3231 = vmatpush1.msra.mxu0 %v2346
  %3232 = vmatprep.subr.mxu0 %v2355
  %3233 = vmatpush1.msra.mxu0 %v2354
  %3234 = vmatprep.subr.mxu0 %v2363
  %3235 = vmatpush1.msra.mxu0 %v2362
  %3236 = vmatprep.subr.mxu0 %v2371
  %3237 = vmatpush1.msra.mxu0 %v2370
  %3238 = vmatprep.subr.mxu0 %v2379
  %3239 = vmatpush1.msra.mxu0 %v2378
  %3240 = vmatprep.subr.mxu0 %v2387
  %3241 = vmatpush1.msra.mxu0 %v2386
  %3242 = vmatprep.subr.mxu0 %v2395
  %3243 = vmatpush1.msra.mxu0 %v2394
  %3244 = vmatprep.subr.mxu0 %v2403
  %3245 = vmatpush1.msra.mxu0 %v2402
  %3246 = vmatprep.subr.mxu0 %v2411
  %3247 = vmatpush1.msra.mxu0 %v2410
  %3248 = vmatprep.subr.mxu0 %v2419
  %3249 = vmatpush1.msra.mxu0 %v2418
  %3250 = vmatprep.subr.mxu0 %v2427
  %3251 = vmatpush1.msra.mxu0 %v2426
  %3252 = vmatprep.subr.mxu0 %v2435
  %3253 = vmatpush1.msra.mxu0 %v2434
  %3254 = vmatprep.mubr.f32.mxu0 %v987
  %3255 = vmatmul.mubr.f32.gmra.mrb[0].mxu0 %v986
  %v3256 = vpop.f32.mrb[0].mxu0
  %v3257 = vadd.f32 0.0, %v3256
  %v3258 = vpop.f32.mrb[0].mxu0
  %v3259 = vadd.f32 0.0, %v3258
  %3260 = vmatprep.mubr.f32.mxu0 %v991
  %3261 = vmatmul.mubr.f32.gmra.mrb[0].mxu0 %v990
  %v3262 = vpop.f32.mrb[0].mxu0
  %v3263 = vadd.f32 0.0, %v3262
  %v3264 = vpop.f32.mrb[0].mxu0
  %v3265 = vadd.f32 0.0, %v3264
  %3266 = vmatprep.mubr.f32.mxu0 %v995
  %3267 = vmatmul.mubr.f32.gmra.mrb[0].mxu0 %v994
  %v3268 = vpop.f32.mrb[0].mxu0
  %v3269 = vadd.f32 0.0, %v3268
  %v3270 = vpop.f32.mrb[0].mxu0
  %v3271 = vadd.f32 0.0, %v3270
  %3272 = vdwg.mxu0
  %3273 = vmatprep.subr.mxu0 %v2443
  %3274 = vmatpush1.msra.mxu0 %v2442
  %3275 = vmatprep.subr.mxu0 %v2451
  %3276 = vmatpush1.msra.mxu0 %v2450
  %3277 = vmatprep.subr.mxu0 %v2459
  %3278 = vmatpush1.msra.mxu0 %v2458
  %3279 = vmatprep.subr.mxu0 %v2467
  %3280 = vmatpush1.msra.mxu0 %v2466
  %3281 = vmatprep.subr.mxu0 %v2475
  %3282 = vmatpush1.msra.mxu0 %v2474
  %3283 = vmatprep.subr.mxu0 %v2483
  %3284 = vmatpush1.msra.mxu0 %v2482
  %3285 = vmatprep.subr.mxu0 %v2491
  %3286 = vmatpush1.msra.mxu0 %v2490
  %3287 = vmatprep.subr.mxu0 %v2499
  %3288 = vmatpush1.msra.mxu0 %v2498
  %3289 = vmatprep.subr.mxu0 %v2507
  %3290 = vmatpush1.msra.mxu0 %v2506
  %3291 = vmatprep.subr.mxu0 %v2515
  %3292 = vmatpush1.msra.mxu0 %v2514
  %3293 = vmatprep.subr.mxu0 %v2523
  %3294 = vmatpush1.msra.mxu0 %v2522
  %3295 = vmatprep.subr.mxu0 %v2531
  %3296 = vmatpush1.msra.mxu0 %v2530
  %3297 = vmatprep.subr.mxu0 %v2539
  %3298 = vmatpush1.msra.mxu0 %v2538
  %3299 = vmatprep.subr.mxu0 %v2547
  %3300 = vmatpush1.msra.mxu0 %v2546
  %3301 = vmatprep.subr.mxu0 %v2555
  %3302 = vmatpush1.msra.mxu0 %v2554
  %3303 = vmatprep.subr.mxu0 %v2563
  %3304 = vmatpush1.msra.mxu0 %v2562
  %3305 = vmatprep.subr.mxu0 %v2571
  %3306 = vmatpush1.msra.mxu0 %v2570
  %3307 = vmatprep.subr.mxu0 %v2579
  %3308 = vmatpush1.msra.mxu0 %v2578
  %3309 = vmatprep.subr.mxu0 %v2587
  %3310 = vmatpush1.msra.mxu0 %v2586
  %3311 = vmatprep.subr.mxu0 %v2595
  %3312 = vmatpush1.msra.mxu0 %v2594
  %3313 = vmatprep.subr.mxu0 %v2603
  %3314 = vmatpush1.msra.mxu0 %v2602
  %3315 = vmatprep.subr.mxu0 %v2611
  %3316 = vmatpush1.msra.mxu0 %v2610
  %3317 = vmatprep.subr.mxu0 %v2619
  %3318 = vmatpush1.msra.mxu0 %v2618
  %3319 = vmatprep.subr.mxu0 %v2627
  %3320 = vmatpush1.msra.mxu0 %v2626
  %3321 = vmatprep.subr.mxu0 %v2635
  %3322 = vmatpush1.msra.mxu0 %v2634
  %3323 = vmatprep.subr.mxu0 %v2643
  %3324 = vmatpush1.msra.mxu0 %v2642
  %3325 = vmatprep.subr.mxu0 %v2651
  %3326 = vmatpush1.msra.mxu0 %v2650
  %3327 = vmatprep.subr.mxu0 %v2659
  %3328 = vmatpush1.msra.mxu0 %v2658
  %3329 = vmatprep.subr.mxu0 %v2667
  %3330 = vmatpush1.msra.mxu0 %v2666
  %3331 = vmatprep.subr.mxu0 %v2675
  %3332 = vmatpush1.msra.mxu0 %v2674
  %3333 = vmatprep.subr.mxu0 %v2683
  %3334 = vmatpush1.msra.mxu0 %v2682
  %3335 = vmatprep.subr.mxu0 %v2691
  %3336 = vmatpush1.msra.mxu0 %v2690
  %3337 = vmatprep.mubr.f32.mxu0 %v989
  %3338 = vmatmul.mubr.f32.gmra.mrb[0].mxu0 %v988
  %v3339 = vpop.f32.mrb[0].mxu0
  %v3340 = vadd.f32 %v3257, %v3339
  %v3341 = vpop.f32.mrb[0].mxu0
  %v3342 = vadd.f32 %v3259, %v3341
  %3343 = vmatprep.mubr.f32.mxu0 %v993
  %3344 = vmatmul.mubr.f32.gmra.mrb[0].mxu0 %v992
  %v3345 = vpop.f32.mrb[0].mxu0
  %v3346 = vadd.f32 %v3263, %v3345
  %v3347 = vpop.f32.mrb[0].mxu0
  %v3348 = vadd.f32 %v3265, %v3347
  %3349 = vmatprep.mubr.f32.mxu0 %v997
  %3350 = vmatmul.mubr.f32.gmra.mrb[0].mxu0 %v996
  %v3351 = vpop.f32.mrb[0].mxu0
  %v3352 = vadd.f32 %v3269, %v3351
  %v3353 = vpop.f32.mrb[0].mxu0
  %v3354 = vadd.f32 %v3271, %v3353
  %3355 = vdwg.mxu0
  %vm3356 = vcmask 195584
  %v3358 = vsel %vm3356, %v2177, 0
  %v3361 = vsel %vm3356, %v2178, 0
  %3363 = vmatprep.subr.mxu0 %v2844
  %3364 = vmatpush1.msra.mxu0 %v2842
  %3365 = vmatprep.subr.mxu0 %v2850
  %3366 = vmatpush1.msra.mxu0 %v2848
  %3367 = vmatprep.subr.mxu0 %v2856
  %3368 = vmatpush1.msra.mxu0 %v2854
  %3369 = vmatprep.subr.mxu0 0.0
  %3370 = vmatpush1.msra.mxu0 0.0
  %3371 = vmatprep.subr.mxu0 0.0
  %3372 = vmatpush1.msra.mxu0 0.0
  %3373 = vmatprep.subr.mxu0 0.0
  %3374 = vmatpush1.msra.mxu0 0.0
  %3375 = vmatprep.subr.mxu0 0.0
  %3376 = vmatpush1.msra.mxu0 0.0
  %3377 = vmatprep.subr.mxu0 0.0
  %3378 = vmatpush1.msra.mxu0 0.0
  %3379 = vmatprep.subr.mxu0 0.0
  %3380 = vmatpush1.msra.mxu0 0.0
  %3381 = vmatprep.subr.mxu0 0.0
  %3382 = vmatpush1.msra.mxu0 0.0
  %3383 = vmatprep.subr.mxu0 0.0
  %3384 = vmatpush1.msra.mxu0 0.0
  %3385 = vmatprep.subr.mxu0 0.0
  %3386 = vmatpush1.msra.mxu0 0.0
  %3387 = vmatprep.subr.mxu0 0.0
  %3388 = vmatpush1.msra.mxu0 0.0
  %3389 = vmatprep.subr.mxu0 0.0
  %3390 = vmatpush1.msra.mxu0 0.0
  %3391 = vmatprep.subr.mxu0 0.0
  %3392 = vmatpush1.msra.mxu0 0.0
  %3393 = vmatprep.subr.mxu0 0.0
  %3394 = vmatpush1.msra.mxu0 0.0
  %3395 = vmatprep.subr.mxu0 0.0
  %3396 = vmatpush1.msra.mxu0 0.0
  %3397 = vmatprep.subr.mxu0 0.0
  %3398 = vmatpush1.msra.mxu0 0.0
  %3399 = vmatprep.subr.mxu0 0.0
  %3400 = vmatpush1.msra.mxu0 0.0
  %3401 = vmatprep.subr.mxu0 0.0
  %3402 = vmatpush1.msra.mxu0 0.0
  %3403 = vmatprep.subr.mxu0 0.0
  %3404 = vmatpush1.msra.mxu0 0.0
  %3405 = vmatprep.subr.mxu0 0.0
  %3406 = vmatpush1.msra.mxu0 0.0
  %3407 = vmatprep.subr.mxu0 0.0
  %3408 = vmatpush1.msra.mxu0 0.0
  %3409 = vmatprep.subr.mxu0 0.0
  %3410 = vmatpush1.msra.mxu0 0.0
  %3411 = vmatprep.subr.mxu0 0.0
  %3412 = vmatpush1.msra.mxu0 0.0
  %3413 = vmatprep.subr.mxu0 0.0
  %3414 = vmatpush1.msra.mxu0 0.0
  %3415 = vmatprep.subr.mxu0 0.0
  %3416 = vmatpush1.msra.mxu0 0.0
  %3417 = vmatprep.subr.mxu0 0.0
  %3418 = vmatpush1.msra.mxu0 0.0
  %3419 = vmatprep.subr.mxu0 0.0
  %3420 = vmatpush1.msra.mxu0 0.0
  %3421 = vmatprep.subr.mxu0 0.0
  %3422 = vmatpush1.msra.mxu0 0.0
  %3423 = vmatprep.subr.mxu0 0.0
  %3424 = vmatpush1.msra.mxu0 0.0
  %3425 = vmatprep.subr.mxu0 0.0
  %3426 = vmatpush1.msra.mxu0 0.0
  %3427 = vmatprep.mubr.f32.mxu0 0.0
  %3428 = vmatmul.mubr.f32.gmra.mrb[0].mxu0 %v3358
  %v3429 = vpop.f32.mrb[0].mxu0
  %v3430 = vadd.f32 0.0, %v3429
  %v3431 = vpop.f32.mrb[0].mxu0
  %v3432 = vadd.f32 0.0, %v3431
  %3433 = vmatprep.mubr.f32.mxu0 0.0
  %3434 = vmatmul.mubr.f32.gmra.mrb[0].mxu0 %v3361
  %v3435 = vpop.f32.mrb[0].mxu0
  %v3436 = vadd.f32 0.0, %v3435
  %v3437 = vpop.f32.mrb[0].mxu0
  %v3438 = vadd.f32 0.0, %v3437
  %3439 = vdwg.mxu0
  %3440 = vmatprep.subr.mxu0 %v3010
  %3441 = vmatpush1.msra.mxu0 %v3008
  %3442 = vmatprep.subr.mxu0 %v3016
  %3443 = vmatpush1.msra.mxu0 %v3014
  %3444 = vmatprep.subr.mxu0 %v3022
  %3445 = vmatpush1.msra.mxu0 %v3020
  %3446 = vmatprep.subr.mxu0 0.0
  %3447 = vmatpush1.msra.mxu0 0.0
  %3448 = vmatprep.subr.mxu0 0.0
  %3449 = vmatpush1.msra.mxu0 0.0
  %3450 = vmatprep.subr.mxu0 0.0
  %3451 = vmatpush1.msra.mxu0 0.0
  %3452 = vmatprep.subr.mxu0 0.0
  %3453 = vmatpush1.msra.mxu0 0.0
  %3454 = vmatprep.subr.mxu0 0.0
  %3455 = vmatpush1.msra.mxu0 0.0
  %3456 = vmatprep.subr.mxu0 0.0
  %3457 = vmatpush1.msra.mxu0 0.0
  %3458 = vmatprep.subr.mxu0 0.0
  %3459 = vmatpush1.msra.mxu0 0.0
  %3460 = vmatprep.subr.mxu0 0.0
  %3461 = vmatpush1.msra.mxu0 0.0
  %3462 = vmatprep.subr.mxu0 0.0
  %3463 = vmatpush1.msra.mxu0 0.0
  %3464 = vmatprep.subr.mxu0 0.0
  %3465 = vmatpush1.msra.mxu0 0.0
  %3466 = vmatprep.subr.mxu0 0.0
  %3467 = vmatpush1.msra.mxu0 0.0
  %3468 = vmatprep.subr.mxu0 0.0
  %3469 = vmatpush1.msra.mxu0 0.0
  %3470 = vmatprep.subr.mxu0 0.0
  %3471 = vmatpush1.msra.mxu0 0.0
  %3472 = vmatprep.subr.mxu0 0.0
  %3473 = vmatpush1.msra.mxu0 0.0
  %3474 = vmatprep.subr.mxu0 0.0
  %3475 = vmatpush1.msra.mxu0 0.0
  %3476 = vmatprep.subr.mxu0 0.0
  %3477 = vmatpush1.msra.mxu0 0.0
  %3478 = vmatprep.subr.mxu0 0.0
  %3479 = vmatpush1.msra.mxu0 0.0
  %3480 = vmatprep.subr.mxu0 0.0
  %3481 = vmatpush1.msra.mxu0 0.0
  %3482 = vmatprep.subr.mxu0 0.0
  %3483 = vmatpush1.msra.mxu0 0.0
  %3484 = vmatprep.subr.mxu0 0.0
  %3485 = vmatpush1.msra.mxu0 0.0
  %3486 = vmatprep.subr.mxu0 0.0
  %3487 = vmatpush1.msra.mxu0 0.0
  %3488 = vmatprep.subr.mxu0 0.0
  %3489 = vmatpush1.msra.mxu0 0.0
  %3490 = vmatprep.subr.mxu0 0.0
  %3491 = vmatpush1.msra.mxu0 0.0
  %3492 = vmatprep.subr.mxu0 0.0
  %3493 = vmatpush1.msra.mxu0 0.0
  %3494 = vmatprep.subr.mxu0 0.0
  %3495 = vmatpush1.msra.mxu0 0.0
  %3496 = vmatprep.subr.mxu0 0.0
  %3497 = vmatpush1.msra.mxu0 0.0
  %3498 = vmatprep.subr.mxu0 0.0
  %3499 = vmatpush1.msra.mxu0 0.0
  %3500 = vmatprep.subr.mxu0 0.0
  %3501 = vmatpush1.msra.mxu0 0.0
  %3502 = vmatprep.subr.mxu0 0.0
  %3503 = vmatpush1.msra.mxu0 0.0
  %3504 = vmatprep.mubr.f32.mxu0 0.0
  %3505 = vmatmul.mubr.f32.gmra.mrb[0].mxu0 %v3358
  %v3506 = vpop.f32.mrb[0].mxu0
  %v3507 = vadd.f32 0.0, %v3506
  %v3508 = vpop.f32.mrb[0].mxu0
  %v3509 = vadd.f32 0.0, %v3508
  %3510 = vmatprep.mubr.f32.mxu0 0.0
  %3511 = vmatmul.mubr.f32.gmra.mrb[0].mxu0 %v3361
  %v3512 = vpop.f32.mrb[0].mxu0
  %v3513 = vadd.f32 0.0, %v3512
  %v3514 = vpop.f32.mrb[0].mxu0
  %v3515 = vadd.f32 0.0, %v3514
  %3516 = vdwg.mxu0
  %3517 = vmatprep.subr.mxu0 %v3176
  %3518 = vmatpush1.msra.mxu0 %v3174
  %3519 = vmatprep.subr.mxu0 %v3182
  %3520 = vmatpush1.msra.mxu0 %v3180
  %3521 = vmatprep.subr.mxu0 %v3188
  %3522 = vmatpush1.msra.mxu0 %v3186
  %3523 = vmatprep.subr.mxu0 0.0
  %3524 = vmatpush1.msra.mxu0 0.0
  %3525 = vmatprep.subr.mxu0 0.0
  %3526 = vmatpush1.msra.mxu0 0.0
  %3527 = vmatprep.subr.mxu0 0.0
  %3528 = vmatpush1.msra.mxu0 0.0
  %3529 = vmatprep.subr.mxu0 0.0
  %3530 = vmatpush1.msra.mxu0 0.0
  %3531 = vmatprep.subr.mxu0 0.0
  %3532 = vmatpush1.msra.mxu0 0.0
  %3533 = vmatprep.subr.mxu0 0.0
  %3534 = vmatpush1.msra.mxu0 0.0
  %3535 = vmatprep.subr.mxu0 0.0
  %3536 = vmatpush1.msra.mxu0 0.0
  %3537 = vmatprep.subr.mxu0 0.0
  %3538 = vmatpush1.msra.mxu0 0.0
  %3539 = vmatprep.subr.mxu0 0.0
  %3540 = vmatpush1.msra.mxu0 0.0
  %3541 = vmatprep.subr.mxu0 0.0
  %3542 = vmatpush1.msra.mxu0 0.0
  %3543 = vmatprep.subr.mxu0 0.0
  %3544 = vmatpush1.msra.mxu0 0.0
  %3545 = vmatprep.subr.mxu0 0.0
  %3546 = vmatpush1.msra.mxu0 0.0
  %3547 = vmatprep.subr.mxu0 0.0
  %3548 = vmatpush1.msra.mxu0 0.0
  %3549 = vmatprep.subr.mxu0 0.0
  %3550 = vmatpush1.msra.mxu0 0.0
  %3551 = vmatprep.subr.mxu0 0.0
  %3552 = vmatpush1.msra.mxu0 0.0
  %3553 = vmatprep.subr.mxu0 0.0
  %3554 = vmatpush1.msra.mxu0 0.0
  %3555 = vmatprep.subr.mxu0 0.0
  %3556 = vmatpush1.msra.mxu0 0.0
  %3557 = vmatprep.subr.mxu0 0.0
  %3558 = vmatpush1.msra.mxu0 0.0
  %3559 = vmatprep.subr.mxu0 0.0
  %3560 = vmatpush1.msra.mxu0 0.0
  %3561 = vmatprep.subr.mxu0 0.0
  %3562 = vmatpush1.msra.mxu0 0.0
  %3563 = vmatprep.subr.mxu0 0.0
  %3564 = vmatpush1.msra.mxu0 0.0
  %3565 = vmatprep.subr.mxu0 0.0
  %3566 = vmatpush1.msra.mxu0 0.0
  %3567 = vmatprep.subr.mxu0 0.0
  %3568 = vmatpush1.msra.mxu0 0.0
  %3569 = vmatprep.subr.mxu0 0.0
  %3570 = vmatpush1.msra.mxu0 0.0
  %3571 = vmatprep.subr.mxu0 0.0
  %3572 = vmatpush1.msra.mxu0 0.0
  %3573 = vmatprep.subr.mxu0 0.0
  %3574 = vmatpush1.msra.mxu0 0.0
  %3575 = vmatprep.subr.mxu0 0.0
  %3576 = vmatpush1.msra.mxu0 0.0
  %3577 = vmatprep.subr.mxu0 0.0
  %3578 = vmatpush1.msra.mxu0 0.0
  %3579 = vmatprep.subr.mxu0 0.0
  %3580 = vmatpush1.msra.mxu0 0.0
  %3581 = vmatprep.mubr.f32.mxu0 0.0
  %3582 = vmatmul.mubr.f32.gmra.mrb[0].mxu0 %v3358
  %v3583 = vpop.f32.mrb[0].mxu0
  %v3584 = vadd.f32 0.0, %v3583
  %v3585 = vpop.f32.mrb[0].mxu0
  %v3586 = vadd.f32 0.0, %v3585
  %3587 = vmatprep.mubr.f32.mxu0 0.0
  %3588 = vmatmul.mubr.f32.gmra.mrb[0].mxu0 %v3361
  %v3589 = vpop.f32.mrb[0].mxu0
  %v3590 = vadd.f32 0.0, %v3589
  %v3591 = vpop.f32.mrb[0].mxu0
  %v3592 = vadd.f32 0.0, %v3591
  %3593 = vdwg.mxu0
  %3594 = vmatprep.subr.mxu0 %v3342
  %3595 = vmatpush1.msra.mxu0 %v3340
  %3596 = vmatprep.subr.mxu0 %v3348
  %3597 = vmatpush1.msra.mxu0 %v3346
  %3598 = vmatprep.subr.mxu0 %v3354
  %3599 = vmatpush1.msra.mxu0 %v3352
  %3600 = vmatprep.subr.mxu0 0.0
  %3601 = vmatpush1.msra.mxu0 0.0
  %3602 = vmatprep.subr.mxu0 0.0
  %3603 = vmatpush1.msra.mxu0 0.0
  %3604 = vmatprep.subr.mxu0 0.0
  %3605 = vmatpush1.msra.mxu0 0.0
  %3606 = vmatprep.subr.mxu0 0.0
  %3607 = vmatpush1.msra.mxu0 0.0
  %3608 = vmatprep.subr.mxu0 0.0
  %3609 = vmatpush1.msra.mxu0 0.0
  %3610 = vmatprep.subr.mxu0 0.0
  %3611 = vmatpush1.msra.mxu0 0.0
  %3612 = vmatprep.subr.mxu0 0.0
  %3613 = vmatpush1.msra.mxu0 0.0
  %3614 = vmatprep.subr.mxu0 0.0
  %3615 = vmatpush1.msra.mxu0 0.0
  %3616 = vmatprep.subr.mxu0 0.0
  %3617 = vmatpush1.msra.mxu0 0.0
  %3618 = vmatprep.subr.mxu0 0.0
  %3619 = vmatpush1.msra.mxu0 0.0
  %3620 = vmatprep.subr.mxu0 0.0
  %3621 = vmatpush1.msra.mxu0 0.0
  %3622 = vmatprep.subr.mxu0 0.0
  %3623 = vmatpush1.msra.mxu0 0.0
  %3624 = vmatprep.subr.mxu0 0.0
  %3625 = vmatpush1.msra.mxu0 0.0
  %3626 = vmatprep.subr.mxu0 0.0
  %3627 = vmatpush1.msra.mxu0 0.0
  %3628 = vmatprep.subr.mxu0 0.0
  %3629 = vmatpush1.msra.mxu0 0.0
  %3630 = vmatprep.subr.mxu0 0.0
  %3631 = vmatpush1.msra.mxu0 0.0
  %3632 = vmatprep.subr.mxu0 0.0
  %3633 = vmatpush1.msra.mxu0 0.0
  %3634 = vmatprep.subr.mxu0 0.0
  %3635 = vmatpush1.msra.mxu0 0.0
  %3636 = vmatprep.subr.mxu0 0.0
  %3637 = vmatpush1.msra.mxu0 0.0
  %3638 = vmatprep.subr.mxu0 0.0
  %3639 = vmatpush1.msra.mxu0 0.0
  %3640 = vmatprep.subr.mxu0 0.0
  %3641 = vmatpush1.msra.mxu0 0.0
  %3642 = vmatprep.subr.mxu0 0.0
  %3643 = vmatpush1.msra.mxu0 0.0
  %3644 = vmatprep.subr.mxu0 0.0
  %3645 = vmatpush1.msra.mxu0 0.0
  %3646 = vmatprep.subr.mxu0 0.0
  %3647 = vmatpush1.msra.mxu0 0.0
  %3648 = vmatprep.subr.mxu0 0.0
  %3649 = vmatpush1.msra.mxu0 0.0
  %3650 = vmatprep.subr.mxu0 0.0
  %3651 = vmatpush1.msra.mxu0 0.0
  %3652 = vmatprep.subr.mxu0 0.0
  %3653 = vmatpush1.msra.mxu0 0.0
  %3654 = vmatprep.subr.mxu0 0.0
  %3655 = vmatpush1.msra.mxu0 0.0
  %3656 = vmatprep.subr.mxu0 0.0
  %3657 = vmatpush1.msra.mxu0 0.0
  %3658 = vmatprep.mubr.f32.mxu0 0.0
  %3659 = vmatmul.mubr.f32.gmra.mrb[0].mxu0 %v3358
  %v3660 = vpop.f32.mrb[0].mxu0
  %v3661 = vadd.f32 0.0, %v3660
  %v3662 = vpop.f32.mrb[0].mxu0
  %v3663 = vadd.f32 0.0, %v3662
  %3664 = vmatprep.mubr.f32.mxu0 0.0
  %3665 = vmatmul.mubr.f32.gmra.mrb[0].mxu0 %v3361
  %v3666 = vpop.f32.mrb[0].mxu0
  %v3667 = vadd.f32 0.0, %v3666
  %v3668 = vpop.f32.mrb[0].mxu0
  %v3669 = vadd.f32 0.0, %v3668
  %3670 = vdwg.mxu0
  %v3672 = vsel %vm3356, %v998, 0
  %v3675 = vsel %vm3356, %v999, 0
  %3677 = vmatprep.subr.mxu0 %v1664
  %3678 = vmatpush1.msra.mxu0 %v1662
  %3679 = vmatprep.subr.mxu0 %v1670
  %3680 = vmatpush1.msra.mxu0 %v1668
  %3681 = vmatprep.subr.mxu0 %v1676
  %3682 = vmatpush1.msra.mxu0 %v1674
  %3683 = vmatprep.subr.mxu0 0.0
  %3684 = vmatpush1.msra.mxu0 0.0
  %3685 = vmatprep.subr.mxu0 0.0
  %3686 = vmatpush1.msra.mxu0 0.0
  %3687 = vmatprep.subr.mxu0 0.0
  %3688 = vmatpush1.msra.mxu0 0.0
  %3689 = vmatprep.subr.mxu0 0.0
  %3690 = vmatpush1.msra.mxu0 0.0
  %3691 = vmatprep.subr.mxu0 0.0
  %3692 = vmatpush1.msra.mxu0 0.0
  %3693 = vmatprep.subr.mxu0 0.0
  %3694 = vmatpush1.msra.mxu0 0.0
  %3695 = vmatprep.subr.mxu0 0.0
  %3696 = vmatpush1.msra.mxu0 0.0
  %3697 = vmatprep.subr.mxu0 0.0
  %3698 = vmatpush1.msra.mxu0 0.0
  %3699 = vmatprep.subr.mxu0 0.0
  %3700 = vmatpush1.msra.mxu0 0.0
  %3701 = vmatprep.subr.mxu0 0.0
  %3702 = vmatpush1.msra.mxu0 0.0
  %3703 = vmatprep.subr.mxu0 0.0
  %3704 = vmatpush1.msra.mxu0 0.0
  %3705 = vmatprep.subr.mxu0 0.0
  %3706 = vmatpush1.msra.mxu0 0.0
  %3707 = vmatprep.subr.mxu0 0.0
  %3708 = vmatpush1.msra.mxu0 0.0
  %3709 = vmatprep.subr.mxu0 0.0
  %3710 = vmatpush1.msra.mxu0 0.0
  %3711 = vmatprep.subr.mxu0 0.0
  %3712 = vmatpush1.msra.mxu0 0.0
  %3713 = vmatprep.subr.mxu0 0.0
  %3714 = vmatpush1.msra.mxu0 0.0
  %3715 = vmatprep.subr.mxu0 0.0
  %3716 = vmatpush1.msra.mxu0 0.0
  %3717 = vmatprep.subr.mxu0 0.0
  %3718 = vmatpush1.msra.mxu0 0.0
  %3719 = vmatprep.subr.mxu0 0.0
  %3720 = vmatpush1.msra.mxu0 0.0
  %3721 = vmatprep.subr.mxu0 0.0
  %3722 = vmatpush1.msra.mxu0 0.0
  %3723 = vmatprep.subr.mxu0 0.0
  %3724 = vmatpush1.msra.mxu0 0.0
  %3725 = vmatprep.subr.mxu0 0.0
  %3726 = vmatpush1.msra.mxu0 0.0
  %3727 = vmatprep.subr.mxu0 0.0
  %3728 = vmatpush1.msra.mxu0 0.0
  %3729 = vmatprep.subr.mxu0 0.0
  %3730 = vmatpush1.msra.mxu0 0.0
  %3731 = vmatprep.subr.mxu0 0.0
  %3732 = vmatpush1.msra.mxu0 0.0
  %3733 = vmatprep.subr.mxu0 0.0
  %3734 = vmatpush1.msra.mxu0 0.0
  %3735 = vmatprep.subr.mxu0 0.0
  %3736 = vmatpush1.msra.mxu0 0.0
  %3737 = vmatprep.subr.mxu0 0.0
  %3738 = vmatpush1.msra.mxu0 0.0
  %3739 = vmatprep.subr.mxu0 0.0
  %3740 = vmatpush1.msra.mxu0 0.0
  %3741 = vmatprep.mubr.f32.mxu0 0.0
  %3742 = vmatmul.mubr.f32.gmra.mrb[0].mxu0 %v3672
  %v3743 = vpop.f32.mrb[0].mxu0
  %v3744 = vadd.f32 %v3430, %v3743
  %v3745 = vpop.f32.mrb[0].mxu0
  %v3746 = vadd.f32 %v3432, %v3745
  %3747 = vmatprep.mubr.f32.mxu0 0.0
  %3748 = vmatmul.mubr.f32.gmra.mrb[0].mxu0 %v3675
  %v3749 = vpop.f32.mrb[0].mxu0
  %v3750 = vadd.f32 %v3436, %v3749
  %v3751 = vpop.f32.mrb[0].mxu0
  %v3752 = vadd.f32 %v3438, %v3751
  %3753 = vdwg.mxu0
  %3754 = vmatprep.subr.mxu0 %v1830
  %3755 = vmatpush1.msra.mxu0 %v1828
  %3756 = vmatprep.subr.mxu0 %v1836
  %3757 = vmatpush1.msra.mxu0 %v1834
  %3758 = vmatprep.subr.mxu0 %v1842
  %3759 = vmatpush1.msra.mxu0 %v1840
  %3760 = vmatprep.subr.mxu0 0.0
  %3761 = vmatpush1.msra.mxu0 0.0
  %3762 = vmatprep.subr.mxu0 0.0
  %3763 = vmatpush1.msra.mxu0 0.0
  %3764 = vmatprep.subr.mxu0 0.0
  %3765 = vmatpush1.msra.mxu0 0.0
  %3766 = vmatprep.subr.mxu0 0.0
  %3767 = vmatpush1.msra.mxu0 0.0
  %3768 = vmatprep.subr.mxu0 0.0
  %3769 = vmatpush1.msra.mxu0 0.0
  %3770 = vmatprep.subr.mxu0 0.0
  %3771 = vmatpush1.msra.mxu0 0.0
  %3772 = vmatprep.subr.mxu0 0.0
  %3773 = vmatpush1.msra.mxu0 0.0
  %3774 = vmatprep.subr.mxu0 0.0
  %3775 = vmatpush1.msra.mxu0 0.0
  %3776 = vmatprep.subr.mxu0 0.0
  %3777 = vmatpush1.msra.mxu0 0.0
  %3778 = vmatprep.subr.mxu0 0.0
  %3779 = vmatpush1.msra.mxu0 0.0
  %3780 = vmatprep.subr.mxu0 0.0
  %3781 = vmatpush1.msra.mxu0 0.0
  %3782 = vmatprep.subr.mxu0 0.0
  %3783 = vmatpush1.msra.mxu0 0.0
  %3784 = vmatprep.subr.mxu0 0.0
  %3785 = vmatpush1.msra.mxu0 0.0
  %3786 = vmatprep.subr.mxu0 0.0
  %3787 = vmatpush1.msra.mxu0 0.0
  %3788 = vmatprep.subr.mxu0 0.0
  %3789 = vmatpush1.msra.mxu0 0.0
  %3790 = vmatprep.subr.mxu0 0.0
  %3791 = vmatpush1.msra.mxu0 0.0
  %3792 = vmatprep.subr.mxu0 0.0
  %3793 = vmatpush1.msra.mxu0 0.0
  %3794 = vmatprep.subr.mxu0 0.0
  %3795 = vmatpush1.msra.mxu0 0.0
  %3796 = vmatprep.subr.mxu0 0.0
  %3797 = vmatpush1.msra.mxu0 0.0
  %3798 = vmatprep.subr.mxu0 0.0
  %3799 = vmatpush1.msra.mxu0 0.0
  %3800 = vmatprep.subr.mxu0 0.0
  %3801 = vmatpush1.msra.mxu0 0.0
  %3802 = vmatprep.subr.mxu0 0.0
  %3803 = vmatpush1.msra.mxu0 0.0
  %3804 = vmatprep.subr.mxu0 0.0
  %3805 = vmatpush1.msra.mxu0 0.0
  %3806 = vmatprep.subr.mxu0 0.0
  %3807 = vmatpush1.msra.mxu0 0.0
  %3808 = vmatprep.subr.mxu0 0.0
  %3809 = vmatpush1.msra.mxu0 0.0
  %3810 = vmatprep.subr.mxu0 0.0
  %3811 = vmatpush1.msra.mxu0 0.0
  %3812 = vmatprep.subr.mxu0 0.0
  %3813 = vmatpush1.msra.mxu0 0.0
  %3814 = vmatprep.subr.mxu0 0.0
  %3815 = vmatpush1.msra.mxu0 0.0
  %3816 = vmatprep.subr.mxu0 0.0
  %3817 = vmatpush1.msra.mxu0 0.0
  %3818 = vmatprep.mubr.f32.mxu0 0.0
  %3819 = vmatmul.mubr.f32.gmra.mrb[0].mxu0 %v3672
  %v3820 = vpop.f32.mrb[0].mxu0
  %v3821 = vadd.f32 %v3507, %v3820
  %v3822 = vpop.f32.mrb[0].mxu0
  %v3823 = vadd.f32 %v3509, %v3822
  %3824 = vmatprep.mubr.f32.mxu0 0.0
  %3825 = vmatmul.mubr.f32.gmra.mrb[0].mxu0 %v3675
  %v3826 = vpop.f32.mrb[0].mxu0
  %v3827 = vadd.f32 %v3513, %v3826
  %v3828 = vpop.f32.mrb[0].mxu0
  %v3829 = vadd.f32 %v3515, %v3828
  %3830 = vdwg.mxu0
  %3831 = vmatprep.subr.mxu0 %v1996
  %3832 = vmatpush1.msra.mxu0 %v1994
  %3833 = vmatprep.subr.mxu0 %v2002
  %3834 = vmatpush1.msra.mxu0 %v2000
  %3835 = vmatprep.subr.mxu0 %v2008
  %3836 = vmatpush1.msra.mxu0 %v2006
  %3837 = vmatprep.subr.mxu0 0.0
  %3838 = vmatpush1.msra.mxu0 0.0
  %3839 = vmatprep.subr.mxu0 0.0
  %3840 = vmatpush1.msra.mxu0 0.0
  %3841 = vmatprep.subr.mxu0 0.0
  %3842 = vmatpush1.msra.mxu0 0.0
  %3843 = vmatprep.subr.mxu0 0.0
  %3844 = vmatpush1.msra.mxu0 0.0
  %3845 = vmatprep.subr.mxu0 0.0
  %3846 = vmatpush1.msra.mxu0 0.0
  %3847 = vmatprep.subr.mxu0 0.0
  %3848 = vmatpush1.msra.mxu0 0.0
  %3849 = vmatprep.subr.mxu0 0.0
  %3850 = vmatpush1.msra.mxu0 0.0
  %3851 = vmatprep.subr.mxu0 0.0
  %3852 = vmatpush1.msra.mxu0 0.0
  %3853 = vmatprep.subr.mxu0 0.0
  %3854 = vmatpush1.msra.mxu0 0.0
  %3855 = vmatprep.subr.mxu0 0.0
  %3856 = vmatpush1.msra.mxu0 0.0
  %3857 = vmatprep.subr.mxu0 0.0
  %3858 = vmatpush1.msra.mxu0 0.0
  %3859 = vmatprep.subr.mxu0 0.0
  %3860 = vmatpush1.msra.mxu0 0.0
  %3861 = vmatprep.subr.mxu0 0.0
  %3862 = vmatpush1.msra.mxu0 0.0
  %3863 = vmatprep.subr.mxu0 0.0
  %3864 = vmatpush1.msra.mxu0 0.0
  %3865 = vmatprep.subr.mxu0 0.0
  %3866 = vmatpush1.msra.mxu0 0.0
  %3867 = vmatprep.subr.mxu0 0.0
  %3868 = vmatpush1.msra.mxu0 0.0
  %3869 = vmatprep.subr.mxu0 0.0
  %3870 = vmatpush1.msra.mxu0 0.0
  %3871 = vmatprep.subr.mxu0 0.0
  %3872 = vmatpush1.msra.mxu0 0.0
  %3873 = vmatprep.subr.mxu0 0.0
  %3874 = vmatpush1.msra.mxu0 0.0
  %3875 = vmatprep.subr.mxu0 0.0
  %3876 = vmatpush1.msra.mxu0 0.0
  %3877 = vmatprep.subr.mxu0 0.0
  %3878 = vmatpush1.msra.mxu0 0.0
  %3879 = vmatprep.subr.mxu0 0.0
  %3880 = vmatpush1.msra.mxu0 0.0
  %3881 = vmatprep.subr.mxu0 0.0
  %3882 = vmatpush1.msra.mxu0 0.0
  %3883 = vmatprep.subr.mxu0 0.0
  %3884 = vmatpush1.msra.mxu0 0.0
  %3885 = vmatprep.subr.mxu0 0.0
  %3886 = vmatpush1.msra.mxu0 0.0
  %3887 = vmatprep.subr.mxu0 0.0
  %3888 = vmatpush1.msra.mxu0 0.0
  %3889 = vmatprep.subr.mxu0 0.0
  %3890 = vmatpush1.msra.mxu0 0.0
  %3891 = vmatprep.subr.mxu0 0.0
  %3892 = vmatpush1.msra.mxu0 0.0
  %3893 = vmatprep.subr.mxu0 0.0
  %3894 = vmatpush1.msra.mxu0 0.0
  %3895 = vmatprep.mubr.f32.mxu0 0.0
  %3896 = vmatmul.mubr.f32.gmra.mrb[0].mxu0 %v3672
  %v3897 = vpop.f32.mrb[0].mxu0
  %v3898 = vadd.f32 %v3584, %v3897
  %v3899 = vpop.f32.mrb[0].mxu0
  %v3900 = vadd.f32 %v3586, %v3899
  %3901 = vmatprep.mubr.f32.mxu0 0.0
  %3902 = vmatmul.mubr.f32.gmra.mrb[0].mxu0 %v3675
  %v3903 = vpop.f32.mrb[0].mxu0
  %v3904 = vadd.f32 %v3590, %v3903
  %v3905 = vpop.f32.mrb[0].mxu0
  %v3906 = vadd.f32 %v3592, %v3905
  %3907 = vdwg.mxu0
  %3908 = vmatprep.subr.mxu0 %v2162
  %3909 = vmatpush1.msra.mxu0 %v2160
  %3910 = vmatprep.subr.mxu0 %v2168
  %3911 = vmatpush1.msra.mxu0 %v2166
  %3912 = vmatprep.subr.mxu0 %v2174
  %3913 = vmatpush1.msra.mxu0 %v2172
  %3914 = vmatprep.subr.mxu0 0.0
  %3915 = vmatpush1.msra.mxu0 0.0
  %3916 = vmatprep.subr.mxu0 0.0
  %3917 = vmatpush1.msra.mxu0 0.0
  %3918 = vmatprep.subr.mxu0 0.0
  %3919 = vmatpush1.msra.mxu0 0.0
  %3920 = vmatprep.subr.mxu0 0.0
  %3921 = vmatpush1.msra.mxu0 0.0
  %3922 = vmatprep.subr.mxu0 0.0
  %3923 = vmatpush1.msra.mxu0 0.0
  %3924 = vmatprep.subr.mxu0 0.0
  %3925 = vmatpush1.msra.mxu0 0.0
  %3926 = vmatprep.subr.mxu0 0.0
  %3927 = vmatpush1.msra.mxu0 0.0
  %3928 = vmatprep.subr.mxu0 0.0
  %3929 = vmatpush1.msra.mxu0 0.0
  %3930 = vmatprep.subr.mxu0 0.0
  %3931 = vmatpush1.msra.mxu0 0.0
  %3932 = vmatprep.subr.mxu0 0.0
  %3933 = vmatpush1.msra.mxu0 0.0
  %3934 = vmatprep.subr.mxu0 0.0
  %3935 = vmatpush1.msra.mxu0 0.0
  %3936 = vmatprep.subr.mxu0 0.0
  %3937 = vmatpush1.msra.mxu0 0.0
  %3938 = vmatprep.subr.mxu0 0.0
  %3939 = vmatpush1.msra.mxu0 0.0
  %3940 = vmatprep.subr.mxu0 0.0
  %3941 = vmatpush1.msra.mxu0 0.0
  %3942 = vmatprep.subr.mxu0 0.0
  %3943 = vmatpush1.msra.mxu0 0.0
  %3944 = vmatprep.subr.mxu0 0.0
  %3945 = vmatpush1.msra.mxu0 0.0
  %3946 = vmatprep.subr.mxu0 0.0
  %3947 = vmatpush1.msra.mxu0 0.0
  %3948 = vmatprep.subr.mxu0 0.0
  %3949 = vmatpush1.msra.mxu0 0.0
  %3950 = vmatprep.subr.mxu0 0.0
  %3951 = vmatpush1.msra.mxu0 0.0
  %3952 = vmatprep.subr.mxu0 0.0
  %3953 = vmatpush1.msra.mxu0 0.0
  %3954 = vmatprep.subr.mxu0 0.0
  %3955 = vmatpush1.msra.mxu0 0.0
  %3956 = vmatprep.subr.mxu0 0.0
  %3957 = vmatpush1.msra.mxu0 0.0
  %3958 = vmatprep.subr.mxu0 0.0
  %3959 = vmatpush1.msra.mxu0 0.0
  %3960 = vmatprep.subr.mxu0 0.0
  %3961 = vmatpush1.msra.mxu0 0.0
  %3962 = vmatprep.subr.mxu0 0.0
  %3963 = vmatpush1.msra.mxu0 0.0
  %3964 = vmatprep.subr.mxu0 0.0
  %3965 = vmatpush1.msra.mxu0 0.0
  %3966 = vmatprep.subr.mxu0 0.0
  %3967 = vmatpush1.msra.mxu0 0.0
  %3968 = vmatprep.subr.mxu0 0.0
  %3969 = vmatpush1.msra.mxu0 0.0
  %3970 = vmatprep.subr.mxu0 0.0
  %3971 = vmatpush1.msra.mxu0 0.0
  %3972 = vmatprep.mubr.f32.mxu0 0.0
  %3973 = vmatmul.mubr.f32.gmra.mrb[0].mxu0 %v3672
  %v3974 = vpop.f32.mrb[0].mxu0
  %v3975 = vadd.f32 %v3661, %v3974
  %v3976 = vpop.f32.mrb[0].mxu0
  %v3977 = vadd.f32 %v3663, %v3976
  %3978 = vmatprep.mubr.f32.mxu0 0.0
  %3979 = vmatmul.mubr.f32.gmra.mrb[0].mxu0 %v3675
  %v3980 = vpop.f32.mrb[0].mxu0
  %v3981 = vadd.f32 %v3667, %v3980
  %v3982 = vpop.f32.mrb[0].mxu0
  %v3983 = vadd.f32 %v3669, %v3982
  %3984 = vdwg.mxu0
  %s3985 = scalar_lea.vmem %s5, 32
  %v3986 = vld [vmem:[%s3985] sm:$0xff]
  %v3987 = vld [vmem:[%s3985 + $0x8] sm:$0xff]
  %s3988 = scalar_lea.vmem %s4, 8192
  %v3989 = vld [vmem:[%s3988] sm:$0xff]
  %v3990 = vld [vmem:[%s3988 + $0x8] sm:$0xff]
  %v3991 = vld [vmem:[%s3988 + $0x10] sm:$0xff]
  %v3992 = vld [vmem:[%s3988 + $0x18] sm:$0xff]
  %v3993 = vld [vmem:[%s3988 + $0x20] sm:$0xff]
  %v3994 = vld [vmem:[%s3988 + $0x28] sm:$0xff]
  %v3995 = vld [vmem:[%s3988 + $0x30] sm:$0xff]
  %v3996 = vld [vmem:[%s3988 + $0x38] sm:$0xff]
  %v3997 = vld [vmem:[%s3988 + $0x40] sm:$0xff]
  %v3998 = vld [vmem:[%s3988 + $0x48] sm:$0xff]
  %v3999 = vld [vmem:[%s3988 + $0x50] sm:$0xff]
  %v4000 = vld [vmem:[%s3988 + $0x58] sm:$0xff]
  %v4001 = vld [vmem:[%s3988 + $0x60] sm:$0xff]
  %v4002 = vld [vmem:[%s3988 + $0x68] sm:$0xff]
  %v4003 = vld [vmem:[%s3988 + $0x70] sm:$0xff]
  %v4004 = vld [vmem:[%s3988 + $0x78] sm:$0xff]
  %v4005 = vld [vmem:[%s3988 + $0x80] sm:$0xff]
  %v4006 = vld [vmem:[%s3988 + $0x88] sm:$0xff]
  %v4007 = vld [vmem:[%s3988 + $0x90] sm:$0xff]
  %v4008 = vld [vmem:[%s3988 + $0x98] sm:$0xff]
  %v4009 = vld [vmem:[%s3988 + $0xa0] sm:$0xff]
  %v4010 = vld [vmem:[%s3988 + $0xa8] sm:$0xff]
  %v4011 = vld [vmem:[%s3988 + $0xb0] sm:$0xff]
  %v4012 = vld [vmem:[%s3988 + $0xb8] sm:$0xff]
  %v4013 = vld [vmem:[%s3988 + $0xc0] sm:$0xff]
  %v4014 = vld [vmem:[%s3988 + $0xc8] sm:$0xff]
  %v4015 = vld [vmem:[%s3988 + $0xd0] sm:$0xff]
  %v4016 = vld [vmem:[%s3988 + $0xd8] sm:$0xff]
  %v4017 = vld [vmem:[%s3988 + $0xe0] sm:$0xff]
  %v4018 = vld [vmem:[%s3988 + $0xe8] sm:$0xff]
  %v4019 = vld [vmem:[%s3988 + $0xf0] sm:$0xff]
  %v4020 = vld [vmem:[%s3988 + $0xf8] sm:$0xff]
  %v4021 = vld [vmem:[%s3988 + $0x100] sm:$0xff]
  %v4022 = vld [vmem:[%s3988 + $0x108] sm:$0xff]
  %v4023 = vld [vmem:[%s3988 + $0x110] sm:$0xff]
  %v4024 = vld [vmem:[%s3988 + $0x118] sm:$0xff]
  %v4025 = vld [vmem:[%s3988 + $0x120] sm:$0xff]
  %v4026 = vld [vmem:[%s3988 + $0x128] sm:$0xff]
  %v4027 = vld [vmem:[%s3988 + $0x130] sm:$0xff]
  %v4028 = vld [vmem:[%s3988 + $0x138] sm:$0xff]
  %v4029 = vld [vmem:[%s3988 + $0x140] sm:$0xff]
  %v4030 = vld [vmem:[%s3988 + $0x148] sm:$0xff]
  %v4031 = vld [vmem:[%s3988 + $0x150] sm:$0xff]
  %v4032 = vld [vmem:[%s3988 + $0x158] sm:$0xff]
  %v4033 = vld [vmem:[%s3988 + $0x160] sm:$0xff]
  %v4034 = vld [vmem:[%s3988 + $0x168] sm:$0xff]
  %v4035 = vld [vmem:[%s3988 + $0x170] sm:$0xff]
  %v4036 = vld [vmem:[%s3988 + $0x178] sm:$0xff]
  %v4037 = vld [vmem:[%s3988 + $0x180] sm:$0xff]
  %v4038 = vld [vmem:[%s3988 + $0x188] sm:$0xff]
  %v4039 = vld [vmem:[%s3988 + $0x190] sm:$0xff]
  %v4040 = vld [vmem:[%s3988 + $0x198] sm:$0xff]
  %v4041 = vld [vmem:[%s3988 + $0x1a0] sm:$0xff]
  %v4042 = vld [vmem:[%s3988 + $0x1a8] sm:$0xff]
  %v4043 = vld [vmem:[%s3988 + $0x1b0] sm:$0xff]
  %v4044 = vld [vmem:[%s3988 + $0x1b8] sm:$0xff]
  %v4045 = vld [vmem:[%s3988 + $0x1c0] sm:$0xff]
  %v4046 = vld [vmem:[%s3988 + $0x1c8] sm:$0xff]
  %v4047 = vld [vmem:[%s3988 + $0x1d0] sm:$0xff]
  %v4048 = vld [vmem:[%s3988 + $0x1d8] sm:$0xff]
  %v4049 = vld [vmem:[%s3988 + $0x1e0] sm:$0xff]
  %v4050 = vld [vmem:[%s3988 + $0x1e8] sm:$0xff]
  %v4051 = vld [vmem:[%s3988 + $0x1f0] sm:$0xff]
  %v4052 = vld [vmem:[%s3988 + $0x1f8] sm:$0xff]
  %v4053 = vld [vmem:[%s3988 + $0x200] sm:$0xff]
  %v4054 = vld [vmem:[%s3988 + $0x208] sm:$0xff]
  %v4055 = vld [vmem:[%s3988 + $0x210] sm:$0xff]
  %v4056 = vld [vmem:[%s3988 + $0x218] sm:$0xff]
  %v4057 = vld [vmem:[%s3988 + $0x220] sm:$0xff]
  %v4058 = vld [vmem:[%s3988 + $0x228] sm:$0xff]
  %v4059 = vld [vmem:[%s3988 + $0x230] sm:$0xff]
  %v4060 = vld [vmem:[%s3988 + $0x238] sm:$0xff]
  %v4061 = vld [vmem:[%s3988 + $0x240] sm:$0xff]
  %v4062 = vld [vmem:[%s3988 + $0x248] sm:$0xff]
  %v4063 = vld [vmem:[%s3988 + $0x250] sm:$0xff]
  %v4064 = vld [vmem:[%s3988 + $0x258] sm:$0xff]
  %v4065 = vld [vmem:[%s3988 + $0x260] sm:$0xff]
  %v4066 = vld [vmem:[%s3988 + $0x268] sm:$0xff]
  %v4067 = vld [vmem:[%s3988 + $0x270] sm:$0xff]
  %v4068 = vld [vmem:[%s3988 + $0x278] sm:$0xff]
  %v4069 = vld [vmem:[%s3988 + $0x280] sm:$0xff]
  %v4070 = vld [vmem:[%s3988 + $0x288] sm:$0xff]
  %v4071 = vld [vmem:[%s3988 + $0x290] sm:$0xff]
  %v4072 = vld [vmem:[%s3988 + $0x298] sm:$0xff]
  %v4073 = vld [vmem:[%s3988 + $0x2a0] sm:$0xff]
  %v4074 = vld [vmem:[%s3988 + $0x2a8] sm:$0xff]
  %v4075 = vld [vmem:[%s3988 + $0x2b0] sm:$0xff]
  %v4076 = vld [vmem:[%s3988 + $0x2b8] sm:$0xff]
  %v4077 = vld [vmem:[%s3988 + $0x2c0] sm:$0xff]
  %v4078 = vld [vmem:[%s3988 + $0x2c8] sm:$0xff]
  %v4079 = vld [vmem:[%s3988 + $0x2d0] sm:$0xff]
  %v4080 = vld [vmem:[%s3988 + $0x2d8] sm:$0xff]
  %v4081 = vld [vmem:[%s3988 + $0x2e0] sm:$0xff]
  %v4082 = vld [vmem:[%s3988 + $0x2e8] sm:$0xff]
  %v4083 = vld [vmem:[%s3988 + $0x2f0] sm:$0xff]
  %v4084 = vld [vmem:[%s3988 + $0x2f8] sm:$0xff]
  %v4085 = vld [vmem:[%s3988 + $0x300] sm:$0xff]
  %v4086 = vld [vmem:[%s3988 + $0x308] sm:$0xff]
  %v4087 = vld [vmem:[%s3988 + $0x310] sm:$0xff]
  %v4088 = vld [vmem:[%s3988 + $0x318] sm:$0xff]
  %v4089 = vld [vmem:[%s3988 + $0x320] sm:$0xff]
  %v4090 = vld [vmem:[%s3988 + $0x328] sm:$0xff]
  %v4091 = vld [vmem:[%s3988 + $0x330] sm:$0xff]
  %v4092 = vld [vmem:[%s3988 + $0x338] sm:$0xff]
  %v4093 = vld [vmem:[%s3988 + $0x340] sm:$0xff]
  %v4094 = vld [vmem:[%s3988 + $0x348] sm:$0xff]
  %v4095 = vld [vmem:[%s3988 + $0x350] sm:$0xff]
  %v4096 = vld [vmem:[%s3988 + $0x358] sm:$0xff]
  %v4097 = vld [vmem:[%s3988 + $0x360] sm:$0xff]
  %v4098 = vld [vmem:[%s3988 + $0x368] sm:$0xff]
  %v4099 = vld [vmem:[%s3988 + $0x370] sm:$0xff]
  %v4100 = vld [vmem:[%s3988 + $0x378] sm:$0xff]
  %v4101 = vld [vmem:[%s3988 + $0x380] sm:$0xff]
  %v4102 = vld [vmem:[%s3988 + $0x388] sm:$0xff]
  %v4103 = vld [vmem:[%s3988 + $0x390] sm:$0xff]
  %v4104 = vld [vmem:[%s3988 + $0x398] sm:$0xff]
  %v4105 = vld [vmem:[%s3988 + $0x3a0] sm:$0xff]
  %v4106 = vld [vmem:[%s3988 + $0x3a8] sm:$0xff]
  %v4107 = vld [vmem:[%s3988 + $0x3b0] sm:$0xff]
  %v4108 = vld [vmem:[%s3988 + $0x3b8] sm:$0xff]
  %v4109 = vld [vmem:[%s3988 + $0x3c0] sm:$0xff]
  %v4110 = vld [vmem:[%s3988 + $0x3c8] sm:$0xff]
  %v4111 = vld [vmem:[%s3988 + $0x3d0] sm:$0xff]
  %v4112 = vld [vmem:[%s3988 + $0x3d8] sm:$0xff]
  %v4113 = vld [vmem:[%s3988 + $0x3e0] sm:$0xff]
  %v4114 = vld [vmem:[%s3988 + $0x3e8] sm:$0xff]
  %v4115 = vld [vmem:[%s3988 + $0x3f0] sm:$0xff]
  %v4116 = vld [vmem:[%s3988 + $0x3f8] sm:$0xff]
  %v4117 = vld [vmem:[%s3988 + $0x400] sm:$0xff]
  %v4118 = vld [vmem:[%s3988 + $0x408] sm:$0xff]
  %v4119 = vld [vmem:[%s3988 + $0x410] sm:$0xff]
  %v4120 = vld [vmem:[%s3988 + $0x418] sm:$0xff]
  %v4121 = vld [vmem:[%s3988 + $0x420] sm:$0xff]
  %v4122 = vld [vmem:[%s3988 + $0x428] sm:$0xff]
  %v4123 = vld [vmem:[%s3988 + $0x430] sm:$0xff]
  %v4124 = vld [vmem:[%s3988 + $0x438] sm:$0xff]
  %v4125 = vld [vmem:[%s3988 + $0x440] sm:$0xff]
  %v4126 = vld [vmem:[%s3988 + $0x448] sm:$0xff]
  %v4127 = vld [vmem:[%s3988 + $0x450] sm:$0xff]
  %v4128 = vld [vmem:[%s3988 + $0x458] sm:$0xff]
  %v4129 = vld [vmem:[%s3988 + $0x460] sm:$0xff]
  %v4130 = vld [vmem:[%s3988 + $0x468] sm:$0xff]
  %v4131 = vld [vmem:[%s3988 + $0x470] sm:$0xff]
  %v4132 = vld [vmem:[%s3988 + $0x478] sm:$0xff]
  %v4133 = vld [vmem:[%s3988 + $0x480] sm:$0xff]
  %v4134 = vld [vmem:[%s3988 + $0x488] sm:$0xff]
  %v4135 = vld [vmem:[%s3988 + $0x490] sm:$0xff]
  %v4136 = vld [vmem:[%s3988 + $0x498] sm:$0xff]
  %v4137 = vld [vmem:[%s3988 + $0x4a0] sm:$0xff]
  %v4138 = vld [vmem:[%s3988 + $0x4a8] sm:$0xff]
  %v4139 = vld [vmem:[%s3988 + $0x4b0] sm:$0xff]
  %v4140 = vld [vmem:[%s3988 + $0x4b8] sm:$0xff]
  %v4141 = vld [vmem:[%s3988 + $0x4c0] sm:$0xff]
  %v4142 = vld [vmem:[%s3988 + $0x4c8] sm:$0xff]
  %v4143 = vld [vmem:[%s3988 + $0x4d0] sm:$0xff]
  %v4144 = vld [vmem:[%s3988 + $0x4d8] sm:$0xff]
  %v4145 = vld [vmem:[%s3988 + $0x4e0] sm:$0xff]
  %v4146 = vld [vmem:[%s3988 + $0x4e8] sm:$0xff]
  %v4147 = vld [vmem:[%s3988 + $0x4f0] sm:$0xff]
  %v4148 = vld [vmem:[%s3988 + $0x4f8] sm:$0xff]
  %v4149 = vld [vmem:[%s3988 + $0x500] sm:$0xff]
  %v4150 = vld [vmem:[%s3988 + $0x508] sm:$0xff]
  %v4151 = vld [vmem:[%s3988 + $0x510] sm:$0xff]
  %v4152 = vld [vmem:[%s3988 + $0x518] sm:$0xff]
  %v4153 = vld [vmem:[%s3988 + $0x520] sm:$0xff]
  %v4154 = vld [vmem:[%s3988 + $0x528] sm:$0xff]
  %v4155 = vld [vmem:[%s3988 + $0x530] sm:$0xff]
  %v4156 = vld [vmem:[%s3988 + $0x538] sm:$0xff]
  %v4157 = vld [vmem:[%s3988 + $0x540] sm:$0xff]
  %v4158 = vld [vmem:[%s3988 + $0x548] sm:$0xff]
  %v4159 = vld [vmem:[%s3988 + $0x550] sm:$0xff]
  %v4160 = vld [vmem:[%s3988 + $0x558] sm:$0xff]
  %v4161 = vld [vmem:[%s3988 + $0x560] sm:$0xff]
  %v4162 = vld [vmem:[%s3988 + $0x568] sm:$0xff]
  %v4163 = vld [vmem:[%s3988 + $0x570] sm:$0xff]
  %v4164 = vld [vmem:[%s3988 + $0x578] sm:$0xff]
  %v4165 = vld [vmem:[%s3988 + $0x580] sm:$0xff]
  %v4166 = vld [vmem:[%s3988 + $0x588] sm:$0xff]
  %v4167 = vld [vmem:[%s3988 + $0x590] sm:$0xff]
  %v4168 = vld [vmem:[%s3988 + $0x598] sm:$0xff]
  %v4169 = vld [vmem:[%s3988 + $0x5a0] sm:$0xff]
  %v4170 = vld [vmem:[%s3988 + $0x5a8] sm:$0xff]
  %v4171 = vld [vmem:[%s3988 + $0x5b0] sm:$0xff]
  %v4172 = vld [vmem:[%s3988 + $0x5b8] sm:$0xff]
  %v4173 = vld [vmem:[%s3988 + $0x5c0] sm:$0xff]
  %v4174 = vld [vmem:[%s3988 + $0x5c8] sm:$0xff]
  %v4175 = vld [vmem:[%s3988 + $0x5d0] sm:$0xff]
  %v4176 = vld [vmem:[%s3988 + $0x5d8] sm:$0xff]
  %v4177 = vld [vmem:[%s3988 + $0x5e0] sm:$0xff]
  %v4178 = vld [vmem:[%s3988 + $0x5e8] sm:$0xff]
  %v4179 = vld [vmem:[%s3988 + $0x5f0] sm:$0xff]
  %v4180 = vld [vmem:[%s3988 + $0x5f8] sm:$0xff]
  %v4181 = vld [vmem:[%s3988 + $0x600] sm:$0xff]
  %v4182 = vld [vmem:[%s3988 + $0x608] sm:$0xff]
  %v4183 = vld [vmem:[%s3988 + $0x610] sm:$0xff]
  %v4184 = vld [vmem:[%s3988 + $0x618] sm:$0xff]
  %v4185 = vld [vmem:[%s3988 + $0x620] sm:$0xff]
  %v4186 = vld [vmem:[%s3988 + $0x628] sm:$0xff]
  %v4187 = vld [vmem:[%s3988 + $0x630] sm:$0xff]
  %v4188 = vld [vmem:[%s3988 + $0x638] sm:$0xff]
  %v4189 = vld [vmem:[%s3988 + $0x640] sm:$0xff]
  %v4190 = vld [vmem:[%s3988 + $0x648] sm:$0xff]
  %v4191 = vld [vmem:[%s3988 + $0x650] sm:$0xff]
  %v4192 = vld [vmem:[%s3988 + $0x658] sm:$0xff]
  %v4193 = vld [vmem:[%s3988 + $0x660] sm:$0xff]
  %v4194 = vld [vmem:[%s3988 + $0x668] sm:$0xff]
  %v4195 = vld [vmem:[%s3988 + $0x670] sm:$0xff]
  %v4196 = vld [vmem:[%s3988 + $0x678] sm:$0xff]
  %v4197 = vld [vmem:[%s3988 + $0x680] sm:$0xff]
  %v4198 = vld [vmem:[%s3988 + $0x688] sm:$0xff]
  %v4199 = vld [vmem:[%s3988 + $0x690] sm:$0xff]
  %v4200 = vld [vmem:[%s3988 + $0x698] sm:$0xff]
  %v4201 = vld [vmem:[%s3988 + $0x6a0] sm:$0xff]
  %v4202 = vld [vmem:[%s3988 + $0x6a8] sm:$0xff]
  %v4203 = vld [vmem:[%s3988 + $0x6b0] sm:$0xff]
  %v4204 = vld [vmem:[%s3988 + $0x6b8] sm:$0xff]
  %v4205 = vld [vmem:[%s3988 + $0x6c0] sm:$0xff]
  %v4206 = vld [vmem:[%s3988 + $0x6c8] sm:$0xff]
  %v4207 = vld [vmem:[%s3988 + $0x6d0] sm:$0xff]
  %v4208 = vld [vmem:[%s3988 + $0x6d8] sm:$0xff]
  %v4209 = vld [vmem:[%s3988 + $0x6e0] sm:$0xff]
  %v4210 = vld [vmem:[%s3988 + $0x6e8] sm:$0xff]
  %v4211 = vld [vmem:[%s3988 + $0x6f0] sm:$0xff]
  %v4212 = vld [vmem:[%s3988 + $0x6f8] sm:$0xff]
  %v4213 = vld [vmem:[%s3988 + $0x700] sm:$0xff]
  %v4214 = vld [vmem:[%s3988 + $0x708] sm:$0xff]
  %v4215 = vld [vmem:[%s3988 + $0x710] sm:$0xff]
  %v4216 = vld [vmem:[%s3988 + $0x718] sm:$0xff]
  %v4217 = vld [vmem:[%s3988 + $0x720] sm:$0xff]
  %v4218 = vld [vmem:[%s3988 + $0x728] sm:$0xff]
  %v4219 = vld [vmem:[%s3988 + $0x730] sm:$0xff]
  %v4220 = vld [vmem:[%s3988 + $0x738] sm:$0xff]
  %v4221 = vld [vmem:[%s3988 + $0x740] sm:$0xff]
  %v4222 = vld [vmem:[%s3988 + $0x748] sm:$0xff]
  %v4223 = vld [vmem:[%s3988 + $0x750] sm:$0xff]
  %v4224 = vld [vmem:[%s3988 + $0x758] sm:$0xff]
  %v4225 = vld [vmem:[%s3988 + $0x760] sm:$0xff]
  %v4226 = vld [vmem:[%s3988 + $0x768] sm:$0xff]
  %v4227 = vld [vmem:[%s3988 + $0x770] sm:$0xff]
  %v4228 = vld [vmem:[%s3988 + $0x778] sm:$0xff]
  %v4229 = vld [vmem:[%s3988 + $0x780] sm:$0xff]
  %v4230 = vld [vmem:[%s3988 + $0x788] sm:$0xff]
  %v4231 = vld [vmem:[%s3988 + $0x790] sm:$0xff]
  %v4232 = vld [vmem:[%s3988 + $0x798] sm:$0xff]
  %v4233 = vld [vmem:[%s3988 + $0x7a0] sm:$0xff]
  %v4234 = vld [vmem:[%s3988 + $0x7a8] sm:$0xff]
  %v4235 = vld [vmem:[%s3988 + $0x7b0] sm:$0xff]
  %v4236 = vld [vmem:[%s3988 + $0x7b8] sm:$0xff]
  %v4237 = vld [vmem:[%s3988 + $0x7c0] sm:$0xff]
  %v4238 = vld [vmem:[%s3988 + $0x7c8] sm:$0xff]
  %v4239 = vld [vmem:[%s3988 + $0x7d0] sm:$0xff]
  %v4240 = vld [vmem:[%s3988 + $0x7d8] sm:$0xff]
  %v4241 = vld [vmem:[%s3988 + $0x7e0] sm:$0xff]
  %v4242 = vld [vmem:[%s3988 + $0x7e8] sm:$0xff]
  %v4243 = vld [vmem:[%s3988 + $0x7f0] sm:$0xff]
  %v4244 = vld [vmem:[%s3988 + $0x7f8] sm:$0xff]
  %v4245 = vld [vmem:[%s3988 + $0x800] sm:$0xff]
  %v4246 = vld [vmem:[%s3988 + $0x808] sm:$0xff]
  %v4247 = vld [vmem:[%s3988 + $0x810] sm:$0xff]
  %v4248 = vld [vmem:[%s3988 + $0x818] sm:$0xff]
  %v4249 = vld [vmem:[%s3988 + $0x820] sm:$0xff]
  %v4250 = vld [vmem:[%s3988 + $0x828] sm:$0xff]
  %v4251 = vld [vmem:[%s3988 + $0x830] sm:$0xff]
  %v4252 = vld [vmem:[%s3988 + $0x838] sm:$0xff]
  %v4253 = vld [vmem:[%s3988 + $0x840] sm:$0xff]
  %v4254 = vld [vmem:[%s3988 + $0x848] sm:$0xff]
  %v4255 = vld [vmem:[%s3988 + $0x850] sm:$0xff]
  %v4256 = vld [vmem:[%s3988 + $0x858] sm:$0xff]
  %v4257 = vld [vmem:[%s3988 + $0x860] sm:$0xff]
  %v4258 = vld [vmem:[%s3988 + $0x868] sm:$0xff]
  %v4259 = vld [vmem:[%s3988 + $0x870] sm:$0xff]
  %v4260 = vld [vmem:[%s3988 + $0x878] sm:$0xff]
  %v4261 = vld [vmem:[%s3988 + $0x880] sm:$0xff]
  %v4262 = vld [vmem:[%s3988 + $0x888] sm:$0xff]
  %v4263 = vld [vmem:[%s3988 + $0x890] sm:$0xff]
  %v4264 = vld [vmem:[%s3988 + $0x898] sm:$0xff]
  %v4265 = vld [vmem:[%s3988 + $0x8a0] sm:$0xff]
  %v4266 = vld [vmem:[%s3988 + $0x8a8] sm:$0xff]
  %v4267 = vld [vmem:[%s3988 + $0x8b0] sm:$0xff]
  %v4268 = vld [vmem:[%s3988 + $0x8b8] sm:$0xff]
  %v4269 = vld [vmem:[%s3988 + $0x8c0] sm:$0xff]
  %v4270 = vld [vmem:[%s3988 + $0x8c8] sm:$0xff]
  %v4271 = vld [vmem:[%s3988 + $0x8d0] sm:$0xff]
  %v4272 = vld [vmem:[%s3988 + $0x8d8] sm:$0xff]
  %v4273 = vld [vmem:[%s3988 + $0x8e0] sm:$0xff]
  %v4274 = vld [vmem:[%s3988 + $0x8e8] sm:$0xff]
  %v4275 = vld [vmem:[%s3988 + $0x8f0] sm:$0xff]
  %v4276 = vld [vmem:[%s3988 + $0x8f8] sm:$0xff]
  %v4277 = vld [vmem:[%s3988 + $0x900] sm:$0xff]
  %v4278 = vld [vmem:[%s3988 + $0x908] sm:$0xff]
  %v4279 = vld [vmem:[%s3988 + $0x910] sm:$0xff]
  %v4280 = vld [vmem:[%s3988 + $0x918] sm:$0xff]
  %v4281 = vld [vmem:[%s3988 + $0x920] sm:$0xff]
  %v4282 = vld [vmem:[%s3988 + $0x928] sm:$0xff]
  %v4283 = vld [vmem:[%s3988 + $0x930] sm:$0xff]
  %v4284 = vld [vmem:[%s3988 + $0x938] sm:$0xff]
  %v4285 = vld [vmem:[%s3988 + $0x940] sm:$0xff]
  %v4286 = vld [vmem:[%s3988 + $0x948] sm:$0xff]
  %v4287 = vld [vmem:[%s3988 + $0x950] sm:$0xff]
  %v4288 = vld [vmem:[%s3988 + $0x958] sm:$0xff]
  %v4289 = vld [vmem:[%s3988 + $0x960] sm:$0xff]
  %v4290 = vld [vmem:[%s3988 + $0x968] sm:$0xff]
  %v4291 = vld [vmem:[%s3988 + $0x970] sm:$0xff]
  %v4292 = vld [vmem:[%s3988 + $0x978] sm:$0xff]
  %v4293 = vld [vmem:[%s3988 + $0x980] sm:$0xff]
  %v4294 = vld [vmem:[%s3988 + $0x988] sm:$0xff]
  %v4295 = vld [vmem:[%s3988 + $0x990] sm:$0xff]
  %v4296 = vld [vmem:[%s3988 + $0x998] sm:$0xff]
  %v4297 = vld [vmem:[%s3988 + $0x9a0] sm:$0xff]
  %v4298 = vld [vmem:[%s3988 + $0x9a8] sm:$0xff]
  %v4299 = vld [vmem:[%s3988 + $0x9b0] sm:$0xff]
  %v4300 = vld [vmem:[%s3988 + $0x9b8] sm:$0xff]
  %v4301 = vld [vmem:[%s3988 + $0x9c0] sm:$0xff]
  %v4302 = vld [vmem:[%s3988 + $0x9c8] sm:$0xff]
  %v4303 = vld [vmem:[%s3988 + $0x9d0] sm:$0xff]
  %v4304 = vld [vmem:[%s3988 + $0x9d8] sm:$0xff]
  %v4305 = vld [vmem:[%s3988 + $0x9e0] sm:$0xff]
  %v4306 = vld [vmem:[%s3988 + $0x9e8] sm:$0xff]
  %v4307 = vld [vmem:[%s3988 + $0x9f0] sm:$0xff]
  %v4308 = vld [vmem:[%s3988 + $0x9f8] sm:$0xff]
  %v4309 = vld [vmem:[%s3988 + $0xa00] sm:$0xff]
  %v4310 = vld [vmem:[%s3988 + $0xa08] sm:$0xff]
  %v4311 = vld [vmem:[%s3988 + $0xa10] sm:$0xff]
  %v4312 = vld [vmem:[%s3988 + $0xa18] sm:$0xff]
  %v4313 = vld [vmem:[%s3988 + $0xa20] sm:$0xff]
  %v4314 = vld [vmem:[%s3988 + $0xa28] sm:$0xff]
  %v4315 = vld [vmem:[%s3988 + $0xa30] sm:$0xff]
  %v4316 = vld [vmem:[%s3988 + $0xa38] sm:$0xff]
  %v4317 = vld [vmem:[%s3988 + $0xa40] sm:$0xff]
  %v4318 = vld [vmem:[%s3988 + $0xa48] sm:$0xff]
  %v4319 = vld [vmem:[%s3988 + $0xa50] sm:$0xff]
  %v4320 = vld [vmem:[%s3988 + $0xa58] sm:$0xff]
  %v4321 = vld [vmem:[%s3988 + $0xa60] sm:$0xff]
  %v4322 = vld [vmem:[%s3988 + $0xa68] sm:$0xff]
  %v4323 = vld [vmem:[%s3988 + $0xa70] sm:$0xff]
  %v4324 = vld [vmem:[%s3988 + $0xa78] sm:$0xff]
  %v4325 = vld [vmem:[%s3988 + $0xa80] sm:$0xff]
  %v4326 = vld [vmem:[%s3988 + $0xa88] sm:$0xff]
  %v4327 = vld [vmem:[%s3988 + $0xa90] sm:$0xff]
  %v4328 = vld [vmem:[%s3988 + $0xa98] sm:$0xff]
  %v4329 = vld [vmem:[%s3988 + $0xaa0] sm:$0xff]
  %v4330 = vld [vmem:[%s3988 + $0xaa8] sm:$0xff]
  %v4331 = vld [vmem:[%s3988 + $0xab0] sm:$0xff]
  %v4332 = vld [vmem:[%s3988 + $0xab8] sm:$0xff]
  %v4333 = vld [vmem:[%s3988 + $0xac0] sm:$0xff]
  %v4334 = vld [vmem:[%s3988 + $0xac8] sm:$0xff]
  %v4335 = vld [vmem:[%s3988 + $0xad0] sm:$0xff]
  %v4336 = vld [vmem:[%s3988 + $0xad8] sm:$0xff]
  %v4337 = vld [vmem:[%s3988 + $0xae0] sm:$0xff]
  %v4338 = vld [vmem:[%s3988 + $0xae8] sm:$0xff]
  %v4339 = vld [vmem:[%s3988 + $0xaf0] sm:$0xff]
  %v4340 = vld [vmem:[%s3988 + $0xaf8] sm:$0xff]
  %v4341 = vld [vmem:[%s3988 + $0xb00] sm:$0xff]
  %v4342 = vld [vmem:[%s3988 + $0xb08] sm:$0xff]
  %v4343 = vld [vmem:[%s3988 + $0xb10] sm:$0xff]
  %v4344 = vld [vmem:[%s3988 + $0xb18] sm:$0xff]
  %v4345 = vld [vmem:[%s3988 + $0xb20] sm:$0xff]
  %v4346 = vld [vmem:[%s3988 + $0xb28] sm:$0xff]
  %v4347 = vld [vmem:[%s3988 + $0xb30] sm:$0xff]
  %v4348 = vld [vmem:[%s3988 + $0xb38] sm:$0xff]
  %v4349 = vld [vmem:[%s3988 + $0xb40] sm:$0xff]
  %v4350 = vld [vmem:[%s3988 + $0xb48] sm:$0xff]
  %v4351 = vld [vmem:[%s3988 + $0xb50] sm:$0xff]
  %v4352 = vld [vmem:[%s3988 + $0xb58] sm:$0xff]
  %v4353 = vld [vmem:[%s3988 + $0xb60] sm:$0xff]
  %v4354 = vld [vmem:[%s3988 + $0xb68] sm:$0xff]
  %v4355 = vld [vmem:[%s3988 + $0xb70] sm:$0xff]
  %v4356 = vld [vmem:[%s3988 + $0xb78] sm:$0xff]
  %v4357 = vld [vmem:[%s3988 + $0xb80] sm:$0xff]
  %v4358 = vld [vmem:[%s3988 + $0xb88] sm:$0xff]
  %v4359 = vld [vmem:[%s3988 + $0xb90] sm:$0xff]
  %v4360 = vld [vmem:[%s3988 + $0xb98] sm:$0xff]
  %v4361 = vld [vmem:[%s3988 + $0xba0] sm:$0xff]
  %v4362 = vld [vmem:[%s3988 + $0xba8] sm:$0xff]
  %v4363 = vld [vmem:[%s3988 + $0xbb0] sm:$0xff]
  %v4364 = vld [vmem:[%s3988 + $0xbb8] sm:$0xff]
  %v4365 = vld [vmem:[%s3988 + $0xbc0] sm:$0xff]
  %v4366 = vld [vmem:[%s3988 + $0xbc8] sm:$0xff]
  %v4367 = vld [vmem:[%s3988 + $0xbd0] sm:$0xff]
  %v4368 = vld [vmem:[%s3988 + $0xbd8] sm:$0xff]
  %v4369 = vld [vmem:[%s3988 + $0xbe0] sm:$0xff]
  %v4370 = vld [vmem:[%s3988 + $0xbe8] sm:$0xff]
  %v4371 = vld [vmem:[%s3988 + $0xbf0] sm:$0xff]
  %v4372 = vld [vmem:[%s3988 + $0xbf8] sm:$0xff]
  %v4373 = vld [vmem:[%s3988 + $0xc00] sm:$0xff]
  %v4374 = vld [vmem:[%s3988 + $0xc08] sm:$0xff]
  %v4375 = vld [vmem:[%s3988 + $0xc10] sm:$0xff]
  %v4376 = vld [vmem:[%s3988 + $0xc18] sm:$0xff]
  %v4377 = vld [vmem:[%s3988 + $0xc20] sm:$0xff]
  %v4378 = vld [vmem:[%s3988 + $0xc28] sm:$0xff]
  %v4379 = vld [vmem:[%s3988 + $0xc30] sm:$0xff]
  %v4380 = vld [vmem:[%s3988 + $0xc38] sm:$0xff]
  %v4381 = vld [vmem:[%s3988 + $0xc40] sm:$0xff]
  %v4382 = vld [vmem:[%s3988 + $0xc48] sm:$0xff]
  %v4383 = vld [vmem:[%s3988 + $0xc50] sm:$0xff]
  %v4384 = vld [vmem:[%s3988 + $0xc58] sm:$0xff]
  %v4385 = vld [vmem:[%s3988 + $0xc60] sm:$0xff]
  %v4386 = vld [vmem:[%s3988 + $0xc68] sm:$0xff]
  %v4387 = vld [vmem:[%s3988 + $0xc70] sm:$0xff]
  %v4388 = vld [vmem:[%s3988 + $0xc78] sm:$0xff]
  %v4389 = vld [vmem:[%s3988 + $0xc80] sm:$0xff]
  %v4390 = vld [vmem:[%s3988 + $0xc88] sm:$0xff]
  %v4391 = vld [vmem:[%s3988 + $0xc90] sm:$0xff]
  %v4392 = vld [vmem:[%s3988 + $0xc98] sm:$0xff]
  %v4393 = vld [vmem:[%s3988 + $0xca0] sm:$0xff]
  %v4394 = vld [vmem:[%s3988 + $0xca8] sm:$0xff]
  %v4395 = vld [vmem:[%s3988 + $0xcb0] sm:$0xff]
  %v4396 = vld [vmem:[%s3988 + $0xcb8] sm:$0xff]
  %v4397 = vld [vmem:[%s3988 + $0xcc0] sm:$0xff]
  %v4398 = vld [vmem:[%s3988 + $0xcc8] sm:$0xff]
  %v4399 = vld [vmem:[%s3988 + $0xcd0] sm:$0xff]
  %v4400 = vld [vmem:[%s3988 + $0xcd8] sm:$0xff]
  %v4401 = vld [vmem:[%s3988 + $0xce0] sm:$0xff]
  %v4402 = vld [vmem:[%s3988 + $0xce8] sm:$0xff]
  %v4403 = vld [vmem:[%s3988 + $0xcf0] sm:$0xff]
  %v4404 = vld [vmem:[%s3988 + $0xcf8] sm:$0xff]
  %v4405 = vld [vmem:[%s3988 + $0xd00] sm:$0xff]
  %v4406 = vld [vmem:[%s3988 + $0xd08] sm:$0xff]
  %v4407 = vld [vmem:[%s3988 + $0xd10] sm:$0xff]
  %v4408 = vld [vmem:[%s3988 + $0xd18] sm:$0xff]
  %v4409 = vld [vmem:[%s3988 + $0xd20] sm:$0xff]
  %v4410 = vld [vmem:[%s3988 + $0xd28] sm:$0xff]
  %v4411 = vld [vmem:[%s3988 + $0xd30] sm:$0xff]
  %v4412 = vld [vmem:[%s3988 + $0xd38] sm:$0xff]
  %v4413 = vld [vmem:[%s3988 + $0xd40] sm:$0xff]
  %v4414 = vld [vmem:[%s3988 + $0xd48] sm:$0xff]
  %v4415 = vld [vmem:[%s3988 + $0xd50] sm:$0xff]
  %v4416 = vld [vmem:[%s3988 + $0xd58] sm:$0xff]
  %v4417 = vld [vmem:[%s3988 + $0xd60] sm:$0xff]
  %v4418 = vld [vmem:[%s3988 + $0xd68] sm:$0xff]
  %v4419 = vld [vmem:[%s3988 + $0xd70] sm:$0xff]
  %v4420 = vld [vmem:[%s3988 + $0xd78] sm:$0xff]
  %v4421 = vld [vmem:[%s3988 + $0xd80] sm:$0xff]
  %v4422 = vld [vmem:[%s3988 + $0xd88] sm:$0xff]
  %v4423 = vld [vmem:[%s3988 + $0xd90] sm:$0xff]
  %v4424 = vld [vmem:[%s3988 + $0xd98] sm:$0xff]
  %v4425 = vld [vmem:[%s3988 + $0xda0] sm:$0xff]
  %v4426 = vld [vmem:[%s3988 + $0xda8] sm:$0xff]
  %v4427 = vld [vmem:[%s3988 + $0xdb0] sm:$0xff]
  %v4428 = vld [vmem:[%s3988 + $0xdb8] sm:$0xff]
  %v4429 = vld [vmem:[%s3988 + $0xdc0] sm:$0xff]
  %v4430 = vld [vmem:[%s3988 + $0xdc8] sm:$0xff]
  %v4431 = vld [vmem:[%s3988 + $0xdd0] sm:$0xff]
  %v4432 = vld [vmem:[%s3988 + $0xdd8] sm:$0xff]
  %v4433 = vld [vmem:[%s3988 + $0xde0] sm:$0xff]
  %v4434 = vld [vmem:[%s3988 + $0xde8] sm:$0xff]
  %v4435 = vld [vmem:[%s3988 + $0xdf0] sm:$0xff]
  %v4436 = vld [vmem:[%s3988 + $0xdf8] sm:$0xff]
  %v4437 = vld [vmem:[%s3988 + $0xe00] sm:$0xff]
  %v4438 = vld [vmem:[%s3988 + $0xe08] sm:$0xff]
  %v4439 = vld [vmem:[%s3988 + $0xe10] sm:$0xff]
  %v4440 = vld [vmem:[%s3988 + $0xe18] sm:$0xff]
  %v4441 = vld [vmem:[%s3988 + $0xe20] sm:$0xff]
  %v4442 = vld [vmem:[%s3988 + $0xe28] sm:$0xff]
  %v4443 = vld [vmem:[%s3988 + $0xe30] sm:$0xff]
  %v4444 = vld [vmem:[%s3988 + $0xe38] sm:$0xff]
  %v4445 = vld [vmem:[%s3988 + $0xe40] sm:$0xff]
  %v4446 = vld [vmem:[%s3988 + $0xe48] sm:$0xff]
  %v4447 = vld [vmem:[%s3988 + $0xe50] sm:$0xff]
  %v4448 = vld [vmem:[%s3988 + $0xe58] sm:$0xff]
  %v4449 = vld [vmem:[%s3988 + $0xe60] sm:$0xff]
  %v4450 = vld [vmem:[%s3988 + $0xe68] sm:$0xff]
  %v4451 = vld [vmem:[%s3988 + $0xe70] sm:$0xff]
  %v4452 = vld [vmem:[%s3988 + $0xe78] sm:$0xff]
  %v4453 = vld [vmem:[%s3988 + $0xe80] sm:$0xff]
  %v4454 = vld [vmem:[%s3988 + $0xe88] sm:$0xff]
  %v4455 = vld [vmem:[%s3988 + $0xe90] sm:$0xff]
  %v4456 = vld [vmem:[%s3988 + $0xe98] sm:$0xff]
  %v4457 = vld [vmem:[%s3988 + $0xea0] sm:$0xff]
  %v4458 = vld [vmem:[%s3988 + $0xea8] sm:$0xff]
  %v4459 = vld [vmem:[%s3988 + $0xeb0] sm:$0xff]
  %v4460 = vld [vmem:[%s3988 + $0xeb8] sm:$0xff]
  %v4461 = vld [vmem:[%s3988 + $0xec0] sm:$0xff]
  %v4462 = vld [vmem:[%s3988 + $0xec8] sm:$0xff]
  %v4463 = vld [vmem:[%s3988 + $0xed0] sm:$0xff]
  %v4464 = vld [vmem:[%s3988 + $0xed8] sm:$0xff]
  %v4465 = vld [vmem:[%s3988 + $0xee0] sm:$0xff]
  %v4466 = vld [vmem:[%s3988 + $0xee8] sm:$0xff]
  %v4467 = vld [vmem:[%s3988 + $0xef0] sm:$0xff]
  %v4468 = vld [vmem:[%s3988 + $0xef8] sm:$0xff]
  %v4469 = vld [vmem:[%s3988 + $0xf00] sm:$0xff]
  %v4470 = vld [vmem:[%s3988 + $0xf08] sm:$0xff]
  %v4471 = vld [vmem:[%s3988 + $0xf10] sm:$0xff]
  %v4472 = vld [vmem:[%s3988 + $0xf18] sm:$0xff]
  %v4473 = vld [vmem:[%s3988 + $0xf20] sm:$0xff]
  %v4474 = vld [vmem:[%s3988 + $0xf28] sm:$0xff]
  %v4475 = vld [vmem:[%s3988 + $0xf30] sm:$0xff]
  %v4476 = vld [vmem:[%s3988 + $0xf38] sm:$0xff]
  %v4477 = vld [vmem:[%s3988 + $0xf40] sm:$0xff]
  %v4478 = vld [vmem:[%s3988 + $0xf48] sm:$0xff]
  %v4479 = vld [vmem:[%s3988 + $0xf50] sm:$0xff]
  %v4480 = vld [vmem:[%s3988 + $0xf58] sm:$0xff]
  %v4481 = vld [vmem:[%s3988 + $0xf60] sm:$0xff]
  %v4482 = vld [vmem:[%s3988 + $0xf68] sm:$0xff]
  %v4483 = vld [vmem:[%s3988 + $0xf70] sm:$0xff]
  %v4484 = vld [vmem:[%s3988 + $0xf78] sm:$0xff]
  %v4485 = vld [vmem:[%s3988 + $0xf80] sm:$0xff]
  %v4486 = vld [vmem:[%s3988 + $0xf88] sm:$0xff]
  %v4487 = vld [vmem:[%s3988 + $0xf90] sm:$0xff]
  %v4488 = vld [vmem:[%s3988 + $0xf98] sm:$0xff]
  %v4489 = vld [vmem:[%s3988 + $0xfa0] sm:$0xff]
  %v4490 = vld [vmem:[%s3988 + $0xfa8] sm:$0xff]
  %v4491 = vld [vmem:[%s3988 + $0xfb0] sm:$0xff]
  %v4492 = vld [vmem:[%s3988 + $0xfb8] sm:$0xff]
  %v4493 = vld [vmem:[%s3988 + $0xfc0] sm:$0xff]
  %v4494 = vld [vmem:[%s3988 + $0xfc8] sm:$0xff]
  %v4495 = vld [vmem:[%s3988 + $0xfd0] sm:$0xff]
  %v4496 = vld [vmem:[%s3988 + $0xfd8] sm:$0xff]
  %v4497 = vld [vmem:[%s3988 + $0xfe0] sm:$0xff]
  %v4498 = vld [vmem:[%s3988 + $0xfe8] sm:$0xff]
  %v4499 = vld [vmem:[%s3988 + $0xff0] sm:$0xff]
  %v4500 = vld [vmem:[%s3988 + $0xff8] sm:$0xff]
  %4501 = vmatprep.subr.mxu0 %v3990
  %4502 = vmatpush1.msra.mxu0 %v3989
  %4503 = vmatprep.subr.mxu0 %v3998
  %4504 = vmatpush1.msra.mxu0 %v3997
  %4505 = vmatprep.subr.mxu0 %v4006
  %4506 = vmatpush1.msra.mxu0 %v4005
  %4507 = vmatprep.subr.mxu0 %v4014
  %4508 = vmatpush1.msra.mxu0 %v4013
  %4509 = vmatprep.subr.mxu0 %v4022
  %4510 = vmatpush1.msra.mxu0 %v4021
  %4511 = vmatprep.subr.mxu0 %v4030
  %4512 = vmatpush1.msra.mxu0 %v4029
  %4513 = vmatprep.subr.mxu0 %v4038
  %4514 = vmatpush1.msra.mxu0 %v4037
  %4515 = vmatprep.subr.mxu0 %v4046
  %4516 = vmatpush1.msra.mxu0 %v4045
  %4517 = vmatprep.subr.mxu0 %v4054
  %4518 = vmatpush1.msra.mxu0 %v4053
  %4519 = vmatprep.subr.mxu0 %v4062
  %4520 = vmatpush1.msra.mxu0 %v4061
  %4521 = vmatprep.subr.mxu0 %v4070
  %4522 = vmatpush1.msra.mxu0 %v4069
  %4523 = vmatprep.subr.mxu0 %v4078
  %4524 = vmatpush1.msra.mxu0 %v4077
  %4525 = vmatprep.subr.mxu0 %v4086
  %4526 = vmatpush1.msra.mxu0 %v4085
  %4527 = vmatprep.subr.mxu0 %v4094
  %4528 = vmatpush1.msra.mxu0 %v4093
  %4529 = vmatprep.subr.mxu0 %v4102
  %4530 = vmatpush1.msra.mxu0 %v4101
  %4531 = vmatprep.subr.mxu0 %v4110
  %4532 = vmatpush1.msra.mxu0 %v4109
  %4533 = vmatprep.subr.mxu0 %v4118
  %4534 = vmatpush1.msra.mxu0 %v4117
  %4535 = vmatprep.subr.mxu0 %v4126
  %4536 = vmatpush1.msra.mxu0 %v4125
  %4537 = vmatprep.subr.mxu0 %v4134
  %4538 = vmatpush1.msra.mxu0 %v4133
  %4539 = vmatprep.subr.mxu0 %v4142
  %4540 = vmatpush1.msra.mxu0 %v4141
  %4541 = vmatprep.subr.mxu0 %v4150
  %4542 = vmatpush1.msra.mxu0 %v4149
  %4543 = vmatprep.subr.mxu0 %v4158
  %4544 = vmatpush1.msra.mxu0 %v4157
  %4545 = vmatprep.subr.mxu0 %v4166
  %4546 = vmatpush1.msra.mxu0 %v4165
  %4547 = vmatprep.subr.mxu0 %v4174
  %4548 = vmatpush1.msra.mxu0 %v4173
  %4549 = vmatprep.subr.mxu0 %v4182
  %4550 = vmatpush1.msra.mxu0 %v4181
  %4551 = vmatprep.subr.mxu0 %v4190
  %4552 = vmatpush1.msra.mxu0 %v4189
  %4553 = vmatprep.subr.mxu0 %v4198
  %4554 = vmatpush1.msra.mxu0 %v4197
  %4555 = vmatprep.subr.mxu0 %v4206
  %4556 = vmatpush1.msra.mxu0 %v4205
  %4557 = vmatprep.subr.mxu0 %v4214
  %4558 = vmatpush1.msra.mxu0 %v4213
  %4559 = vmatprep.subr.mxu0 %v4222
  %4560 = vmatpush1.msra.mxu0 %v4221
  %4561 = vmatprep.subr.mxu0 %v4230
  %4562 = vmatpush1.msra.mxu0 %v4229
  %4563 = vmatprep.subr.mxu0 %v4238
  %4564 = vmatpush1.msra.mxu0 %v4237
  %4565 = vmatprep.mubr.f32.mxu0 %v987
  %4566 = vmatmul.mubr.f32.gmra.mrb[0].mxu0 %v986
  %v4567 = vpop.f32.mrb[0].mxu0
  %v4568 = vadd.f32 0.0, %v4567
  %v4569 = vpop.f32.mrb[0].mxu0
  %v4570 = vadd.f32 0.0, %v4569
  %4571 = vmatprep.mubr.f32.mxu0 %v991
  %4572 = vmatmul.mubr.f32.gmra.mrb[0].mxu0 %v990
  %v4573 = vpop.f32.mrb[0].mxu0
  %v4574 = vadd.f32 0.0, %v4573
  %v4575 = vpop.f32.mrb[0].mxu0
  %v4576 = vadd.f32 0.0, %v4575
  %4577 = vmatprep.mubr.f32.mxu0 %v995
  %4578 = vmatmul.mubr.f32.gmra.mrb[0].mxu0 %v994
  %v4579 = vpop.f32.mrb[0].mxu0
  %v4580 = vadd.f32 0.0, %v4579
  %v4581 = vpop.f32.mrb[0].mxu0
  %v4582 = vadd.f32 0.0, %v4581
  %4583 = vdwg.mxu0
  %4584 = vmatprep.subr.mxu0 %v4246
  %4585 = vmatpush1.msra.mxu0 %v4245
  %4586 = vmatprep.subr.mxu0 %v4254
  %4587 = vmatpush1.msra.mxu0 %v4253
  %4588 = vmatprep.subr.mxu0 %v4262
  %4589 = vmatpush1.msra.mxu0 %v4261
  %4590 = vmatprep.subr.mxu0 %v4270
  %4591 = vmatpush1.msra.mxu0 %v4269
  %4592 = vmatprep.subr.mxu0 %v4278
  %4593 = vmatpush1.msra.mxu0 %v4277
  %4594 = vmatprep.subr.mxu0 %v4286
  %4595 = vmatpush1.msra.mxu0 %v4285
  %4596 = vmatprep.subr.mxu0 %v4294
  %4597 = vmatpush1.msra.mxu0 %v4293
  %4598 = vmatprep.subr.mxu0 %v4302
  %4599 = vmatpush1.msra.mxu0 %v4301
  %4600 = vmatprep.subr.mxu0 %v4310
  %4601 = vmatpush1.msra.mxu0 %v4309
  %4602 = vmatprep.subr.mxu0 %v4318
  %4603 = vmatpush1.msra.mxu0 %v4317
  %4604 = vmatprep.subr.mxu0 %v4326
  %4605 = vmatpush1.msra.mxu0 %v4325
  %4606 = vmatprep.subr.mxu0 %v4334
  %4607 = vmatpush1.msra.mxu0 %v4333
  %4608 = vmatprep.subr.mxu0 %v4342
  %4609 = vmatpush1.msra.mxu0 %v4341
  %4610 = vmatprep.subr.mxu0 %v4350
  %4611 = vmatpush1.msra.mxu0 %v4349
  %4612 = vmatprep.subr.mxu0 %v4358
  %4613 = vmatpush1.msra.mxu0 %v4357
  %4614 = vmatprep.subr.mxu0 %v4366
  %4615 = vmatpush1.msra.mxu0 %v4365
  %4616 = vmatprep.subr.mxu0 %v4374
  %4617 = vmatpush1.msra.mxu0 %v4373
  %4618 = vmatprep.subr.mxu0 %v4382
  %4619 = vmatpush1.msra.mxu0 %v4381
  %4620 = vmatprep.subr.mxu0 %v4390
  %4621 = vmatpush1.msra.mxu0 %v4389
  %4622 = vmatprep.subr.mxu0 %v4398
  %4623 = vmatpush1.msra.mxu0 %v4397
  %4624 = vmatprep.subr.mxu0 %v4406
  %4625 = vmatpush1.msra.mxu0 %v4405
  %4626 = vmatprep.subr.mxu0 %v4414
  %4627 = vmatpush1.msra.mxu0 %v4413
  %4628 = vmatprep.subr.mxu0 %v4422
  %4629 = vmatpush1.msra.mxu0 %v4421
  %4630 = vmatprep.subr.mxu0 %v4430
  %4631 = vmatpush1.msra.mxu0 %v4429
  %4632 = vmatprep.subr.mxu0 %v4438
  %4633 = vmatpush1.msra.mxu0 %v4437
  %4634 = vmatprep.subr.mxu0 %v4446
  %4635 = vmatpush1.msra.mxu0 %v4445
  %4636 = vmatprep.subr.mxu0 %v4454
  %4637 = vmatpush1.msra.mxu0 %v4453
  %4638 = vmatprep.subr.mxu0 %v4462
  %4639 = vmatpush1.msra.mxu0 %v4461
  %4640 = vmatprep.subr.mxu0 %v4470
  %4641 = vmatpush1.msra.mxu0 %v4469
  %4642 = vmatprep.subr.mxu0 %v4478
  %4643 = vmatpush1.msra.mxu0 %v4477
  %4644 = vmatprep.subr.mxu0 %v4486
  %4645 = vmatpush1.msra.mxu0 %v4485
  %4646 = vmatprep.subr.mxu0 %v4494
  %4647 = vmatpush1.msra.mxu0 %v4493
  %4648 = vmatprep.mubr.f32.mxu0 %v989
  %4649 = vmatmul.mubr.f32.gmra.mrb[0].mxu0 %v988
  %v4650 = vpop.f32.mrb[0].mxu0
  %v4651 = vadd.f32 %v4568, %v4650
  %v4652 = vpop.f32.mrb[0].mxu0
  %v4653 = vadd.f32 %v4570, %v4652
  %4654 = vmatprep.mubr.f32.mxu0 %v993
  %4655 = vmatmul.mubr.f32.gmra.mrb[0].mxu0 %v992
  %v4656 = vpop.f32.mrb[0].mxu0
  %v4657 = vadd.f32 %v4574, %v4656
  %v4658 = vpop.f32.mrb[0].mxu0
  %v4659 = vadd.f32 %v4576, %v4658
  %4660 = vmatprep.mubr.f32.mxu0 %v997
  %4661 = vmatmul.mubr.f32.gmra.mrb[0].mxu0 %v996
  %v4662 = vpop.f32.mrb[0].mxu0
  %v4663 = vadd.f32 %v4580, %v4662
  %v4664 = vpop.f32.mrb[0].mxu0
  %v4665 = vadd.f32 %v4582, %v4664
  %4666 = vdwg.mxu0
  %4667 = vmatprep.subr.mxu0 %v3992
  %4668 = vmatpush1.msra.mxu0 %v3991
  %4669 = vmatprep.subr.mxu0 %v4000
  %4670 = vmatpush1.msra.mxu0 %v3999
  %4671 = vmatprep.subr.mxu0 %v4008
  %4672 = vmatpush1.msra.mxu0 %v4007
  %4673 = vmatprep.subr.mxu0 %v4016
  %4674 = vmatpush1.msra.mxu0 %v4015
  %4675 = vmatprep.subr.mxu0 %v4024
  %4676 = vmatpush1.msra.mxu0 %v4023
  %4677 = vmatprep.subr.mxu0 %v4032
  %4678 = vmatpush1.msra.mxu0 %v4031
  %4679 = vmatprep.subr.mxu0 %v4040
  %4680 = vmatpush1.msra.mxu0 %v4039
  %4681 = vmatprep.subr.mxu0 %v4048
  %4682 = vmatpush1.msra.mxu0 %v4047
  %4683 = vmatprep.subr.mxu0 %v4056
  %4684 = vmatpush1.msra.mxu0 %v4055
  %4685 = vmatprep.subr.mxu0 %v4064
  %4686 = vmatpush1.msra.mxu0 %v4063
  %4687 = vmatprep.subr.mxu0 %v4072
  %4688 = vmatpush1.msra.mxu0 %v4071
  %4689 = vmatprep.subr.mxu0 %v4080
  %4690 = vmatpush1.msra.mxu0 %v4079
  %4691 = vmatprep.subr.mxu0 %v4088
  %4692 = vmatpush1.msra.mxu0 %v4087
  %4693 = vmatprep.subr.mxu0 %v4096
  %4694 = vmatpush1.msra.mxu0 %v4095
  %4695 = vmatprep.subr.mxu0 %v4104
  %4696 = vmatpush1.msra.mxu0 %v4103
  %4697 = vmatprep.subr.mxu0 %v4112
  %4698 = vmatpush1.msra.mxu0 %v4111
  %4699 = vmatprep.subr.mxu0 %v4120
  %4700 = vmatpush1.msra.mxu0 %v4119
  %4701 = vmatprep.subr.mxu0 %v4128
  %4702 = vmatpush1.msra.mxu0 %v4127
  %4703 = vmatprep.subr.mxu0 %v4136
  %4704 = vmatpush1.msra.mxu0 %v4135
  %4705 = vmatprep.subr.mxu0 %v4144
  %4706 = vmatpush1.msra.mxu0 %v4143
  %4707 = vmatprep.subr.mxu0 %v4152
  %4708 = vmatpush1.msra.mxu0 %v4151
  %4709 = vmatprep.subr.mxu0 %v4160
  %4710 = vmatpush1.msra.mxu0 %v4159
  %4711 = vmatprep.subr.mxu0 %v4168
  %4712 = vmatpush1.msra.mxu0 %v4167
  %4713 = vmatprep.subr.mxu0 %v4176
  %4714 = vmatpush1.msra.mxu0 %v4175
  %4715 = vmatprep.subr.mxu0 %v4184
  %4716 = vmatpush1.msra.mxu0 %v4183
  %4717 = vmatprep.subr.mxu0 %v4192
  %4718 = vmatpush1.msra.mxu0 %v4191
  %4719 = vmatprep.subr.mxu0 %v4200
  %4720 = vmatpush1.msra.mxu0 %v4199
  %4721 = vmatprep.subr.mxu0 %v4208
  %4722 = vmatpush1.msra.mxu0 %v4207
  %4723 = vmatprep.subr.mxu0 %v4216
  %4724 = vmatpush1.msra.mxu0 %v4215
  %4725 = vmatprep.subr.mxu0 %v4224
  %4726 = vmatpush1.msra.mxu0 %v4223
  %4727 = vmatprep.subr.mxu0 %v4232
  %4728 = vmatpush1.msra.mxu0 %v4231
  %4729 = vmatprep.subr.mxu0 %v4240
  %4730 = vmatpush1.msra.mxu0 %v4239
  %4731 = vmatprep.mubr.f32.mxu0 %v987
  %4732 = vmatmul.mubr.f32.gmra.mrb[0].mxu0 %v986
  %v4733 = vpop.f32.mrb[0].mxu0
  %v4734 = vadd.f32 0.0, %v4733
  %v4735 = vpop.f32.mrb[0].mxu0
  %v4736 = vadd.f32 0.0, %v4735
  %4737 = vmatprep.mubr.f32.mxu0 %v991
  %4738 = vmatmul.mubr.f32.gmra.mrb[0].mxu0 %v990
  %v4739 = vpop.f32.mrb[0].mxu0
  %v4740 = vadd.f32 0.0, %v4739
  %v4741 = vpop.f32.mrb[0].mxu0
  %v4742 = vadd.f32 0.0, %v4741
  %4743 = vmatprep.mubr.f32.mxu0 %v995
  %4744 = vmatmul.mubr.f32.gmra.mrb[0].mxu0 %v994
  %v4745 = vpop.f32.mrb[0].mxu0
  %v4746 = vadd.f32 0.0, %v4745
  %v4747 = vpop.f32.mrb[0].mxu0
  %v4748 = vadd.f32 0.0, %v4747
  %4749 = vdwg.mxu0
  %4750 = vmatprep.subr.mxu0 %v4248
  %4751 = vmatpush1.msra.mxu0 %v4247
  %4752 = vmatprep.subr.mxu0 %v4256
  %4753 = vmatpush1.msra.mxu0 %v4255
  %4754 = vmatprep.subr.mxu0 %v4264
  %4755 = vmatpush1.msra.mxu0 %v4263
  %4756 = vmatprep.subr.mxu0 %v4272
  %4757 = vmatpush1.msra.mxu0 %v4271
  %4758 = vmatprep.subr.mxu0 %v4280
  %4759 = vmatpush1.msra.mxu0 %v4279
  %4760 = vmatprep.subr.mxu0 %v4288
  %4761 = vmatpush1.msra.mxu0 %v4287
  %4762 = vmatprep.subr.mxu0 %v4296
  %4763 = vmatpush1.msra.mxu0 %v4295
  %4764 = vmatprep.subr.mxu0 %v4304
  %4765 = vmatpush1.msra.mxu0 %v4303
  %4766 = vmatprep.subr.mxu0 %v4312
  %4767 = vmatpush1.msra.mxu0 %v4311
  %4768 = vmatprep.subr.mxu0 %v4320
  %4769 = vmatpush1.msra.mxu0 %v4319
  %4770 = vmatprep.subr.mxu0 %v4328
  %4771 = vmatpush1.msra.mxu0 %v4327
  %4772 = vmatprep.subr.mxu0 %v4336
  %4773 = vmatpush1.msra.mxu0 %v4335
  %4774 = vmatprep.subr.mxu0 %v4344
  %4775 = vmatpush1.msra.mxu0 %v4343
  %4776 = vmatprep.subr.mxu0 %v4352
  %4777 = vmatpush1.msra.mxu0 %v4351
  %4778 = vmatprep.subr.mxu0 %v4360
  %4779 = vmatpush1.msra.mxu0 %v4359
  %4780 = vmatprep.subr.mxu0 %v4368
  %4781 = vmatpush1.msra.mxu0 %v4367
  %4782 = vmatprep.subr.mxu0 %v4376
  %4783 = vmatpush1.msra.mxu0 %v4375
  %4784 = vmatprep.subr.mxu0 %v4384
  %4785 = vmatpush1.msra.mxu0 %v4383
  %4786 = vmatprep.subr.mxu0 %v4392
  %4787 = vmatpush1.msra.mxu0 %v4391
  %4788 = vmatprep.subr.mxu0 %v4400
  %4789 = vmatpush1.msra.mxu0 %v4399
  %4790 = vmatprep.subr.mxu0 %v4408
  %4791 = vmatpush1.msra.mxu0 %v4407
  %4792 = vmatprep.subr.mxu0 %v4416
  %4793 = vmatpush1.msra.mxu0 %v4415
  %4794 = vmatprep.subr.mxu0 %v4424
  %4795 = vmatpush1.msra.mxu0 %v4423
  %4796 = vmatprep.subr.mxu0 %v4432
  %4797 = vmatpush1.msra.mxu0 %v4431
  %4798 = vmatprep.subr.mxu0 %v4440
  %4799 = vmatpush1.msra.mxu0 %v4439
  %4800 = vmatprep.subr.mxu0 %v4448
  %4801 = vmatpush1.msra.mxu0 %v4447
  %4802 = vmatprep.subr.mxu0 %v4456
  %4803 = vmatpush1.msra.mxu0 %v4455
  %4804 = vmatprep.subr.mxu0 %v4464
  %4805 = vmatpush1.msra.mxu0 %v4463
  %4806 = vmatprep.subr.mxu0 %v4472
  %4807 = vmatpush1.msra.mxu0 %v4471
  %4808 = vmatprep.subr.mxu0 %v4480
  %4809 = vmatpush1.msra.mxu0 %v4479
  %4810 = vmatprep.subr.mxu0 %v4488
  %4811 = vmatpush1.msra.mxu0 %v4487
  %4812 = vmatprep.subr.mxu0 %v4496
  %4813 = vmatpush1.msra.mxu0 %v4495
  %4814 = vmatprep.mubr.f32.mxu0 %v989
  %4815 = vmatmul.mubr.f32.gmra.mrb[0].mxu0 %v988
  %v4816 = vpop.f32.mrb[0].mxu0
  %v4817 = vadd.f32 %v4734, %v4816
  %v4818 = vpop.f32.mrb[0].mxu0
  %v4819 = vadd.f32 %v4736, %v4818
  %4820 = vmatprep.mubr.f32.mxu0 %v993
  %4821 = vmatmul.mubr.f32.gmra.mrb[0].mxu0 %v992
  %v4822 = vpop.f32.mrb[0].mxu0
  %v4823 = vadd.f32 %v4740, %v4822
  %v4824 = vpop.f32.mrb[0].mxu0
  %v4825 = vadd.f32 %v4742, %v4824
  %4826 = vmatprep.mubr.f32.mxu0 %v997
  %4827 = vmatmul.mubr.f32.gmra.mrb[0].mxu0 %v996
  %v4828 = vpop.f32.mrb[0].mxu0
  %v4829 = vadd.f32 %v4746, %v4828
  %v4830 = vpop.f32.mrb[0].mxu0
  %v4831 = vadd.f32 %v4748, %v4830
  %4832 = vdwg.mxu0
  %4833 = vmatprep.subr.mxu0 %v3994
  %4834 = vmatpush1.msra.mxu0 %v3993
  %4835 = vmatprep.subr.mxu0 %v4002
  %4836 = vmatpush1.msra.mxu0 %v4001
  %4837 = vmatprep.subr.mxu0 %v4010
  %4838 = vmatpush1.msra.mxu0 %v4009
  %4839 = vmatprep.subr.mxu0 %v4018
  %4840 = vmatpush1.msra.mxu0 %v4017
  %4841 = vmatprep.subr.mxu0 %v4026
  %4842 = vmatpush1.msra.mxu0 %v4025
  %4843 = vmatprep.subr.mxu0 %v4034
  %4844 = vmatpush1.msra.mxu0 %v4033
  %4845 = vmatprep.subr.mxu0 %v4042
  %4846 = vmatpush1.msra.mxu0 %v4041
  %4847 = vmatprep.subr.mxu0 %v4050
  %4848 = vmatpush1.msra.mxu0 %v4049
  %4849 = vmatprep.subr.mxu0 %v4058
  %4850 = vmatpush1.msra.mxu0 %v4057
  %4851 = vmatprep.subr.mxu0 %v4066
  %4852 = vmatpush1.msra.mxu0 %v4065
  %4853 = vmatprep.subr.mxu0 %v4074
  %4854 = vmatpush1.msra.mxu0 %v4073
  %4855 = vmatprep.subr.mxu0 %v4082
  %4856 = vmatpush1.msra.mxu0 %v4081
  %4857 = vmatprep.subr.mxu0 %v4090
  %4858 = vmatpush1.msra.mxu0 %v4089
  %4859 = vmatprep.subr.mxu0 %v4098
  %4860 = vmatpush1.msra.mxu0 %v4097
  %4861 = vmatprep.subr.mxu0 %v4106
  %4862 = vmatpush1.msra.mxu0 %v4105
  %4863 = vmatprep.subr.mxu0 %v4114
  %4864 = vmatpush1.msra.mxu0 %v4113
  %4865 = vmatprep.subr.mxu0 %v4122
  %4866 = vmatpush1.msra.mxu0 %v4121
  %4867 = vmatprep.subr.mxu0 %v4130
  %4868 = vmatpush1.msra.mxu0 %v4129
  %4869 = vmatprep.subr.mxu0 %v4138
  %4870 = vmatpush1.msra.mxu0 %v4137
  %4871 = vmatprep.subr.mxu0 %v4146
  %4872 = vmatpush1.msra.mxu0 %v4145
  %4873 = vmatprep.subr.mxu0 %v4154
  %4874 = vmatpush1.msra.mxu0 %v4153
  %4875 = vmatprep.subr.mxu0 %v4162
  %4876 = vmatpush1.msra.mxu0 %v4161
  %4877 = vmatprep.subr.mxu0 %v4170
  %4878 = vmatpush1.msra.mxu0 %v4169
  %4879 = vmatprep.subr.mxu0 %v4178
  %4880 = vmatpush1.msra.mxu0 %v4177
  %4881 = vmatprep.subr.mxu0 %v4186
  %4882 = vmatpush1.msra.mxu0 %v4185
  %4883 = vmatprep.subr.mxu0 %v4194
  %4884 = vmatpush1.msra.mxu0 %v4193
  %4885 = vmatprep.subr.mxu0 %v4202
  %4886 = vmatpush1.msra.mxu0 %v4201
  %4887 = vmatprep.subr.mxu0 %v4210
  %4888 = vmatpush1.msra.mxu0 %v4209
  %4889 = vmatprep.subr.mxu0 %v4218
  %4890 = vmatpush1.msra.mxu0 %v4217
  %4891 = vmatprep.subr.mxu0 %v4226
  %4892 = vmatpush1.msra.mxu0 %v4225
  %4893 = vmatprep.subr.mxu0 %v4234
  %4894 = vmatpush1.msra.mxu0 %v4233
  %4895 = vmatprep.subr.mxu0 %v4242
  %4896 = vmatpush1.msra.mxu0 %v4241
  %4897 = vmatprep.mubr.f32.mxu0 %v987
  %4898 = vmatmul.mubr.f32.gmra.mrb[0].mxu0 %v986
  %v4899 = vpop.f32.mrb[0].mxu0
  %v4900 = vadd.f32 0.0, %v4899
  %v4901 = vpop.f32.mrb[0].mxu0
  %v4902 = vadd.f32 0.0, %v4901
  %4903 = vmatprep.mubr.f32.mxu0 %v991
  %4904 = vmatmul.mubr.f32.gmra.mrb[0].mxu0 %v990
  %v4905 = vpop.f32.mrb[0].mxu0
  %v4906 = vadd.f32 0.0, %v4905
  %v4907 = vpop.f32.mrb[0].mxu0
  %v4908 = vadd.f32 0.0, %v4907
  %4909 = vmatprep.mubr.f32.mxu0 %v995
  %4910 = vmatmul.mubr.f32.gmra.mrb[0].mxu0 %v994
  %v4911 = vpop.f32.mrb[0].mxu0
  %v4912 = vadd.f32 0.0, %v4911
  %v4913 = vpop.f32.mrb[0].mxu0
  %v4914 = vadd.f32 0.0, %v4913
  %4915 = vdwg.mxu0
  %4916 = vmatprep.subr.mxu0 %v4250
  %4917 = vmatpush1.msra.mxu0 %v4249
  %4918 = vmatprep.subr.mxu0 %v4258
  %4919 = vmatpush1.msra.mxu0 %v4257
  %4920 = vmatprep.subr.mxu0 %v4266
  %4921 = vmatpush1.msra.mxu0 %v4265
  %4922 = vmatprep.subr.mxu0 %v4274
  %4923 = vmatpush1.msra.mxu0 %v4273
  %4924 = vmatprep.subr.mxu0 %v4282
  %4925 = vmatpush1.msra.mxu0 %v4281
  %4926 = vmatprep.subr.mxu0 %v4290
  %4927 = vmatpush1.msra.mxu0 %v4289
  %4928 = vmatprep.subr.mxu0 %v4298
  %4929 = vmatpush1.msra.mxu0 %v4297
  %4930 = vmatprep.subr.mxu0 %v4306
  %4931 = vmatpush1.msra.mxu0 %v4305
  %4932 = vmatprep.subr.mxu0 %v4314
  %4933 = vmatpush1.msra.mxu0 %v4313
  %4934 = vmatprep.subr.mxu0 %v4322
  %4935 = vmatpush1.msra.mxu0 %v4321
  %4936 = vmatprep.subr.mxu0 %v4330
  %4937 = vmatpush1.msra.mxu0 %v4329
  %4938 = vmatprep.subr.mxu0 %v4338
  %4939 = vmatpush1.msra.mxu0 %v4337
  %4940 = vmatprep.subr.mxu0 %v4346
  %4941 = vmatpush1.msra.mxu0 %v4345
  %4942 = vmatprep.subr.mxu0 %v4354
  %4943 = vmatpush1.msra.mxu0 %v4353
  %4944 = vmatprep.subr.mxu0 %v4362
  %4945 = vmatpush1.msra.mxu0 %v4361
  %4946 = vmatprep.subr.mxu0 %v4370
  %4947 = vmatpush1.msra.mxu0 %v4369
  %4948 = vmatprep.subr.mxu0 %v4378
  %4949 = vmatpush1.msra.mxu0 %v4377
  %4950 = vmatprep.subr.mxu0 %v4386
  %4951 = vmatpush1.msra.mxu0 %v4385
  %4952 = vmatprep.subr.mxu0 %v4394
  %4953 = vmatpush1.msra.mxu0 %v4393
  %4954 = vmatprep.subr.mxu0 %v4402
  %4955 = vmatpush1.msra.mxu0 %v4401
  %4956 = vmatprep.subr.mxu0 %v4410
  %4957 = vmatpush1.msra.mxu0 %v4409
  %4958 = vmatprep.subr.mxu0 %v4418
  %4959 = vmatpush1.msra.mxu0 %v4417
  %4960 = vmatprep.subr.mxu0 %v4426
  %4961 = vmatpush1.msra.mxu0 %v4425
  %4962 = vmatprep.subr.mxu0 %v4434
  %4963 = vmatpush1.msra.mxu0 %v4433
  %4964 = vmatprep.subr.mxu0 %v4442
  %4965 = vmatpush1.msra.mxu0 %v4441
  %4966 = vmatprep.subr.mxu0 %v4450
  %4967 = vmatpush1.msra.mxu0 %v4449
  %4968 = vmatprep.subr.mxu0 %v4458
  %4969 = vmatpush1.msra.mxu0 %v4457
  %4970 = vmatprep.subr.mxu0 %v4466
  %4971 = vmatpush1.msra.mxu0 %v4465
  %4972 = vmatprep.subr.mxu0 %v4474
  %4973 = vmatpush1.msra.mxu0 %v4473
  %4974 = vmatprep.subr.mxu0 %v4482
  %4975 = vmatpush1.msra.mxu0 %v4481
  %4976 = vmatprep.subr.mxu0 %v4490
  %4977 = vmatpush1.msra.mxu0 %v4489
  %4978 = vmatprep.subr.mxu0 %v4498
  %4979 = vmatpush1.msra.mxu0 %v4497
  %4980 = vmatprep.mubr.f32.mxu0 %v989
  %4981 = vmatmul.mubr.f32.gmra.mrb[0].mxu0 %v988
  %v4982 = vpop.f32.mrb[0].mxu0
  %v4983 = vadd.f32 %v4900, %v4982
  %v4984 = vpop.f32.mrb[0].mxu0
  %v4985 = vadd.f32 %v4902, %v4984
  %4986 = vmatprep.mubr.f32.mxu0 %v993
  %4987 = vmatmul.mubr.f32.gmra.mrb[0].mxu0 %v992
  %v4988 = vpop.f32.mrb[0].mxu0
  %v4989 = vadd.f32 %v4906, %v4988
  %v4990 = vpop.f32.mrb[0].mxu0
  %v4991 = vadd.f32 %v4908, %v4990
  %4992 = vmatprep.mubr.f32.mxu0 %v997
  %4993 = vmatmul.mubr.f32.gmra.mrb[0].mxu0 %v996
  %v4994 = vpop.f32.mrb[0].mxu0
  %v4995 = vadd.f32 %v4912, %v4994
  %v4996 = vpop.f32.mrb[0].mxu0
  %v4997 = vadd.f32 %v4914, %v4996
  %4998 = vdwg.mxu0
  %4999 = vmatprep.subr.mxu0 %v3996
  %5000 = vmatpush1.msra.mxu0 %v3995
  %5001 = vmatprep.subr.mxu0 %v4004
  %5002 = vmatpush1.msra.mxu0 %v4003
  %5003 = vmatprep.subr.mxu0 %v4012
  %5004 = vmatpush1.msra.mxu0 %v4011
  %5005 = vmatprep.subr.mxu0 %v4020
  %5006 = vmatpush1.msra.mxu0 %v4019
  %5007 = vmatprep.subr.mxu0 %v4028
  %5008 = vmatpush1.msra.mxu0 %v4027
  %5009 = vmatprep.subr.mxu0 %v4036
  %5010 = vmatpush1.msra.mxu0 %v4035
  %5011 = vmatprep.subr.mxu0 %v4044
  %5012 = vmatpush1.msra.mxu0 %v4043
  %5013 = vmatprep.subr.mxu0 %v4052
  %5014 = vmatpush1.msra.mxu0 %v4051
  %5015 = vmatprep.subr.mxu0 %v4060
  %5016 = vmatpush1.msra.mxu0 %v4059
  %5017 = vmatprep.subr.mxu0 %v4068
  %5018 = vmatpush1.msra.mxu0 %v4067
  %5019 = vmatprep.subr.mxu0 %v4076
  %5020 = vmatpush1.msra.mxu0 %v4075
  %5021 = vmatprep.subr.mxu0 %v4084
  %5022 = vmatpush1.msra.mxu0 %v4083
  %5023 = vmatprep.subr.mxu0 %v4092
  %5024 = vmatpush1.msra.mxu0 %v4091
  %5025 = vmatprep.subr.mxu0 %v4100
  %5026 = vmatpush1.msra.mxu0 %v4099
  %5027 = vmatprep.subr.mxu0 %v4108
  %5028 = vmatpush1.msra.mxu0 %v4107
  %5029 = vmatprep.subr.mxu0 %v4116
  %5030 = vmatpush1.msra.mxu0 %v4115
  %5031 = vmatprep.subr.mxu0 %v4124
  %5032 = vmatpush1.msra.mxu0 %v4123
  %5033 = vmatprep.subr.mxu0 %v4132
  %5034 = vmatpush1.msra.mxu0 %v4131
  %5035 = vmatprep.subr.mxu0 %v4140
  %5036 = vmatpush1.msra.mxu0 %v4139
  %5037 = vmatprep.subr.mxu0 %v4148
  %5038 = vmatpush1.msra.mxu0 %v4147
  %5039 = vmatprep.subr.mxu0 %v4156
  %5040 = vmatpush1.msra.mxu0 %v4155
  %5041 = vmatprep.subr.mxu0 %v4164
  %5042 = vmatpush1.msra.mxu0 %v4163
  %5043 = vmatprep.subr.mxu0 %v4172
  %5044 = vmatpush1.msra.mxu0 %v4171
  %5045 = vmatprep.subr.mxu0 %v4180
  %5046 = vmatpush1.msra.mxu0 %v4179
  %5047 = vmatprep.subr.mxu0 %v4188
  %5048 = vmatpush1.msra.mxu0 %v4187
  %5049 = vmatprep.subr.mxu0 %v4196
  %5050 = vmatpush1.msra.mxu0 %v4195
  %5051 = vmatprep.subr.mxu0 %v4204
  %5052 = vmatpush1.msra.mxu0 %v4203
  %5053 = vmatprep.subr.mxu0 %v4212
  %5054 = vmatpush1.msra.mxu0 %v4211
  %5055 = vmatprep.subr.mxu0 %v4220
  %5056 = vmatpush1.msra.mxu0 %v4219
  %5057 = vmatprep.subr.mxu0 %v4228
  %5058 = vmatpush1.msra.mxu0 %v4227
  %5059 = vmatprep.subr.mxu0 %v4236
  %5060 = vmatpush1.msra.mxu0 %v4235
  %5061 = vmatprep.subr.mxu0 %v4244
  %5062 = vmatpush1.msra.mxu0 %v4243
  %5063 = vmatprep.mubr.f32.mxu0 %v987
  %5064 = vmatmul.mubr.f32.gmra.mrb[0].mxu0 %v986
  %v5065 = vpop.f32.mrb[0].mxu0
  %v5066 = vadd.f32 0.0, %v5065
  %v5067 = vpop.f32.mrb[0].mxu0
  %v5068 = vadd.f32 0.0, %v5067
  %5069 = vmatprep.mubr.f32.mxu0 %v991
  %5070 = vmatmul.mubr.f32.gmra.mrb[0].mxu0 %v990
  %v5071 = vpop.f32.mrb[0].mxu0
  %v5072 = vadd.f32 0.0, %v5071
  %v5073 = vpop.f32.mrb[0].mxu0
  %v5074 = vadd.f32 0.0, %v5073
  %5075 = vmatprep.mubr.f32.mxu0 %v995
  %5076 = vmatmul.mubr.f32.gmra.mrb[0].mxu0 %v994
  %v5077 = vpop.f32.mrb[0].mxu0
  %v5078 = vadd.f32 0.0, %v5077
  %v5079 = vpop.f32.mrb[0].mxu0
  %v5080 = vadd.f32 0.0, %v5079
  %5081 = vdwg.mxu0
  %5082 = vmatprep.subr.mxu0 %v4252
  %5083 = vmatpush1.msra.mxu0 %v4251
  %5084 = vmatprep.subr.mxu0 %v4260
  %5085 = vmatpush1.msra.mxu0 %v4259
  %5086 = vmatprep.subr.mxu0 %v4268
  %5087 = vmatpush1.msra.mxu0 %v4267
  %5088 = vmatprep.subr.mxu0 %v4276
  %5089 = vmatpush1.msra.mxu0 %v4275
  %5090 = vmatprep.subr.mxu0 %v4284
  %5091 = vmatpush1.msra.mxu0 %v4283
  %5092 = vmatprep.subr.mxu0 %v4292
  %5093 = vmatpush1.msra.mxu0 %v4291
  %5094 = vmatprep.subr.mxu0 %v4300
  %5095 = vmatpush1.msra.mxu0 %v4299
  %5096 = vmatprep.subr.mxu0 %v4308
  %5097 = vmatpush1.msra.mxu0 %v4307
  %5098 = vmatprep.subr.mxu0 %v4316
  %5099 = vmatpush1.msra.mxu0 %v4315
  %5100 = vmatprep.subr.mxu0 %v4324
  %5101 = vmatpush1.msra.mxu0 %v4323
  %5102 = vmatprep.subr.mxu0 %v4332
  %5103 = vmatpush1.msra.mxu0 %v4331
  %5104 = vmatprep.subr.mxu0 %v4340
  %5105 = vmatpush1.msra.mxu0 %v4339
  %5106 = vmatprep.subr.mxu0 %v4348
  %5107 = vmatpush1.msra.mxu0 %v4347
  %5108 = vmatprep.subr.mxu0 %v4356
  %5109 = vmatpush1.msra.mxu0 %v4355
  %5110 = vmatprep.subr.mxu0 %v4364
  %5111 = vmatpush1.msra.mxu0 %v4363
  %5112 = vmatprep.subr.mxu0 %v4372
  %5113 = vmatpush1.msra.mxu0 %v4371
  %5114 = vmatprep.subr.mxu0 %v4380
  %5115 = vmatpush1.msra.mxu0 %v4379
  %5116 = vmatprep.subr.mxu0 %v4388
  %5117 = vmatpush1.msra.mxu0 %v4387
  %5118 = vmatprep.subr.mxu0 %v4396
  %5119 = vmatpush1.msra.mxu0 %v4395
  %5120 = vmatprep.subr.mxu0 %v4404
  %5121 = vmatpush1.msra.mxu0 %v4403
  %5122 = vmatprep.subr.mxu0 %v4412
  %5123 = vmatpush1.msra.mxu0 %v4411
  %5124 = vmatprep.subr.mxu0 %v4420
  %5125 = vmatpush1.msra.mxu0 %v4419
  %5126 = vmatprep.subr.mxu0 %v4428
  %5127 = vmatpush1.msra.mxu0 %v4427
  %5128 = vmatprep.subr.mxu0 %v4436
  %5129 = vmatpush1.msra.mxu0 %v4435
  %5130 = vmatprep.subr.mxu0 %v4444
  %5131 = vmatpush1.msra.mxu0 %v4443
  %5132 = vmatprep.subr.mxu0 %v4452
  %5133 = vmatpush1.msra.mxu0 %v4451
  %5134 = vmatprep.subr.mxu0 %v4460
  %5135 = vmatpush1.msra.mxu0 %v4459
  %5136 = vmatprep.subr.mxu0 %v4468
  %5137 = vmatpush1.msra.mxu0 %v4467
  %5138 = vmatprep.subr.mxu0 %v4476
  %5139 = vmatpush1.msra.mxu0 %v4475
  %5140 = vmatprep.subr.mxu0 %v4484
  %5141 = vmatpush1.msra.mxu0 %v4483
  %5142 = vmatprep.subr.mxu0 %v4492
  %5143 = vmatpush1.msra.mxu0 %v4491
  %5144 = vmatprep.subr.mxu0 %v4500
  %5145 = vmatpush1.msra.mxu0 %v4499
  %5146 = vmatprep.mubr.f32.mxu0 %v989
  %5147 = vmatmul.mubr.f32.gmra.mrb[0].mxu0 %v988
  %v5148 = vpop.f32.mrb[0].mxu0
  %v5149 = vadd.f32 %v5066, %v5148
  %v5150 = vpop.f32.mrb[0].mxu0
  %v5151 = vadd.f32 %v5068, %v5150
  %5152 = vmatprep.mubr.f32.mxu0 %v993
  %5153 = vmatmul.mubr.f32.gmra.mrb[0].mxu0 %v992
  %v5154 = vpop.f32.mrb[0].mxu0
  %v5155 = vadd.f32 %v5072, %v5154
  %v5156 = vpop.f32.mrb[0].mxu0
  %v5157 = vadd.f32 %v5074, %v5156
  %5158 = vmatprep.mubr.f32.mxu0 %v997
  %5159 = vmatmul.mubr.f32.gmra.mrb[0].mxu0 %v996
  %v5160 = vpop.f32.mrb[0].mxu0
  %v5161 = vadd.f32 %v5078, %v5160
  %v5162 = vpop.f32.mrb[0].mxu0
  %v5163 = vadd.f32 %v5080, %v5162
  %5164 = vdwg.mxu0
  %v5166 = vsel %vm3356, %v3986, 0
  %v5169 = vsel %vm3356, %v3987, 0
  %5171 = vmatprep.subr.mxu0 %v4653
  %5172 = vmatpush1.msra.mxu0 %v4651
  %5173 = vmatprep.subr.mxu0 %v4659
  %5174 = vmatpush1.msra.mxu0 %v4657
  %5175 = vmatprep.subr.mxu0 %v4665
  %5176 = vmatpush1.msra.mxu0 %v4663
  %5177 = vmatprep.subr.mxu0 0.0
  %5178 = vmatpush1.msra.mxu0 0.0
  %5179 = vmatprep.subr.mxu0 0.0
  %5180 = vmatpush1.msra.mxu0 0.0
  %5181 = vmatprep.subr.mxu0 0.0
  %5182 = vmatpush1.msra.mxu0 0.0
  %5183 = vmatprep.subr.mxu0 0.0
  %5184 = vmatpush1.msra.mxu0 0.0
  %5185 = vmatprep.subr.mxu0 0.0
  %5186 = vmatpush1.msra.mxu0 0.0
  %5187 = vmatprep.subr.mxu0 0.0
  %5188 = vmatpush1.msra.mxu0 0.0
  %5189 = vmatprep.subr.mxu0 0.0
  %5190 = vmatpush1.msra.mxu0 0.0
  %5191 = vmatprep.subr.mxu0 0.0
  %5192 = vmatpush1.msra.mxu0 0.0
  %5193 = vmatprep.subr.mxu0 0.0
  %5194 = vmatpush1.msra.mxu0 0.0
  %5195 = vmatprep.subr.mxu0 0.0
  %5196 = vmatpush1.msra.mxu0 0.0
  %5197 = vmatprep.subr.mxu0 0.0
  %5198 = vmatpush1.msra.mxu0 0.0
  %5199 = vmatprep.subr.mxu0 0.0
  %5200 = vmatpush1.msra.mxu0 0.0
  %5201 = vmatprep.subr.mxu0 0.0
  %5202 = vmatpush1.msra.mxu0 0.0
  %5203 = vmatprep.subr.mxu0 0.0
  %5204 = vmatpush1.msra.mxu0 0.0
  %5205 = vmatprep.subr.mxu0 0.0
  %5206 = vmatpush1.msra.mxu0 0.0
  %5207 = vmatprep.subr.mxu0 0.0
  %5208 = vmatpush1.msra.mxu0 0.0
  %5209 = vmatprep.subr.mxu0 0.0
  %5210 = vmatpush1.msra.mxu0 0.0
  %5211 = vmatprep.subr.mxu0 0.0
  %5212 = vmatpush1.msra.mxu0 0.0
  %5213 = vmatprep.subr.mxu0 0.0
  %5214 = vmatpush1.msra.mxu0 0.0
  %5215 = vmatprep.subr.mxu0 0.0
  %5216 = vmatpush1.msra.mxu0 0.0
  %5217 = vmatprep.subr.mxu0 0.0
  %5218 = vmatpush1.msra.mxu0 0.0
  %5219 = vmatprep.subr.mxu0 0.0
  %5220 = vmatpush1.msra.mxu0 0.0
  %5221 = vmatprep.subr.mxu0 0.0
  %5222 = vmatpush1.msra.mxu0 0.0
  %5223 = vmatprep.subr.mxu0 0.0
  %5224 = vmatpush1.msra.mxu0 0.0
  %5225 = vmatprep.subr.mxu0 0.0
  %5226 = vmatpush1.msra.mxu0 0.0
  %5227 = vmatprep.subr.mxu0 0.0
  %5228 = vmatpush1.msra.mxu0 0.0
  %5229 = vmatprep.subr.mxu0 0.0
  %5230 = vmatpush1.msra.mxu0 0.0
  %5231 = vmatprep.subr.mxu0 0.0
  %5232 = vmatpush1.msra.mxu0 0.0
  %5233 = vmatprep.subr.mxu0 0.0
  %5234 = vmatpush1.msra.mxu0 0.0
  %5235 = vmatprep.mubr.f32.mxu0 0.0
  %5236 = vmatmul.mubr.f32.gmra.mrb[0].mxu0 %v5166
  %v5237 = vpop.f32.mrb[0].mxu0
  %v5238 = vadd.f32 0.0, %v5237
  %v5239 = vpop.f32.mrb[0].mxu0
  %v5240 = vadd.f32 0.0, %v5239
  %5241 = vmatprep.mubr.f32.mxu0 0.0
  %5242 = vmatmul.mubr.f32.gmra.mrb[0].mxu0 %v5169
  %v5243 = vpop.f32.mrb[0].mxu0
  %v5244 = vadd.f32 0.0, %v5243
  %v5245 = vpop.f32.mrb[0].mxu0
  %v5246 = vadd.f32 0.0, %v5245
  %5247 = vdwg.mxu0
  %5248 = vmatprep.subr.mxu0 %v4819
  %5249 = vmatpush1.msra.mxu0 %v4817
  %5250 = vmatprep.subr.mxu0 %v4825
  %5251 = vmatpush1.msra.mxu0 %v4823
  %5252 = vmatprep.subr.mxu0 %v4831
  %5253 = vmatpush1.msra.mxu0 %v4829
  %5254 = vmatprep.subr.mxu0 0.0
  %5255 = vmatpush1.msra.mxu0 0.0
  %5256 = vmatprep.subr.mxu0 0.0
  %5257 = vmatpush1.msra.mxu0 0.0
  %5258 = vmatprep.subr.mxu0 0.0
  %5259 = vmatpush1.msra.mxu0 0.0
  %5260 = vmatprep.subr.mxu0 0.0
  %5261 = vmatpush1.msra.mxu0 0.0
  %5262 = vmatprep.subr.mxu0 0.0
  %5263 = vmatpush1.msra.mxu0 0.0
  %5264 = vmatprep.subr.mxu0 0.0
  %5265 = vmatpush1.msra.mxu0 0.0
  %5266 = vmatprep.subr.mxu0 0.0
  %5267 = vmatpush1.msra.mxu0 0.0
  %5268 = vmatprep.subr.mxu0 0.0
  %5269 = vmatpush1.msra.mxu0 0.0
  %5270 = vmatprep.subr.mxu0 0.0
  %5271 = vmatpush1.msra.mxu0 0.0
  %5272 = vmatprep.subr.mxu0 0.0
  %5273 = vmatpush1.msra.mxu0 0.0
  %5274 = vmatprep.subr.mxu0 0.0
  %5275 = vmatpush1.msra.mxu0 0.0
  %5276 = vmatprep.subr.mxu0 0.0
  %5277 = vmatpush1.msra.mxu0 0.0
  %5278 = vmatprep.subr.mxu0 0.0
  %5279 = vmatpush1.msra.mxu0 0.0
  %5280 = vmatprep.subr.mxu0 0.0
  %5281 = vmatpush1.msra.mxu0 0.0
  %5282 = vmatprep.subr.mxu0 0.0
  %5283 = vmatpush1.msra.mxu0 0.0
  %5284 = vmatprep.subr.mxu0 0.0
  %5285 = vmatpush1.msra.mxu0 0.0
  %5286 = vmatprep.subr.mxu0 0.0
  %5287 = vmatpush1.msra.mxu0 0.0
  %5288 = vmatprep.subr.mxu0 0.0
  %5289 = vmatpush1.msra.mxu0 0.0
  %5290 = vmatprep.subr.mxu0 0.0
  %5291 = vmatpush1.msra.mxu0 0.0
  %5292 = vmatprep.subr.mxu0 0.0
  %5293 = vmatpush1.msra.mxu0 0.0
  %5294 = vmatprep.subr.mxu0 0.0
  %5295 = vmatpush1.msra.mxu0 0.0
  %5296 = vmatprep.subr.mxu0 0.0
  %5297 = vmatpush1.msra.mxu0 0.0
  %5298 = vmatprep.subr.mxu0 0.0
  %5299 = vmatpush1.msra.mxu0 0.0
  %5300 = vmatprep.subr.mxu0 0.0
  %5301 = vmatpush1.msra.mxu0 0.0
  %5302 = vmatprep.subr.mxu0 0.0
  %5303 = vmatpush1.msra.mxu0 0.0
  %5304 = vmatprep.subr.mxu0 0.0
  %5305 = vmatpush1.msra.mxu0 0.0
  %5306 = vmatprep.subr.mxu0 0.0
  %5307 = vmatpush1.msra.mxu0 0.0
  %5308 = vmatprep.subr.mxu0 0.0
  %5309 = vmatpush1.msra.mxu0 0.0
  %5310 = vmatprep.subr.mxu0 0.0
  %5311 = vmatpush1.msra.mxu0 0.0
  %5312 = vmatprep.mubr.f32.mxu0 0.0
  %5313 = vmatmul.mubr.f32.gmra.mrb[0].mxu0 %v5166
  %v5314 = vpop.f32.mrb[0].mxu0
  %v5315 = vadd.f32 0.0, %v5314
  %v5316 = vpop.f32.mrb[0].mxu0
  %v5317 = vadd.f32 0.0, %v5316
  %5318 = vmatprep.mubr.f32.mxu0 0.0
  %5319 = vmatmul.mubr.f32.gmra.mrb[0].mxu0 %v5169
  %v5320 = vpop.f32.mrb[0].mxu0
  %v5321 = vadd.f32 0.0, %v5320
  %v5322 = vpop.f32.mrb[0].mxu0
  %v5323 = vadd.f32 0.0, %v5322
  %5324 = vdwg.mxu0
  %5325 = vmatprep.subr.mxu0 %v4985
  %5326 = vmatpush1.msra.mxu0 %v4983
  %5327 = vmatprep.subr.mxu0 %v4991
  %5328 = vmatpush1.msra.mxu0 %v4989
  %5329 = vmatprep.subr.mxu0 %v4997
  %5330 = vmatpush1.msra.mxu0 %v4995
  %5331 = vmatprep.subr.mxu0 0.0
  %5332 = vmatpush1.msra.mxu0 0.0
  %5333 = vmatprep.subr.mxu0 0.0
  %5334 = vmatpush1.msra.mxu0 0.0
  %5335 = vmatprep.subr.mxu0 0.0
  %5336 = vmatpush1.msra.mxu0 0.0
  %5337 = vmatprep.subr.mxu0 0.0
  %5338 = vmatpush1.msra.mxu0 0.0
  %5339 = vmatprep.subr.mxu0 0.0
  %5340 = vmatpush1.msra.mxu0 0.0
  %5341 = vmatprep.subr.mxu0 0.0
  %5342 = vmatpush1.msra.mxu0 0.0
  %5343 = vmatprep.subr.mxu0 0.0
  %5344 = vmatpush1.msra.mxu0 0.0
  %5345 = vmatprep.subr.mxu0 0.0
  %5346 = vmatpush1.msra.mxu0 0.0
  %5347 = vmatprep.subr.mxu0 0.0
  %5348 = vmatpush1.msra.mxu0 0.0
  %5349 = vmatprep.subr.mxu0 0.0
  %5350 = vmatpush1.msra.mxu0 0.0
  %5351 = vmatprep.subr.mxu0 0.0
  %5352 = vmatpush1.msra.mxu0 0.0
  %5353 = vmatprep.subr.mxu0 0.0
  %5354 = vmatpush1.msra.mxu0 0.0
  %5355 = vmatprep.subr.mxu0 0.0
  %5356 = vmatpush1.msra.mxu0 0.0
  %5357 = vmatprep.subr.mxu0 0.0
  %5358 = vmatpush1.msra.mxu0 0.0
  %5359 = vmatprep.subr.mxu0 0.0
  %5360 = vmatpush1.msra.mxu0 0.0
  %5361 = vmatprep.subr.mxu0 0.0
  %5362 = vmatpush1.msra.mxu0 0.0
  %5363 = vmatprep.subr.mxu0 0.0
  %5364 = vmatpush1.msra.mxu0 0.0
  %5365 = vmatprep.subr.mxu0 0.0
  %5366 = vmatpush1.msra.mxu0 0.0
  %5367 = vmatprep.subr.mxu0 0.0
  %5368 = vmatpush1.msra.mxu0 0.0
  %5369 = vmatprep.subr.mxu0 0.0
  %5370 = vmatpush1.msra.mxu0 0.0
  %5371 = vmatprep.subr.mxu0 0.0
  %5372 = vmatpush1.msra.mxu0 0.0
  %5373 = vmatprep.subr.mxu0 0.0
  %5374 = vmatpush1.msra.mxu0 0.0
  %5375 = vmatprep.subr.mxu0 0.0
  %5376 = vmatpush1.msra.mxu0 0.0
  %5377 = vmatprep.subr.mxu0 0.0
  %5378 = vmatpush1.msra.mxu0 0.0
  %5379 = vmatprep.subr.mxu0 0.0
  %5380 = vmatpush1.msra.mxu0 0.0
  %5381 = vmatprep.subr.mxu0 0.0
  %5382 = vmatpush1.msra.mxu0 0.0
  %5383 = vmatprep.subr.mxu0 0.0
  %5384 = vmatpush1.msra.mxu0 0.0
  %5385 = vmatprep.subr.mxu0 0.0
  %5386 = vmatpush1.msra.mxu0 0.0
  %5387 = vmatprep.subr.mxu0 0.0
  %5388 = vmatpush1.msra.mxu0 0.0
  %5389 = vmatprep.mubr.f32.mxu0 0.0
  %5390 = vmatmul.mubr.f32.gmra.mrb[0].mxu0 %v5166
  %v5391 = vpop.f32.mrb[0].mxu0
  %v5392 = vadd.f32 0.0, %v5391
  %v5393 = vpop.f32.mrb[0].mxu0
  %v5394 = vadd.f32 0.0, %v5393
  %5395 = vmatprep.mubr.f32.mxu0 0.0
  %5396 = vmatmul.mubr.f32.gmra.mrb[0].mxu0 %v5169
  %v5397 = vpop.f32.mrb[0].mxu0
  %v5398 = vadd.f32 0.0, %v5397
  %v5399 = vpop.f32.mrb[0].mxu0
  %v5400 = vadd.f32 0.0, %v5399
  %5401 = vdwg.mxu0
  %5402 = vmatprep.subr.mxu0 %v5151
  %5403 = vmatpush1.msra.mxu0 %v5149
  %5404 = vmatprep.subr.mxu0 %v5157
  %5405 = vmatpush1.msra.mxu0 %v5155
  %5406 = vmatprep.subr.mxu0 %v5163
  %5407 = vmatpush1.msra.mxu0 %v5161
  %5408 = vmatprep.subr.mxu0 0.0
  %5409 = vmatpush1.msra.mxu0 0.0
  %5410 = vmatprep.subr.mxu0 0.0
  %5411 = vmatpush1.msra.mxu0 0.0
  %5412 = vmatprep.subr.mxu0 0.0
  %5413 = vmatpush1.msra.mxu0 0.0
  %5414 = vmatprep.subr.mxu0 0.0
  %5415 = vmatpush1.msra.mxu0 0.0
  %5416 = vmatprep.subr.mxu0 0.0
  %5417 = vmatpush1.msra.mxu0 0.0
  %5418 = vmatprep.subr.mxu0 0.0
  %5419 = vmatpush1.msra.mxu0 0.0
  %5420 = vmatprep.subr.mxu0 0.0
  %5421 = vmatpush1.msra.mxu0 0.0
  %5422 = vmatprep.subr.mxu0 0.0
  %5423 = vmatpush1.msra.mxu0 0.0
  %5424 = vmatprep.subr.mxu0 0.0
  %5425 = vmatpush1.msra.mxu0 0.0
  %5426 = vmatprep.subr.mxu0 0.0
  %5427 = vmatpush1.msra.mxu0 0.0
  %5428 = vmatprep.subr.mxu0 0.0
  %5429 = vmatpush1.msra.mxu0 0.0
  %5430 = vmatprep.subr.mxu0 0.0
  %5431 = vmatpush1.msra.mxu0 0.0
  %5432 = vmatprep.subr.mxu0 0.0
  %5433 = vmatpush1.msra.mxu0 0.0
  %5434 = vmatprep.subr.mxu0 0.0
  %5435 = vmatpush1.msra.mxu0 0.0
  %5436 = vmatprep.subr.mxu0 0.0
  %5437 = vmatpush1.msra.mxu0 0.0
  %5438 = vmatprep.subr.mxu0 0.0
  %5439 = vmatpush1.msra.mxu0 0.0
  %5440 = vmatprep.subr.mxu0 0.0
  %5441 = vmatpush1.msra.mxu0 0.0
  %5442 = vmatprep.subr.mxu0 0.0
  %5443 = vmatpush1.msra.mxu0 0.0
  %5444 = vmatprep.subr.mxu0 0.0
  %5445 = vmatpush1.msra.mxu0 0.0
  %5446 = vmatprep.subr.mxu0 0.0
  %5447 = vmatpush1.msra.mxu0 0.0
  %5448 = vmatprep.subr.mxu0 0.0
  %5449 = vmatpush1.msra.mxu0 0.0
  %5450 = vmatprep.subr.mxu0 0.0
  %5451 = vmatpush1.msra.mxu0 0.0
  %5452 = vmatprep.subr.mxu0 0.0
  %5453 = vmatpush1.msra.mxu0 0.0
  %5454 = vmatprep.subr.mxu0 0.0
  %5455 = vmatpush1.msra.mxu0 0.0
  %5456 = vmatprep.subr.mxu0 0.0
  %5457 = vmatpush1.msra.mxu0 0.0
  %5458 = vmatprep.subr.mxu0 0.0
  %5459 = vmatpush1.msra.mxu0 0.0
  %5460 = vmatprep.subr.mxu0 0.0
  %5461 = vmatpush1.msra.mxu0 0.0
  %5462 = vmatprep.subr.mxu0 0.0
  %5463 = vmatpush1.msra.mxu0 0.0
  %5464 = vmatprep.subr.mxu0 0.0
  %5465 = vmatpush1.msra.mxu0 0.0
  %5466 = vmatprep.mubr.f32.mxu0 0.0
  %5467 = vmatmul.mubr.f32.gmra.mrb[0].mxu0 %v5166
  %v5468 = vpop.f32.mrb[0].mxu0
  %v5469 = vadd.f32 0.0, %v5468
  %v5470 = vpop.f32.mrb[0].mxu0
  %v5471 = vadd.f32 0.0, %v5470
  %5472 = vmatprep.mubr.f32.mxu0 0.0
  %5473 = vmatmul.mubr.f32.gmra.mrb[0].mxu0 %v5169
  %v5474 = vpop.f32.mrb[0].mxu0
  %v5475 = vadd.f32 0.0, %v5474
  %v5476 = vpop.f32.mrb[0].mxu0
  %v5477 = vadd.f32 0.0, %v5476
  %5478 = vdwg.mxu0
  %v5479 = vadd.f32 %v3744, %v5238
  %v5480 = vadd.f32 %v3746, %v5240
  %v5481 = vadd.f32 %v3821, %v5315
  %v5482 = vadd.f32 %v3823, %v5317
  %v5483 = vadd.f32 %v3898, %v5392
  %v5484 = vadd.f32 %v3900, %v5394
  %v5485 = vadd.f32 %v3975, %v5469
  %v5486 = vadd.f32 %v3977, %v5471
  %v5487 = vadd.f32 %v3750, %v5244
  %v5488 = vadd.f32 %v3752, %v5246
  %v5489 = vadd.f32 %v3827, %v5321
  %v5490 = vadd.f32 %v3829, %v5323
  %v5491 = vadd.f32 %v3904, %v5398
  %v5492 = vadd.f32 %v3906, %v5400
  %v5493 = vadd.f32 %v3981, %v5475
  %v5494 = vadd.f32 %v3983, %v5477
  %5495 = vst [vmem:[%s6] sm:$0xff] %v5479
  %5496 = vst [vmem:[%s6 + $0x8] sm:$0xff] %v5480
  %5497 = vst [vmem:[%s6 + $0x10] sm:$0xff] %v5481
  %5498 = vst [vmem:[%s6 + $0x18] sm:$0xff] %v5482
  %5499 = vst [vmem:[%s6 + $0x20] sm:$0xff] %v5483
  %5500 = vst [vmem:[%s6 + $0x28] sm:$0xff] %v5484
  %5501 = vst [vmem:[%s6 + $0x30] sm:$0xff] %v5485
  %5502 = vst [vmem:[%s6 + $0x38] sm:$0xff] %v5486
  %5503 = vst [vmem:[%s6 + $0x40] sm:$0xff] %v5487
  %5504 = vst [vmem:[%s6 + $0x48] sm:$0xff] %v5488
  %5505 = vst [vmem:[%s6 + $0x50] sm:$0xff] %v5489
  %5506 = vst [vmem:[%s6 + $0x58] sm:$0xff] %v5490
  %5507 = vst [vmem:[%s6 + $0x60] sm:$0xff] %v5491
  %5508 = vst [vmem:[%s6 + $0x68] sm:$0xff] %v5492
  %5509 = vst [vmem:[%s6 + $0x70] sm:$0xff] %v5493
  %5510 = vst [vmem:[%s6 + $0x78] sm:$0xff] %v5494
  // Predicated region
  $region26: #{up_conv_layer.1} parent=0 // pred_check
    _
  $region27: #{up_conv_layer.1} parent=0 // pred_check_branch
    %5512 = sbr.rel (0) target = $region29
  $region28: #{up_conv_layer.1} parent=0 // pred_region
    _
  $region29: #{up_conv_layer.1} parent=0 // pred_fallthru
    _
  // Predicated region
  $region30: #{up_conv_layer.1} parent=0 // pred_check
    _
  $region31: #{up_conv_layer.1} parent=0 // pred_check_branch
    %5514 = sbr.rel (0) target = $region33
  $region32: #{up_conv_layer.1} parent=0 // pred_region
    _
  $region33: #{up_conv_layer.1} parent=0 // pred_fallthru
    _

</llo_original>
